<compile_context>
chip_gen: v7x
topology: tpu7x:2x2x1
jax: 0.10.0
libtpu: 0.0.40
codegen_flags: <defaults>
</compile_context>

<pallas_src>
import math
import functools

import jax
import jax.numpy as jnp
from jax.experimental import pallas as pl
from jax.experimental.pallas import tpu as pltpu


# ----------------------------- model config -----------------------------
VOCAB = 64
VPAD = 128                       # lane-dense padded vocab for the logits path
D_MODEL = 32
D_KV = 8
N_HEADS = 4
INNER = N_HEADS * D_KV           # 32
D_FF = 64
N_LAYERS = 2
NUM_BUCKETS = 8
MAX_DISTANCE = 16
PAD_ID = 0
DEC_START_ID = 0
LN_EPS = 1e-6
NEG_INF = -1e9


# ----------------------------- fused Pallas kernel -----------------------------
def _t5_fused_kernel(
    # inputs
    ids_ref, labels_ref, shared_ref, enc_bias_ref, dec_bias_ref,
    enc_wqkv_ref, enc_wo_ref, enc_wi_ref, enc_wff_ref, enc_ln_ref, enc_final_ln_ref,
    dec_s_wqkv_ref, dec_s_wo_ref,
    dec_c_wq_ref, dec_c_wkv_ref, dec_c_wo_ref,
    dec_wi_ref, dec_wff_ref, dec_ln_ref, dec_final_ln_ref,
    # outputs
    logits_ref, parts_ref,
    *, ts, tt,
):
    shared = shared_ref[...]                                   # (VPAD, D) f32, rows >= VOCAB are zero

    def rmsnorm(x, w):
        # T5 LayerNorm: no mean subtraction, no bias.  x: (N, D), w: (1, D)
        var = jnp.mean(x * x, axis=-1, keepdims=True)
        return x * jax.lax.rsqrt(var + LN_EPS) * w

    def split_heads(x):
        # (N, INNER) -> (H, N, D_KV) via stacked lane slices
        return jnp.stack([x[:, h * D_KV:(h + 1) * D_KV] for h in range(N_HEADS)],
                         axis=0)

    def mha(q, k, v, wo, bias3):
        # q: (Nq, INNER), k/v: (Nk, INNER), wo: (INNER, D), bias3: (H, Nq, Nk) or None
        # NOTE: T5 does NOT scale scores by 1/sqrt(d_kv).
        q3, k3, v3 = split_heads(q), split_heads(k), split_heads(v)
        s = jnp.einsum('hqd,hkd->hqk', q3, k3,
                       preferred_element_type=jnp.float32)      # (H, Nq, Nk)
        if bias3 is not None:
            s = s + bias3
        # single head-stacked softmax chain
        s = s - jnp.max(s, axis=-1, keepdims=True)
        p = jnp.exp(s)
        p = p * pl.reciprocal(jnp.sum(p, axis=-1, keepdims=True), approx=True)
        o3 = jnp.einsum('hqk,hkd->hqd', p, v3,
                        preferred_element_type=jnp.float32)     # (H, Nq, Dkv)
        o = jnp.concatenate([o3[h] for h in range(N_HEADS)], axis=-1)  # (Nq, INNER)
        # fused output projection: one matmul for all heads
        return jnp.dot(o, wo, preferred_element_type=jnp.float32)

    def ffn(x, wi, wo):
        h = jnp.maximum(jnp.dot(x, wi, preferred_element_type=jnp.float32), 0.0)
        return jnp.dot(h, wo, preferred_element_type=jnp.float32)

    # ---------------- fused embedding (encoder + decoder ids in one matmul) ----------------
    ids = ids_ref[0]                                             # (ts+tt, 1) int32
    elane = jax.lax.broadcasted_iota(jnp.int32, (ts + tt, VPAD), 1)
    onehot = (elane == ids).astype(jnp.float32)
    emb = jnp.dot(onehot, shared, preferred_element_type=jnp.float32)  # (ts+tt, D)
    x = emb[:ts]                                                 # encoder rows
    y = emb[ts:]                                                 # decoder rows

    enc_bias = enc_bias_ref[...]                                 # (H, Ts, Ts)
    dec_bias = dec_bias_ref[...]                                 # (H, Tt, Tt), incl. causal

    # ---------------- encoder ----------------
    # TODO(synk): no encoder padding attention_mask from input_ids == PAD_ID is
    # applied (synthetic inputs here contain no padding).
    for l in range(N_LAYERS):
        ln = enc_ln_ref[l]                                       # (2, D)
        h = rmsnorm(x, ln[0:1, :])
        qkv = jnp.dot(h, enc_wqkv_ref[l], preferred_element_type=jnp.float32)
        x = x + mha(qkv[:, :INNER], qkv[:, INNER:2 * INNER], qkv[:, 2 * INNER:],
                    enc_wo_ref[l], enc_bias)
        h = rmsnorm(x, ln[1:2, :])
        x = x + ffn(h, enc_wi_ref[l], enc_wff_ref[l])
    enc_out = rmsnorm(x, enc_final_ln_ref[...])

    # ---------------- decoder ----------------
    for l in range(N_LAYERS):
        ln = dec_ln_ref[l]                                       # (3, D)
        # self attention (causal + relative bias)
        h = rmsnorm(y, ln[0:1, :])
        qkv = jnp.dot(h, dec_s_wqkv_ref[l], preferred_element_type=jnp.float32)
        y = y + mha(qkv[:, :INNER], qkv[:, INNER:2 * INNER], qkv[:, 2 * INNER:],
                    dec_s_wo_ref[l], dec_bias)
        # cross attention (no bias needed under the batch grid)
        h = rmsnorm(y, ln[1:2, :])
        q = jnp.dot(h, dec_c_wq_ref[l], preferred_element_type=jnp.float32)
        kv = jnp.dot(enc_out, dec_c_wkv_ref[l], preferred_element_type=jnp.float32)
        y = y + mha(q, kv[:, :INNER], kv[:, INNER:], dec_c_wo_ref[l], None)
        # feed-forward
        h = rmsnorm(y, ln[2:3, :])
        y = y + ffn(h, dec_wi_ref[l], dec_wff_ref[l])

    # d_model**-0.5 tied-embedding scale is folded into dec_final_ln at init time.
    y = rmsnorm(y, dec_final_ln_ref[...])

    # ---------------- LM head (tied embedding) + cross entropy, lane-dense ----------------
    logits = jax.lax.dot_general(y, shared, (((1,), (1,)), ((), ())),
                                 preferred_element_type=jnp.float32)   # (tt, VPAD)
    logits_ref[0] = logits

    labels = labels_ref[0]                                       # (tt, 1) int32
    vlane = jax.lax.broadcasted_iota(jnp.int32, (tt, VPAD), 1)
    masked = jnp.where(vlane < VOCAB, logits, NEG_INF)           # kill padded lanes
    m = jnp.max(masked, axis=-1, keepdims=True)
    lse = jnp.log(jnp.sum(jnp.exp(masked - m), axis=-1, keepdims=True)) + m
    # labels == -100 -> all-zero one-hot row (tgt = 0); masked by `valid` below.
    onehot_l = (vlane == labels).astype(jnp.float32)
    tgt = jnp.sum(logits * onehot_l, axis=-1, keepdims=True)
    valid = (labels != -100).astype(jnp.float32)
    loss_sum = jnp.sum((lse - tgt) * valid)
    count = jnp.sum(valid)

    # per-batch partial sums; reduced on host (required for the parallel grid).
    plane = jax.lax.broadcasted_iota(jnp.int32, (8, 128), 1)
    parts_ref[0] = jnp.where(plane == 0, loss_sum,
                             jnp.where(plane == 1, count, 0.0))


# ----------------------------- host-side glue (plain JAX) -----------------------------
def _relative_position_bucket(rel_pos, bidirectional, num_buckets, max_distance):
    ret = jnp.zeros_like(rel_pos)
    n = num_buckets
    if bidirectional:
        n = n // 2
        ret = ret + (rel_pos > 0).astype(jnp.int32) * n
        rel_pos = jnp.abs(rel_pos)
    else:
        rel_pos = -jnp.minimum(rel_pos, 0)
    max_exact = n // 2
    is_small = rel_pos < max_exact
    safe = jnp.maximum(rel_pos, 1)         # clamp: avoid log(0) -> -inf -> int cast UB
    rel_large = max_exact + (
        jnp.log(safe.astype(jnp.float32) / max_exact)
        / math.log(max_distance / max_exact) * (n - max_exact)
    ).astype(jnp.int32)
    rel_large = jnp.minimum(rel_large, n - 1)
    return ret + jnp.where(is_small, rel_pos, rel_large)


def compute_rel_bias(rel_emb, qlen, klen, bidirectional):
    ctx = jnp.arange(qlen)[:, None]
    mem = jnp.arange(klen)[None, :]
    rel = mem - ctx
    buckets = _relative_position_bucket(rel, bidirectional, NUM_BUCKETS, MAX_DISTANCE)
    vals = rel_emb[buckets]                      # (q, k, H)
    return jnp.transpose(vals, (2, 0, 1))        # (H, q, k)


def precompute_biases(params, ts, tt):
    """Host-side bias construction, hoisted out of the per-step jit (runs once)."""
    enc_bias = compute_rel_bias(params['enc_rel_bias'], ts, ts, bidirectional=True)
    dec_rel = compute_rel_bias(params['dec_rel_bias'], tt, tt, bidirectional=False)
    causal = jnp.where(jnp.arange(tt)[None, :] <= jnp.arange(tt)[:, None],
                       0.0, NEG_INF).astype(jnp.float32)
    return {
        'enc_bias': enc_bias.astype(jnp.float32),            # (H, Ts, Ts)
        'dec_bias': (dec_rel + causal[None]).astype(jnp.float32),  # (H, Tt, Tt)
    }


def shift_right(labels):
    b = labels.shape[0]
    shifted = jnp.concatenate(
        [jnp.full((b, 1), DEC_START_ID, labels.dtype), labels[:, :-1]], axis=1)
    return jnp.where(shifted == -100, PAD_ID, shifted)


def _full_spec(shape):
    return pl.BlockSpec(shape, lambda *_: (0,) * len(shape))


def t5_forward(params, statics, input_ids, labels):
    b, ts = input_ids.shape
    tt = labels.shape[1]
    dec_ids = shift_right(labels)

    ids = jnp.concatenate([input_ids, dec_ids], axis=1).astype(jnp.int32)[..., None]  # (B, ts+tt, 1)
    labels3 = labels.astype(jnp.int32)[..., None]                                     # (B, tt, 1)

    kernel = functools.partial(_t5_fused_kernel, ts=ts, tt=tt)
    L = N_LAYERS

    in_specs = [
        pl.BlockSpec((1, ts + tt, 1), lambda i: (i, 0, 0)),   # ids (per-batch)
        pl.BlockSpec((1, tt, 1), lambda i: (i, 0, 0)),        # labels (per-batch)
        _full_spec((VPAD, D_MODEL)),                          # padded tied embedding
        _full_spec((N_HEADS, ts, ts)),                        # enc rel bias
        _full_spec((N_HEADS, tt, tt)),                        # dec rel + causal bias
        _full_spec((L, D_MODEL, 3 * INNER)),                  # enc qkv
        _full_spec((L, INNER, D_MODEL)),                      # enc o
        _full_spec((L, D_MODEL, D_FF)),                       # enc wi
        _full_spec((L, D_FF, D_MODEL)),                       # enc wo(ff)
        _full_spec((L, 2, D_MODEL)),                          # enc layer norms
        _full_spec((1, D_MODEL)),                             # enc final norm
        _full_spec((L, D_MODEL, 3 * INNER)),                  # dec self qkv
        _full_spec((L, INNER, D_MODEL)),                      # dec self o
        _full_spec((L, D_MODEL, INNER)),                      # dec cross q
        _full_spec((L, D_MODEL, 2 * INNER)),                  # dec cross kv
        _full_spec((L, INNER, D_MODEL)),                      # dec cross o
        _full_spec((L, D_MODEL, D_FF)),                       # dec wi
        _full_spec((L, D_FF, D_MODEL)),                       # dec wo(ff)
        _full_spec((L, 3, D_MODEL)),                          # dec layer norms
        _full_spec((1, D_MODEL)),                             # dec final norm (pre-scaled)
    ]
    out_specs = (
        pl.BlockSpec((1, tt, VPAD), lambda i: (i, 0, 0)),     # lane-dense padded logits
        pl.BlockSpec((1, 8, 128), lambda i: (i, 0, 0)),       # per-batch loss partials
    )

    logits_pad, parts = pl.pallas_call(
        kernel,
        grid=(b,),
        in_specs=in_specs,
        out_specs=out_specs,
        out_shape=(jax.ShapeDtypeStruct((b, tt, VPAD), jnp.float32),
                   jax.ShapeDtypeStruct((b, 8, 128), jnp.float32)),
        compiler_params=pltpu.CompilerParams(dimension_semantics=("parallel",)),
    )(ids, labels3, params['shared_pad'],
      statics['enc_bias'], statics['dec_bias'],
      params['enc_wqkv'], params['enc_wo'], params['enc_wi'], params['enc_wff_o'],
      params['enc_ln'], params['enc_final_ln'],
      params['dec_self_wqkv'], params['dec_self_wo'],
      params['dec_cross_wq'], params['dec_cross_wkv'], params['dec_cross_wo'],
      params['dec_wi'], params['dec_wff_o'], params['dec_ln'], params['dec_final_ln'])

    loss_sum = jnp.sum(parts[:, 0, 0])
    count = jnp.maximum(jnp.sum(parts[:, 0, 1]), 1.0)          # div-by-zero guard
    loss = loss_sum / count
    return loss, logits_pad[:, :, :VOCAB]


# ----------------------------- parameter init (synthetic, deterministic) -----------------------------
def init_params(key):
    keys = iter(jax.random.split(key, 64))

    def w(shape):
        return jax.random.normal(next(keys), shape, jnp.float32) * 0.02

    L = N_LAYERS
    shared = w((VOCAB, D_MODEL))
    shared_pad = jnp.zeros((VPAD, D_MODEL), jnp.float32).at[:VOCAB].set(shared)
    return {
        'shared_pad': shared_pad,                 # tied embedding, zero-padded to 128 rows
        'enc_rel_bias': w((NUM_BUCKETS, N_HEADS)),
        'dec_rel_bias': w((NUM_BUCKETS, N_HEADS)),
        # per-layer weights stacked along a leading layer axis; q/k/v (and cross
        # k/v) concatenated so each projection is a single matmul in the kernel.
        'enc_wqkv': w((L, D_MODEL, 3 * INNER)),
        'enc_wo': w((L, INNER, D_MODEL)),
        'enc_wi': w((L, D_MODEL, D_FF)),
        'enc_wff_o': w((L, D_FF, D_MODEL)),
        'enc_ln': jnp.ones((L, 2, D_MODEL), jnp.float32),
        'enc_final_ln': jnp.ones((1, D_MODEL), jnp.float32),
        'dec_self_wqkv': w((L, D_MODEL, 3 * INNER)),
        'dec_self_wo': w((L, INNER, D_MODEL)),
        'dec_cross_wq': w((L, D_MODEL, INNER)),
        'dec_cross_wkv': w((L, D_MODEL, 2 * INNER)),
        'dec_cross_wo': w((L, INNER, D_MODEL)),
        'dec_wi': w((L, D_MODEL, D_FF)),
        'dec_wff_o': w((L, D_FF, D_MODEL)),
        'dec_ln': jnp.ones((L, 3, D_MODEL), jnp.float32),
        # d_model**-0.5 tied-embedding output scale folded into the final LN weight
        # (do NOT prescale `shared` — it is tied to the input embedding).
        'dec_final_ln': jnp.full((1, D_MODEL), D_MODEL ** -0.5, jnp.float32),
    }


# TODO(synk): the module's `generate()` (autoregressive greedy decode) is not
# implemented here; only the training forward (loss + logits) is kernelized.

if __name__ == "__main__":
    key = jax.random.PRNGKey(0)
    k_params, k_in, k_lab = jax.random.split(key, 3)

    params = init_params(k_params)

    B, SEQ = 2, 8
    input_ids = jax.random.randint(k_in, (B, SEQ), 1, VOCAB, dtype=jnp.int32)
    labels = jax.random.randint(k_lab, (B, SEQ), 1, VOCAB, dtype=jnp.int32)
    # emulate padded label positions (ignored by the loss)
    labels = labels.at[1, -2:].set(-100)

    # relative-position / causal biases depend only on params + static shapes:
    # computed once here, outside the per-step jit.
    statics = precompute_biases(params, SEQ, SEQ)

    fwd = jax.jit(functools.partial(t5_forward, params, statics))
    loss, logits = fwd(input_ids, labels)
    jax.block_until_ready((loss, logits))

    assert logits.shape == (B, SEQ, VOCAB)
    assert jnp.isfinite(loss)
    print("KERNEL_OK")
</pallas_src>

<mosaic_0001>
module attributes {stable_mosaic.version = 11 : i64} {
  func.func @_t5_fused_kernel(%arg0: i32, %arg1: memref<1x16x1xi32, #tpu.memory_space<vmem>>, %arg2: memref<1x8x1xi32, #tpu.memory_space<vmem>>, %arg3: memref<128x32xf32, #tpu.memory_space<vmem>>, %arg4: memref<4x8x8xf32, #tpu.memory_space<vmem>>, %arg5: memref<4x8x8xf32, #tpu.memory_space<vmem>>, %arg6: memref<2x32x96xf32, #tpu.memory_space<vmem>>, %arg7: memref<2x32x32xf32, #tpu.memory_space<vmem>>, %arg8: memref<2x32x64xf32, #tpu.memory_space<vmem>>, %arg9: memref<2x64x32xf32, #tpu.memory_space<vmem>>, %arg10: memref<2x2x32xf32, #tpu.memory_space<vmem>>, %arg11: memref<1x32xf32, #tpu.memory_space<vmem>>, %arg12: memref<2x32x96xf32, #tpu.memory_space<vmem>>, %arg13: memref<2x32x32xf32, #tpu.memory_space<vmem>>, %arg14: memref<2x32x32xf32, #tpu.memory_space<vmem>>, %arg15: memref<2x32x64xf32, #tpu.memory_space<vmem>>, %arg16: memref<2x32x32xf32, #tpu.memory_space<vmem>>, %arg17: memref<2x32x64xf32, #tpu.memory_space<vmem>>, %arg18: memref<2x64x32xf32, #tpu.memory_space<vmem>>, %arg19: memref<2x3x32xf32, #tpu.memory_space<vmem>>, %arg20: memref<1x32xf32, #tpu.memory_space<vmem>>, %arg21: memref<1x8x128xf32, #tpu.memory_space<vmem>>, %arg22: memref<1x8x128xf32, #tpu.memory_space<vmem>>) attributes {dimension_semantics = [#tpu.dimension_semantics<parallel>], iteration_bounds = array<i64: 2>, scalar_prefetch = 0 : i64, scratch_operands = 0 : i64, tpu.core_type = #tpu.core_type<tc>, window_params = [{transform_indices = @transform_0, window_bounds = array<i64: 1, 16, 1>}, {transform_indices = @transform_1, window_bounds = array<i64: 1, 8, 1>}, {pipeline_mode = #tpu.pipeline_mode<synchronous>, transform_indices = @transform_2, window_bounds = array<i64: 128, 32>}, {pipeline_mode = #tpu.pipeline_mode<synchronous>, transform_indices = @transform_3, window_bounds = array<i64: 4, 8, 8>}, {pipeline_mode = #tpu.pipeline_mode<synchronous>, transform_indices = @transform_4, window_bounds = array<i64: 4, 8, 8>}, {pipeline_mode = #tpu.pipeline_mode<synchronous>, transform_indices = @transform_5, window_bounds = array<i64: 2, 32, 96>}, {pipeline_mode = #tpu.pipeline_mode<synchronous>, transform_indices = @transform_6, window_bounds = array<i64: 2, 32, 32>}, {pipeline_mode = #tpu.pipeline_mode<synchronous>, transform_indices = @transform_7, window_bounds = array<i64: 2, 32, 64>}, {pipeline_mode = #tpu.pipeline_mode<synchronous>, transform_indices = @transform_8, window_bounds = array<i64: 2, 64, 32>}, {pipeline_mode = #tpu.pipeline_mode<synchronous>, transform_indices = @transform_9, window_bounds = array<i64: 2, 2, 32>}, {pipeline_mode = #tpu.pipeline_mode<synchronous>, transform_indices = @transform_10, window_bounds = array<i64: 1, 32>}, {pipeline_mode = #tpu.pipeline_mode<synchronous>, transform_indices = @transform_11, window_bounds = array<i64: 2, 32, 96>}, {pipeline_mode = #tpu.pipeline_mode<synchronous>, transform_indices = @transform_12, window_bounds = array<i64: 2, 32, 32>}, {pipeline_mode = #tpu.pipeline_mode<synchronous>, transform_indices = @transform_13, window_bounds = array<i64: 2, 32, 32>}, {pipeline_mode = #tpu.pipeline_mode<synchronous>, transform_indices = @transform_14, window_bounds = array<i64: 2, 32, 64>}, {pipeline_mode = #tpu.pipeline_mode<synchronous>, transform_indices = @transform_15, window_bounds = array<i64: 2, 32, 32>}, {pipeline_mode = #tpu.pipeline_mode<synchronous>, transform_indices = @transform_16, window_bounds = array<i64: 2, 32, 64>}, {pipeline_mode = #tpu.pipeline_mode<synchronous>, transform_indices = @transform_17, window_bounds = array<i64: 2, 64, 32>}, {pipeline_mode = #tpu.pipeline_mode<synchronous>, transform_indices = @transform_18, window_bounds = array<i64: 2, 3, 32>}, {pipeline_mode = #tpu.pipeline_mode<synchronous>, transform_indices = @transform_19, window_bounds = array<i64: 1, 32>}, {transform_indices = @transform_20, window_bounds = array<i64: 1, 8, 128>}, {transform_indices = @transform_21, window_bounds = array<i64: 1, 8, 128>}]} {
    %c0 = arith.constant 0 : index
    %c0_0 = arith.constant 0 : index
    %0 = vector.load %arg3[%c0, %c0_0] : memref<128x32xf32, #tpu.memory_space<vmem>>, vector<128x32xf32>
    %c0_1 = arith.constant 0 : index
    %c0_2 = arith.constant 0 : index
    %c0_3 = arith.constant 0 : index
    %1 = vector.load %arg1[%c0_1, %c0_2, %c0_3] : memref<1x16x1xi32, #tpu.memory_space<vmem>>, vector<1x16x1xi32>
    %2 = vector.shape_cast %1 : vector<1x16x1xi32> to vector<16x1xi32>
    %3 = tpu.iota {dimensions = array<i32: 1>} : vector<16x128xi32>
    %4 = vector.broadcast %2 : vector<16x1xi32> to vector<16x128xi32>
    %5 = arith.cmpi eq, %3, %4 : vector<16x128xi32>
    %6 = arith.extui %5 : vector<16x128xi1> to vector<16x128xi32>
    %7 = arith.sitofp %6 : vector<16x128xi32> to vector<16x128xf32>
    %cst = arith.constant dense<0.000000e+00> : vector<16x32xf32>
    %8 = tpu.matmul %7, %0, %cst {dimension_numbers = #tpu.dot_dimension_numbers<[1], [0], [0], [1], [0, 0, 1, 1], [], []>} : vector<16x128xf32>, vector<128x32xf32>, vector<16x32xf32> -> vector<16x32xf32>
    %9 = vector.extract_strided_slice %8 {offsets = [0, 0], sizes = [8, 32], strides = [1, 1]} : vector<16x32xf32> to vector<8x32xf32>
    %10 = vector.extract_strided_slice %8 {offsets = [8, 0], sizes = [8, 32], strides = [1, 1]} : vector<16x32xf32> to vector<8x32xf32>
    %c0_4 = arith.constant 0 : index
    %c0_5 = arith.constant 0 : index
    %c0_6 = arith.constant 0 : index
    %11 = vector.load %arg4[%c0_4, %c0_5, %c0_6] : memref<4x8x8xf32, #tpu.memory_space<vmem>>, vector<4x8x8xf32>
    %c0_7 = arith.constant 0 : index
    %c0_8 = arith.constant 0 : index
    %c0_9 = arith.constant 0 : index
    %12 = vector.load %arg5[%c0_7, %c0_8, %c0_9] : memref<4x8x8xf32, #tpu.memory_space<vmem>>, vector<4x8x8xf32>
    %c0_10 = arith.constant 0 : index
    %c0_11 = arith.constant 0 : index
    %c0_12 = arith.constant 0 : index
    %13 = vector.load %arg10[%c0_10, %c0_11, %c0_12] : memref<2x2x32xf32, #tpu.memory_space<vmem>>, vector<1x2x32xf32>
    %14 = vector.shape_cast %13 : vector<1x2x32xf32> to vector<2x32xf32>
    %15 = vector.extract_strided_slice %14 {offsets = [0, 0], sizes = [1, 32], strides = [1, 1]} : vector<2x32xf32> to vector<1x32xf32>
    %16 = arith.mulf %9, %9 : vector<8x32xf32>
    %cst_13 = arith.constant dense<0.000000e+00> : vector<8xf32>
    %17 = vector.multi_reduction <add>, %16, %cst_13 [1] : vector<8x32xf32> to vector<8xf32>
    %18 = vector.shape_cast %17 : vector<8xf32> to vector<8x1xf32>
    %cst_14 = arith.constant 3.200000e+01 : f32
    %19 = vector.broadcast %cst_14 : f32 to vector<8x1xf32>
    %20 = arith.divf %18, %19 : vector<8x1xf32>
    %cst_15 = arith.constant 9.99999997E-7 : f32
    %21 = vector.broadcast %cst_15 : f32 to vector<8x1xf32>
    %22 = arith.addf %20, %21 : vector<8x1xf32>
    %23 = math.rsqrt %22 : vector<8x1xf32>
    %24 = vector.broadcast %23 : vector<8x1xf32> to vector<8x32xf32>
    %25 = arith.mulf %9, %24 : vector<8x32xf32>
    %26 = vector.broadcast %15 : vector<1x32xf32> to vector<8x32xf32>
    %27 = arith.mulf %25, %26 : vector<8x32xf32>
    %c0_16 = arith.constant 0 : index
    %c0_17 = arith.constant 0 : index
    %c0_18 = arith.constant 0 : index
    %28 = vector.load %arg6[%c0_16, %c0_17, %c0_18] : memref<2x32x96xf32, #tpu.memory_space<vmem>>, vector<1x32x96xf32>
    %29 = vector.shape_cast %28 : vector<1x32x96xf32> to vector<32x96xf32>
    %cst_19 = arith.constant dense<0.000000e+00> : vector<8x96xf32>
    %30 = tpu.matmul %27, %29, %cst_19 {dimension_numbers = #tpu.dot_dimension_numbers<[1], [0], [0], [1], [0, 0, 1, 1], [], []>} : vector<8x32xf32>, vector<32x96xf32>, vector<8x96xf32> -> vector<8x96xf32>
    %31 = vector.extract_strided_slice %30 {offsets = [0, 0], sizes = [8, 32], strides = [1, 1]} : vector<8x96xf32> to vector<8x32xf32>
    %32 = vector.extract_strided_slice %30 {offsets = [0, 32], sizes = [8, 32], strides = [1, 1]} : vector<8x96xf32> to vector<8x32xf32>
    %33 = vector.extract_strided_slice %30 {offsets = [0, 64], sizes = [8, 32], strides = [1, 1]} : vector<8x96xf32> to vector<8x32xf32>
    %c0_20 = arith.constant 0 : index
    %c0_21 = arith.constant 0 : index
    %c0_22 = arith.constant 0 : index
    %34 = vector.load %arg7[%c0_20, %c0_21, %c0_22] : memref<2x32x32xf32, #tpu.memory_space<vmem>>, vector<1x32x32xf32>
    %35 = vector.shape_cast %34 : vector<1x32x32xf32> to vector<32x32xf32>
    %36 = vector.extract_strided_slice %31 {offsets = [0, 0], sizes = [8, 8], strides = [1, 1]} : vector<8x32xf32> to vector<8x8xf32>
    %37 = vector.extract_strided_slice %31 {offsets = [0, 8], sizes = [8, 8], strides = [1, 1]} : vector<8x32xf32> to vector<8x8xf32>
    %38 = vector.extract_strided_slice %31 {offsets = [0, 16], sizes = [8, 8], strides = [1, 1]} : vector<8x32xf32> to vector<8x8xf32>
    %39 = vector.extract_strided_slice %31 {offsets = [0, 24], sizes = [8, 8], strides = [1, 1]} : vector<8x32xf32> to vector<8x8xf32>
    %40 = vector.shape_cast %36 : vector<8x8xf32> to vector<1x8x8xf32>
    %41 = vector.shape_cast %37 : vector<8x8xf32> to vector<1x8x8xf32>
    %42 = vector.shape_cast %38 : vector<8x8xf32> to vector<1x8x8xf32>
    %43 = vector.shape_cast %39 : vector<8x8xf32> to vector<1x8x8xf32>
    %44 = tpu.concatenate %40, %41, %42, %43 in 0 : vector<1x8x8xf32>, vector<1x8x8xf32>, vector<1x8x8xf32>, vector<1x8x8xf32> -> vector<4x8x8xf32>
    %45 = vector.extract_strided_slice %32 {offsets = [0, 0], sizes = [8, 8], strides = [1, 1]} : vector<8x32xf32> to vector<8x8xf32>
    %46 = vector.extract_strided_slice %32 {offsets = [0, 8], sizes = [8, 8], strides = [1, 1]} : vector<8x32xf32> to vector<8x8xf32>
    %47 = vector.extract_strided_slice %32 {offsets = [0, 16], sizes = [8, 8], strides = [1, 1]} : vector<8x32xf32> to vector<8x8xf32>
    %48 = vector.extract_strided_slice %32 {offsets = [0, 24], sizes = [8, 8], strides = [1, 1]} : vector<8x32xf32> to vector<8x8xf32>
    %49 = vector.shape_cast %45 : vector<8x8xf32> to vector<1x8x8xf32>
    %50 = vector.shape_cast %46 : vector<8x8xf32> to vector<1x8x8xf32>
    %51 = vector.shape_cast %47 : vector<8x8xf32> to vector<1x8x8xf32>
    %52 = vector.shape_cast %48 : vector<8x8xf32> to vector<1x8x8xf32>
    %53 = tpu.concatenate %49, %50, %51, %52 in 0 : vector<1x8x8xf32>, vector<1x8x8xf32>, vector<1x8x8xf32>, vector<1x8x8xf32> -> vector<4x8x8xf32>
    %54 = vector.extract_strided_slice %33 {offsets = [0, 0], sizes = [8, 8], strides = [1, 1]} : vector<8x32xf32> to vector<8x8xf32>
    %55 = vector.extract_strided_slice %33 {offsets = [0, 8], sizes = [8, 8], strides = [1, 1]} : vector<8x32xf32> to vector<8x8xf32>
    %56 = vector.extract_strided_slice %33 {offsets = [0, 16], sizes = [8, 8], strides = [1, 1]} : vector<8x32xf32> to vector<8x8xf32>
    %57 = vector.extract_strided_slice %33 {offsets = [0, 24], sizes = [8, 8], strides = [1, 1]} : vector<8x32xf32> to vector<8x8xf32>
    %58 = vector.shape_cast %54 : vector<8x8xf32> to vector<1x8x8xf32>
    %59 = vector.shape_cast %55 : vector<8x8xf32> to vector<1x8x8xf32>
    %60 = vector.shape_cast %56 : vector<8x8xf32> to vector<1x8x8xf32>
    %61 = vector.shape_cast %57 : vector<8x8xf32> to vector<1x8x8xf32>
    %62 = tpu.concatenate %58, %59, %60, %61 in 0 : vector<1x8x8xf32>, vector<1x8x8xf32>, vector<1x8x8xf32>, vector<1x8x8xf32> -> vector<4x8x8xf32>
    "tpu.trace_start"() <{level = 10 : i32, message = "hqd,hkd->hqk"}> : () -> ()
    %cst_23 = arith.constant dense<0.000000e+00> : vector<4x8x8xf32>
    %63 = tpu.matmul %44, %53, %cst_23 {dimension_numbers = #tpu.dot_dimension_numbers<[2], [2], [1], [1], [0, 0, 0, 1, 1, 1], [0], [0]>} : vector<4x8x8xf32>, vector<4x8x8xf32>, vector<4x8x8xf32> -> vector<4x8x8xf32>
    "tpu.trace_stop"() : () -> ()
    %64 = arith.addf %63, %11 : vector<4x8x8xf32>
    %cst_24 = arith.constant dense<0xFF800000> : vector<4x8xf32>
    %65 = vector.multi_reduction <maximumf>, %64, %cst_24 [2] : vector<4x8x8xf32> to vector<4x8xf32>
    %66 = vector.shape_cast %65 : vector<4x8xf32> to vector<4x8x1xf32>
    %67 = vector.broadcast %66 : vector<4x8x1xf32> to vector<4x8x8xf32>
    %68 = arith.subf %64, %67 : vector<4x8x8xf32>
    %69 = math.exp %68 : vector<4x8x8xf32>
    %cst_25 = arith.constant dense<0.000000e+00> : vector<4x8xf32>
    %70 = vector.multi_reduction <add>, %69, %cst_25 [2] : vector<4x8x8xf32> to vector<4x8xf32>
    %71 = vector.shape_cast %70 : vector<4x8xf32> to vector<4x8x1xf32>
    %72 = tpu.reciprocal %71 {approx = true} : vector<4x8x1xf32> -> vector<4x8x1xf32>
    %73 = vector.broadcast %72 : vector<4x8x1xf32> to vector<4x8x8xf32>
    %74 = arith.mulf %69, %73 : vector<4x8x8xf32>
    "tpu.trace_start"() <{level = 10 : i32, message = "hqk,hkd->hqd"}> : () -> ()
    %cst_26 = arith.constant dense<0.000000e+00> : vector<4x8x8xf32>
    %75 = tpu.matmul %74, %62, %cst_26 {dimension_numbers = #tpu.dot_dimension_numbers<[2], [1], [1], [2], [0, 0, 0, 1, 1, 2], [0], [0]>} : vector<4x8x8xf32>, vector<4x8x8xf32>, vector<4x8x8xf32> -> vector<4x8x8xf32>
    "tpu.trace_stop"() : () -> ()
    %76 = vector.extract_strided_slice %75 {offsets = [0, 0, 0], sizes = [1, 8, 8], strides = [1, 1, 1]} : vector<4x8x8xf32> to vector<1x8x8xf32>
    %77 = vector.shape_cast %76 : vector<1x8x8xf32> to vector<8x8xf32>
    %78 = vector.extract_strided_slice %75 {offsets = [1, 0, 0], sizes = [1, 8, 8], strides = [1, 1, 1]} : vector<4x8x8xf32> to vector<1x8x8xf32>
    %79 = vector.shape_cast %78 : vector<1x8x8xf32> to vector<8x8xf32>
    %80 = vector.extract_strided_slice %75 {offsets = [2, 0, 0], sizes = [1, 8, 8], strides = [1, 1, 1]} : vector<4x8x8xf32> to vector<1x8x8xf32>
    %81 = vector.shape_cast %80 : vector<1x8x8xf32> to vector<8x8xf32>
    %82 = vector.extract_strided_slice %75 {offsets = [3, 0, 0], sizes = [1, 8, 8], strides = [1, 1, 1]} : vector<4x8x8xf32> to vector<1x8x8xf32>
    %83 = vector.shape_cast %82 : vector<1x8x8xf32> to vector<8x8xf32>
    %84 = tpu.concatenate %77, %79, %81, %83 in 1 : vector<8x8xf32>, vector<8x8xf32>, vector<8x8xf32>, vector<8x8xf32> -> vector<8x32xf32>
    %cst_27 = arith.constant dense<0.000000e+00> : vector<8x32xf32>
    %85 = tpu.matmul %84, %35, %cst_27 {dimension_numbers = #tpu.dot_dimension_numbers<[1], [0], [0], [1], [0, 0, 1, 1], [], []>} : vector<8x32xf32>, vector<32x32xf32>, vector<8x32xf32> -> vector<8x32xf32>
    %86 = arith.addf %9, %85 : vector<8x32xf32>
    %87 = vector.extract_strided_slice %14 {offsets = [1, 0], sizes = [1, 32], strides = [1, 1]} : vector<2x32xf32> to vector<1x32xf32>
    %88 = arith.mulf %86, %86 : vector<8x32xf32>
    %cst_28 = arith.constant dense<0.000000e+00> : vector<8xf32>
    %89 = vector.multi_reduction <add>, %88, %cst_28 [1] : vector<8x32xf32> to vector<8xf32>
    %90 = vector.shape_cast %89 : vector<8xf32> to vector<8x1xf32>
    %cst_29 = arith.constant 3.200000e+01 : f32
    %91 = vector.broadcast %cst_29 : f32 to vector<8x1xf32>
    %92 = arith.divf %90, %91 : vector<8x1xf32>
    %cst_30 = arith.constant 9.99999997E-7 : f32
    %93 = vector.broadcast %cst_30 : f32 to vector<8x1xf32>
    %94 = arith.addf %92, %93 : vector<8x1xf32>
    %95 = math.rsqrt %94 : vector<8x1xf32>
    %96 = vector.broadcast %95 : vector<8x1xf32> to vector<8x32xf32>
    %97 = arith.mulf %86, %96 : vector<8x32xf32>
    %98 = vector.broadcast %87 : vector<1x32xf32> to vector<8x32xf32>
    %99 = arith.mulf %97, %98 : vector<8x32xf32>
    %c0_31 = arith.constant 0 : index
    %c0_32 = arith.constant 0 : index
    %c0_33 = arith.constant 0 : index
    %100 = vector.load %arg8[%c0_31, %c0_32, %c0_33] : memref<2x32x64xf32, #tpu.memory_space<vmem>>, vector<1x32x64xf32>
    %101 = vector.shape_cast %100 : vector<1x32x64xf32> to vector<32x64xf32>
    %c0_34 = arith.constant 0 : index
    %c0_35 = arith.constant 0 : index
    %c0_36 = arith.constant 0 : index
    %102 = vector.load %arg9[%c0_34, %c0_35, %c0_36] : memref<2x64x32xf32, #tpu.memory_space<vmem>>, vector<1x64x32xf32>
    %103 = vector.shape_cast %102 : vector<1x64x32xf32> to vector<64x32xf32>
    %cst_37 = arith.constant dense<0.000000e+00> : vector<8x64xf32>
    %104 = tpu.matmul %99, %101, %cst_37 {dimension_numbers = #tpu.dot_dimension_numbers<[1], [0], [0], [1], [0, 0, 1, 1], [], []>} : vector<8x32xf32>, vector<32x64xf32>, vector<8x64xf32> -> vector<8x64xf32>
    %cst_38 = arith.constant 0.000000e+00 : f32
    %105 = vector.broadcast %cst_38 : f32 to vector<8x64xf32>
    %106 = arith.maximumf %104, %105 : vector<8x64xf32>
    %cst_39 = arith.constant dense<0.000000e+00> : vector<8x32xf32>
    %107 = tpu.matmul %106, %103, %cst_39 {dimension_numbers = #tpu.dot_dimension_numbers<[1], [0], [0], [1], [0, 0, 1, 1], [], []>} : vector<8x64xf32>, vector<64x32xf32>, vector<8x32xf32> -> vector<8x32xf32>
    %108 = arith.addf %86, %107 : vector<8x32xf32>
    %c1 = arith.constant 1 : index
    %c0_40 = arith.constant 0 : index
    %c0_41 = arith.constant 0 : index
    %109 = vector.load %arg10[%c1, %c0_40, %c0_41] : memref<2x2x32xf32, #tpu.memory_space<vmem>>, vector<1x2x32xf32>
    %110 = vector.shape_cast %109 : vector<1x2x32xf32> to vector<2x32xf32>
    %111 = vector.extract_strided_slice %110 {offsets = [0, 0], sizes = [1, 32], strides = [1, 1]} : vector<2x32xf32> to vector<1x32xf32>
    %112 = arith.mulf %108, %108 : vector<8x32xf32>
    %cst_42 = arith.constant dense<0.000000e+00> : vector<8xf32>
    %113 = vector.multi_reduction <add>, %112, %cst_42 [1] : vector<8x32xf32> to vector<8xf32>
    %114 = vector.shape_cast %113 : vector<8xf32> to vector<8x1xf32>
    %cst_43 = arith.constant 3.200000e+01 : f32
    %115 = vector.broadcast %cst_43 : f32 to vector<8x1xf32>
    %116 = arith.divf %114, %115 : vector<8x1xf32>
    %cst_44 = arith.constant 9.99999997E-7 : f32
    %117 = vector.broadcast %cst_44 : f32 to vector<8x1xf32>
    %118 = arith.addf %116, %117 : vector<8x1xf32>
    %119 = math.rsqrt %118 : vector<8x1xf32>
    %120 = vector.broadcast %119 : vector<8x1xf32> to vector<8x32xf32>
    %121 = arith.mulf %108, %120 : vector<8x32xf32>
    %122 = vector.broadcast %111 : vector<1x32xf32> to vector<8x32xf32>
    %123 = arith.mulf %121, %122 : vector<8x32xf32>
    %c1_45 = arith.constant 1 : index
    %c0_46 = arith.constant 0 : index
    %c0_47 = arith.constant 0 : index
    %124 = vector.load %arg6[%c1_45, %c0_46, %c0_47] : memref<2x32x96xf32, #tpu.memory_space<vmem>>, vector<1x32x96xf32>
    %125 = vector.shape_cast %124 : vector<1x32x96xf32> to vector<32x96xf32>
    %cst_48 = arith.constant dense<0.000000e+00> : vector<8x96xf32>
    %126 = tpu.matmul %123, %125, %cst_48 {dimension_numbers = #tpu.dot_dimension_numbers<[1], [0], [0], [1], [0, 0, 1, 1], [], []>} : vector<8x32xf32>, vector<32x96xf32>, vector<8x96xf32> -> vector<8x96xf32>
    %127 = vector.extract_strided_slice %126 {offsets = [0, 0], sizes = [8, 32], strides = [1, 1]} : vector<8x96xf32> to vector<8x32xf32>
    %128 = vector.extract_strided_slice %126 {offsets = [0, 32], sizes = [8, 32], strides = [1, 1]} : vector<8x96xf32> to vector<8x32xf32>
    %129 = vector.extract_strided_slice %126 {offsets = [0, 64], sizes = [8, 32], strides = [1, 1]} : vector<8x96xf32> to vector<8x32xf32>
    %c1_49 = arith.constant 1 : index
    %c0_50 = arith.constant 0 : index
    %c0_51 = arith.constant 0 : index
    %130 = vector.load %arg7[%c1_49, %c0_50, %c0_51] : memref<2x32x32xf32, #tpu.memory_space<vmem>>, vector<1x32x32xf32>
    %131 = vector.shape_cast %130 : vector<1x32x32xf32> to vector<32x32xf32>
    %132 = vector.extract_strided_slice %127 {offsets = [0, 0], sizes = [8, 8], strides = [1, 1]} : vector<8x32xf32> to vector<8x8xf32>
    %133 = vector.extract_strided_slice %127 {offsets = [0, 8], sizes = [8, 8], strides = [1, 1]} : vector<8x32xf32> to vector<8x8xf32>
    %134 = vector.extract_strided_slice %127 {offsets = [0, 16], sizes = [8, 8], strides = [1, 1]} : vector<8x32xf32> to vector<8x8xf32>
    %135 = vector.extract_strided_slice %127 {offsets = [0, 24], sizes = [8, 8], strides = [1, 1]} : vector<8x32xf32> to vector<8x8xf32>
    %136 = vector.shape_cast %132 : vector<8x8xf32> to vector<1x8x8xf32>
    %137 = vector.shape_cast %133 : vector<8x8xf32> to vector<1x8x8xf32>
    %138 = vector.shape_cast %134 : vector<8x8xf32> to vector<1x8x8xf32>
    %139 = vector.shape_cast %135 : vector<8x8xf32> to vector<1x8x8xf32>
    %140 = tpu.concatenate %136, %137, %138, %139 in 0 : vector<1x8x8xf32>, vector<1x8x8xf32>, vector<1x8x8xf32>, vector<1x8x8xf32> -> vector<4x8x8xf32>
    %141 = vector.extract_strided_slice %128 {offsets = [0, 0], sizes = [8, 8], strides = [1, 1]} : vector<8x32xf32> to vector<8x8xf32>
    %142 = vector.extract_strided_slice %128 {offsets = [0, 8], sizes = [8, 8], strides = [1, 1]} : vector<8x32xf32> to vector<8x8xf32>
    %143 = vector.extract_strided_slice %128 {offsets = [0, 16], sizes = [8, 8], strides = [1, 1]} : vector<8x32xf32> to vector<8x8xf32>
    %144 = vector.extract_strided_slice %128 {offsets = [0, 24], sizes = [8, 8], strides = [1, 1]} : vector<8x32xf32> to vector<8x8xf32>
    %145 = vector.shape_cast %141 : vector<8x8xf32> to vector<1x8x8xf32>
    %146 = vector.shape_cast %142 : vector<8x8xf32> to vector<1x8x8xf32>
    %147 = vector.shape_cast %143 : vector<8x8xf32> to vector<1x8x8xf32>
    %148 = vector.shape_cast %144 : vector<8x8xf32> to vector<1x8x8xf32>
    %149 = tpu.concatenate %145, %146, %147, %148 in 0 : vector<1x8x8xf32>, vector<1x8x8xf32>, vector<1x8x8xf32>, vector<1x8x8xf32> -> vector<4x8x8xf32>
    %150 = vector.extract_strided_slice %129 {offsets = [0, 0], sizes = [8, 8], strides = [1, 1]} : vector<8x32xf32> to vector<8x8xf32>
    %151 = vector.extract_strided_slice %129 {offsets = [0, 8], sizes = [8, 8], strides = [1, 1]} : vector<8x32xf32> to vector<8x8xf32>
    %152 = vector.extract_strided_slice %129 {offsets = [0, 16], sizes = [8, 8], strides = [1, 1]} : vector<8x32xf32> to vector<8x8xf32>
    %153 = vector.extract_strided_slice %129 {offsets = [0, 24], sizes = [8, 8], strides = [1, 1]} : vector<8x32xf32> to vector<8x8xf32>
    %154 = vector.shape_cast %150 : vector<8x8xf32> to vector<1x8x8xf32>
    %155 = vector.shape_cast %151 : vector<8x8xf32> to vector<1x8x8xf32>
    %156 = vector.shape_cast %152 : vector<8x8xf32> to vector<1x8x8xf32>
    %157 = vector.shape_cast %153 : vector<8x8xf32> to vector<1x8x8xf32>
    %158 = tpu.concatenate %154, %155, %156, %157 in 0 : vector<1x8x8xf32>, vector<1x8x8xf32>, vector<1x8x8xf32>, vector<1x8x8xf32> -> vector<4x8x8xf32>
    "tpu.trace_start"() <{level = 10 : i32, message = "hqd,hkd->hqk"}> : () -> ()
    %cst_52 = arith.constant dense<0.000000e+00> : vector<4x8x8xf32>
    %159 = tpu.matmul %140, %149, %cst_52 {dimension_numbers = #tpu.dot_dimension_numbers<[2], [2], [1], [1], [0, 0, 0, 1, 1, 1], [0], [0]>} : vector<4x8x8xf32>, vector<4x8x8xf32>, vector<4x8x8xf32> -> vector<4x8x8xf32>
    "tpu.trace_stop"() : () -> ()
    %160 = arith.addf %159, %11 : vector<4x8x8xf32>
    %cst_53 = arith.constant dense<0xFF800000> : vector<4x8xf32>
    %161 = vector.multi_reduction <maximumf>, %160, %cst_53 [2] : vector<4x8x8xf32> to vector<4x8xf32>
    %162 = vector.shape_cast %161 : vector<4x8xf32> to vector<4x8x1xf32>
    %163 = vector.broadcast %162 : vector<4x8x1xf32> to vector<4x8x8xf32>
    %164 = arith.subf %160, %163 : vector<4x8x8xf32>
    %165 = math.exp %164 : vector<4x8x8xf32>
    %cst_54 = arith.constant dense<0.000000e+00> : vector<4x8xf32>
    %166 = vector.multi_reduction <add>, %165, %cst_54 [2] : vector<4x8x8xf32> to vector<4x8xf32>
    %167 = vector.shape_cast %166 : vector<4x8xf32> to vector<4x8x1xf32>
    %168 = tpu.reciprocal %167 {approx = true} : vector<4x8x1xf32> -> vector<4x8x1xf32>
    %169 = vector.broadcast %168 : vector<4x8x1xf32> to vector<4x8x8xf32>
    %170 = arith.mulf %165, %169 : vector<4x8x8xf32>
    "tpu.trace_start"() <{level = 10 : i32, message = "hqk,hkd->hqd"}> : () -> ()
    %cst_55 = arith.constant dense<0.000000e+00> : vector<4x8x8xf32>
    %171 = tpu.matmul %170, %158, %cst_55 {dimension_numbers = #tpu.dot_dimension_numbers<[2], [1], [1], [2], [0, 0, 0, 1, 1, 2], [0], [0]>} : vector<4x8x8xf32>, vector<4x8x8xf32>, vector<4x8x8xf32> -> vector<4x8x8xf32>
    "tpu.trace_stop"() : () -> ()
    %172 = vector.extract_strided_slice %171 {offsets = [0, 0, 0], sizes = [1, 8, 8], strides = [1, 1, 1]} : vector<4x8x8xf32> to vector<1x8x8xf32>
    %173 = vector.shape_cast %172 : vector<1x8x8xf32> to vector<8x8xf32>
    %174 = vector.extract_strided_slice %171 {offsets = [1, 0, 0], sizes = [1, 8, 8], strides = [1, 1, 1]} : vector<4x8x8xf32> to vector<1x8x8xf32>
    %175 = vector.shape_cast %174 : vector<1x8x8xf32> to vector<8x8xf32>
    %176 = vector.extract_strided_slice %171 {offsets = [2, 0, 0], sizes = [1, 8, 8], strides = [1, 1, 1]} : vector<4x8x8xf32> to vector<1x8x8xf32>
    %177 = vector.shape_cast %176 : vector<1x8x8xf32> to vector<8x8xf32>
    %178 = vector.extract_strided_slice %171 {offsets = [3, 0, 0], sizes = [1, 8, 8], strides = [1, 1, 1]} : vector<4x8x8xf32> to vector<1x8x8xf32>
    %179 = vector.shape_cast %178 : vector<1x8x8xf32> to vector<8x8xf32>
    %180 = tpu.concatenate %173, %175, %177, %179 in 1 : vector<8x8xf32>, vector<8x8xf32>, vector<8x8xf32>, vector<8x8xf32> -> vector<8x32xf32>
    %cst_56 = arith.constant dense<0.000000e+00> : vector<8x32xf32>
    %181 = tpu.matmul %180, %131, %cst_56 {dimension_numbers = #tpu.dot_dimension_numbers<[1], [0], [0], [1], [0, 0, 1, 1], [], []>} : vector<8x32xf32>, vector<32x32xf32>, vector<8x32xf32> -> vector<8x32xf32>
    %182 = arith.addf %108, %181 : vector<8x32xf32>
    %183 = vector.extract_strided_slice %110 {offsets = [1, 0], sizes = [1, 32], strides = [1, 1]} : vector<2x32xf32> to vector<1x32xf32>
    %184 = arith.mulf %182, %182 : vector<8x32xf32>
    %cst_57 = arith.constant dense<0.000000e+00> : vector<8xf32>
    %185 = vector.multi_reduction <add>, %184, %cst_57 [1] : vector<8x32xf32> to vector<8xf32>
    %186 = vector.shape_cast %185 : vector<8xf32> to vector<8x1xf32>
    %cst_58 = arith.constant 3.200000e+01 : f32
    %187 = vector.broadcast %cst_58 : f32 to vector<8x1xf32>
    %188 = arith.divf %186, %187 : vector<8x1xf32>
    %cst_59 = arith.constant 9.99999997E-7 : f32
    %189 = vector.broadcast %cst_59 : f32 to vector<8x1xf32>
    %190 = arith.addf %188, %189 : vector<8x1xf32>
    %191 = math.rsqrt %190 : vector<8x1xf32>
    %192 = vector.broadcast %191 : vector<8x1xf32> to vector<8x32xf32>
    %193 = arith.mulf %182, %192 : vector<8x32xf32>
    %194 = vector.broadcast %183 : vector<1x32xf32> to vector<8x32xf32>
    %195 = arith.mulf %193, %194 : vector<8x32xf32>
    %c1_60 = arith.constant 1 : index
    %c0_61 = arith.constant 0 : index
    %c0_62 = arith.constant 0 : index
    %196 = vector.load %arg8[%c1_60, %c0_61, %c0_62] : memref<2x32x64xf32, #tpu.memory_space<vmem>>, vector<1x32x64xf32>
    %197 = vector.shape_cast %196 : vector<1x32x64xf32> to vector<32x64xf32>
    %c1_63 = arith.constant 1 : index
    %c0_64 = arith.constant 0 : index
    %c0_65 = arith.constant 0 : index
    %198 = vector.load %arg9[%c1_63, %c0_64, %c0_65] : memref<2x64x32xf32, #tpu.memory_space<vmem>>, vector<1x64x32xf32>
    %199 = vector.shape_cast %198 : vector<1x64x32xf32> to vector<64x32xf32>
    %cst_66 = arith.constant dense<0.000000e+00> : vector<8x64xf32>
    %200 = tpu.matmul %195, %197, %cst_66 {dimension_numbers = #tpu.dot_dimension_numbers<[1], [0], [0], [1], [0, 0, 1, 1], [], []>} : vector<8x32xf32>, vector<32x64xf32>, vector<8x64xf32> -> vector<8x64xf32>
    %cst_67 = arith.constant 0.000000e+00 : f32
    %201 = vector.broadcast %cst_67 : f32 to vector<8x64xf32>
    %202 = arith.maximumf %200, %201 : vector<8x64xf32>
    %cst_68 = arith.constant dense<0.000000e+00> : vector<8x32xf32>
    %203 = tpu.matmul %202, %199, %cst_68 {dimension_numbers = #tpu.dot_dimension_numbers<[1], [0], [0], [1], [0, 0, 1, 1], [], []>} : vector<8x64xf32>, vector<64x32xf32>, vector<8x32xf32> -> vector<8x32xf32>
    %204 = arith.addf %182, %203 : vector<8x32xf32>
    %c0_69 = arith.constant 0 : index
    %c0_70 = arith.constant 0 : index
    %205 = vector.load %arg11[%c0_69, %c0_70] : memref<1x32xf32, #tpu.memory_space<vmem>>, vector<1x32xf32>
    %206 = arith.mulf %204, %204 : vector<8x32xf32>
    %cst_71 = arith.constant dense<0.000000e+00> : vector<8xf32>
    %207 = vector.multi_reduction <add>, %206, %cst_71 [1] : vector<8x32xf32> to vector<8xf32>
    %208 = vector.shape_cast %207 : vector<8xf32> to vector<8x1xf32>
    %cst_72 = arith.constant 3.200000e+01 : f32
    %209 = vector.broadcast %cst_72 : f32 to vector<8x1xf32>
    %210 = arith.divf %208, %209 : vector<8x1xf32>
    %cst_73 = arith.constant 9.99999997E-7 : f32
    %211 = vector.broadcast %cst_73 : f32 to vector<8x1xf32>
    %212 = arith.addf %210, %211 : vector<8x1xf32>
    %213 = math.rsqrt %212 : vector<8x1xf32>
    %214 = vector.broadcast %213 : vector<8x1xf32> to vector<8x32xf32>
    %215 = arith.mulf %204, %214 : vector<8x32xf32>
    %216 = vector.broadcast %205 : vector<1x32xf32> to vector<8x32xf32>
    %217 = arith.mulf %215, %216 : vector<8x32xf32>
    %c0_74 = arith.constant 0 : index
    %c0_75 = arith.constant 0 : index
    %c0_76 = arith.constant 0 : index
    %218 = vector.load %arg19[%c0_74, %c0_75, %c0_76] : memref<2x3x32xf32, #tpu.memory_space<vmem>>, vector<1x3x32xf32>
    %219 = vector.shape_cast %218 : vector<1x3x32xf32> to vector<3x32xf32>
    %220 = vector.extract_strided_slice %219 {offsets = [0, 0], sizes = [1, 32], strides = [1, 1]} : vector<3x32xf32> to vector<1x32xf32>
    %221 = arith.mulf %10, %10 : vector<8x32xf32>
    %cst_77 = arith.constant dense<0.000000e+00> : vector<8xf32>
    %222 = vector.multi_reduction <add>, %221, %cst_77 [1] : vector<8x32xf32> to vector<8xf32>
    %223 = vector.shape_cast %222 : vector<8xf32> to vector<8x1xf32>
    %cst_78 = arith.constant 3.200000e+01 : f32
    %224 = vector.broadcast %cst_78 : f32 to vector<8x1xf32>
    %225 = arith.divf %223, %224 : vector<8x1xf32>
    %cst_79 = arith.constant 9.99999997E-7 : f32
    %226 = vector.broadcast %cst_79 : f32 to vector<8x1xf32>
    %227 = arith.addf %225, %226 : vector<8x1xf32>
    %228 = math.rsqrt %227 : vector<8x1xf32>
    %229 = vector.broadcast %228 : vector<8x1xf32> to vector<8x32xf32>
    %230 = arith.mulf %10, %229 : vector<8x32xf32>
    %231 = vector.broadcast %220 : vector<1x32xf32> to vector<8x32xf32>
    %232 = arith.mulf %230, %231 : vector<8x32xf32>
    %c0_80 = arith.constant 0 : index
    %c0_81 = arith.constant 0 : index
    %c0_82 = arith.constant 0 : index
    %233 = vector.load %arg12[%c0_80, %c0_81, %c0_82] : memref<2x32x96xf32, #tpu.memory_space<vmem>>, vector<1x32x96xf32>
    %234 = vector.shape_cast %233 : vector<1x32x96xf32> to vector<32x96xf32>
    %cst_83 = arith.constant dense<0.000000e+00> : vector<8x96xf32>
    %235 = tpu.matmul %232, %234, %cst_83 {dimension_numbers = #tpu.dot_dimension_numbers<[1], [0], [0], [1], [0, 0, 1, 1], [], []>} : vector<8x32xf32>, vector<32x96xf32>, vector<8x96xf32> -> vector<8x96xf32>
    %236 = vector.extract_strided_slice %235 {offsets = [0, 0], sizes = [8, 32], strides = [1, 1]} : vector<8x96xf32> to vector<8x32xf32>
    %237 = vector.extract_strided_slice %235 {offsets = [0, 32], sizes = [8, 32], strides = [1, 1]} : vector<8x96xf32> to vector<8x32xf32>
    %238 = vector.extract_strided_slice %235 {offsets = [0, 64], sizes = [8, 32], strides = [1, 1]} : vector<8x96xf32> to vector<8x32xf32>
    %c0_84 = arith.constant 0 : index
    %c0_85 = arith.constant 0 : index
    %c0_86 = arith.constant 0 : index
    %239 = vector.load %arg13[%c0_84, %c0_85, %c0_86] : memref<2x32x32xf32, #tpu.memory_space<vmem>>, vector<1x32x32xf32>
    %240 = vector.shape_cast %239 : vector<1x32x32xf32> to vector<32x32xf32>
    %241 = vector.extract_strided_slice %236 {offsets = [0, 0], sizes = [8, 8], strides = [1, 1]} : vector<8x32xf32> to vector<8x8xf32>
    %242 = vector.extract_strided_slice %236 {offsets = [0, 8], sizes = [8, 8], strides = [1, 1]} : vector<8x32xf32> to vector<8x8xf32>
    %243 = vector.extract_strided_slice %236 {offsets = [0, 16], sizes = [8, 8], strides = [1, 1]} : vector<8x32xf32> to vector<8x8xf32>
    %244 = vector.extract_strided_slice %236 {offsets = [0, 24], sizes = [8, 8], strides = [1, 1]} : vector<8x32xf32> to vector<8x8xf32>
    %245 = vector.shape_cast %241 : vector<8x8xf32> to vector<1x8x8xf32>
    %246 = vector.shape_cast %242 : vector<8x8xf32> to vector<1x8x8xf32>
    %247 = vector.shape_cast %243 : vector<8x8xf32> to vector<1x8x8xf32>
    %248 = vector.shape_cast %244 : vector<8x8xf32> to vector<1x8x8xf32>
    %249 = tpu.concatenate %245, %246, %247, %248 in 0 : vector<1x8x8xf32>, vector<1x8x8xf32>, vector<1x8x8xf32>, vector<1x8x8xf32> -> vector<4x8x8xf32>
    %250 = vector.extract_strided_slice %237 {offsets = [0, 0], sizes = [8, 8], strides = [1, 1]} : vector<8x32xf32> to vector<8x8xf32>
    %251 = vector.extract_strided_slice %237 {offsets = [0, 8], sizes = [8, 8], strides = [1, 1]} : vector<8x32xf32> to vector<8x8xf32>
    %252 = vector.extract_strided_slice %237 {offsets = [0, 16], sizes = [8, 8], strides = [1, 1]} : vector<8x32xf32> to vector<8x8xf32>
    %253 = vector.extract_strided_slice %237 {offsets = [0, 24], sizes = [8, 8], strides = [1, 1]} : vector<8x32xf32> to vector<8x8xf32>
    %254 = vector.shape_cast %250 : vector<8x8xf32> to vector<1x8x8xf32>
    %255 = vector.shape_cast %251 : vector<8x8xf32> to vector<1x8x8xf32>
    %256 = vector.shape_cast %252 : vector<8x8xf32> to vector<1x8x8xf32>
    %257 = vector.shape_cast %253 : vector<8x8xf32> to vector<1x8x8xf32>
    %258 = tpu.concatenate %254, %255, %256, %257 in 0 : vector<1x8x8xf32>, vector<1x8x8xf32>, vector<1x8x8xf32>, vector<1x8x8xf32> -> vector<4x8x8xf32>
    %259 = vector.extract_strided_slice %238 {offsets = [0, 0], sizes = [8, 8], strides = [1, 1]} : vector<8x32xf32> to vector<8x8xf32>
    %260 = vector.extract_strided_slice %238 {offsets = [0, 8], sizes = [8, 8], strides = [1, 1]} : vector<8x32xf32> to vector<8x8xf32>
    %261 = vector.extract_strided_slice %238 {offsets = [0, 16], sizes = [8, 8], strides = [1, 1]} : vector<8x32xf32> to vector<8x8xf32>
    %262 = vector.extract_strided_slice %238 {offsets = [0, 24], sizes = [8, 8], strides = [1, 1]} : vector<8x32xf32> to vector<8x8xf32>
    %263 = vector.shape_cast %259 : vector<8x8xf32> to vector<1x8x8xf32>
    %264 = vector.shape_cast %260 : vector<8x8xf32> to vector<1x8x8xf32>
    %265 = vector.shape_cast %261 : vector<8x8xf32> to vector<1x8x8xf32>
    %266 = vector.shape_cast %262 : vector<8x8xf32> to vector<1x8x8xf32>
    %267 = tpu.concatenate %263, %264, %265, %266 in 0 : vector<1x8x8xf32>, vector<1x8x8xf32>, vector<1x8x8xf32>, vector<1x8x8xf32> -> vector<4x8x8xf32>
    "tpu.trace_start"() <{level = 10 : i32, message = "hqd,hkd->hqk"}> : () -> ()
    %cst_87 = arith.constant dense<0.000000e+00> : vector<4x8x8xf32>
    %268 = tpu.matmul %249, %258, %cst_87 {dimension_numbers = #tpu.dot_dimension_numbers<[2], [2], [1], [1], [0, 0, 0, 1, 1, 1], [0], [0]>} : vector<4x8x8xf32>, vector<4x8x8xf32>, vector<4x8x8xf32> -> vector<4x8x8xf32>
    "tpu.trace_stop"() : () -> ()
    %269 = arith.addf %268, %12 : vector<4x8x8xf32>
    %cst_88 = arith.constant dense<0xFF800000> : vector<4x8xf32>
    %270 = vector.multi_reduction <maximumf>, %269, %cst_88 [2] : vector<4x8x8xf32> to vector<4x8xf32>
    %271 = vector.shape_cast %270 : vector<4x8xf32> to vector<4x8x1xf32>
    %272 = vector.broadcast %271 : vector<4x8x1xf32> to vector<4x8x8xf32>
    %273 = arith.subf %269, %272 : vector<4x8x8xf32>
    %274 = math.exp %273 : vector<4x8x8xf32>
    %cst_89 = arith.constant dense<0.000000e+00> : vector<4x8xf32>
    %275 = vector.multi_reduction <add>, %274, %cst_89 [2] : vector<4x8x8xf32> to vector<4x8xf32>
    %276 = vector.shape_cast %275 : vector<4x8xf32> to vector<4x8x1xf32>
    %277 = tpu.reciprocal %276 {approx = true} : vector<4x8x1xf32> -> vector<4x8x1xf32>
    %278 = vector.broadcast %277 : vector<4x8x1xf32> to vector<4x8x8xf32>
    %279 = arith.mulf %274, %278 : vector<4x8x8xf32>
    "tpu.trace_start"() <{level = 10 : i32, message = "hqk,hkd->hqd"}> : () -> ()
    %cst_90 = arith.constant dense<0.000000e+00> : vector<4x8x8xf32>
    %280 = tpu.matmul %279, %267, %cst_90 {dimension_numbers = #tpu.dot_dimension_numbers<[2], [1], [1], [2], [0, 0, 0, 1, 1, 2], [0], [0]>} : vector<4x8x8xf32>, vector<4x8x8xf32>, vector<4x8x8xf32> -> vector<4x8x8xf32>
    "tpu.trace_stop"() : () -> ()
    %281 = vector.extract_strided_slice %280 {offsets = [0, 0, 0], sizes = [1, 8, 8], strides = [1, 1, 1]} : vector<4x8x8xf32> to vector<1x8x8xf32>
    %282 = vector.shape_cast %281 : vector<1x8x8xf32> to vector<8x8xf32>
    %283 = vector.extract_strided_slice %280 {offsets = [1, 0, 0], sizes = [1, 8, 8], strides = [1, 1, 1]} : vector<4x8x8xf32> to vector<1x8x8xf32>
    %284 = vector.shape_cast %283 : vector<1x8x8xf32> to vector<8x8xf32>
    %285 = vector.extract_strided_slice %280 {offsets = [2, 0, 0], sizes = [1, 8, 8], strides = [1, 1, 1]} : vector<4x8x8xf32> to vector<1x8x8xf32>
    %286 = vector.shape_cast %285 : vector<1x8x8xf32> to vector<8x8xf32>
    %287 = vector.extract_strided_slice %280 {offsets = [3, 0, 0], sizes = [1, 8, 8], strides = [1, 1, 1]} : vector<4x8x8xf32> to vector<1x8x8xf32>
    %288 = vector.shape_cast %287 : vector<1x8x8xf32> to vector<8x8xf32>
    %289 = tpu.concatenate %282, %284, %286, %288 in 1 : vector<8x8xf32>, vector<8x8xf32>, vector<8x8xf32>, vector<8x8xf32> -> vector<8x32xf32>
    %cst_91 = arith.constant dense<0.000000e+00> : vector<8x32xf32>
    %290 = tpu.matmul %289, %240, %cst_91 {dimension_numbers = #tpu.dot_dimension_numbers<[1], [0], [0], [1], [0, 0, 1, 1], [], []>} : vector<8x32xf32>, vector<32x32xf32>, vector<8x32xf32> -> vector<8x32xf32>
    %291 = arith.addf %10, %290 : vector<8x32xf32>
    %292 = vector.extract_strided_slice %219 {offsets = [1, 0], sizes = [1, 32], strides = [1, 1]} : vector<3x32xf32> to vector<1x32xf32>
    %293 = arith.mulf %291, %291 : vector<8x32xf32>
    %cst_92 = arith.constant dense<0.000000e+00> : vector<8xf32>
    %294 = vector.multi_reduction <add>, %293, %cst_92 [1] : vector<8x32xf32> to vector<8xf32>
    %295 = vector.shape_cast %294 : vector<8xf32> to vector<8x1xf32>
    %cst_93 = arith.constant 3.200000e+01 : f32
    %296 = vector.broadcast %cst_93 : f32 to vector<8x1xf32>
    %297 = arith.divf %295, %296 : vector<8x1xf32>
    %cst_94 = arith.constant 9.99999997E-7 : f32
    %298 = vector.broadcast %cst_94 : f32 to vector<8x1xf32>
    %299 = arith.addf %297, %298 : vector<8x1xf32>
    %300 = math.rsqrt %299 : vector<8x1xf32>
    %301 = vector.broadcast %300 : vector<8x1xf32> to vector<8x32xf32>
    %302 = arith.mulf %291, %301 : vector<8x32xf32>
    %303 = vector.broadcast %292 : vector<1x32xf32> to vector<8x32xf32>
    %304 = arith.mulf %302, %303 : vector<8x32xf32>
    %c0_95 = arith.constant 0 : index
    %c0_96 = arith.constant 0 : index
    %c0_97 = arith.constant 0 : index
    %305 = vector.load %arg14[%c0_95, %c0_96, %c0_97] : memref<2x32x32xf32, #tpu.memory_space<vmem>>, vector<1x32x32xf32>
    %306 = vector.shape_cast %305 : vector<1x32x32xf32> to vector<32x32xf32>
    %cst_98 = arith.constant dense<0.000000e+00> : vector<8x32xf32>
    %307 = tpu.matmul %304, %306, %cst_98 {dimension_numbers = #tpu.dot_dimension_numbers<[1], [0], [0], [1], [0, 0, 1, 1], [], []>} : vector<8x32xf32>, vector<32x32xf32>, vector<8x32xf32> -> vector<8x32xf32>
    %c0_99 = arith.constant 0 : index
    %c0_100 = arith.constant 0 : index
    %c0_101 = arith.constant 0 : index
    %308 = vector.load %arg15[%c0_99, %c0_100, %c0_101] : memref<2x32x64xf32, #tpu.memory_space<vmem>>, vector<1x32x64xf32>
    %309 = vector.shape_cast %308 : vector<1x32x64xf32> to vector<32x64xf32>
    %cst_102 = arith.constant dense<0.000000e+00> : vector<8x64xf32>
    %310 = tpu.matmul %217, %309, %cst_102 {dimension_numbers = #tpu.dot_dimension_numbers<[1], [0], [0], [1], [0, 0, 1, 1], [], []>} : vector<8x32xf32>, vector<32x64xf32>, vector<8x64xf32> -> vector<8x64xf32>
    %311 = vector.extract_strided_slice %310 {offsets = [0, 0], sizes = [8, 32], strides = [1, 1]} : vector<8x64xf32> to vector<8x32xf32>
    %312 = vector.extract_strided_slice %310 {offsets = [0, 32], sizes = [8, 32], strides = [1, 1]} : vector<8x64xf32> to vector<8x32xf32>
    %c0_103 = arith.constant 0 : index
    %c0_104 = arith.constant 0 : index
    %c0_105 = arith.constant 0 : index
    %313 = vector.load %arg16[%c0_103, %c0_104, %c0_105] : memref<2x32x32xf32, #tpu.memory_space<vmem>>, vector<1x32x32xf32>
    %314 = vector.shape_cast %313 : vector<1x32x32xf32> to vector<32x32xf32>
    %315 = vector.extract_strided_slice %307 {offsets = [0, 0], sizes = [8, 8], strides = [1, 1]} : vector<8x32xf32> to vector<8x8xf32>
    %316 = vector.extract_strided_slice %307 {offsets = [0, 8], sizes = [8, 8], strides = [1, 1]} : vector<8x32xf32> to vector<8x8xf32>
    %317 = vector.extract_strided_slice %307 {offsets = [0, 16], sizes = [8, 8], strides = [1, 1]} : vector<8x32xf32> to vector<8x8xf32>
    %318 = vector.extract_strided_slice %307 {offsets = [0, 24], sizes = [8, 8], strides = [1, 1]} : vector<8x32xf32> to vector<8x8xf32>
    %319 = vector.shape_cast %315 : vector<8x8xf32> to vector<1x8x8xf32>
    %320 = vector.shape_cast %316 : vector<8x8xf32> to vector<1x8x8xf32>
    %321 = vector.shape_cast %317 : vector<8x8xf32> to vector<1x8x8xf32>
    %322 = vector.shape_cast %318 : vector<8x8xf32> to vector<1x8x8xf32>
    %323 = tpu.concatenate %319, %320, %321, %322 in 0 : vector<1x8x8xf32>, vector<1x8x8xf32>, vector<1x8x8xf32>, vector<1x8x8xf32> -> vector<4x8x8xf32>
    %324 = vector.extract_strided_slice %311 {offsets = [0, 0], sizes = [8, 8], strides = [1, 1]} : vector<8x32xf32> to vector<8x8xf32>
    %325 = vector.extract_strided_slice %311 {offsets = [0, 8], sizes = [8, 8], strides = [1, 1]} : vector<8x32xf32> to vector<8x8xf32>
    %326 = vector.extract_strided_slice %311 {offsets = [0, 16], sizes = [8, 8], strides = [1, 1]} : vector<8x32xf32> to vector<8x8xf32>
    %327 = vector.extract_strided_slice %311 {offsets = [0, 24], sizes = [8, 8], strides = [1, 1]} : vector<8x32xf32> to vector<8x8xf32>
    %328 = vector.shape_cast %324 : vector<8x8xf32> to vector<1x8x8xf32>
    %329 = vector.shape_cast %325 : vector<8x8xf32> to vector<1x8x8xf32>
    %330 = vector.shape_cast %326 : vector<8x8xf32> to vector<1x8x8xf32>
    %331 = vector.shape_cast %327 : vector<8x8xf32> to vector<1x8x8xf32>
    %332 = tpu.concatenate %328, %329, %330, %331 in 0 : vector<1x8x8xf32>, vector<1x8x8xf32>, vector<1x8x8xf32>, vector<1x8x8xf32> -> vector<4x8x8xf32>
    %333 = vector.extract_strided_slice %312 {offsets = [0, 0], sizes = [8, 8], strides = [1, 1]} : vector<8x32xf32> to vector<8x8xf32>
    %334 = vector.extract_strided_slice %312 {offsets = [0, 8], sizes = [8, 8], strides = [1, 1]} : vector<8x32xf32> to vector<8x8xf32>
    %335 = vector.extract_strided_slice %312 {offsets = [0, 16], sizes = [8, 8], strides = [1, 1]} : vector<8x32xf32> to vector<8x8xf32>
    %336 = vector.extract_strided_slice %312 {offsets = [0, 24], sizes = [8, 8], strides = [1, 1]} : vector<8x32xf32> to vector<8x8xf32>
    %337 = vector.shape_cast %333 : vector<8x8xf32> to vector<1x8x8xf32>
    %338 = vector.shape_cast %334 : vector<8x8xf32> to vector<1x8x8xf32>
    %339 = vector.shape_cast %335 : vector<8x8xf32> to vector<1x8x8xf32>
    %340 = vector.shape_cast %336 : vector<8x8xf32> to vector<1x8x8xf32>
    %341 = tpu.concatenate %337, %338, %339, %340 in 0 : vector<1x8x8xf32>, vector<1x8x8xf32>, vector<1x8x8xf32>, vector<1x8x8xf32> -> vector<4x8x8xf32>
    "tpu.trace_start"() <{level = 10 : i32, message = "hqd,hkd->hqk"}> : () -> ()
    %cst_106 = arith.constant dense<0.000000e+00> : vector<4x8x8xf32>
    %342 = tpu.matmul %323, %332, %cst_106 {dimension_numbers = #tpu.dot_dimension_numbers<[2], [2], [1], [1], [0, 0, 0, 1, 1, 1], [0], [0]>} : vector<4x8x8xf32>, vector<4x8x8xf32>, vector<4x8x8xf32> -> vector<4x8x8xf32>
    "tpu.trace_stop"() : () -> ()
    %cst_107 = arith.constant dense<0xFF800000> : vector<4x8xf32>
    %343 = vector.multi_reduction <maximumf>, %342, %cst_107 [2] : vector<4x8x8xf32> to vector<4x8xf32>
    %344 = vector.shape_cast %343 : vector<4x8xf32> to vector<4x8x1xf32>
    %345 = vector.broadcast %344 : vector<4x8x1xf32> to vector<4x8x8xf32>
    %346 = arith.subf %342, %345 : vector<4x8x8xf32>
    %347 = math.exp %346 : vector<4x8x8xf32>
    %cst_108 = arith.constant dense<0.000000e+00> : vector<4x8xf32>
    %348 = vector.multi_reduction <add>, %347, %cst_108 [2] : vector<4x8x8xf32> to vector<4x8xf32>
    %349 = vector.shape_cast %348 : vector<4x8xf32> to vector<4x8x1xf32>
    %350 = tpu.reciprocal %349 {approx = true} : vector<4x8x1xf32> -> vector<4x8x1xf32>
    %351 = vector.broadcast %350 : vector<4x8x1xf32> to vector<4x8x8xf32>
    %352 = arith.mulf %347, %351 : vector<4x8x8xf32>
    "tpu.trace_start"() <{level = 10 : i32, message = "hqk,hkd->hqd"}> : () -> ()
    %cst_109 = arith.constant dense<0.000000e+00> : vector<4x8x8xf32>
    %353 = tpu.matmul %352, %341, %cst_109 {dimension_numbers = #tpu.dot_dimension_numbers<[2], [1], [1], [2], [0, 0, 0, 1, 1, 2], [0], [0]>} : vector<4x8x8xf32>, vector<4x8x8xf32>, vector<4x8x8xf32> -> vector<4x8x8xf32>
    "tpu.trace_stop"() : () -> ()
    %354 = vector.extract_strided_slice %353 {offsets = [0, 0, 0], sizes = [1, 8, 8], strides = [1, 1, 1]} : vector<4x8x8xf32> to vector<1x8x8xf32>
    %355 = vector.shape_cast %354 : vector<1x8x8xf32> to vector<8x8xf32>
    %356 = vector.extract_strided_slice %353 {offsets = [1, 0, 0], sizes = [1, 8, 8], strides = [1, 1, 1]} : vector<4x8x8xf32> to vector<1x8x8xf32>
    %357 = vector.shape_cast %356 : vector<1x8x8xf32> to vector<8x8xf32>
    %358 = vector.extract_strided_slice %353 {offsets = [2, 0, 0], sizes = [1, 8, 8], strides = [1, 1, 1]} : vector<4x8x8xf32> to vector<1x8x8xf32>
    %359 = vector.shape_cast %358 : vector<1x8x8xf32> to vector<8x8xf32>
    %360 = vector.extract_strided_slice %353 {offsets = [3, 0, 0], sizes = [1, 8, 8], strides = [1, 1, 1]} : vector<4x8x8xf32> to vector<1x8x8xf32>
    %361 = vector.shape_cast %360 : vector<1x8x8xf32> to vector<8x8xf32>
    %362 = tpu.concatenate %355, %357, %359, %361 in 1 : vector<8x8xf32>, vector<8x8xf32>, vector<8x8xf32>, vector<8x8xf32> -> vector<8x32xf32>
    %cst_110 = arith.constant dense<0.000000e+00> : vector<8x32xf32>
    %363 = tpu.matmul %362, %314, %cst_110 {dimension_numbers = #tpu.dot_dimension_numbers<[1], [0], [0], [1], [0, 0, 1, 1], [], []>} : vector<8x32xf32>, vector<32x32xf32>, vector<8x32xf32> -> vector<8x32xf32>
    %364 = arith.addf %291, %363 : vector<8x32xf32>
    %365 = vector.extract_strided_slice %219 {offsets = [2, 0], sizes = [1, 32], strides = [1, 1]} : vector<3x32xf32> to vector<1x32xf32>
    %366 = arith.mulf %364, %364 : vector<8x32xf32>
    %cst_111 = arith.constant dense<0.000000e+00> : vector<8xf32>
    %367 = vector.multi_reduction <add>, %366, %cst_111 [1] : vector<8x32xf32> to vector<8xf32>
    %368 = vector.shape_cast %367 : vector<8xf32> to vector<8x1xf32>
    %cst_112 = arith.constant 3.200000e+01 : f32
    %369 = vector.broadcast %cst_112 : f32 to vector<8x1xf32>
    %370 = arith.divf %368, %369 : vector<8x1xf32>
    %cst_113 = arith.constant 9.99999997E-7 : f32
    %371 = vector.broadcast %cst_113 : f32 to vector<8x1xf32>
    %372 = arith.addf %370, %371 : vector<8x1xf32>
    %373 = math.rsqrt %372 : vector<8x1xf32>
    %374 = vector.broadcast %373 : vector<8x1xf32> to vector<8x32xf32>
    %375 = arith.mulf %364, %374 : vector<8x32xf32>
    %376 = vector.broadcast %365 : vector<1x32xf32> to vector<8x32xf32>
    %377 = arith.mulf %375, %376 : vector<8x32xf32>
    %c0_114 = arith.constant 0 : index
    %c0_115 = arith.constant 0 : index
    %c0_116 = arith.constant 0 : index
    %378 = vector.load %arg17[%c0_114, %c0_115, %c0_116] : memref<2x32x64xf32, #tpu.memory_space<vmem>>, vector<1x32x64xf32>
    %379 = vector.shape_cast %378 : vector<1x32x64xf32> to vector<32x64xf32>
    %c0_117 = arith.constant 0 : index
    %c0_118 = arith.constant 0 : index
    %c0_119 = arith.constant 0 : index
    %380 = vector.load %arg18[%c0_117, %c0_118, %c0_119] : memref<2x64x32xf32, #tpu.memory_space<vmem>>, vector<1x64x32xf32>
    %381 = vector.shape_cast %380 : vector<1x64x32xf32> to vector<64x32xf32>
    %cst_120 = arith.constant dense<0.000000e+00> : vector<8x64xf32>
    %382 = tpu.matmul %377, %379, %cst_120 {dimension_numbers = #tpu.dot_dimension_numbers<[1], [0], [0], [1], [0, 0, 1, 1], [], []>} : vector<8x32xf32>, vector<32x64xf32>, vector<8x64xf32> -> vector<8x64xf32>
    %cst_121 = arith.constant 0.000000e+00 : f32
    %383 = vector.broadcast %cst_121 : f32 to vector<8x64xf32>
    %384 = arith.maximumf %382, %383 : vector<8x64xf32>
    %cst_122 = arith.constant dense<0.000000e+00> : vector<8x32xf32>
    %385 = tpu.matmul %384, %381, %cst_122 {dimension_numbers = #tpu.dot_dimension_numbers<[1], [0], [0], [1], [0, 0, 1, 1], [], []>} : vector<8x64xf32>, vector<64x32xf32>, vector<8x32xf32> -> vector<8x32xf32>
    %386 = arith.addf %364, %385 : vector<8x32xf32>
    %c1_123 = arith.constant 1 : index
    %c0_124 = arith.constant 0 : index
    %c0_125 = arith.constant 0 : index
    %387 = vector.load %arg19[%c1_123, %c0_124, %c0_125] : memref<2x3x32xf32, #tpu.memory_space<vmem>>, vector<1x3x32xf32>
    %388 = vector.shape_cast %387 : vector<1x3x32xf32> to vector<3x32xf32>
    %389 = vector.extract_strided_slice %388 {offsets = [0, 0], sizes = [1, 32], strides = [1, 1]} : vector<3x32xf32> to vector<1x32xf32>
    %390 = arith.mulf %386, %386 : vector<8x32xf32>
    %cst_126 = arith.constant dense<0.000000e+00> : vector<8xf32>
    %391 = vector.multi_reduction <add>, %390, %cst_126 [1] : vector<8x32xf32> to vector<8xf32>
    %392 = vector.shape_cast %391 : vector<8xf32> to vector<8x1xf32>
    %cst_127 = arith.constant 3.200000e+01 : f32
    %393 = vector.broadcast %cst_127 : f32 to vector<8x1xf32>
    %394 = arith.divf %392, %393 : vector<8x1xf32>
    %cst_128 = arith.constant 9.99999997E-7 : f32
    %395 = vector.broadcast %cst_128 : f32 to vector<8x1xf32>
    %396 = arith.addf %394, %395 : vector<8x1xf32>
    %397 = math.rsqrt %396 : vector<8x1xf32>
    %398 = vector.broadcast %397 : vector<8x1xf32> to vector<8x32xf32>
    %399 = arith.mulf %386, %398 : vector<8x32xf32>
    %400 = vector.broadcast %389 : vector<1x32xf32> to vector<8x32xf32>
    %401 = arith.mulf %399, %400 : vector<8x32xf32>
    %c1_129 = arith.constant 1 : index
    %c0_130 = arith.constant 0 : index
    %c0_131 = arith.constant 0 : index
    %402 = vector.load %arg12[%c1_129, %c0_130, %c0_131] : memref<2x32x96xf32, #tpu.memory_space<vmem>>, vector<1x32x96xf32>
    %403 = vector.shape_cast %402 : vector<1x32x96xf32> to vector<32x96xf32>
    %cst_132 = arith.constant dense<0.000000e+00> : vector<8x96xf32>
    %404 = tpu.matmul %401, %403, %cst_132 {dimension_numbers = #tpu.dot_dimension_numbers<[1], [0], [0], [1], [0, 0, 1, 1], [], []>} : vector<8x32xf32>, vector<32x96xf32>, vector<8x96xf32> -> vector<8x96xf32>
    %405 = vector.extract_strided_slice %404 {offsets = [0, 0], sizes = [8, 32], strides = [1, 1]} : vector<8x96xf32> to vector<8x32xf32>
    %406 = vector.extract_strided_slice %404 {offsets = [0, 32], sizes = [8, 32], strides = [1, 1]} : vector<8x96xf32> to vector<8x32xf32>
    %407 = vector.extract_strided_slice %404 {offsets = [0, 64], sizes = [8, 32], strides = [1, 1]} : vector<8x96xf32> to vector<8x32xf32>
    %c1_133 = arith.constant 1 : index
    %c0_134 = arith.constant 0 : index
    %c0_135 = arith.constant 0 : index
    %408 = vector.load %arg13[%c1_133, %c0_134, %c0_135] : memref<2x32x32xf32, #tpu.memory_space<vmem>>, vector<1x32x32xf32>
    %409 = vector.shape_cast %408 : vector<1x32x32xf32> to vector<32x32xf32>
    %410 = vector.extract_strided_slice %405 {offsets = [0, 0], sizes = [8, 8], strides = [1, 1]} : vector<8x32xf32> to vector<8x8xf32>
    %411 = vector.extract_strided_slice %405 {offsets = [0, 8], sizes = [8, 8], strides = [1, 1]} : vector<8x32xf32> to vector<8x8xf32>
    %412 = vector.extract_strided_slice %405 {offsets = [0, 16], sizes = [8, 8], strides = [1, 1]} : vector<8x32xf32> to vector<8x8xf32>
    %413 = vector.extract_strided_slice %405 {offsets = [0, 24], sizes = [8, 8], strides = [1, 1]} : vector<8x32xf32> to vector<8x8xf32>
    %414 = vector.shape_cast %410 : vector<8x8xf32> to vector<1x8x8xf32>
    %415 = vector.shape_cast %411 : vector<8x8xf32> to vector<1x8x8xf32>
    %416 = vector.shape_cast %412 : vector<8x8xf32> to vector<1x8x8xf32>
    %417 = vector.shape_cast %413 : vector<8x8xf32> to vector<1x8x8xf32>
    %418 = tpu.concatenate %414, %415, %416, %417 in 0 : vector<1x8x8xf32>, vector<1x8x8xf32>, vector<1x8x8xf32>, vector<1x8x8xf32> -> vector<4x8x8xf32>
    %419 = vector.extract_strided_slice %406 {offsets = [0, 0], sizes = [8, 8], strides = [1, 1]} : vector<8x32xf32> to vector<8x8xf32>
    %420 = vector.extract_strided_slice %406 {offsets = [0, 8], sizes = [8, 8], strides = [1, 1]} : vector<8x32xf32> to vector<8x8xf32>
    %421 = vector.extract_strided_slice %406 {offsets = [0, 16], sizes = [8, 8], strides = [1, 1]} : vector<8x32xf32> to vector<8x8xf32>
    %422 = vector.extract_strided_slice %406 {offsets = [0, 24], sizes = [8, 8], strides = [1, 1]} : vector<8x32xf32> to vector<8x8xf32>
    %423 = vector.shape_cast %419 : vector<8x8xf32> to vector<1x8x8xf32>
    %424 = vector.shape_cast %420 : vector<8x8xf32> to vector<1x8x8xf32>
    %425 = vector.shape_cast %421 : vector<8x8xf32> to vector<1x8x8xf32>
    %426 = vector.shape_cast %422 : vector<8x8xf32> to vector<1x8x8xf32>
    %427 = tpu.concatenate %423, %424, %425, %426 in 0 : vector<1x8x8xf32>, vector<1x8x8xf32>, vector<1x8x8xf32>, vector<1x8x8xf32> -> vector<4x8x8xf32>
    %428 = vector.extract_strided_slice %407 {offsets = [0, 0], sizes = [8, 8], strides = [1, 1]} : vector<8x32xf32> to vector<8x8xf32>
    %429 = vector.extract_strided_slice %407 {offsets = [0, 8], sizes = [8, 8], strides = [1, 1]} : vector<8x32xf32> to vector<8x8xf32>
    %430 = vector.extract_strided_slice %407 {offsets = [0, 16], sizes = [8, 8], strides = [1, 1]} : vector<8x32xf32> to vector<8x8xf32>
    %431 = vector.extract_strided_slice %407 {offsets = [0, 24], sizes = [8, 8], strides = [1, 1]} : vector<8x32xf32> to vector<8x8xf32>
    %432 = vector.shape_cast %428 : vector<8x8xf32> to vector<1x8x8xf32>
    %433 = vector.shape_cast %429 : vector<8x8xf32> to vector<1x8x8xf32>
    %434 = vector.shape_cast %430 : vector<8x8xf32> to vector<1x8x8xf32>
    %435 = vector.shape_cast %431 : vector<8x8xf32> to vector<1x8x8xf32>
    %436 = tpu.concatenate %432, %433, %434, %435 in 0 : vector<1x8x8xf32>, vector<1x8x8xf32>, vector<1x8x8xf32>, vector<1x8x8xf32> -> vector<4x8x8xf32>
    "tpu.trace_start"() <{level = 10 : i32, message = "hqd,hkd->hqk"}> : () -> ()
    %cst_136 = arith.constant dense<0.000000e+00> : vector<4x8x8xf32>
    %437 = tpu.matmul %418, %427, %cst_136 {dimension_numbers = #tpu.dot_dimension_numbers<[2], [2], [1], [1], [0, 0, 0, 1, 1, 1], [0], [0]>} : vector<4x8x8xf32>, vector<4x8x8xf32>, vector<4x8x8xf32> -> vector<4x8x8xf32>
    "tpu.trace_stop"() : () -> ()
    %438 = arith.addf %437, %12 : vector<4x8x8xf32>
    %cst_137 = arith.constant dense<0xFF800000> : vector<4x8xf32>
    %439 = vector.multi_reduction <maximumf>, %438, %cst_137 [2] : vector<4x8x8xf32> to vector<4x8xf32>
    %440 = vector.shape_cast %439 : vector<4x8xf32> to vector<4x8x1xf32>
    %441 = vector.broadcast %440 : vector<4x8x1xf32> to vector<4x8x8xf32>
    %442 = arith.subf %438, %441 : vector<4x8x8xf32>
    %443 = math.exp %442 : vector<4x8x8xf32>
    %cst_138 = arith.constant dense<0.000000e+00> : vector<4x8xf32>
    %444 = vector.multi_reduction <add>, %443, %cst_138 [2] : vector<4x8x8xf32> to vector<4x8xf32>
    %445 = vector.shape_cast %444 : vector<4x8xf32> to vector<4x8x1xf32>
    %446 = tpu.reciprocal %445 {approx = true} : vector<4x8x1xf32> -> vector<4x8x1xf32>
    %447 = vector.broadcast %446 : vector<4x8x1xf32> to vector<4x8x8xf32>
    %448 = arith.mulf %443, %447 : vector<4x8x8xf32>
    "tpu.trace_start"() <{level = 10 : i32, message = "hqk,hkd->hqd"}> : () -> ()
    %cst_139 = arith.constant dense<0.000000e+00> : vector<4x8x8xf32>
    %449 = tpu.matmul %448, %436, %cst_139 {dimension_numbers = #tpu.dot_dimension_numbers<[2], [1], [1], [2], [0, 0, 0, 1, 1, 2], [0], [0]>} : vector<4x8x8xf32>, vector<4x8x8xf32>, vector<4x8x8xf32> -> vector<4x8x8xf32>
    "tpu.trace_stop"() : () -> ()
    %450 = vector.extract_strided_slice %449 {offsets = [0, 0, 0], sizes = [1, 8, 8], strides = [1, 1, 1]} : vector<4x8x8xf32> to vector<1x8x8xf32>
    %451 = vector.shape_cast %450 : vector<1x8x8xf32> to vector<8x8xf32>
    %452 = vector.extract_strided_slice %449 {offsets = [1, 0, 0], sizes = [1, 8, 8], strides = [1, 1, 1]} : vector<4x8x8xf32> to vector<1x8x8xf32>
    %453 = vector.shape_cast %452 : vector<1x8x8xf32> to vector<8x8xf32>
    %454 = vector.extract_strided_slice %449 {offsets = [2, 0, 0], sizes = [1, 8, 8], strides = [1, 1, 1]} : vector<4x8x8xf32> to vector<1x8x8xf32>
    %455 = vector.shape_cast %454 : vector<1x8x8xf32> to vector<8x8xf32>
    %456 = vector.extract_strided_slice %449 {offsets = [3, 0, 0], sizes = [1, 8, 8], strides = [1, 1, 1]} : vector<4x8x8xf32> to vector<1x8x8xf32>
    %457 = vector.shape_cast %456 : vector<1x8x8xf32> to vector<8x8xf32>
    %458 = tpu.concatenate %451, %453, %455, %457 in 1 : vector<8x8xf32>, vector<8x8xf32>, vector<8x8xf32>, vector<8x8xf32> -> vector<8x32xf32>
    %cst_140 = arith.constant dense<0.000000e+00> : vector<8x32xf32>
    %459 = tpu.matmul %458, %409, %cst_140 {dimension_numbers = #tpu.dot_dimension_numbers<[1], [0], [0], [1], [0, 0, 1, 1], [], []>} : vector<8x32xf32>, vector<32x32xf32>, vector<8x32xf32> -> vector<8x32xf32>
    %460 = arith.addf %386, %459 : vector<8x32xf32>
    %461 = vector.extract_strided_slice %388 {offsets = [1, 0], sizes = [1, 32], strides = [1, 1]} : vector<3x32xf32> to vector<1x32xf32>
    %462 = arith.mulf %460, %460 : vector<8x32xf32>
    %cst_141 = arith.constant dense<0.000000e+00> : vector<8xf32>
    %463 = vector.multi_reduction <add>, %462, %cst_141 [1] : vector<8x32xf32> to vector<8xf32>
    %464 = vector.shape_cast %463 : vector<8xf32> to vector<8x1xf32>
    %cst_142 = arith.constant 3.200000e+01 : f32
    %465 = vector.broadcast %cst_142 : f32 to vector<8x1xf32>
    %466 = arith.divf %464, %465 : vector<8x1xf32>
    %cst_143 = arith.constant 9.99999997E-7 : f32
    %467 = vector.broadcast %cst_143 : f32 to vector<8x1xf32>
    %468 = arith.addf %466, %467 : vector<8x1xf32>
    %469 = math.rsqrt %468 : vector<8x1xf32>
    %470 = vector.broadcast %469 : vector<8x1xf32> to vector<8x32xf32>
    %471 = arith.mulf %460, %470 : vector<8x32xf32>
    %472 = vector.broadcast %461 : vector<1x32xf32> to vector<8x32xf32>
    %473 = arith.mulf %471, %472 : vector<8x32xf32>
    %c1_144 = arith.constant 1 : index
    %c0_145 = arith.constant 0 : index
    %c0_146 = arith.constant 0 : index
    %474 = vector.load %arg14[%c1_144, %c0_145, %c0_146] : memref<2x32x32xf32, #tpu.memory_space<vmem>>, vector<1x32x32xf32>
    %475 = vector.shape_cast %474 : vector<1x32x32xf32> to vector<32x32xf32>
    %cst_147 = arith.constant dense<0.000000e+00> : vector<8x32xf32>
    %476 = tpu.matmul %473, %475, %cst_147 {dimension_numbers = #tpu.dot_dimension_numbers<[1], [0], [0], [1], [0, 0, 1, 1], [], []>} : vector<8x32xf32>, vector<32x32xf32>, vector<8x32xf32> -> vector<8x32xf32>
    %c1_148 = arith.constant 1 : index
    %c0_149 = arith.constant 0 : index
    %c0_150 = arith.constant 0 : index
    %477 = vector.load %arg15[%c1_148, %c0_149, %c0_150] : memref<2x32x64xf32, #tpu.memory_space<vmem>>, vector<1x32x64xf32>
    %478 = vector.shape_cast %477 : vector<1x32x64xf32> to vector<32x64xf32>
    %cst_151 = arith.constant dense<0.000000e+00> : vector<8x64xf32>
    %479 = tpu.matmul %217, %478, %cst_151 {dimension_numbers = #tpu.dot_dimension_numbers<[1], [0], [0], [1], [0, 0, 1, 1], [], []>} : vector<8x32xf32>, vector<32x64xf32>, vector<8x64xf32> -> vector<8x64xf32>
    %480 = vector.extract_strided_slice %479 {offsets = [0, 0], sizes = [8, 32], strides = [1, 1]} : vector<8x64xf32> to vector<8x32xf32>
    %481 = vector.extract_strided_slice %479 {offsets = [0, 32], sizes = [8, 32], strides = [1, 1]} : vector<8x64xf32> to vector<8x32xf32>
    %c1_152 = arith.constant 1 : index
    %c0_153 = arith.constant 0 : index
    %c0_154 = arith.constant 0 : index
    %482 = vector.load %arg16[%c1_152, %c0_153, %c0_154] : memref<2x32x32xf32, #tpu.memory_space<vmem>>, vector<1x32x32xf32>
    %483 = vector.shape_cast %482 : vector<1x32x32xf32> to vector<32x32xf32>
    %484 = vector.extract_strided_slice %476 {offsets = [0, 0], sizes = [8, 8], strides = [1, 1]} : vector<8x32xf32> to vector<8x8xf32>
    %485 = vector.extract_strided_slice %476 {offsets = [0, 8], sizes = [8, 8], strides = [1, 1]} : vector<8x32xf32> to vector<8x8xf32>
    %486 = vector.extract_strided_slice %476 {offsets = [0, 16], sizes = [8, 8], strides = [1, 1]} : vector<8x32xf32> to vector<8x8xf32>
    %487 = vector.extract_strided_slice %476 {offsets = [0, 24], sizes = [8, 8], strides = [1, 1]} : vector<8x32xf32> to vector<8x8xf32>
    %488 = vector.shape_cast %484 : vector<8x8xf32> to vector<1x8x8xf32>
    %489 = vector.shape_cast %485 : vector<8x8xf32> to vector<1x8x8xf32>
    %490 = vector.shape_cast %486 : vector<8x8xf32> to vector<1x8x8xf32>
    %491 = vector.shape_cast %487 : vector<8x8xf32> to vector<1x8x8xf32>
    %492 = tpu.concatenate %488, %489, %490, %491 in 0 : vector<1x8x8xf32>, vector<1x8x8xf32>, vector<1x8x8xf32>, vector<1x8x8xf32> -> vector<4x8x8xf32>
    %493 = vector.extract_strided_slice %480 {offsets = [0, 0], sizes = [8, 8], strides = [1, 1]} : vector<8x32xf32> to vector<8x8xf32>
    %494 = vector.extract_strided_slice %480 {offsets = [0, 8], sizes = [8, 8], strides = [1, 1]} : vector<8x32xf32> to vector<8x8xf32>
    %495 = vector.extract_strided_slice %480 {offsets = [0, 16], sizes = [8, 8], strides = [1, 1]} : vector<8x32xf32> to vector<8x8xf32>
    %496 = vector.extract_strided_slice %480 {offsets = [0, 24], sizes = [8, 8], strides = [1, 1]} : vector<8x32xf32> to vector<8x8xf32>
    %497 = vector.shape_cast %493 : vector<8x8xf32> to vector<1x8x8xf32>
    %498 = vector.shape_cast %494 : vector<8x8xf32> to vector<1x8x8xf32>
    %499 = vector.shape_cast %495 : vector<8x8xf32> to vector<1x8x8xf32>
    %500 = vector.shape_cast %496 : vector<8x8xf32> to vector<1x8x8xf32>
    %501 = tpu.concatenate %497, %498, %499, %500 in 0 : vector<1x8x8xf32>, vector<1x8x8xf32>, vector<1x8x8xf32>, vector<1x8x8xf32> -> vector<4x8x8xf32>
    %502 = vector.extract_strided_slice %481 {offsets = [0, 0], sizes = [8, 8], strides = [1, 1]} : vector<8x32xf32> to vector<8x8xf32>
    %503 = vector.extract_strided_slice %481 {offsets = [0, 8], sizes = [8, 8], strides = [1, 1]} : vector<8x32xf32> to vector<8x8xf32>
    %504 = vector.extract_strided_slice %481 {offsets = [0, 16], sizes = [8, 8], strides = [1, 1]} : vector<8x32xf32> to vector<8x8xf32>
    %505 = vector.extract_strided_slice %481 {offsets = [0, 24], sizes = [8, 8], strides = [1, 1]} : vector<8x32xf32> to vector<8x8xf32>
    %506 = vector.shape_cast %502 : vector<8x8xf32> to vector<1x8x8xf32>
    %507 = vector.shape_cast %503 : vector<8x8xf32> to vector<1x8x8xf32>
    %508 = vector.shape_cast %504 : vector<8x8xf32> to vector<1x8x8xf32>
    %509 = vector.shape_cast %505 : vector<8x8xf32> to vector<1x8x8xf32>
    %510 = tpu.concatenate %506, %507, %508, %509 in 0 : vector<1x8x8xf32>, vector<1x8x8xf32>, vector<1x8x8xf32>, vector<1x8x8xf32> -> vector<4x8x8xf32>
    "tpu.trace_start"() <{level = 10 : i32, message = "hqd,hkd->hqk"}> : () -> ()
    %cst_155 = arith.constant dense<0.000000e+00> : vector<4x8x8xf32>
    %511 = tpu.matmul %492, %501, %cst_155 {dimension_numbers = #tpu.dot_dimension_numbers<[2], [2], [1], [1], [0, 0, 0, 1, 1, 1], [0], [0]>} : vector<4x8x8xf32>, vector<4x8x8xf32>, vector<4x8x8xf32> -> vector<4x8x8xf32>
    "tpu.trace_stop"() : () -> ()
    %cst_156 = arith.constant dense<0xFF800000> : vector<4x8xf32>
    %512 = vector.multi_reduction <maximumf>, %511, %cst_156 [2] : vector<4x8x8xf32> to vector<4x8xf32>
    %513 = vector.shape_cast %512 : vector<4x8xf32> to vector<4x8x1xf32>
    %514 = vector.broadcast %513 : vector<4x8x1xf32> to vector<4x8x8xf32>
    %515 = arith.subf %511, %514 : vector<4x8x8xf32>
    %516 = math.exp %515 : vector<4x8x8xf32>
    %cst_157 = arith.constant dense<0.000000e+00> : vector<4x8xf32>
    %517 = vector.multi_reduction <add>, %516, %cst_157 [2] : vector<4x8x8xf32> to vector<4x8xf32>
    %518 = vector.shape_cast %517 : vector<4x8xf32> to vector<4x8x1xf32>
    %519 = tpu.reciprocal %518 {approx = true} : vector<4x8x1xf32> -> vector<4x8x1xf32>
    %520 = vector.broadcast %519 : vector<4x8x1xf32> to vector<4x8x8xf32>
    %521 = arith.mulf %516, %520 : vector<4x8x8xf32>
    "tpu.trace_start"() <{level = 10 : i32, message = "hqk,hkd->hqd"}> : () -> ()
    %cst_158 = arith.constant dense<0.000000e+00> : vector<4x8x8xf32>
    %522 = tpu.matmul %521, %510, %cst_158 {dimension_numbers = #tpu.dot_dimension_numbers<[2], [1], [1], [2], [0, 0, 0, 1, 1, 2], [0], [0]>} : vector<4x8x8xf32>, vector<4x8x8xf32>, vector<4x8x8xf32> -> vector<4x8x8xf32>
    "tpu.trace_stop"() : () -> ()
    %523 = vector.extract_strided_slice %522 {offsets = [0, 0, 0], sizes = [1, 8, 8], strides = [1, 1, 1]} : vector<4x8x8xf32> to vector<1x8x8xf32>
    %524 = vector.shape_cast %523 : vector<1x8x8xf32> to vector<8x8xf32>
    %525 = vector.extract_strided_slice %522 {offsets = [1, 0, 0], sizes = [1, 8, 8], strides = [1, 1, 1]} : vector<4x8x8xf32> to vector<1x8x8xf32>
    %526 = vector.shape_cast %525 : vector<1x8x8xf32> to vector<8x8xf32>
    %527 = vector.extract_strided_slice %522 {offsets = [2, 0, 0], sizes = [1, 8, 8], strides = [1, 1, 1]} : vector<4x8x8xf32> to vector<1x8x8xf32>
    %528 = vector.shape_cast %527 : vector<1x8x8xf32> to vector<8x8xf32>
    %529 = vector.extract_strided_slice %522 {offsets = [3, 0, 0], sizes = [1, 8, 8], strides = [1, 1, 1]} : vector<4x8x8xf32> to vector<1x8x8xf32>
    %530 = vector.shape_cast %529 : vector<1x8x8xf32> to vector<8x8xf32>
    %531 = tpu.concatenate %524, %526, %528, %530 in 1 : vector<8x8xf32>, vector<8x8xf32>, vector<8x8xf32>, vector<8x8xf32> -> vector<8x32xf32>
    %cst_159 = arith.constant dense<0.000000e+00> : vector<8x32xf32>
    %532 = tpu.matmul %531, %483, %cst_159 {dimension_numbers = #tpu.dot_dimension_numbers<[1], [0], [0], [1], [0, 0, 1, 1], [], []>} : vector<8x32xf32>, vector<32x32xf32>, vector<8x32xf32> -> vector<8x32xf32>
    %533 = arith.addf %460, %532 : vector<8x32xf32>
    %534 = vector.extract_strided_slice %388 {offsets = [2, 0], sizes = [1, 32], strides = [1, 1]} : vector<3x32xf32> to vector<1x32xf32>
    %535 = arith.mulf %533, %533 : vector<8x32xf32>
    %cst_160 = arith.constant dense<0.000000e+00> : vector<8xf32>
    %536 = vector.multi_reduction <add>, %535, %cst_160 [1] : vector<8x32xf32> to vector<8xf32>
    %537 = vector.shape_cast %536 : vector<8xf32> to vector<8x1xf32>
    %cst_161 = arith.constant 3.200000e+01 : f32
    %538 = vector.broadcast %cst_161 : f32 to vector<8x1xf32>
    %539 = arith.divf %537, %538 : vector<8x1xf32>
    %cst_162 = arith.constant 9.99999997E-7 : f32
    %540 = vector.broadcast %cst_162 : f32 to vector<8x1xf32>
    %541 = arith.addf %539, %540 : vector<8x1xf32>
    %542 = math.rsqrt %541 : vector<8x1xf32>
    %543 = vector.broadcast %542 : vector<8x1xf32> to vector<8x32xf32>
    %544 = arith.mulf %533, %543 : vector<8x32xf32>
    %545 = vector.broadcast %534 : vector<1x32xf32> to vector<8x32xf32>
    %546 = arith.mulf %544, %545 : vector<8x32xf32>
    %c1_163 = arith.constant 1 : index
    %c0_164 = arith.constant 0 : index
    %c0_165 = arith.constant 0 : index
    %547 = vector.load %arg17[%c1_163, %c0_164, %c0_165] : memref<2x32x64xf32, #tpu.memory_space<vmem>>, vector<1x32x64xf32>
    %548 = vector.shape_cast %547 : vector<1x32x64xf32> to vector<32x64xf32>
    %c1_166 = arith.constant 1 : index
    %c0_167 = arith.constant 0 : index
    %c0_168 = arith.constant 0 : index
    %549 = vector.load %arg18[%c1_166, %c0_167, %c0_168] : memref<2x64x32xf32, #tpu.memory_space<vmem>>, vector<1x64x32xf32>
    %550 = vector.shape_cast %549 : vector<1x64x32xf32> to vector<64x32xf32>
    %cst_169 = arith.constant dense<0.000000e+00> : vector<8x64xf32>
    %551 = tpu.matmul %546, %548, %cst_169 {dimension_numbers = #tpu.dot_dimension_numbers<[1], [0], [0], [1], [0, 0, 1, 1], [], []>} : vector<8x32xf32>, vector<32x64xf32>, vector<8x64xf32> -> vector<8x64xf32>
    %cst_170 = arith.constant 0.000000e+00 : f32
    %552 = vector.broadcast %cst_170 : f32 to vector<8x64xf32>
    %553 = arith.maximumf %551, %552 : vector<8x64xf32>
    %cst_171 = arith.constant dense<0.000000e+00> : vector<8x32xf32>
    %554 = tpu.matmul %553, %550, %cst_171 {dimension_numbers = #tpu.dot_dimension_numbers<[1], [0], [0], [1], [0, 0, 1, 1], [], []>} : vector<8x64xf32>, vector<64x32xf32>, vector<8x32xf32> -> vector<8x32xf32>
    %555 = arith.addf %533, %554 : vector<8x32xf32>
    %c0_172 = arith.constant 0 : index
    %c0_173 = arith.constant 0 : index
    %556 = vector.load %arg20[%c0_172, %c0_173] : memref<1x32xf32, #tpu.memory_space<vmem>>, vector<1x32xf32>
    %557 = arith.mulf %555, %555 : vector<8x32xf32>
    %cst_174 = arith.constant dense<0.000000e+00> : vector<8xf32>
    %558 = vector.multi_reduction <add>, %557, %cst_174 [1] : vector<8x32xf32> to vector<8xf32>
    %559 = vector.shape_cast %558 : vector<8xf32> to vector<8x1xf32>
    %cst_175 = arith.constant 3.200000e+01 : f32
    %560 = vector.broadcast %cst_175 : f32 to vector<8x1xf32>
    %561 = arith.divf %559, %560 : vector<8x1xf32>
    %cst_176 = arith.constant 9.99999997E-7 : f32
    %562 = vector.broadcast %cst_176 : f32 to vector<8x1xf32>
    %563 = arith.addf %561, %562 : vector<8x1xf32>
    %564 = math.rsqrt %563 : vector<8x1xf32>
    %565 = vector.broadcast %564 : vector<8x1xf32> to vector<8x32xf32>
    %566 = arith.mulf %555, %565 : vector<8x32xf32>
    %567 = vector.broadcast %556 : vector<1x32xf32> to vector<8x32xf32>
    %568 = arith.mulf %566, %567 : vector<8x32xf32>
    %cst_177 = arith.constant dense<0.000000e+00> : vector<8x128xf32>
    %569 = tpu.matmul %568, %0, %cst_177 {dimension_numbers = #tpu.dot_dimension_numbers<[1], [1], [0], [0], [0, 0, 1, 0], [], []>} : vector<8x32xf32>, vector<128x32xf32>, vector<8x128xf32> -> vector<8x128xf32>
    %c0_178 = arith.constant 0 : index
    %c0_179 = arith.constant 0 : index
    %c0_180 = arith.constant 0 : index
    %570 = vector.load %arg21[%c0_178, %c0_179, %c0_180] : memref<1x8x128xf32, #tpu.memory_space<vmem>>, vector<1x8x128xf32>
    %571 = vector.shape_cast %570 : vector<1x8x128xf32> to vector<8x128xf32>
    %572 = vector.shape_cast %569 : vector<8x128xf32> to vector<1x8x128xf32>
    tpu.vector_store %arg21[%c0_178, %c0_179, %c0_180], %572 {strides = array<i32>} : memref<1x8x128xf32, #tpu.memory_space<vmem>>, vector<1x8x128xf32>,
    %c0_181 = arith.constant 0 : index
    %c0_182 = arith.constant 0 : index
    %c0_183 = arith.constant 0 : index
    %573 = vector.load %arg2[%c0_181, %c0_182, %c0_183] : memref<1x8x1xi32, #tpu.memory_space<vmem>>, vector<1x8x1xi32>
    %574 = vector.shape_cast %573 : vector<1x8x1xi32> to vector<8x1xi32>
    %575 = tpu.iota {dimensions = array<i32: 1>} : vector<8x128xi32>
    %c64_i32 = arith.constant 64 : i32
    %576 = vector.broadcast %c64_i32 : i32 to vector<8x128xi32>
    %577 = arith.cmpi slt, %575, %576 : vector<8x128xi32>
    %cst_184 = arith.constant -1.000000e+09 : f32
    %578 = vector.broadcast %cst_184 : f32 to vector<8x128xf32>
    %579 = arith.select %577, %569, %578 : vector<8x128xi1>, vector<8x128xf32>
    %cst_185 = arith.constant dense<0xFF800000> : vector<8xf32>
    %580 = vector.multi_reduction <maximumf>, %579, %cst_185 [1] : vector<8x128xf32> to vector<8xf32>
    %581 = vector.shape_cast %580 : vector<8xf32> to vector<8x1xf32>
    %582 = vector.broadcast %581 : vector<8x1xf32> to vector<8x128xf32>
    %583 = arith.subf %579, %582 : vector<8x128xf32>
    %584 = math.exp %583 : vector<8x128xf32>
    %cst_186 = arith.constant dense<0.000000e+00> : vector<8xf32>
    %585 = vector.multi_reduction <add>, %584, %cst_186 [1] : vector<8x128xf32> to vector<8xf32>
    %586 = vector.shape_cast %585 : vector<8xf32> to vector<8x1xf32>
    %587 = math.log %586 : vector<8x1xf32>
    %588 = arith.addf %587, %581 : vector<8x1xf32>
    %589 = vector.broadcast %574 : vector<8x1xi32> to vector<8x128xi32>
    %590 = arith.cmpi eq, %575, %589 : vector<8x128xi32>
    %591 = arith.extui %590 : vector<8x128xi1> to vector<8x128xi32>
    %592 = arith.sitofp %591 : vector<8x128xi32> to vector<8x128xf32>
    %593 = arith.mulf %569, %592 : vector<8x128xf32>
    %cst_187 = arith.constant dense<0.000000e+00> : vector<8xf32>
    %594 = vector.multi_reduction <add>, %593, %cst_187 [1] : vector<8x128xf32> to vector<8xf32>
    %595 = vector.shape_cast %594 : vector<8xf32> to vector<8x1xf32>
    %c-100_i32 = arith.constant -100 : i32
    %596 = vector.broadcast %c-100_i32 : i32 to vector<8x1xi32>
    %597 = arith.cmpi ne, %574, %596 : vector<8x1xi32>
    %598 = arith.extui %597 : vector<8x1xi1> to vector<8x1xi32>
    %599 = arith.sitofp %598 : vector<8x1xi32> to vector<8x1xf32>
    %600 = arith.subf %588, %595 : vector<8x1xf32>
    %601 = arith.mulf %600, %599 : vector<8x1xf32>
    %602 = vector.shape_cast %601 : vector<8x1xf32> to vector<1x8x1xf32>
    %cst_188 = arith.constant dense<0.000000e+00> : vector<1xf32>
    %603 = vector.multi_reduction <add>, %602, %cst_188 [1, 2] : vector<1x8x1xf32> to vector<1xf32>
    %604 = vector.shape_cast %603 : vector<1xf32> to vector<1x1x1xf32>
    %605 = vector.extract %604[0, 0, 0] : f32 from vector<1x1x1xf32>
    %606 = vector.shape_cast %599 : vector<8x1xf32> to vector<1x8x1xf32>
    %cst_189 = arith.constant dense<0.000000e+00> : vector<1xf32>
    %607 = vector.multi_reduction <add>, %606, %cst_189 [1, 2] : vector<1x8x1xf32> to vector<1xf32>
    %608 = vector.shape_cast %607 : vector<1xf32> to vector<1x1x1xf32>
    %609 = vector.extract %608[0, 0, 0] : f32 from vector<1x1x1xf32>
    %610 = tpu.iota {dimensions = array<i32: 1>} : vector<8x128xi32>
    %c0_i32 = arith.constant 0 : i32
    %611 = vector.broadcast %c0_i32 : i32 to vector<8x128xi32>
    %612 = arith.cmpi eq, %610, %611 : vector<8x128xi32>
    %c1_i32 = arith.constant 1 : i32
    %613 = vector.broadcast %c1_i32 : i32 to vector<8x128xi32>
    %614 = arith.cmpi eq, %610, %613 : vector<8x128xi32>
    %cst_190 = arith.constant 0.000000e+00 : f32
    %615 = vector.broadcast %609 : f32 to vector<8x128xf32>
    %616 = vector.broadcast %cst_190 : f32 to vector<8x128xf32>
    %617 = arith.select %614, %615, %616 : vector<8x128xi1>, vector<8x128xf32>
    %618 = vector.broadcast %605 : f32 to vector<8x128xf32>
    %619 = arith.select %612, %618, %617 : vector<8x128xi1>, vector<8x128xf32>
    %c0_191 = arith.constant 0 : index
    %c0_192 = arith.constant 0 : index
    %c0_193 = arith.constant 0 : index
    %620 = vector.load %arg22[%c0_191, %c0_192, %c0_193] : memref<1x8x128xf32, #tpu.memory_space<vmem>>, vector<1x8x128xf32>
    %621 = vector.shape_cast %620 : vector<1x8x128xf32> to vector<8x128xf32>
    %622 = vector.shape_cast %619 : vector<8x128xf32> to vector<1x8x128xf32>
    tpu.vector_store %arg22[%c0_191, %c0_192, %c0_193], %622 {strides = array<i32>} : memref<1x8x128xf32, #tpu.memory_space<vmem>>, vector<1x8x128xf32>,
    return
  }
  func.func @transform_0(%arg0: i32) -> (i32, i32, i32) {
    %c0_i32 = arith.constant 0 : i32
    %c0_i32_0 = arith.constant 0 : i32
    %c0_i32_1 = arith.constant 0 : i32
    return %arg0, %c0_i32, %c0_i32_0 : i32, i32, i32
  }
  func.func @transform_1(%arg0: i32) -> (i32, i32, i32) {
    %c0_i32 = arith.constant 0 : i32
    %c0_i32_0 = arith.constant 0 : i32
    %c0_i32_1 = arith.constant 0 : i32
    return %arg0, %c0_i32, %c0_i32_0 : i32, i32, i32
  }
  func.func @transform_2(%arg0: i32) -> (i32, i32) {
    %c0_i32 = arith.constant 0 : i32
    %c0_i32_0 = arith.constant 0 : i32
    %c0_i32_1 = arith.constant 0 : i32
    return %c0_i32, %c0_i32_0 : i32, i32
  }
  func.func @transform_3(%arg0: i32) -> (i32, i32, i32) {
    %c0_i32 = arith.constant 0 : i32
    %c0_i32_0 = arith.constant 0 : i32
    %c0_i32_1 = arith.constant 0 : i32
    %c0_i32_2 = arith.constant 0 : i32
    return %c0_i32, %c0_i32_0, %c0_i32_1 : i32, i32, i32
  }
  func.func @transform_4(%arg0: i32) -> (i32, i32, i32) {
    %c0_i32 = arith.constant 0 : i32
    %c0_i32_0 = arith.constant 0 : i32
    %c0_i32_1 = arith.constant 0 : i32
    %c0_i32_2 = arith.constant 0 : i32
    return %c0_i32, %c0_i32_0, %c0_i32_1 : i32, i32, i32
  }
  func.func @transform_5(%arg0: i32) -> (i32, i32, i32) {
    %c0_i32 = arith.constant 0 : i32
    %c0_i32_0 = arith.constant 0 : i32
    %c0_i32_1 = arith.constant 0 : i32
    %c0_i32_2 = arith.constant 0 : i32
    return %c0_i32, %c0_i32_0, %c0_i32_1 : i32, i32, i32
  }
  func.func @transform_6(%arg0: i32) -> (i32, i32, i32) {
    %c0_i32 = arith.constant 0 : i32
    %c0_i32_0 = arith.constant 0 : i32
    %c0_i32_1 = arith.constant 0 : i32
    %c0_i32_2 = arith.constant 0 : i32
    return %c0_i32, %c0_i32_0, %c0_i32_1 : i32, i32, i32
  }
  func.func @transform_7(%arg0: i32) -> (i32, i32, i32) {
    %c0_i32 = arith.constant 0 : i32
    %c0_i32_0 = arith.constant 0 : i32
    %c0_i32_1 = arith.constant 0 : i32
    %c0_i32_2 = arith.constant 0 : i32
    return %c0_i32, %c0_i32_0, %c0_i32_1 : i32, i32, i32
  }
  func.func @transform_8(%arg0: i32) -> (i32, i32, i32) {
    %c0_i32 = arith.constant 0 : i32
    %c0_i32_0 = arith.constant 0 : i32
    %c0_i32_1 = arith.constant 0 : i32
    %c0_i32_2 = arith.constant 0 : i32
    return %c0_i32, %c0_i32_0, %c0_i32_1 : i32, i32, i32
  }
  func.func @transform_9(%arg0: i32) -> (i32, i32, i32) {
    %c0_i32 = arith.constant 0 : i32
    %c0_i32_0 = arith.constant 0 : i32
    %c0_i32_1 = arith.constant 0 : i32
    %c0_i32_2 = arith.constant 0 : i32
    return %c0_i32, %c0_i32_0, %c0_i32_1 : i32, i32, i32
  }
  func.func @transform_10(%arg0: i32) -> (i32, i32) {
    %c0_i32 = arith.constant 0 : i32
    %c0_i32_0 = arith.constant 0 : i32
    %c0_i32_1 = arith.constant 0 : i32
    return %c0_i32, %c0_i32_0 : i32, i32
  }
  func.func @transform_11(%arg0: i32) -> (i32, i32, i32) {
    %c0_i32 = arith.constant 0 : i32
    %c0_i32_0 = arith.constant 0 : i32
    %c0_i32_1 = arith.constant 0 : i32
    %c0_i32_2 = arith.constant 0 : i32
    return %c0_i32, %c0_i32_0, %c0_i32_1 : i32, i32, i32
  }
  func.func @transform_12(%arg0: i32) -> (i32, i32, i32) {
    %c0_i32 = arith.constant 0 : i32
    %c0_i32_0 = arith.constant 0 : i32
    %c0_i32_1 = arith.constant 0 : i32
    %c0_i32_2 = arith.constant 0 : i32
    return %c0_i32, %c0_i32_0, %c0_i32_1 : i32, i32, i32
  }
  func.func @transform_13(%arg0: i32) -> (i32, i32, i32) {
    %c0_i32 = arith.constant 0 : i32
    %c0_i32_0 = arith.constant 0 : i32
    %c0_i32_1 = arith.constant 0 : i32
    %c0_i32_2 = arith.constant 0 : i32
    return %c0_i32, %c0_i32_0, %c0_i32_1 : i32, i32, i32
  }
  func.func @transform_14(%arg0: i32) -> (i32, i32, i32) {
    %c0_i32 = arith.constant 0 : i32
    %c0_i32_0 = arith.constant 0 : i32
    %c0_i32_1 = arith.constant 0 : i32
    %c0_i32_2 = arith.constant 0 : i32
    return %c0_i32, %c0_i32_0, %c0_i32_1 : i32, i32, i32
  }
  func.func @transform_15(%arg0: i32) -> (i32, i32, i32) {
    %c0_i32 = arith.constant 0 : i32
    %c0_i32_0 = arith.constant 0 : i32
    %c0_i32_1 = arith.constant 0 : i32
    %c0_i32_2 = arith.constant 0 : i32
    return %c0_i32, %c0_i32_0, %c0_i32_1 : i32, i32, i32
  }
  func.func @transform_16(%arg0: i32) -> (i32, i32, i32) {
    %c0_i32 = arith.constant 0 : i32
    %c0_i32_0 = arith.constant 0 : i32
    %c0_i32_1 = arith.constant 0 : i32
    %c0_i32_2 = arith.constant 0 : i32
    return %c0_i32, %c0_i32_0, %c0_i32_1 : i32, i32, i32
  }
  func.func @transform_17(%arg0: i32) -> (i32, i32, i32) {
    %c0_i32 = arith.constant 0 : i32
    %c0_i32_0 = arith.constant 0 : i32
    %c0_i32_1 = arith.constant 0 : i32
    %c0_i32_2 = arith.constant 0 : i32
    return %c0_i32, %c0_i32_0, %c0_i32_1 : i32, i32, i32
  }
  func.func @transform_18(%arg0: i32) -> (i32, i32, i32) {
    %c0_i32 = arith.constant 0 : i32
    %c0_i32_0 = arith.constant 0 : i32
    %c0_i32_1 = arith.constant 0 : i32
    %c0_i32_2 = arith.constant 0 : i32
    return %c0_i32, %c0_i32_0, %c0_i32_1 : i32, i32, i32
  }
  func.func @transform_19(%arg0: i32) -> (i32, i32) {
    %c0_i32 = arith.constant 0 : i32
    %c0_i32_0 = arith.constant 0 : i32
    %c0_i32_1 = arith.constant 0 : i32
    return %c0_i32, %c0_i32_0 : i32, i32
  }
  func.func @transform_20(%arg0: i32) -> (i32, i32, i32) {
    %c0_i32 = arith.constant 0 : i32
    %c0_i32_0 = arith.constant 0 : i32
    %c0_i32_1 = arith.constant 0 : i32
    return %arg0, %c0_i32, %c0_i32_0 : i32, i32, i32
  }
  func.func @transform_21(%arg0: i32) -> (i32, i32, i32) {
    %c0_i32 = arith.constant 0 : i32
    %c0_i32_0 = arith.constant 0 : i32
    %c0_i32_1 = arith.constant 0 : i32
    return %arg0, %c0_i32, %c0_i32_0 : i32, i32, i32
  }
}

</mosaic_0001>

<llo_original>
// kernel: t5_forward.1
$region0: #{t5_forward.1}
  #allocation0 [shape = 'u32[]', space=smem, size = 0x4, offset = 0x4, fixed_abs, tag = 'smem constant byte address 0x4 - core index']
  #allocation1 [shape = 'u32[144,128]{1,0:T(1,128)}', space=vmem, size = 0x12000, scoped, tag = 'internal scratch']
  %s0 = inlined_call_operand.vmem [shape: s32[2,16,1], index: 0, kind: input, shape index: {}]
  %s1 = inlined_call_operand.vmem [shape: s32[2,8,1], index: 1, kind: input, shape index: {}]
  %s2 = inlined_call_operand.hbm [shape: f32[128,32], index: 2, kind: input, shape index: {}]
  %s3 = inlined_call_operand.hbm [shape: f32[4,8,8], index: 3, kind: input, shape index: {}]
  %s4 = inlined_call_operand.hbm [shape: f32[4,8,8], index: 4, kind: input, shape index: {}]
  %s5 = inlined_call_operand.hbm [shape: f32[2,32,96], index: 5, kind: input, shape index: {}]
  %s6 = inlined_call_operand.hbm [shape: f32[2,32,32], index: 6, kind: input, shape index: {}]
  %s7 = inlined_call_operand.hbm [shape: f32[2,32,64], index: 7, kind: input, shape index: {}]
  %s8 = inlined_call_operand.hbm [shape: f32[2,64,32], index: 8, kind: input, shape index: {}]
  %s9 = inlined_call_operand.vmem [shape: f32[2,2,32], index: 9, kind: input, shape index: {}]
  %s10 = inlined_call_operand.vmem [shape: f32[1,32], index: 10, kind: input, shape index: {}]
  %s11 = inlined_call_operand.hbm [shape: f32[2,32,96], index: 11, kind: input, shape index: {}]
  %s12 = inlined_call_operand.hbm [shape: f32[2,32,32], index: 12, kind: input, shape index: {}]
  %s13 = inlined_call_operand.hbm [shape: f32[2,32,32], index: 13, kind: input, shape index: {}]
  %s14 = inlined_call_operand.hbm [shape: f32[2,32,64], index: 14, kind: input, shape index: {}]
  %s15 = inlined_call_operand.hbm [shape: f32[2,32,32], index: 15, kind: input, shape index: {}]
  %s16 = inlined_call_operand.hbm [shape: f32[2,32,64], index: 16, kind: input, shape index: {}]
  %s17 = inlined_call_operand.vmem [shape: f32[2,64,32], index: 17, kind: input, shape index: {}]
  %s18 = inlined_call_operand.vmem [shape: f32[2,3,32], index: 18, kind: input, shape index: {}]
  %s19 = inlined_call_operand.vmem [shape: f32[1,32], index: 19, kind: input, shape index: {}]
  %s20 = inlined_call_operand.hbm [shape: f32[2,8,128], index: 20, kind: output, shape index: {0}]
  %s21 = inlined_call_operand.vmem [shape: f32[2,8,128], index: 21, kind: output, shape index: {1}]
  %22 = xla_tuple %s20, %s21
  %s23 = sld [smem:[#allocation0]]
  $region173: #{t5_forward.1} parent=0
    _
  %s25 = ssub.s32 1, %s23
  %s26 = scalar_select 0, %s25, %s23
  $region1: #{t5_forward.1} parent=0
    #allocation2 [shape = 'u8[65536]{0}', space=vmem, size = 0x10000, scoped, tag = 'input window, operand 2, single buffered']
    #allocation3 [shape = 's32[2]{0}', space=sflag, size = 0x8, scoped, tag = 'scoped memory for t5_forward.1']
    #allocation4 [shape = 's32[2]{0}', space=sflag, size = 0x8, scoped, tag = 'scoped memory for t5_forward.1']
    #allocation5 [shape = 'u8[16384]{0}', space=vmem, size = 0x4000, scoped, tag = 'input window, operand 3, single buffered']
    #allocation6 [shape = 's32[1]{0}', space=sflag, size = 0x4, scoped, tag = 'scoped memory for t5_forward.1']
    #allocation7 [shape = 'u8[16384]{0}', space=vmem, size = 0x4000, scoped, tag = 'input window, operand 4, single buffered']
    #allocation8 [shape = 'u8[32768]{0}', space=vmem, size = 0x8000, scoped, tag = 'input window, operand 5, single buffered']
    #allocation9 [shape = 's32[1]{0}', space=sflag, size = 0x4, scoped, tag = 'scoped memory for t5_forward.1']
    #allocation10 [shape = 'u8[32768]{0}', space=vmem, size = 0x8000, scoped, tag = 'input window, operand 6, single buffered']
    #allocation11 [shape = 'u8[32768]{0}', space=vmem, size = 0x8000, scoped, tag = 'input window, operand 7, single buffered']
    #allocation12 [shape = 's32[1]{0}', space=sflag, size = 0x4, scoped, tag = 'scoped memory for t5_forward.1']
    #allocation13 [shape = 'u8[65536]{0}', space=vmem, size = 0x10000, scoped, tag = 'input window, operand 8, single buffered']
    #allocation14 [shape = 'u8[32768]{0}', space=vmem, size = 0x8000, scoped, tag = 'input window, operand 11, single buffered']
    #allocation15 [shape = 's32[1]{0}', space=sflag, size = 0x4, scoped, tag = 'scoped memory for t5_forward.1']
    #allocation16 [shape = 'u8[32768]{0}', space=vmem, size = 0x8000, scoped, tag = 'input window, operand 12, single buffered']
    #allocation17 [shape = 'u8[32768]{0}', space=vmem, size = 0x8000, scoped, tag = 'input window, operand 13, single buffered']
    #allocation18 [shape = 's32[1]{0}', space=sflag, size = 0x4, scoped, tag = 'scoped memory for t5_forward.1']
    #allocation19 [shape = 'u8[32768]{0}', space=vmem, size = 0x8000, scoped, tag = 'input window, operand 14, single buffered']
    #allocation20 [shape = 'u8[32768]{0}', space=vmem, size = 0x8000, scoped, tag = 'input window, operand 15, single buffered']
    #allocation21 [shape = 's32[1]{0}', space=sflag, size = 0x4, scoped, tag = 'scoped memory for t5_forward.1']
    #allocation22 [shape = 'u8[32768]{0}', space=vmem, size = 0x8000, scoped, tag = 'input window, operand 16, single buffered']
    #allocation23 [shape = 'u8[8192]{0}', space=vmem, size = 0x2000, scoped, tag = 'output window, operand 0']
    %27 = vsyncpa [#allocation3], 0
    %28 = vsyncpa [#allocation6], 0
    %29 = vsyncpa [#allocation9], 0
    %30 = vsyncpa [#allocation12], 0
    %31 = vsyncpa [#allocation15], 0
    %32 = vsyncpa [#allocation18], 0
    %33 = vsyncpa [#allocation21], 0
    %34 = vsyncpa [#allocation4], 0
    %s35 = scalar_lea.sflag [#allocation4], 1
    %36 = vsyncpa %s35, 0
    loop: start=0, step=1, limit=4
    $region2: #{t5_forward.1} parent=1 // loop_pre_header
      _
    $region3: #{t5_forward.1} parent=1 // loop_header
      %s38 = sphi 0, %s42
      %p39 = scmp.ge.s32.totalorder %s38, 4
      %s48 = sphi 0, %s50
      %s51 = sphi 0, %s48
      %s52 = sphi 0, %s51
      %s68 = sphi 0, %s52
      %s74 = sphi 0, %s76
      %s77 = sphi 0, %s74
      %s78 = sphi 0, %s77
      %s94 = sphi 0, %s78
      %s98 = sphi 0, %s98
      %s100 = sphi 0, %s98
      %s101 = sphi 0, %s100
      %s115 = sphi 0, %s101
      %s119 = sphi 0, %s119
      %s121 = sphi 0, %s119
      %s122 = sphi 0, %s121
      %s136 = sphi 0, %s122
      %s140 = sphi 0, %s140
      %s142 = sphi 0, %s140
      %s143 = sphi 0, %s142
      %s157 = sphi 0, %s143
      %s161 = sphi 0, %s161
      %s163 = sphi 0, %s161
      %s164 = sphi 0, %s163
      %s178 = sphi 0, %s164
      %s182 = sphi 0, %s182
      %s184 = sphi 0, %s182
      %s185 = sphi 0, %s184
      %s199 = sphi 0, %s185
      %s203 = sphi 0, %s203
      %s205 = sphi 0, %s203
      %s206 = sphi 0, %s205
      %s220 = sphi 0, %s206
      %s224 = sphi 0, %s224
      %s226 = sphi 0, %s224
      %s227 = sphi 0, %s226
      %s241 = sphi 0, %s227
      %s245 = sphi 0, %s245
      %s247 = sphi 0, %s245
      %s248 = sphi 0, %s247
      %s262 = sphi 0, %s248
      %s266 = sphi 0, %s266
      %s268 = sphi 0, %s266
      %s269 = sphi 0, %s268
      %s283 = sphi 0, %s269
      %s287 = sphi 0, %s287
      %s289 = sphi 0, %s287
      %s290 = sphi 0, %s289
      %s304 = sphi 0, %s290
      %s308 = sphi 0, %s308
      %s310 = sphi 0, %s308
      %s311 = sphi 0, %s310
      %s325 = sphi 0, %s311
      %s329 = sphi 0, %s329
      %s331 = sphi 0, %s329
      %s332 = sphi 0, %s331
      %s346 = sphi 0, %s332
      %s350 = sphi 0, %s350
      %s352 = sphi 0, %s350
      %s353 = sphi 0, %s352
      %s367 = sphi 0, %s353
      %s371 = sphi 0, %s371
      %s373 = sphi 0, %s371
      %s374 = sphi 0, %s373
      %s388 = sphi 0, %s374
      %s392 = sphi 0, %s392
      %s394 = sphi 0, %s392
      %s395 = sphi 0, %s394
      %s409 = sphi 0, %s395
      %s413 = sphi 0, %s413
      %s415 = sphi 0, %s413
      %s416 = sphi 0, %s415
      %s430 = sphi 0, %s416
      %s434 = sphi 0, %s434
      %s436 = sphi 0, %s434
      %s437 = sphi 0, %s436
      %s451 = sphi 0, %s437
      %s455 = sphi 0, %s455
      %s457 = sphi 0, %s455
      %s458 = sphi 0, %s457
      %s472 = sphi 0, %s458
      %s478 = sphi 0, %s480
      %s481 = sphi 0, %s478
      %s482 = sphi 0, %s481
      %s498 = sphi 0, %s482
      %s504 = sphi 0, %s506
      %s507 = sphi 0, %s504
      %s508 = sphi 0, %s507
      %s524 = sphi 0, %s508
    $region4: #{t5_forward.1} parent=1 // loop_header_branch
      %41 = sbr.rel (%p39) target = $region8
    $region5: #{t5_forward.1} parent=1 // loop_body
      %s43 = ssub.s32 %s38, 1
      %s44 = ssub.s32 %s38, 2
      %s45 = sadd.s32 %s38, 1
      %s46 = ssub.s32 %s38, %s45
      %p47 = scmp.eq.s32.totalorder %s46, 0
      %s49 = sadd.s32 %s48, 1
      %s50 = scalar_select %p47, %s48, %s49
      %p53 = pneg %p47
      %p54 = scmp.eq.s32.totalorder %s38, 1
      %p55 = por %p53, %p54
      %p56 = scmp.ne.s32.totalorder %s48, %s51
      %p57 = scmp.eq.s32.totalorder %s38, 0
      %p58 = por %p56, %p57
      %p59 = scmp.ne.s32.totalorder %s48, %s51
      %p60 = scmp.eq.s32.totalorder %s43, 1
      %p61 = por %p59, %p60
      %p62 = scmp.ne.s32.totalorder %s51, %s52
      %p63 = scmp.eq.s32.totalorder %s43, 0
      %p64 = por %p62, %p63
      %p65 = scmp.ne.s32.totalorder %s51, %s52
      %p66 = scmp.eq.s32.totalorder %s44, 1
      %p67 = por %p65, %p66
      %p69 = scmp.ne.s32.totalorder %s52, %s68
      %p70 = scmp.eq.s32.totalorder %s44, 0
      %p71 = por %p69, %p70
      %s72 = ssub.s32 %s38, %s45
      %p73 = scmp.eq.s32.totalorder %s72, 0
      %s75 = sadd.s32 %s74, 1
      %s76 = scalar_select %p73, %s74, %s75
      %p79 = pneg %p73
      %p80 = scmp.eq.s32.totalorder %s38, 1
      %p81 = por %p79, %p80
      %p82 = scmp.ne.s32.totalorder %s74, %s77
      %p83 = scmp.eq.s32.totalorder %s38, 0
      %p84 = por %p82, %p83
      %p85 = scmp.ne.s32.totalorder %s74, %s77
      %p86 = scmp.eq.s32.totalorder %s43, 1
      %p87 = por %p85, %p86
      %p88 = scmp.ne.s32.totalorder %s77, %s78
      %p89 = scmp.eq.s32.totalorder %s43, 0
      %p90 = por %p88, %p89
      %p91 = scmp.ne.s32.totalorder %s77, %s78
      %p92 = scmp.eq.s32.totalorder %s44, 1
      %p93 = por %p91, %p92
      %p95 = scmp.ne.s32.totalorder %s78, %s94
      %p96 = scmp.eq.s32.totalorder %s44, 0
      %p97 = por %p95, %p96
      %s99 = sadd.s32 %s98, 1
      %p102 = scmp.eq.s32.totalorder %s38, 1
      %p103 = scmp.ne.s32.totalorder %s98, %s100
      %p104 = scmp.eq.s32.totalorder %s38, 0
      %p105 = por %p103, %p104
      %p106 = scmp.ne.s32.totalorder %s98, %s100
      %p107 = scmp.eq.s32.totalorder %s43, 1
      %p108 = por %p106, %p107
      %p109 = scmp.ne.s32.totalorder %s100, %s101
      %p110 = scmp.eq.s32.totalorder %s43, 0
      %p111 = por %p109, %p110
      %p112 = scmp.ne.s32.totalorder %s100, %s101
      %p113 = scmp.eq.s32.totalorder %s44, 1
      %p114 = por %p112, %p113
      %p116 = scmp.ne.s32.totalorder %s101, %s115
      %p117 = scmp.eq.s32.totalorder %s44, 0
      %p118 = por %p116, %p117
      %s120 = sadd.s32 %s119, 1
      %p123 = scmp.eq.s32.totalorder %s38, 1
      %p124 = scmp.ne.s32.totalorder %s119, %s121
      %p125 = scmp.eq.s32.totalorder %s38, 0
      %p126 = por %p124, %p125
      %p127 = scmp.ne.s32.totalorder %s119, %s121
      %p128 = scmp.eq.s32.totalorder %s43, 1
      %p129 = por %p127, %p128
      %p130 = scmp.ne.s32.totalorder %s121, %s122
      %p131 = scmp.eq.s32.totalorder %s43, 0
      %p132 = por %p130, %p131
      %p133 = scmp.ne.s32.totalorder %s121, %s122
      %p134 = scmp.eq.s32.totalorder %s44, 1
      %p135 = por %p133, %p134
      %p137 = scmp.ne.s32.totalorder %s122, %s136
      %p138 = scmp.eq.s32.totalorder %s44, 0
      %p139 = por %p137, %p138
      %s141 = sadd.s32 %s140, 1
      %p144 = scmp.eq.s32.totalorder %s38, 1
      %p145 = scmp.ne.s32.totalorder %s140, %s142
      %p146 = scmp.eq.s32.totalorder %s38, 0
      %p147 = por %p145, %p146
      %p148 = scmp.ne.s32.totalorder %s140, %s142
      %p149 = scmp.eq.s32.totalorder %s43, 1
      %p150 = por %p148, %p149
      %p151 = scmp.ne.s32.totalorder %s142, %s143
      %p152 = scmp.eq.s32.totalorder %s43, 0
      %p153 = por %p151, %p152
      %p154 = scmp.ne.s32.totalorder %s142, %s143
      %p155 = scmp.eq.s32.totalorder %s44, 1
      %p156 = por %p154, %p155
      %p158 = scmp.ne.s32.totalorder %s143, %s157
      %p159 = scmp.eq.s32.totalorder %s44, 0
      %p160 = por %p158, %p159
      %s162 = sadd.s32 %s161, 1
      %p165 = scmp.eq.s32.totalorder %s38, 1
      %p166 = scmp.ne.s32.totalorder %s161, %s163
      %p167 = scmp.eq.s32.totalorder %s38, 0
      %p168 = por %p166, %p167
      %p169 = scmp.ne.s32.totalorder %s161, %s163
      %p170 = scmp.eq.s32.totalorder %s43, 1
      %p171 = por %p169, %p170
      %p172 = scmp.ne.s32.totalorder %s163, %s164
      %p173 = scmp.eq.s32.totalorder %s43, 0
      %p174 = por %p172, %p173
      %p175 = scmp.ne.s32.totalorder %s163, %s164
      %p176 = scmp.eq.s32.totalorder %s44, 1
      %p177 = por %p175, %p176
      %p179 = scmp.ne.s32.totalorder %s164, %s178
      %p180 = scmp.eq.s32.totalorder %s44, 0
      %p181 = por %p179, %p180
      %s183 = sadd.s32 %s182, 1
      %p186 = scmp.eq.s32.totalorder %s38, 1
      %p187 = scmp.ne.s32.totalorder %s182, %s184
      %p188 = scmp.eq.s32.totalorder %s38, 0
      %p189 = por %p187, %p188
      %p190 = scmp.ne.s32.totalorder %s182, %s184
      %p191 = scmp.eq.s32.totalorder %s43, 1
      %p192 = por %p190, %p191
      %p193 = scmp.ne.s32.totalorder %s184, %s185
      %p194 = scmp.eq.s32.totalorder %s43, 0
      %p195 = por %p193, %p194
      %p196 = scmp.ne.s32.totalorder %s184, %s185
      %p197 = scmp.eq.s32.totalorder %s44, 1
      %p198 = por %p196, %p197
      %p200 = scmp.ne.s32.totalorder %s185, %s199
      %p201 = scmp.eq.s32.totalorder %s44, 0
      %p202 = por %p200, %p201
      %s204 = sadd.s32 %s203, 1
      %p207 = scmp.eq.s32.totalorder %s38, 1
      %p208 = scmp.ne.s32.totalorder %s203, %s205
      %p209 = scmp.eq.s32.totalorder %s38, 0
      %p210 = por %p208, %p209
      %p211 = scmp.ne.s32.totalorder %s203, %s205
      %p212 = scmp.eq.s32.totalorder %s43, 1
      %p213 = por %p211, %p212
      %p214 = scmp.ne.s32.totalorder %s205, %s206
      %p215 = scmp.eq.s32.totalorder %s43, 0
      %p216 = por %p214, %p215
      %p217 = scmp.ne.s32.totalorder %s205, %s206
      %p218 = scmp.eq.s32.totalorder %s44, 1
      %p219 = por %p217, %p218
      %p221 = scmp.ne.s32.totalorder %s206, %s220
      %p222 = scmp.eq.s32.totalorder %s44, 0
      %p223 = por %p221, %p222
      %s225 = sadd.s32 %s224, 1
      %p228 = scmp.eq.s32.totalorder %s38, 1
      %p229 = scmp.ne.s32.totalorder %s224, %s226
      %p230 = scmp.eq.s32.totalorder %s38, 0
      %p231 = por %p229, %p230
      %p232 = scmp.ne.s32.totalorder %s224, %s226
      %p233 = scmp.eq.s32.totalorder %s43, 1
      %p234 = por %p232, %p233
      %p235 = scmp.ne.s32.totalorder %s226, %s227
      %p236 = scmp.eq.s32.totalorder %s43, 0
      %p237 = por %p235, %p236
      %p238 = scmp.ne.s32.totalorder %s226, %s227
      %p239 = scmp.eq.s32.totalorder %s44, 1
      %p240 = por %p238, %p239
      %p242 = scmp.ne.s32.totalorder %s227, %s241
      %p243 = scmp.eq.s32.totalorder %s44, 0
      %p244 = por %p242, %p243
      %s246 = sadd.s32 %s245, 1
      %p249 = scmp.eq.s32.totalorder %s38, 1
      %p250 = scmp.ne.s32.totalorder %s245, %s247
      %p251 = scmp.eq.s32.totalorder %s38, 0
      %p252 = por %p250, %p251
      %p253 = scmp.ne.s32.totalorder %s245, %s247
      %p254 = scmp.eq.s32.totalorder %s43, 1
      %p255 = por %p253, %p254
      %p256 = scmp.ne.s32.totalorder %s247, %s248
      %p257 = scmp.eq.s32.totalorder %s43, 0
      %p258 = por %p256, %p257
      %p259 = scmp.ne.s32.totalorder %s247, %s248
      %p260 = scmp.eq.s32.totalorder %s44, 1
      %p261 = por %p259, %p260
      %p263 = scmp.ne.s32.totalorder %s248, %s262
      %p264 = scmp.eq.s32.totalorder %s44, 0
      %p265 = por %p263, %p264
      %s267 = sadd.s32 %s266, 1
      %p270 = scmp.eq.s32.totalorder %s38, 1
      %p271 = scmp.ne.s32.totalorder %s266, %s268
      %p272 = scmp.eq.s32.totalorder %s38, 0
      %p273 = por %p271, %p272
      %p274 = scmp.ne.s32.totalorder %s266, %s268
      %p275 = scmp.eq.s32.totalorder %s43, 1
      %p276 = por %p274, %p275
      %p277 = scmp.ne.s32.totalorder %s268, %s269
      %p278 = scmp.eq.s32.totalorder %s43, 0
      %p279 = por %p277, %p278
      %p280 = scmp.ne.s32.totalorder %s268, %s269
      %p281 = scmp.eq.s32.totalorder %s44, 1
      %p282 = por %p280, %p281
      %p284 = scmp.ne.s32.totalorder %s269, %s283
      %p285 = scmp.eq.s32.totalorder %s44, 0
      %p286 = por %p284, %p285
      %s288 = sadd.s32 %s287, 1
      %p291 = scmp.eq.s32.totalorder %s38, 1
      %p292 = scmp.ne.s32.totalorder %s287, %s289
      %p293 = scmp.eq.s32.totalorder %s38, 0
      %p294 = por %p292, %p293
      %p295 = scmp.ne.s32.totalorder %s287, %s289
      %p296 = scmp.eq.s32.totalorder %s43, 1
      %p297 = por %p295, %p296
      %p298 = scmp.ne.s32.totalorder %s289, %s290
      %p299 = scmp.eq.s32.totalorder %s43, 0
      %p300 = por %p298, %p299
      %p301 = scmp.ne.s32.totalorder %s289, %s290
      %p302 = scmp.eq.s32.totalorder %s44, 1
      %p303 = por %p301, %p302
      %p305 = scmp.ne.s32.totalorder %s290, %s304
      %p306 = scmp.eq.s32.totalorder %s44, 0
      %p307 = por %p305, %p306
      %s309 = sadd.s32 %s308, 1
      %p312 = scmp.eq.s32.totalorder %s38, 1
      %p313 = scmp.ne.s32.totalorder %s308, %s310
      %p314 = scmp.eq.s32.totalorder %s38, 0
      %p315 = por %p313, %p314
      %p316 = scmp.ne.s32.totalorder %s308, %s310
      %p317 = scmp.eq.s32.totalorder %s43, 1
      %p318 = por %p316, %p317
      %p319 = scmp.ne.s32.totalorder %s310, %s311
      %p320 = scmp.eq.s32.totalorder %s43, 0
      %p321 = por %p319, %p320
      %p322 = scmp.ne.s32.totalorder %s310, %s311
      %p323 = scmp.eq.s32.totalorder %s44, 1
      %p324 = por %p322, %p323
      %p326 = scmp.ne.s32.totalorder %s311, %s325
      %p327 = scmp.eq.s32.totalorder %s44, 0
      %p328 = por %p326, %p327
      %s330 = sadd.s32 %s329, 1
      %p333 = scmp.eq.s32.totalorder %s38, 1
      %p334 = scmp.ne.s32.totalorder %s329, %s331
      %p335 = scmp.eq.s32.totalorder %s38, 0
      %p336 = por %p334, %p335
      %p337 = scmp.ne.s32.totalorder %s329, %s331
      %p338 = scmp.eq.s32.totalorder %s43, 1
      %p339 = por %p337, %p338
      %p340 = scmp.ne.s32.totalorder %s331, %s332
      %p341 = scmp.eq.s32.totalorder %s43, 0
      %p342 = por %p340, %p341
      %p343 = scmp.ne.s32.totalorder %s331, %s332
      %p344 = scmp.eq.s32.totalorder %s44, 1
      %p345 = por %p343, %p344
      %p347 = scmp.ne.s32.totalorder %s332, %s346
      %p348 = scmp.eq.s32.totalorder %s44, 0
      %p349 = por %p347, %p348
      %s351 = sadd.s32 %s350, 1
      %p354 = scmp.eq.s32.totalorder %s38, 1
      %p355 = scmp.ne.s32.totalorder %s350, %s352
      %p356 = scmp.eq.s32.totalorder %s38, 0
      %p357 = por %p355, %p356
      %p358 = scmp.ne.s32.totalorder %s350, %s352
      %p359 = scmp.eq.s32.totalorder %s43, 1
      %p360 = por %p358, %p359
      %p361 = scmp.ne.s32.totalorder %s352, %s353
      %p362 = scmp.eq.s32.totalorder %s43, 0
      %p363 = por %p361, %p362
      %p364 = scmp.ne.s32.totalorder %s352, %s353
      %p365 = scmp.eq.s32.totalorder %s44, 1
      %p366 = por %p364, %p365
      %p368 = scmp.ne.s32.totalorder %s353, %s367
      %p369 = scmp.eq.s32.totalorder %s44, 0
      %p370 = por %p368, %p369
      %s372 = sadd.s32 %s371, 1
      %p375 = scmp.eq.s32.totalorder %s38, 1
      %p376 = scmp.ne.s32.totalorder %s371, %s373
      %p377 = scmp.eq.s32.totalorder %s38, 0
      %p378 = por %p376, %p377
      %p379 = scmp.ne.s32.totalorder %s371, %s373
      %p380 = scmp.eq.s32.totalorder %s43, 1
      %p381 = por %p379, %p380
      %p382 = scmp.ne.s32.totalorder %s373, %s374
      %p383 = scmp.eq.s32.totalorder %s43, 0
      %p384 = por %p382, %p383
      %p385 = scmp.ne.s32.totalorder %s373, %s374
      %p386 = scmp.eq.s32.totalorder %s44, 1
      %p387 = por %p385, %p386
      %p389 = scmp.ne.s32.totalorder %s374, %s388
      %p390 = scmp.eq.s32.totalorder %s44, 0
      %p391 = por %p389, %p390
      %s393 = sadd.s32 %s392, 1
      %p396 = scmp.eq.s32.totalorder %s38, 1
      %p397 = scmp.ne.s32.totalorder %s392, %s394
      %p398 = scmp.eq.s32.totalorder %s38, 0
      %p399 = por %p397, %p398
      %p400 = scmp.ne.s32.totalorder %s392, %s394
      %p401 = scmp.eq.s32.totalorder %s43, 1
      %p402 = por %p400, %p401
      %p403 = scmp.ne.s32.totalorder %s394, %s395
      %p404 = scmp.eq.s32.totalorder %s43, 0
      %p405 = por %p403, %p404
      %p406 = scmp.ne.s32.totalorder %s394, %s395
      %p407 = scmp.eq.s32.totalorder %s44, 1
      %p408 = por %p406, %p407
      %p410 = scmp.ne.s32.totalorder %s395, %s409
      %p411 = scmp.eq.s32.totalorder %s44, 0
      %p412 = por %p410, %p411
      %s414 = sadd.s32 %s413, 1
      %p417 = scmp.eq.s32.totalorder %s38, 1
      %p418 = scmp.ne.s32.totalorder %s413, %s415
      %p419 = scmp.eq.s32.totalorder %s38, 0
      %p420 = por %p418, %p419
      %p421 = scmp.ne.s32.totalorder %s413, %s415
      %p422 = scmp.eq.s32.totalorder %s43, 1
      %p423 = por %p421, %p422
      %p424 = scmp.ne.s32.totalorder %s415, %s416
      %p425 = scmp.eq.s32.totalorder %s43, 0
      %p426 = por %p424, %p425
      %p427 = scmp.ne.s32.totalorder %s415, %s416
      %p428 = scmp.eq.s32.totalorder %s44, 1
      %p429 = por %p427, %p428
      %p431 = scmp.ne.s32.totalorder %s416, %s430
      %p432 = scmp.eq.s32.totalorder %s44, 0
      %p433 = por %p431, %p432
      %s435 = sadd.s32 %s434, 1
      %p438 = scmp.eq.s32.totalorder %s38, 1
      %p439 = scmp.ne.s32.totalorder %s434, %s436
      %p440 = scmp.eq.s32.totalorder %s38, 0
      %p441 = por %p439, %p440
      %p442 = scmp.ne.s32.totalorder %s434, %s436
      %p443 = scmp.eq.s32.totalorder %s43, 1
      %p444 = por %p442, %p443
      %p445 = scmp.ne.s32.totalorder %s436, %s437
      %p446 = scmp.eq.s32.totalorder %s43, 0
      %p447 = por %p445, %p446
      %p448 = scmp.ne.s32.totalorder %s436, %s437
      %p449 = scmp.eq.s32.totalorder %s44, 1
      %p450 = por %p448, %p449
      %p452 = scmp.ne.s32.totalorder %s437, %s451
      %p453 = scmp.eq.s32.totalorder %s44, 0
      %p454 = por %p452, %p453
      %s456 = sadd.s32 %s455, 1
      %p459 = scmp.eq.s32.totalorder %s38, 1
      %p460 = scmp.ne.s32.totalorder %s455, %s457
      %p461 = scmp.eq.s32.totalorder %s38, 0
      %p462 = por %p460, %p461
      %p463 = scmp.ne.s32.totalorder %s455, %s457
      %p464 = scmp.eq.s32.totalorder %s43, 1
      %p465 = por %p463, %p464
      %p466 = scmp.ne.s32.totalorder %s457, %s458
      %p467 = scmp.eq.s32.totalorder %s43, 0
      %p468 = por %p466, %p467
      %p469 = scmp.ne.s32.totalorder %s457, %s458
      %p470 = scmp.eq.s32.totalorder %s44, 1
      %p471 = por %p469, %p470
      %p473 = scmp.ne.s32.totalorder %s458, %s472
      %p474 = scmp.eq.s32.totalorder %s44, 0
      %p475 = por %p473, %p474
      %s476 = ssub.s32 %s38, %s45
      %p477 = scmp.eq.s32.totalorder %s476, 0
      %s479 = sadd.s32 %s478, 1
      %s480 = scalar_select %p477, %s478, %s479
      %p483 = pneg %p477
      %p484 = scmp.eq.s32.totalorder %s38, 1
      %p485 = por %p483, %p484
      %p486 = scmp.ne.s32.totalorder %s478, %s481
      %p487 = scmp.eq.s32.totalorder %s38, 0
      %p488 = por %p486, %p487
      %p489 = scmp.ne.s32.totalorder %s478, %s481
      %p490 = scmp.eq.s32.totalorder %s43, 1
      %p491 = por %p489, %p490
      %p492 = scmp.ne.s32.totalorder %s481, %s482
      %p493 = scmp.eq.s32.totalorder %s43, 0
      %p494 = por %p492, %p493
      %p495 = scmp.ne.s32.totalorder %s481, %s482
      %p496 = scmp.eq.s32.totalorder %s44, 1
      %p497 = por %p495, %p496
      %p499 = scmp.ne.s32.totalorder %s482, %s498
      %p500 = scmp.eq.s32.totalorder %s44, 0
      %p501 = por %p499, %p500
      %s502 = ssub.s32 %s38, %s45
      %p503 = scmp.eq.s32.totalorder %s502, 0
      %s505 = sadd.s32 %s504, 1
      %s506 = scalar_select %p503, %s504, %s505
      %p509 = pneg %p503
      %p510 = scmp.eq.s32.totalorder %s38, 1
      %p511 = por %p509, %p510
      %p512 = scmp.ne.s32.totalorder %s504, %s507
      %p513 = scmp.eq.s32.totalorder %s38, 0
      %p514 = por %p512, %p513
      %p515 = scmp.ne.s32.totalorder %s504, %s507
      %p516 = scmp.eq.s32.totalorder %s43, 1
      %p517 = por %p515, %p516
      %p518 = scmp.ne.s32.totalorder %s507, %s508
      %p519 = scmp.eq.s32.totalorder %s43, 0
      %p520 = por %p518, %p519
      %p521 = scmp.ne.s32.totalorder %s507, %s508
      %p522 = scmp.eq.s32.totalorder %s44, 1
      %p523 = por %p521, %p522
      %p525 = scmp.ne.s32.totalorder %s508, %s524
      %p526 = scmp.eq.s32.totalorder %s44, 0
      %p527 = por %p525, %p526
      %p528 = scmp.le.s32.totalorder 1, %s38
      %p529 = scmp.lt.s32.totalorder %s38, 3
      %p530 = pnand %p528, %p529
      %p531 = pneg %p530
      // Predicated region
      $region9: #{t5_forward.1} parent=5 // pred_check
        _
      $region10: #{t5_forward.1} parent=5 // pred_check_branch
        %533 = sbr.rel (%p530) target = $region12
      $region11: #{t5_forward.1} parent=5 // pred_region
        %s534 = ssub.s32 %s38, 1
        // Predicated region
        $region13: #{t5_forward.1} parent=11 // pred_check
          %p535 = pneg %p111
        $region14: #{t5_forward.1} parent=11 // pred_check_branch
          %537 = sbr.rel (%p535) target = $region16
        $region15: #{t5_forward.1} parent=11 // pred_region
          %s539 = ssub.s32 2048, 2048
          %540 = vsyncadd [#allocation3], %s539
          %s541 = sshll.u32 [#allocation2], 4
          %s542 = int_to_ptr.vmem [resolvable:$true] %s541
          %547 = dma.hbm_to_vmem [thread:$0]  %s2, 2048, %s542, [#allocation3], 128, 128, 8
        $region16: #{t5_forward.1} parent=11 // pred_fallthru
          _
        // Predicated region
        $region17: #{t5_forward.1} parent=11 // pred_check
          %p548 = pneg %p132
        $region18: #{t5_forward.1} parent=11 // pred_check_branch
          %550 = sbr.rel (%p548) target = $region20
        $region19: #{t5_forward.1} parent=11 // pred_region
          %s552 = ssub.s32 512, 512
          %553 = vsyncadd [#allocation6], %s552
          %s554 = sshll.u32 [#allocation5], 4
          %s555 = int_to_ptr.vmem [resolvable:$true] %s554
          %560 = dma.hbm_to_vmem [thread:$0]  %s3, 512, %s555, [#allocation6], 128, 128, 8
        $region20: #{t5_forward.1} parent=11 // pred_fallthru
          _
        // Predicated region
        $region21: #{t5_forward.1} parent=11 // pred_check
          %p561 = pneg %p153
        $region22: #{t5_forward.1} parent=11 // pred_check_branch
          %563 = sbr.rel (%p561) target = $region24
        $region23: #{t5_forward.1} parent=11 // pred_region
          %s565 = ssub.s32 512, 512
          %566 = vsyncadd [#allocation6], %s565
          %s567 = sshll.u32 [#allocation7], 4
          %s568 = int_to_ptr.vmem [resolvable:$true] %s567
          %573 = dma.hbm_to_vmem [thread:$0]  %s4, 512, %s568, [#allocation6], 128, 128, 8
        $region24: #{t5_forward.1} parent=11 // pred_fallthru
          _
        // Predicated region
        $region25: #{t5_forward.1} parent=11 // pred_check
          %p574 = pneg %p174
        $region26: #{t5_forward.1} parent=11 // pred_check_branch
          %576 = sbr.rel (%p574) target = $region28
        $region27: #{t5_forward.1} parent=11 // pred_region
          %s578 = ssub.s32 1024, 1024
          %579 = vsyncadd [#allocation9], %s578
          %s580 = sshll.u32 [#allocation8], 4
          %s581 = int_to_ptr.vmem [resolvable:$true] %s580
          %586 = dma.hbm_to_vmem [thread:$0]  %s5, 1024, %s581, [#allocation9], 128, 128, 8
        $region28: #{t5_forward.1} parent=11 // pred_fallthru
          _
        // Predicated region
        $region29: #{t5_forward.1} parent=11 // pred_check
          %p587 = pneg %p195
        $region30: #{t5_forward.1} parent=11 // pred_check_branch
          %589 = sbr.rel (%p587) target = $region32
        $region31: #{t5_forward.1} parent=11 // pred_region
          %s591 = ssub.s32 1024, 1024
          %592 = vsyncadd [#allocation9], %s591
          %s593 = sshll.u32 [#allocation10], 4
          %s594 = int_to_ptr.vmem [resolvable:$true] %s593
          %599 = dma.hbm_to_vmem [thread:$0]  %s6, 1024, %s594, [#allocation9], 128, 128, 8
        $region32: #{t5_forward.1} parent=11 // pred_fallthru
          _
        // Predicated region
        $region33: #{t5_forward.1} parent=11 // pred_check
          %p600 = pneg %p216
        $region34: #{t5_forward.1} parent=11 // pred_check_branch
          %602 = sbr.rel (%p600) target = $region36
        $region35: #{t5_forward.1} parent=11 // pred_region
          %s604 = ssub.s32 1024, 1024
          %605 = vsyncadd [#allocation12], %s604
          %s606 = sshll.u32 [#allocation11], 4
          %s607 = int_to_ptr.vmem [resolvable:$true] %s606
          %612 = dma.hbm_to_vmem [thread:$0]  %s7, 1024, %s607, [#allocation12], 128, 128, 8
        $region36: #{t5_forward.1} parent=11 // pred_fallthru
          _
        // Predicated region
        $region37: #{t5_forward.1} parent=11 // pred_check
          %p613 = pneg %p237
        $region38: #{t5_forward.1} parent=11 // pred_check_branch
          %615 = sbr.rel (%p613) target = $region40
        $region39: #{t5_forward.1} parent=11 // pred_region
          %s617 = ssub.s32 2048, 2048
          %618 = vsyncadd [#allocation12], %s617
          %s619 = sshll.u32 [#allocation13], 4
          %s620 = int_to_ptr.vmem [resolvable:$true] %s619
          %625 = dma.hbm_to_vmem [thread:$0]  %s8, 2048, %s620, [#allocation12], 128, 128, 8
        $region40: #{t5_forward.1} parent=11 // pred_fallthru
          _
        // Predicated region
        $region41: #{t5_forward.1} parent=11 // pred_check
          %p626 = pneg %p258
        $region42: #{t5_forward.1} parent=11 // pred_check_branch
          %628 = sbr.rel (%p626) target = $region44
        $region43: #{t5_forward.1} parent=11 // pred_region
          _
        $region44: #{t5_forward.1} parent=11 // pred_fallthru
          _
        // Predicated region
        $region45: #{t5_forward.1} parent=11 // pred_check
          %p629 = pneg %p279
        $region46: #{t5_forward.1} parent=11 // pred_check_branch
          %631 = sbr.rel (%p629) target = $region48
        $region47: #{t5_forward.1} parent=11 // pred_region
          _
        $region48: #{t5_forward.1} parent=11 // pred_fallthru
          _
        // Predicated region
        $region49: #{t5_forward.1} parent=11 // pred_check
          %p632 = pneg %p300
        $region50: #{t5_forward.1} parent=11 // pred_check_branch
          %634 = sbr.rel (%p632) target = $region52
        $region51: #{t5_forward.1} parent=11 // pred_region
          %s636 = ssub.s32 1024, 1024
          %637 = vsyncadd [#allocation15], %s636
          %s638 = sshll.u32 [#allocation14], 4
          %s639 = int_to_ptr.vmem [resolvable:$true] %s638
          %644 = dma.hbm_to_vmem [thread:$0]  %s11, 1024, %s639, [#allocation15], 128, 128, 8
        $region52: #{t5_forward.1} parent=11 // pred_fallthru
          _
        // Predicated region
        $region53: #{t5_forward.1} parent=11 // pred_check
          %p645 = pneg %p321
        $region54: #{t5_forward.1} parent=11 // pred_check_branch
          %647 = sbr.rel (%p645) target = $region56
        $region55: #{t5_forward.1} parent=11 // pred_region
          %s649 = ssub.s32 1024, 1024
          %650 = vsyncadd [#allocation15], %s649
          %s651 = sshll.u32 [#allocation16], 4
          %s652 = int_to_ptr.vmem [resolvable:$true] %s651
          %657 = dma.hbm_to_vmem [thread:$0]  %s12, 1024, %s652, [#allocation15], 128, 128, 8
        $region56: #{t5_forward.1} parent=11 // pred_fallthru
          _
        // Predicated region
        $region57: #{t5_forward.1} parent=11 // pred_check
          %p658 = pneg %p342
        $region58: #{t5_forward.1} parent=11 // pred_check_branch
          %660 = sbr.rel (%p658) target = $region60
        $region59: #{t5_forward.1} parent=11 // pred_region
          %s662 = ssub.s32 1024, 1024
          %663 = vsyncadd [#allocation18], %s662
          %s664 = sshll.u32 [#allocation17], 4
          %s665 = int_to_ptr.vmem [resolvable:$true] %s664
          %670 = dma.hbm_to_vmem [thread:$0]  %s13, 1024, %s665, [#allocation18], 128, 128, 8
        $region60: #{t5_forward.1} parent=11 // pred_fallthru
          _
        // Predicated region
        $region61: #{t5_forward.1} parent=11 // pred_check
          %p671 = pneg %p363
        $region62: #{t5_forward.1} parent=11 // pred_check_branch
          %673 = sbr.rel (%p671) target = $region64
        $region63: #{t5_forward.1} parent=11 // pred_region
          %s675 = ssub.s32 1024, 1024
          %676 = vsyncadd [#allocation18], %s675
          %s677 = sshll.u32 [#allocation19], 4
          %s678 = int_to_ptr.vmem [resolvable:$true] %s677
          %683 = dma.hbm_to_vmem [thread:$0]  %s14, 1024, %s678, [#allocation18], 128, 128, 8
        $region64: #{t5_forward.1} parent=11 // pred_fallthru
          _
        // Predicated region
        $region65: #{t5_forward.1} parent=11 // pred_check
          %p684 = pneg %p384
        $region66: #{t5_forward.1} parent=11 // pred_check_branch
          %686 = sbr.rel (%p684) target = $region68
        $region67: #{t5_forward.1} parent=11 // pred_region
          %s688 = ssub.s32 1024, 1024
          %689 = vsyncadd [#allocation21], %s688
          %s690 = sshll.u32 [#allocation20], 4
          %s691 = int_to_ptr.vmem [resolvable:$true] %s690
          %696 = dma.hbm_to_vmem [thread:$0]  %s15, 1024, %s691, [#allocation21], 128, 128, 8
        $region68: #{t5_forward.1} parent=11 // pred_fallthru
          _
        // Predicated region
        $region69: #{t5_forward.1} parent=11 // pred_check
          %p697 = pneg %p405
        $region70: #{t5_forward.1} parent=11 // pred_check_branch
          %699 = sbr.rel (%p697) target = $region72
        $region71: #{t5_forward.1} parent=11 // pred_region
          %s701 = ssub.s32 1024, 1024
          %702 = vsyncadd [#allocation21], %s701
          %s703 = sshll.u32 [#allocation22], 4
          %s704 = int_to_ptr.vmem [resolvable:$true] %s703
          %709 = dma.hbm_to_vmem [thread:$0]  %s16, 1024, %s704, [#allocation21], 128, 128, 8
        $region72: #{t5_forward.1} parent=11 // pred_fallthru
          _
        // Predicated region
        $region73: #{t5_forward.1} parent=11 // pred_check
          %p710 = pneg %p426
        $region74: #{t5_forward.1} parent=11 // pred_check_branch
          %712 = sbr.rel (%p710) target = $region76
        $region75: #{t5_forward.1} parent=11 // pred_region
          _
        $region76: #{t5_forward.1} parent=11 // pred_fallthru
          _
        // Predicated region
        $region77: #{t5_forward.1} parent=11 // pred_check
          %p713 = pneg %p447
        $region78: #{t5_forward.1} parent=11 // pred_check_branch
          %715 = sbr.rel (%p713) target = $region80
        $region79: #{t5_forward.1} parent=11 // pred_region
          _
        $region80: #{t5_forward.1} parent=11 // pred_fallthru
          _
        // Predicated region
        $region81: #{t5_forward.1} parent=11 // pred_check
          %p716 = pneg %p468
        $region82: #{t5_forward.1} parent=11 // pred_check_branch
          %718 = sbr.rel (%p716) target = $region84
        $region83: #{t5_forward.1} parent=11 // pred_region
          _
        $region84: #{t5_forward.1} parent=11 // pred_fallthru
          _
      $region12: #{t5_forward.1} parent=5 // pred_fallthru
        _
      %p719 = scmp.lt.s32.totalorder %s38, 2
      // Predicated region
      $region85: #{t5_forward.1} parent=5 // pred_check
        %p720 = pneg %p719
      $region86: #{t5_forward.1} parent=5 // pred_check_branch
        %722 = sbr.rel (%p720) target = $region88
      $region87: #{t5_forward.1} parent=5 // pred_region
        // Predicated region
        $region89: #{t5_forward.1} parent=87 // pred_check
          %p723 = pneg %p58
        $region90: #{t5_forward.1} parent=87 // pred_check_branch
          %725 = sbr.rel (%p723) target = $region92
        $region91: #{t5_forward.1} parent=87 // pred_region
          %p726 = scmp.lt.s32.totalorder %s38, 1
          %s727 = scalar_select %p726, %s38, 1
          %s728 = smul.addr %s727, 2
          %s729 = smul.addr %s728, 8
          %s730 = scalar_lea.vmem %s0, %s729
        $region92: #{t5_forward.1} parent=87 // pred_fallthru
          _
        // Predicated region
        $region93: #{t5_forward.1} parent=87 // pred_check
          %p731 = pneg %p84
        $region94: #{t5_forward.1} parent=87 // pred_check_branch
          %733 = sbr.rel (%p731) target = $region96
        $region95: #{t5_forward.1} parent=87 // pred_region
          %p734 = scmp.lt.s32.totalorder %s38, 1
          %s735 = scalar_select %p734, %s38, 1
          %s736 = smul.addr %s735, 8
          %s737 = scalar_lea.vmem %s1, %s736
        $region96: #{t5_forward.1} parent=87 // pred_fallthru
          _
      $region88: #{t5_forward.1} parent=5 // pred_fallthru
        _
      %p738 = scmp.le.s32.totalorder 1, %s38
      %p739 = scmp.lt.s32.totalorder %s38, 3
      %p740 = pnand %p738, %p739
      %p741 = pneg %p740
      // Predicated region
      $region97: #{t5_forward.1} parent=5 // pred_check
        _
      $region98: #{t5_forward.1} parent=5 // pred_check_branch
        %743 = sbr.rel (%p740) target = $region100
      $region99: #{t5_forward.1} parent=5 // pred_region
        %s744 = ssub.s32 %s38, 1
        // Predicated region
        $region101: #{t5_forward.1} parent=99 // pred_check
          %p745 = pneg %p111
        $region102: #{t5_forward.1} parent=99 // pred_check_branch
          %747 = sbr.rel (%p745) target = $region104
        $region103: #{t5_forward.1} parent=99 // pred_region
          %748 = dma.done [#allocation3], 2048
        $region104: #{t5_forward.1} parent=99 // pred_fallthru
          _
        // Predicated region
        $region105: #{t5_forward.1} parent=99 // pred_check
          %p749 = pneg %p132
        $region106: #{t5_forward.1} parent=99 // pred_check_branch
          %751 = sbr.rel (%p749) target = $region108
        $region107: #{t5_forward.1} parent=99 // pred_region
          %752 = dma.done [#allocation6], 512
        $region108: #{t5_forward.1} parent=99 // pred_fallthru
          _
        // Predicated region
        $region109: #{t5_forward.1} parent=99 // pred_check
          %p753 = pneg %p153
        $region110: #{t5_forward.1} parent=99 // pred_check_branch
          %755 = sbr.rel (%p753) target = $region112
        $region111: #{t5_forward.1} parent=99 // pred_region
          %756 = dma.done [#allocation6], 512
        $region112: #{t5_forward.1} parent=99 // pred_fallthru
          _
        // Predicated region
        $region113: #{t5_forward.1} parent=99 // pred_check
          %p757 = pneg %p174
        $region114: #{t5_forward.1} parent=99 // pred_check_branch
          %759 = sbr.rel (%p757) target = $region116
        $region115: #{t5_forward.1} parent=99 // pred_region
          %760 = dma.done [#allocation9], 1024
        $region116: #{t5_forward.1} parent=99 // pred_fallthru
          _
        // Predicated region
        $region117: #{t5_forward.1} parent=99 // pred_check
          %p761 = pneg %p195
        $region118: #{t5_forward.1} parent=99 // pred_check_branch
          %763 = sbr.rel (%p761) target = $region120
        $region119: #{t5_forward.1} parent=99 // pred_region
          %764 = dma.done [#allocation9], 1024
        $region120: #{t5_forward.1} parent=99 // pred_fallthru
          _
        // Predicated region
        $region121: #{t5_forward.1} parent=99 // pred_check
          %p765 = pneg %p216
        $region122: #{t5_forward.1} parent=99 // pred_check_branch
          %767 = sbr.rel (%p765) target = $region124
        $region123: #{t5_forward.1} parent=99 // pred_region
          %768 = dma.done [#allocation12], 1024
        $region124: #{t5_forward.1} parent=99 // pred_fallthru
          _
        // Predicated region
        $region125: #{t5_forward.1} parent=99 // pred_check
          %p769 = pneg %p237
        $region126: #{t5_forward.1} parent=99 // pred_check_branch
          %771 = sbr.rel (%p769) target = $region128
        $region127: #{t5_forward.1} parent=99 // pred_region
          %772 = dma.done [#allocation12], 2048
        $region128: #{t5_forward.1} parent=99 // pred_fallthru
          _
        // Predicated region
        $region129: #{t5_forward.1} parent=99 // pred_check
          %p773 = pneg %p300
        $region130: #{t5_forward.1} parent=99 // pred_check_branch
          %775 = sbr.rel (%p773) target = $region132
        $region131: #{t5_forward.1} parent=99 // pred_region
          %776 = dma.done [#allocation15], 1024
        $region132: #{t5_forward.1} parent=99 // pred_fallthru
          _
        // Predicated region
        $region133: #{t5_forward.1} parent=99 // pred_check
          %p777 = pneg %p321
        $region134: #{t5_forward.1} parent=99 // pred_check_branch
          %779 = sbr.rel (%p777) target = $region136
        $region135: #{t5_forward.1} parent=99 // pred_region
          %780 = dma.done [#allocation15], 1024
        $region136: #{t5_forward.1} parent=99 // pred_fallthru
          _
        // Predicated region
        $region137: #{t5_forward.1} parent=99 // pred_check
          %p781 = pneg %p342
        $region138: #{t5_forward.1} parent=99 // pred_check_branch
          %783 = sbr.rel (%p781) target = $region140
        $region139: #{t5_forward.1} parent=99 // pred_region
          %784 = dma.done [#allocation18], 1024
        $region140: #{t5_forward.1} parent=99 // pred_fallthru
          _
        // Predicated region
        $region141: #{t5_forward.1} parent=99 // pred_check
          %p785 = pneg %p363
        $region142: #{t5_forward.1} parent=99 // pred_check_branch
          %787 = sbr.rel (%p785) target = $region144
        $region143: #{t5_forward.1} parent=99 // pred_region
          %788 = dma.done [#allocation18], 1024
        $region144: #{t5_forward.1} parent=99 // pred_fallthru
          _
        // Predicated region
        $region145: #{t5_forward.1} parent=99 // pred_check
          %p789 = pneg %p384
        $region146: #{t5_forward.1} parent=99 // pred_check_branch
          %791 = sbr.rel (%p789) target = $region148
        $region147: #{t5_forward.1} parent=99 // pred_region
          %792 = dma.done [#allocation21], 1024
        $region148: #{t5_forward.1} parent=99 // pred_fallthru
          _
        // Predicated region
        $region149: #{t5_forward.1} parent=99 // pred_check
          %p793 = pneg %p405
        $region150: #{t5_forward.1} parent=99 // pred_check_branch
          %795 = sbr.rel (%p793) target = $region152
        $region151: #{t5_forward.1} parent=99 // pred_region
          %796 = dma.done [#allocation21], 1024
        $region152: #{t5_forward.1} parent=99 // pred_fallthru
          _
        %p797 = scmp.lt.s32.totalorder %s43, 1
        %s798 = scalar_select %p797, %s43, 1
        %s799 = smul.addr %s798, 2
        %s800 = smul.addr %s799, 8
        %s801 = scalar_lea.vmem %s0, %s800
        %p802 = pneg %p64
        %p803 = pneg %p61
        %p804 = scmp.lt.s32.totalorder %s43, 1
        %s805 = scalar_select %p804, %s43, 1
        %s806 = smul.addr %s805, 8
        %s807 = scalar_lea.vmem %s1, %s806
        %p808 = pneg %p90
        %p809 = pneg %p87
        %p810 = pneg %p111
        %p811 = pneg %p108
        %p812 = pneg %p132
        %p813 = pneg %p129
        %p814 = pneg %p153
        %p815 = pneg %p150
        %p816 = pneg %p174
        %p817 = pneg %p171
        %p818 = pneg %p195
        %p819 = pneg %p192
        %p820 = pneg %p216
        %p821 = pneg %p213
        %p822 = pneg %p237
        %p823 = pneg %p234
        %p824 = pneg %p258
        %p825 = pneg %p255
        %p826 = pneg %p279
        %p827 = pneg %p276
        %p828 = pneg %p300
        %p829 = pneg %p297
        %p830 = pneg %p321
        %p831 = pneg %p318
        %p832 = pneg %p342
        %p833 = pneg %p339
        %p834 = pneg %p363
        %p835 = pneg %p360
        %p836 = pneg %p384
        %p837 = pneg %p381
        %p838 = pneg %p405
        %p839 = pneg %p402
        %p840 = pneg %p426
        %p841 = pneg %p423
        %p842 = pneg %p447
        %p843 = pneg %p444
        %p844 = pneg %p468
        %p845 = pneg %p465
        %p846 = pneg %p494
        %p847 = pneg %p491
        %s848 = sand.u32 %s481, 1
        %s849 = scalar_lea.sflag [#allocation4], %s848
        %s850 = sand.u32 %s481, 1
        %s851 = smul.addr %s850, 8
        %s852 = scalar_lea.vmem [#allocation23], %s851
        %p853 = pneg %p520
        %p854 = pneg %p517
        %p855 = scmp.lt.s32.totalorder %s43, 1
        %s856 = scalar_select %p855, %s43, 1
        %s857 = smul.addr %s856, 8
        %s858 = scalar_lea.vmem %s21, %s857
        %p859 = scmp.lt.s32.totalorder %s43, 1
        %s860 = scalar_select %p859, %s43, 1
        %s861 = smul.addr %s860, 2
        %s862 = smul.addr %s861, 8
        %s863 = scalar_lea.vmem %s0, %s862
        %p864 = scmp.lt.s32.totalorder %s43, 1
        %s865 = scalar_select %p864, %s43, 1
        %s866 = smul.addr %s865, 8
        %s867 = scalar_lea.vmem %s1, %s866
        %p868 = scmp.lt.s32.totalorder %s43, 1
        %s869 = scalar_select %p868, %s43, 1
        %s870 = smul.addr %s869, 8
        %s871 = scalar_lea.vmem %s21, %s870
        %v872 = vld [vmem:[#allocation2] sm:$0xff]
        %v873 = vld [vmem:[#allocation2 + $0x8] sm:$0xff]
        %v874 = vld [vmem:[#allocation2 + $0x10] sm:$0xff]
        %v875 = vld [vmem:[#allocation2 + $0x18] sm:$0xff]
        %v876 = vld [vmem:[#allocation2 + $0x20] sm:$0xff]
        %v877 = vld [vmem:[#allocation2 + $0x28] sm:$0xff]
        %v878 = vld [vmem:[#allocation2 + $0x30] sm:$0xff]
        %v879 = vld [vmem:[#allocation2 + $0x38] sm:$0xff]
        %v880 = vld [vmem:[#allocation2 + $0x40] sm:$0xff]
        %v881 = vld [vmem:[#allocation2 + $0x48] sm:$0xff]
        %v882 = vld [vmem:[#allocation2 + $0x50] sm:$0xff]
        %v883 = vld [vmem:[#allocation2 + $0x58] sm:$0xff]
        %v884 = vld [vmem:[#allocation2 + $0x60] sm:$0xff]
        %v885 = vld [vmem:[#allocation2 + $0x68] sm:$0xff]
        %v886 = vld [vmem:[#allocation2 + $0x70] sm:$0xff]
        %v887 = vld [vmem:[#allocation2 + $0x78] sm:$0xff]
        %v888 = vld [vmem:[%s863] sm:$0xff]
        %v889 = vld [vmem:[%s863 + $0x8] sm:$0xff]
        %v890 = vlaneseq
        %v891 = vand.u32 %v890, 127
        %892 = vset.pattern.permute.xlu0 0
        %893 = vperm.xlu0 %892, %v888
        %v894 = vpop.permute.xlu0 %893
        %895 = vset.pattern.permute.xlu0 0
        %896 = vperm.xlu0 %895, %v889
        %v897 = vpop.permute.xlu0 %896
        %vm898 = vcmp.eq.s32.totalorder %v891, %v894
        %vm899 = vcmp.eq.s32.totalorder %v891, %v897
        %v900 = vsel %vm898, 1, 0
        %v901 = vsel %vm899, 1, 0
        %v902 = vcvt.s32.f32 %v900
        %v903 = vcvt.s32.f32 %v901
        %904 = vmatprep.subr.mxu0 0.0
        %905 = vmatpush1.msra.mxu0 %v872
        %906 = vmatprep.subr.mxu0 0.0
        %907 = vmatpush1.msra.mxu0 %v873
        %908 = vmatprep.subr.mxu0 0.0
        %909 = vmatpush1.msra.mxu0 %v874
        %910 = vmatprep.subr.mxu0 0.0
        %911 = vmatpush1.msra.mxu0 %v875
        %912 = vmatprep.subr.mxu0 0.0
        %913 = vmatpush1.msra.mxu0 %v876
        %914 = vmatprep.subr.mxu0 0.0
        %915 = vmatpush1.msra.mxu0 %v877
        %916 = vmatprep.subr.mxu0 0.0
        %917 = vmatpush1.msra.mxu0 %v878
        %918 = vmatprep.subr.mxu0 0.0
        %919 = vmatpush1.msra.mxu0 %v879
        %920 = vmatprep.subr.mxu0 0.0
        %921 = vmatpush1.msra.mxu0 %v880
        %922 = vmatprep.subr.mxu0 0.0
        %923 = vmatpush1.msra.mxu0 %v881
        %924 = vmatprep.subr.mxu0 0.0
        %925 = vmatpush1.msra.mxu0 %v882
        %926 = vmatprep.subr.mxu0 0.0
        %927 = vmatpush1.msra.mxu0 %v883
        %928 = vmatprep.subr.mxu0 0.0
        %929 = vmatpush1.msra.mxu0 %v884
        %930 = vmatprep.subr.mxu0 0.0
        %931 = vmatpush1.msra.mxu0 %v885
        %932 = vmatprep.subr.mxu0 0.0
        %933 = vmatpush1.msra.mxu0 %v886
        %934 = vmatprep.subr.mxu0 0.0
        %935 = vmatpush1.msra.mxu0 %v887
        %936 = vmatprep.subr.mxu0 0.0
        %937 = vmatpush1.msra.mxu0 0.0
        %938 = vmatprep.subr.mxu0 0.0
        %939 = vmatpush1.msra.mxu0 0.0
        %940 = vmatprep.subr.mxu0 0.0
        %941 = vmatpush1.msra.mxu0 0.0
        %942 = vmatprep.subr.mxu0 0.0
        %943 = vmatpush1.msra.mxu0 0.0
        %944 = vmatprep.subr.mxu0 0.0
        %945 = vmatpush1.msra.mxu0 0.0
        %946 = vmatprep.subr.mxu0 0.0
        %947 = vmatpush1.msra.mxu0 0.0
        %948 = vmatprep.subr.mxu0 0.0
        %949 = vmatpush1.msra.mxu0 0.0
        %950 = vmatprep.subr.mxu0 0.0
        %951 = vmatpush1.msra.mxu0 0.0
        %952 = vmatprep.subr.mxu0 0.0
        %953 = vmatpush1.msra.mxu0 0.0
        %954 = vmatprep.subr.mxu0 0.0
        %955 = vmatpush1.msra.mxu0 0.0
        %956 = vmatprep.subr.mxu0 0.0
        %957 = vmatpush1.msra.mxu0 0.0
        %958 = vmatprep.subr.mxu0 0.0
        %959 = vmatpush1.msra.mxu0 0.0
        %960 = vmatprep.subr.mxu0 0.0
        %961 = vmatpush1.msra.mxu0 0.0
        %962 = vmatprep.subr.mxu0 0.0
        %963 = vmatpush1.msra.mxu0 0.0
        %964 = vmatprep.subr.mxu0 0.0
        %965 = vmatpush1.msra.mxu0 0.0
        %966 = vmatprep.subr.mxu0 0.0
        %967 = vmatpush1.msra.mxu0 0.0
        %968 = vmatprep.mubr.f32.mxu0 0.0
        %969 = vmatmul.mubr.f32.gmra.mrb[0].mxu0 %v902
        %v970 = vpop.f32.mrb[0].mxu0
        %v971 = vadd.f32 0.0, %v970
        %v972 = vpop.f32.mrb[0].mxu0
        %973 = vmatprep.mubr.f32.mxu0 0.0
        %974 = vmatmul.mubr.f32.gmra.mrb[0].mxu0 %v903
        %v975 = vpop.f32.mrb[0].mxu0
        %v976 = vadd.f32 0.0, %v975
        %v977 = vpop.f32.mrb[0].mxu0
        %978 = vdwg.mxu0
        %v979 = vld [vmem:[#allocation5] sm:$0xff]
        %v980 = vld [vmem:[#allocation5 + $0x8] sm:$0xff]
        %v981 = vld [vmem:[#allocation5 + $0x10] sm:$0xff]
        %v982 = vld [vmem:[#allocation5 + $0x18] sm:$0xff]
        %v983 = vld [vmem:[#allocation7] sm:$0xff]
        %v984 = vld [vmem:[#allocation7 + $0x8] sm:$0xff]
        %v985 = vld [vmem:[#allocation7 + $0x10] sm:$0xff]
        %v986 = vld [vmem:[#allocation7 + $0x18] sm:$0xff]
        %v987 = vld [vmem:[%s9] sm:$0x3]
        %v988 = vmul.f32 %v971, %v971
        %vm989 = vcmask 261120
        %v990 = vsel %vm989, %v988, 0.0
        %991 = vadd.xlane.f32.xlu0 %v990
        %v992 = vpop.xlane.xlu0 %991
        %v993 = vrcp.pop 32.0
        %v994 = vmul.f32 %v992, %v993
        %v995 = vadd.f32 %v994, 1e-06
        %v996 = vrsqrt.pop %v995
        %v997 = vmul.f32 %v971, %v996
        %v998 = vlaneseq
        %v999 = vshrl.u32 %v998, 7
        %v1000 = vsub.s32 0, %v999
        %v1001 = vrot.slane %v987, %v1000
        %v1002 = vmul.f32 %v997, %v1001
        %v1003 = vld [vmem:[#allocation8] sm:$0xff]
        %v1004 = vld [vmem:[#allocation8 + $0x8] sm:$0xff]
        %v1005 = vld [vmem:[#allocation8 + $0x10] sm:$0xff]
        %v1006 = vld [vmem:[#allocation8 + $0x18] sm:$0xff]
        %v1008 = vsel %vm989, %v1002, 0
        %1010 = vmatprep.subr.mxu0 0.0
        %1011 = vmatpush1.msra.mxu0 %v1003
        %1012 = vmatprep.subr.mxu0 0.0
        %1013 = vmatpush1.msra.mxu0 %v1004
        %1014 = vmatprep.subr.mxu0 0.0
        %1015 = vmatpush1.msra.mxu0 %v1005
        %1016 = vmatprep.subr.mxu0 0.0
        %1017 = vmatpush1.msra.mxu0 %v1006
        %1018 = vmatprep.subr.mxu0 0.0
        %1019 = vmatpush1.msra.mxu0 0.0
        %1020 = vmatprep.subr.mxu0 0.0
        %1021 = vmatpush1.msra.mxu0 0.0
        %1022 = vmatprep.subr.mxu0 0.0
        %1023 = vmatpush1.msra.mxu0 0.0
        %1024 = vmatprep.subr.mxu0 0.0
        %1025 = vmatpush1.msra.mxu0 0.0
        %1026 = vmatprep.subr.mxu0 0.0
        %1027 = vmatpush1.msra.mxu0 0.0
        %1028 = vmatprep.subr.mxu0 0.0
        %1029 = vmatpush1.msra.mxu0 0.0
        %1030 = vmatprep.subr.mxu0 0.0
        %1031 = vmatpush1.msra.mxu0 0.0
        %1032 = vmatprep.subr.mxu0 0.0
        %1033 = vmatpush1.msra.mxu0 0.0
        %1034 = vmatprep.subr.mxu0 0.0
        %1035 = vmatpush1.msra.mxu0 0.0
        %1036 = vmatprep.subr.mxu0 0.0
        %1037 = vmatpush1.msra.mxu0 0.0
        %1038 = vmatprep.subr.mxu0 0.0
        %1039 = vmatpush1.msra.mxu0 0.0
        %1040 = vmatprep.subr.mxu0 0.0
        %1041 = vmatpush1.msra.mxu0 0.0
        %1042 = vmatprep.subr.mxu0 0.0
        %1043 = vmatpush1.msra.mxu0 0.0
        %1044 = vmatprep.subr.mxu0 0.0
        %1045 = vmatpush1.msra.mxu0 0.0
        %1046 = vmatprep.subr.mxu0 0.0
        %1047 = vmatpush1.msra.mxu0 0.0
        %1048 = vmatprep.subr.mxu0 0.0
        %1049 = vmatpush1.msra.mxu0 0.0
        %1050 = vmatprep.subr.mxu0 0.0
        %1051 = vmatpush1.msra.mxu0 0.0
        %1052 = vmatprep.subr.mxu0 0.0
        %1053 = vmatpush1.msra.mxu0 0.0
        %1054 = vmatprep.subr.mxu0 0.0
        %1055 = vmatpush1.msra.mxu0 0.0
        %1056 = vmatprep.subr.mxu0 0.0
        %1057 = vmatpush1.msra.mxu0 0.0
        %1058 = vmatprep.subr.mxu0 0.0
        %1059 = vmatpush1.msra.mxu0 0.0
        %1060 = vmatprep.subr.mxu0 0.0
        %1061 = vmatpush1.msra.mxu0 0.0
        %1062 = vmatprep.subr.mxu0 0.0
        %1063 = vmatpush1.msra.mxu0 0.0
        %1064 = vmatprep.subr.mxu0 0.0
        %1065 = vmatpush1.msra.mxu0 0.0
        %1066 = vmatprep.subr.mxu0 0.0
        %1067 = vmatpush1.msra.mxu0 0.0
        %1068 = vmatprep.subr.mxu0 0.0
        %1069 = vmatpush1.msra.mxu0 0.0
        %1070 = vmatprep.subr.mxu0 0.0
        %1071 = vmatpush1.msra.mxu0 0.0
        %1072 = vmatprep.subr.mxu0 0.0
        %1073 = vmatpush1.msra.mxu0 0.0
        %1074 = vmatprep.mubr.f32.mxu0 0.0
        %1075 = vmatmul.mubr.f32.gmra.mrb[0].mxu0 %v1008
        %v1076 = vpop.f32.mrb[0].mxu0
        %v1077 = vadd.f32 0.0, %v1076
        %v1078 = vpop.f32.mrb[0].mxu0
        %1079 = vdwg.mxu0
        %v1080 = vld [vmem:[#allocation10] sm:$0xff]
        %v1081 = vld [vmem:[#allocation10 + $0x8] sm:$0xff]
        %v1082 = vld [vmem:[#allocation10 + $0x10] sm:$0xff]
        %v1083 = vld [vmem:[#allocation10 + $0x18] sm:$0xff]
        %1085 = vrot.lane.b32.xlu0 %v1077, 120
        %v1086 = vpop.permute.xlu0 %1085
        %1087 = vrot.lane.b32.xlu0 %v1077, 112
        %v1088 = vpop.permute.xlu0 %1087
        %1089 = vrot.lane.b32.xlu0 %v1077, 104
        %v1090 = vpop.permute.xlu0 %1089
        %1091 = vrot.lane.b32.xlu0 %v1077, 96
        %v1092 = vpop.permute.xlu0 %1091
        %vm1093 = vcmask 64512
        %v1094 = vsel %vm1093, %v1077, 0
        %v1096 = vsel %vm1093, %v1092, 0
        %1098 = vmatprep.subr.mxu0 0.0
        %1099 = vmatpush1.xpose.msra.mxu0 %v1096
        %1100 = vmatprep.subr.mxu0 0.0
        %1101 = vmatpush1.xpose.msra.mxu0 0.0
        %1102 = vmatprep.subr.mxu0 0.0
        %1103 = vmatpush1.xpose.msra.mxu0 0.0
        %1104 = vmatprep.subr.mxu0 0.0
        %1105 = vmatpush1.xpose.msra.mxu0 0.0
        %1106 = vmatprep.subr.mxu0 0.0
        %1107 = vmatpush1.xpose.msra.mxu0 0.0
        %1108 = vmatprep.subr.mxu0 0.0
        %1109 = vmatpush1.xpose.msra.mxu0 0.0
        %1110 = vmatprep.subr.mxu0 0.0
        %1111 = vmatpush1.xpose.msra.mxu0 0.0
        %1112 = vmatprep.subr.mxu0 0.0
        %1113 = vmatpush1.xpose.msra.mxu0 0.0
        %1114 = vmatprep.subr.mxu0 0.0
        %1115 = vmatpush1.xpose.msra.mxu0 0.0
        %1116 = vmatprep.subr.mxu0 0.0
        %1117 = vmatpush1.xpose.msra.mxu0 0.0
        %1118 = vmatprep.subr.mxu0 0.0
        %1119 = vmatpush1.xpose.msra.mxu0 0.0
        %1120 = vmatprep.subr.mxu0 0.0
        %1121 = vmatpush1.xpose.msra.mxu0 0.0
        %1122 = vmatprep.subr.mxu0 0.0
        %1123 = vmatpush1.xpose.msra.mxu0 0.0
        %1124 = vmatprep.subr.mxu0 0.0
        %1125 = vmatpush1.xpose.msra.mxu0 0.0
        %1126 = vmatprep.subr.mxu0 0.0
        %1127 = vmatpush1.xpose.msra.mxu0 0.0
        %1128 = vmatprep.subr.mxu0 0.0
        %1129 = vmatpush1.xpose.msra.mxu0 0.0
        %1130 = vmatprep.subr.mxu0 0.0
        %1131 = vmatpush1.xpose.msra.mxu0 0.0
        %1132 = vmatprep.subr.mxu0 0.0
        %1133 = vmatpush1.xpose.msra.mxu0 0.0
        %1134 = vmatprep.subr.mxu0 0.0
        %1135 = vmatpush1.xpose.msra.mxu0 0.0
        %1136 = vmatprep.subr.mxu0 0.0
        %1137 = vmatpush1.xpose.msra.mxu0 0.0
        %1138 = vmatprep.subr.mxu0 0.0
        %1139 = vmatpush1.xpose.msra.mxu0 0.0
        %1140 = vmatprep.subr.mxu0 0.0
        %1141 = vmatpush1.xpose.msra.mxu0 0.0
        %1142 = vmatprep.subr.mxu0 0.0
        %1143 = vmatpush1.xpose.msra.mxu0 0.0
        %1144 = vmatprep.subr.mxu0 0.0
        %1145 = vmatpush1.xpose.msra.mxu0 0.0
        %1146 = vmatprep.subr.mxu0 0.0
        %1147 = vmatpush1.xpose.msra.mxu0 0.0
        %1148 = vmatprep.subr.mxu0 0.0
        %1149 = vmatpush1.xpose.msra.mxu0 0.0
        %1150 = vmatprep.subr.mxu0 0.0
        %1151 = vmatpush1.xpose.msra.mxu0 0.0
        %1152 = vmatprep.subr.mxu0 0.0
        %1153 = vmatpush1.xpose.msra.mxu0 0.0
        %1154 = vmatprep.subr.mxu0 0.0
        %1155 = vmatpush1.xpose.msra.mxu0 0.0
        %1156 = vmatprep.subr.mxu0 0.0
        %1157 = vmatpush1.xpose.msra.mxu0 0.0
        %1158 = vmatprep.subr.mxu0 0.0
        %1159 = vmatpush1.xpose.msra.mxu0 0.0
        %1160 = vmatprep.subr.mxu0 0.0
        %1161 = vmatpush1.xpose.msra.mxu0 0.0
        %1162 = vmatprep.mubr.f32.mxu0 0.0
        %1163 = vmatmul.mubr.f32.gmra.mrb[0].mxu0 %v1094
        %v1164 = vpop.f32.mrb[0].mxu0
        %v1165 = vadd.f32 %v979, %v1164
        %v1166 = vpop.f32.mrb[0].mxu0
        %1167 = vdwg.mxu0
        %1168 = vrot.lane.b32.xlu0 %v1086, 96
        %v1169 = vpop.permute.xlu0 %1168
        %v1170 = vsel %vm1093, %v1086, 0
        %v1172 = vsel %vm1093, %v1169, 0
        %1174 = vmatprep.subr.mxu0 0.0
        %1175 = vmatpush1.xpose.msra.mxu0 %v1172
        %1176 = vmatprep.subr.mxu0 0.0
        %1177 = vmatpush1.xpose.msra.mxu0 0.0
        %1178 = vmatprep.subr.mxu0 0.0
        %1179 = vmatpush1.xpose.msra.mxu0 0.0
        %1180 = vmatprep.subr.mxu0 0.0
        %1181 = vmatpush1.xpose.msra.mxu0 0.0
        %1182 = vmatprep.subr.mxu0 0.0
        %1183 = vmatpush1.xpose.msra.mxu0 0.0
        %1184 = vmatprep.subr.mxu0 0.0
        %1185 = vmatpush1.xpose.msra.mxu0 0.0
        %1186 = vmatprep.subr.mxu0 0.0
        %1187 = vmatpush1.xpose.msra.mxu0 0.0
        %1188 = vmatprep.subr.mxu0 0.0
        %1189 = vmatpush1.xpose.msra.mxu0 0.0
        %1190 = vmatprep.subr.mxu0 0.0
        %1191 = vmatpush1.xpose.msra.mxu0 0.0
        %1192 = vmatprep.subr.mxu0 0.0
        %1193 = vmatpush1.xpose.msra.mxu0 0.0
        %1194 = vmatprep.subr.mxu0 0.0
        %1195 = vmatpush1.xpose.msra.mxu0 0.0
        %1196 = vmatprep.subr.mxu0 0.0
        %1197 = vmatpush1.xpose.msra.mxu0 0.0
        %1198 = vmatprep.subr.mxu0 0.0
        %1199 = vmatpush1.xpose.msra.mxu0 0.0
        %1200 = vmatprep.subr.mxu0 0.0
        %1201 = vmatpush1.xpose.msra.mxu0 0.0
        %1202 = vmatprep.subr.mxu0 0.0
        %1203 = vmatpush1.xpose.msra.mxu0 0.0
        %1204 = vmatprep.subr.mxu0 0.0
        %1205 = vmatpush1.xpose.msra.mxu0 0.0
        %1206 = vmatprep.subr.mxu0 0.0
        %1207 = vmatpush1.xpose.msra.mxu0 0.0
        %1208 = vmatprep.subr.mxu0 0.0
        %1209 = vmatpush1.xpose.msra.mxu0 0.0
        %1210 = vmatprep.subr.mxu0 0.0
        %1211 = vmatpush1.xpose.msra.mxu0 0.0
        %1212 = vmatprep.subr.mxu0 0.0
        %1213 = vmatpush1.xpose.msra.mxu0 0.0
        %1214 = vmatprep.subr.mxu0 0.0
        %1215 = vmatpush1.xpose.msra.mxu0 0.0
        %1216 = vmatprep.subr.mxu0 0.0
        %1217 = vmatpush1.xpose.msra.mxu0 0.0
        %1218 = vmatprep.subr.mxu0 0.0
        %1219 = vmatpush1.xpose.msra.mxu0 0.0
        %1220 = vmatprep.subr.mxu0 0.0
        %1221 = vmatpush1.xpose.msra.mxu0 0.0
        %1222 = vmatprep.subr.mxu0 0.0
        %1223 = vmatpush1.xpose.msra.mxu0 0.0
        %1224 = vmatprep.subr.mxu0 0.0
        %1225 = vmatpush1.xpose.msra.mxu0 0.0
        %1226 = vmatprep.subr.mxu0 0.0
        %1227 = vmatpush1.xpose.msra.mxu0 0.0
        %1228 = vmatprep.subr.mxu0 0.0
        %1229 = vmatpush1.xpose.msra.mxu0 0.0
        %1230 = vmatprep.subr.mxu0 0.0
        %1231 = vmatpush1.xpose.msra.mxu0 0.0
        %1232 = vmatprep.subr.mxu0 0.0
        %1233 = vmatpush1.xpose.msra.mxu0 0.0
        %1234 = vmatprep.subr.mxu0 0.0
        %1235 = vmatpush1.xpose.msra.mxu0 0.0
        %1236 = vmatprep.subr.mxu0 0.0
        %1237 = vmatpush1.xpose.msra.mxu0 0.0
        %1238 = vmatprep.mubr.f32.mxu0 0.0
        %1239 = vmatmul.mubr.f32.gmra.mrb[0].mxu0 %v1170
        %v1240 = vpop.f32.mrb[0].mxu0
        %v1241 = vadd.f32 %v980, %v1240
        %v1242 = vpop.f32.mrb[0].mxu0
        %1243 = vdwg.mxu0
        %1244 = vrot.lane.b32.xlu0 %v1088, 96
        %v1245 = vpop.permute.xlu0 %1244
        %v1246 = vsel %vm1093, %v1088, 0
        %v1248 = vsel %vm1093, %v1245, 0
        %1250 = vmatprep.subr.mxu0 0.0
        %1251 = vmatpush1.xpose.msra.mxu0 %v1248
        %1252 = vmatprep.subr.mxu0 0.0
        %1253 = vmatpush1.xpose.msra.mxu0 0.0
        %1254 = vmatprep.subr.mxu0 0.0
        %1255 = vmatpush1.xpose.msra.mxu0 0.0
        %1256 = vmatprep.subr.mxu0 0.0
        %1257 = vmatpush1.xpose.msra.mxu0 0.0
        %1258 = vmatprep.subr.mxu0 0.0
        %1259 = vmatpush1.xpose.msra.mxu0 0.0
        %1260 = vmatprep.subr.mxu0 0.0
        %1261 = vmatpush1.xpose.msra.mxu0 0.0
        %1262 = vmatprep.subr.mxu0 0.0
        %1263 = vmatpush1.xpose.msra.mxu0 0.0
        %1264 = vmatprep.subr.mxu0 0.0
        %1265 = vmatpush1.xpose.msra.mxu0 0.0
        %1266 = vmatprep.subr.mxu0 0.0
        %1267 = vmatpush1.xpose.msra.mxu0 0.0
        %1268 = vmatprep.subr.mxu0 0.0
        %1269 = vmatpush1.xpose.msra.mxu0 0.0
        %1270 = vmatprep.subr.mxu0 0.0
        %1271 = vmatpush1.xpose.msra.mxu0 0.0
        %1272 = vmatprep.subr.mxu0 0.0
        %1273 = vmatpush1.xpose.msra.mxu0 0.0
        %1274 = vmatprep.subr.mxu0 0.0
        %1275 = vmatpush1.xpose.msra.mxu0 0.0
        %1276 = vmatprep.subr.mxu0 0.0
        %1277 = vmatpush1.xpose.msra.mxu0 0.0
        %1278 = vmatprep.subr.mxu0 0.0
        %1279 = vmatpush1.xpose.msra.mxu0 0.0
        %1280 = vmatprep.subr.mxu0 0.0
        %1281 = vmatpush1.xpose.msra.mxu0 0.0
        %1282 = vmatprep.subr.mxu0 0.0
        %1283 = vmatpush1.xpose.msra.mxu0 0.0
        %1284 = vmatprep.subr.mxu0 0.0
        %1285 = vmatpush1.xpose.msra.mxu0 0.0
        %1286 = vmatprep.subr.mxu0 0.0
        %1287 = vmatpush1.xpose.msra.mxu0 0.0
        %1288 = vmatprep.subr.mxu0 0.0
        %1289 = vmatpush1.xpose.msra.mxu0 0.0
        %1290 = vmatprep.subr.mxu0 0.0
        %1291 = vmatpush1.xpose.msra.mxu0 0.0
        %1292 = vmatprep.subr.mxu0 0.0
        %1293 = vmatpush1.xpose.msra.mxu0 0.0
        %1294 = vmatprep.subr.mxu0 0.0
        %1295 = vmatpush1.xpose.msra.mxu0 0.0
        %1296 = vmatprep.subr.mxu0 0.0
        %1297 = vmatpush1.xpose.msra.mxu0 0.0
        %1298 = vmatprep.subr.mxu0 0.0
        %1299 = vmatpush1.xpose.msra.mxu0 0.0
        %1300 = vmatprep.subr.mxu0 0.0
        %1301 = vmatpush1.xpose.msra.mxu0 0.0
        %1302 = vmatprep.subr.mxu0 0.0
        %1303 = vmatpush1.xpose.msra.mxu0 0.0
        %1304 = vmatprep.subr.mxu0 0.0
        %1305 = vmatpush1.xpose.msra.mxu0 0.0
        %1306 = vmatprep.subr.mxu0 0.0
        %1307 = vmatpush1.xpose.msra.mxu0 0.0
        %1308 = vmatprep.subr.mxu0 0.0
        %1309 = vmatpush1.xpose.msra.mxu0 0.0
        %1310 = vmatprep.subr.mxu0 0.0
        %1311 = vmatpush1.xpose.msra.mxu0 0.0
        %1312 = vmatprep.subr.mxu0 0.0
        %1313 = vmatpush1.xpose.msra.mxu0 0.0
        %1314 = vmatprep.mubr.f32.mxu0 0.0
        %1315 = vmatmul.mubr.f32.gmra.mrb[0].mxu0 %v1246
        %v1316 = vpop.f32.mrb[0].mxu0
        %v1317 = vadd.f32 %v981, %v1316
        %v1318 = vpop.f32.mrb[0].mxu0
        %1319 = vdwg.mxu0
        %1320 = vrot.lane.b32.xlu0 %v1090, 96
        %v1321 = vpop.permute.xlu0 %1320
        %v1322 = vsel %vm1093, %v1090, 0
        %v1324 = vsel %vm1093, %v1321, 0
        %1326 = vmatprep.subr.mxu0 0.0
        %1327 = vmatpush1.xpose.msra.mxu0 %v1324
        %1328 = vmatprep.subr.mxu0 0.0
        %1329 = vmatpush1.xpose.msra.mxu0 0.0
        %1330 = vmatprep.subr.mxu0 0.0
        %1331 = vmatpush1.xpose.msra.mxu0 0.0
        %1332 = vmatprep.subr.mxu0 0.0
        %1333 = vmatpush1.xpose.msra.mxu0 0.0
        %1334 = vmatprep.subr.mxu0 0.0
        %1335 = vmatpush1.xpose.msra.mxu0 0.0
        %1336 = vmatprep.subr.mxu0 0.0
        %1337 = vmatpush1.xpose.msra.mxu0 0.0
        %1338 = vmatprep.subr.mxu0 0.0
        %1339 = vmatpush1.xpose.msra.mxu0 0.0
        %1340 = vmatprep.subr.mxu0 0.0
        %1341 = vmatpush1.xpose.msra.mxu0 0.0
        %1342 = vmatprep.subr.mxu0 0.0
        %1343 = vmatpush1.xpose.msra.mxu0 0.0
        %1344 = vmatprep.subr.mxu0 0.0
        %1345 = vmatpush1.xpose.msra.mxu0 0.0
        %1346 = vmatprep.subr.mxu0 0.0
        %1347 = vmatpush1.xpose.msra.mxu0 0.0
        %1348 = vmatprep.subr.mxu0 0.0
        %1349 = vmatpush1.xpose.msra.mxu0 0.0
        %1350 = vmatprep.subr.mxu0 0.0
        %1351 = vmatpush1.xpose.msra.mxu0 0.0
        %1352 = vmatprep.subr.mxu0 0.0
        %1353 = vmatpush1.xpose.msra.mxu0 0.0
        %1354 = vmatprep.subr.mxu0 0.0
        %1355 = vmatpush1.xpose.msra.mxu0 0.0
        %1356 = vmatprep.subr.mxu0 0.0
        %1357 = vmatpush1.xpose.msra.mxu0 0.0
        %1358 = vmatprep.subr.mxu0 0.0
        %1359 = vmatpush1.xpose.msra.mxu0 0.0
        %1360 = vmatprep.subr.mxu0 0.0
        %1361 = vmatpush1.xpose.msra.mxu0 0.0
        %1362 = vmatprep.subr.mxu0 0.0
        %1363 = vmatpush1.xpose.msra.mxu0 0.0
        %1364 = vmatprep.subr.mxu0 0.0
        %1365 = vmatpush1.xpose.msra.mxu0 0.0
        %1366 = vmatprep.subr.mxu0 0.0
        %1367 = vmatpush1.xpose.msra.mxu0 0.0
        %1368 = vmatprep.subr.mxu0 0.0
        %1369 = vmatpush1.xpose.msra.mxu0 0.0
        %1370 = vmatprep.subr.mxu0 0.0
        %1371 = vmatpush1.xpose.msra.mxu0 0.0
        %1372 = vmatprep.subr.mxu0 0.0
        %1373 = vmatpush1.xpose.msra.mxu0 0.0
        %1374 = vmatprep.subr.mxu0 0.0
        %1375 = vmatpush1.xpose.msra.mxu0 0.0
        %1376 = vmatprep.subr.mxu0 0.0
        %1377 = vmatpush1.xpose.msra.mxu0 0.0
        %1378 = vmatprep.subr.mxu0 0.0
        %1379 = vmatpush1.xpose.msra.mxu0 0.0
        %1380 = vmatprep.subr.mxu0 0.0
        %1381 = vmatpush1.xpose.msra.mxu0 0.0
        %1382 = vmatprep.subr.mxu0 0.0
        %1383 = vmatpush1.xpose.msra.mxu0 0.0
        %1384 = vmatprep.subr.mxu0 0.0
        %1385 = vmatpush1.xpose.msra.mxu0 0.0
        %1386 = vmatprep.subr.mxu0 0.0
        %1387 = vmatpush1.xpose.msra.mxu0 0.0
        %1388 = vmatprep.subr.mxu0 0.0
        %1389 = vmatpush1.xpose.msra.mxu0 0.0
        %1390 = vmatprep.mubr.f32.mxu0 0.0
        %1391 = vmatmul.mubr.f32.gmra.mrb[0].mxu0 %v1322
        %v1392 = vpop.f32.mrb[0].mxu0
        %v1393 = vadd.f32 %v982, %v1392
        %v1394 = vpop.f32.mrb[0].mxu0
        %1395 = vdwg.mxu0
        %v1396 = vsel %vm1093, %v1165, -inf
        %1397 = vmax.xlane.f32.xlu0 %v1396
        %v1398 = vpop.xlane.xlu0 %1397
        %v1399 = vsel %vm1093, %v1241, -inf
        %1400 = vmax.xlane.f32.xlu0 %v1399
        %v1401 = vpop.xlane.xlu0 %1400
        %v1402 = vsel %vm1093, %v1317, -inf
        %1403 = vmax.xlane.f32.xlu0 %v1402
        %v1404 = vpop.xlane.xlu0 %1403
        %v1405 = vsel %vm1093, %v1393, -inf
        %1406 = vmax.xlane.f32.xlu0 %v1405
        %v1407 = vpop.xlane.xlu0 %1406
        %v1408 = vsub.f32 %v1165, %v1398
        %v1409 = vsub.f32 %v1241, %v1401
        %v1410 = vsub.f32 %v1317, %v1404
        %v1411 = vsub.f32 %v1393, %v1407
        %v1412 = vmul.f32 %v1408, 1.442695
        %v1413 = vpow.pop %v1412
        %v1414 = vmul.f32 %v1409, 1.442695
        %v1415 = vpow.pop %v1414
        %v1416 = vmul.f32 %v1410, 1.442695
        %v1417 = vpow.pop %v1416
        %v1418 = vmul.f32 %v1411, 1.442695
        %v1419 = vpow.pop %v1418
        %v1420 = vsel %vm1093, %v1413, 0.0
        %1421 = vadd.xlane.f32.xlu0 %v1420
        %v1422 = vpop.xlane.xlu0 %1421
        %v1423 = vsel %vm1093, %v1415, 0.0
        %1424 = vadd.xlane.f32.xlu0 %v1423
        %v1425 = vpop.xlane.xlu0 %1424
        %v1426 = vsel %vm1093, %v1417, 0.0
        %1427 = vadd.xlane.f32.xlu0 %v1426
        %v1428 = vpop.xlane.xlu0 %1427
        %v1429 = vsel %vm1093, %v1419, 0.0
        %1430 = vadd.xlane.f32.xlu0 %v1429
        %v1431 = vpop.xlane.xlu0 %1430
        %v1432 = vrcp.pop %v1422
        %v1433 = vrcp.pop %v1425
        %v1434 = vrcp.pop %v1428
        %v1435 = vrcp.pop %v1431
        %v1436 = vmul.f32 %v1413, %v1432
        %v1437 = vmul.f32 %v1415, %v1433
        %v1438 = vmul.f32 %v1417, %v1434
        %v1439 = vmul.f32 %v1419, %v1435
        %1440 = vrot.lane.b32.xlu0 %v1077, 64
        %v1441 = vpop.permute.xlu0 %1440
        %v1444 = vsel %vm1093, %v1436, 0
        %1446 = vmatprep.subr.mxu0 0.0
        %1447 = vmatpush1.msra.mxu0 %v1441
        %1448 = vmatprep.subr.mxu0 0.0
        %1449 = vmatpush1.msra.mxu0 0.0
        %1450 = vmatprep.subr.mxu0 0.0
        %1451 = vmatpush1.msra.mxu0 0.0
        %1452 = vmatprep.subr.mxu0 0.0
        %1453 = vmatpush1.msra.mxu0 0.0
        %1454 = vmatprep.subr.mxu0 0.0
        %1455 = vmatpush1.msra.mxu0 0.0
        %1456 = vmatprep.subr.mxu0 0.0
        %1457 = vmatpush1.msra.mxu0 0.0
        %1458 = vmatprep.subr.mxu0 0.0
        %1459 = vmatpush1.msra.mxu0 0.0
        %1460 = vmatprep.subr.mxu0 0.0
        %1461 = vmatpush1.msra.mxu0 0.0
        %1462 = vmatprep.subr.mxu0 0.0
        %1463 = vmatpush1.msra.mxu0 0.0
        %1464 = vmatprep.subr.mxu0 0.0
        %1465 = vmatpush1.msra.mxu0 0.0
        %1466 = vmatprep.subr.mxu0 0.0
        %1467 = vmatpush1.msra.mxu0 0.0
        %1468 = vmatprep.subr.mxu0 0.0
        %1469 = vmatpush1.msra.mxu0 0.0
        %1470 = vmatprep.subr.mxu0 0.0
        %1471 = vmatpush1.msra.mxu0 0.0
        %1472 = vmatprep.subr.mxu0 0.0
        %1473 = vmatpush1.msra.mxu0 0.0
        %1474 = vmatprep.subr.mxu0 0.0
        %1475 = vmatpush1.msra.mxu0 0.0
        %1476 = vmatprep.subr.mxu0 0.0
        %1477 = vmatpush1.msra.mxu0 0.0
        %1478 = vmatprep.subr.mxu0 0.0
        %1479 = vmatpush1.msra.mxu0 0.0
        %1480 = vmatprep.subr.mxu0 0.0
        %1481 = vmatpush1.msra.mxu0 0.0
        %1482 = vmatprep.subr.mxu0 0.0
        %1483 = vmatpush1.msra.mxu0 0.0
        %1484 = vmatprep.subr.mxu0 0.0
        %1485 = vmatpush1.msra.mxu0 0.0
        %1486 = vmatprep.subr.mxu0 0.0
        %1487 = vmatpush1.msra.mxu0 0.0
        %1488 = vmatprep.subr.mxu0 0.0
        %1489 = vmatpush1.msra.mxu0 0.0
        %1490 = vmatprep.subr.mxu0 0.0
        %1491 = vmatpush1.msra.mxu0 0.0
        %1492 = vmatprep.subr.mxu0 0.0
        %1493 = vmatpush1.msra.mxu0 0.0
        %1494 = vmatprep.subr.mxu0 0.0
        %1495 = vmatpush1.msra.mxu0 0.0
        %1496 = vmatprep.subr.mxu0 0.0
        %1497 = vmatpush1.msra.mxu0 0.0
        %1498 = vmatprep.subr.mxu0 0.0
        %1499 = vmatpush1.msra.mxu0 0.0
        %1500 = vmatprep.subr.mxu0 0.0
        %1501 = vmatpush1.msra.mxu0 0.0
        %1502 = vmatprep.subr.mxu0 0.0
        %1503 = vmatpush1.msra.mxu0 0.0
        %1504 = vmatprep.subr.mxu0 0.0
        %1505 = vmatpush1.msra.mxu0 0.0
        %1506 = vmatprep.subr.mxu0 0.0
        %1507 = vmatpush1.msra.mxu0 0.0
        %1508 = vmatprep.subr.mxu0 0.0
        %1509 = vmatpush1.msra.mxu0 0.0
        %1510 = vmatprep.mubr.f32.mxu0 0.0
        %1511 = vmatmul.mubr.f32.gmra.mrb[0].mxu0 %v1444
        %v1512 = vpop.f32.mrb[0].mxu0
        %v1513 = vadd.f32 0.0, %v1512
        %v1514 = vpop.f32.mrb[0].mxu0
        %1515 = vdwg.mxu0
        %1516 = vrot.lane.b32.xlu0 %v1086, 64
        %v1517 = vpop.permute.xlu0 %1516
        %v1520 = vsel %vm1093, %v1437, 0
        %1522 = vmatprep.subr.mxu0 0.0
        %1523 = vmatpush1.msra.mxu0 %v1517
        %1524 = vmatprep.subr.mxu0 0.0
        %1525 = vmatpush1.msra.mxu0 0.0
        %1526 = vmatprep.subr.mxu0 0.0
        %1527 = vmatpush1.msra.mxu0 0.0
        %1528 = vmatprep.subr.mxu0 0.0
        %1529 = vmatpush1.msra.mxu0 0.0
        %1530 = vmatprep.subr.mxu0 0.0
        %1531 = vmatpush1.msra.mxu0 0.0
        %1532 = vmatprep.subr.mxu0 0.0
        %1533 = vmatpush1.msra.mxu0 0.0
        %1534 = vmatprep.subr.mxu0 0.0
        %1535 = vmatpush1.msra.mxu0 0.0
        %1536 = vmatprep.subr.mxu0 0.0
        %1537 = vmatpush1.msra.mxu0 0.0
        %1538 = vmatprep.subr.mxu0 0.0
        %1539 = vmatpush1.msra.mxu0 0.0
        %1540 = vmatprep.subr.mxu0 0.0
        %1541 = vmatpush1.msra.mxu0 0.0
        %1542 = vmatprep.subr.mxu0 0.0
        %1543 = vmatpush1.msra.mxu0 0.0
        %1544 = vmatprep.subr.mxu0 0.0
        %1545 = vmatpush1.msra.mxu0 0.0
        %1546 = vmatprep.subr.mxu0 0.0
        %1547 = vmatpush1.msra.mxu0 0.0
        %1548 = vmatprep.subr.mxu0 0.0
        %1549 = vmatpush1.msra.mxu0 0.0
        %1550 = vmatprep.subr.mxu0 0.0
        %1551 = vmatpush1.msra.mxu0 0.0
        %1552 = vmatprep.subr.mxu0 0.0
        %1553 = vmatpush1.msra.mxu0 0.0
        %1554 = vmatprep.subr.mxu0 0.0
        %1555 = vmatpush1.msra.mxu0 0.0
        %1556 = vmatprep.subr.mxu0 0.0
        %1557 = vmatpush1.msra.mxu0 0.0
        %1558 = vmatprep.subr.mxu0 0.0
        %1559 = vmatpush1.msra.mxu0 0.0
        %1560 = vmatprep.subr.mxu0 0.0
        %1561 = vmatpush1.msra.mxu0 0.0
        %1562 = vmatprep.subr.mxu0 0.0
        %1563 = vmatpush1.msra.mxu0 0.0
        %1564 = vmatprep.subr.mxu0 0.0
        %1565 = vmatpush1.msra.mxu0 0.0
        %1566 = vmatprep.subr.mxu0 0.0
        %1567 = vmatpush1.msra.mxu0 0.0
        %1568 = vmatprep.subr.mxu0 0.0
        %1569 = vmatpush1.msra.mxu0 0.0
        %1570 = vmatprep.subr.mxu0 0.0
        %1571 = vmatpush1.msra.mxu0 0.0
        %1572 = vmatprep.subr.mxu0 0.0
        %1573 = vmatpush1.msra.mxu0 0.0
        %1574 = vmatprep.subr.mxu0 0.0
        %1575 = vmatpush1.msra.mxu0 0.0
        %1576 = vmatprep.subr.mxu0 0.0
        %1577 = vmatpush1.msra.mxu0 0.0
        %1578 = vmatprep.subr.mxu0 0.0
        %1579 = vmatpush1.msra.mxu0 0.0
        %1580 = vmatprep.subr.mxu0 0.0
        %1581 = vmatpush1.msra.mxu0 0.0
        %1582 = vmatprep.subr.mxu0 0.0
        %1583 = vmatpush1.msra.mxu0 0.0
        %1584 = vmatprep.subr.mxu0 0.0
        %1585 = vmatpush1.msra.mxu0 0.0
        %1586 = vmatprep.mubr.f32.mxu0 0.0
        %1587 = vmatmul.mubr.f32.gmra.mrb[0].mxu0 %v1520
        %v1588 = vpop.f32.mrb[0].mxu0
        %v1589 = vadd.f32 0.0, %v1588
        %v1590 = vpop.f32.mrb[0].mxu0
        %1591 = vdwg.mxu0
        %1592 = vrot.lane.b32.xlu0 %v1088, 64
        %v1593 = vpop.permute.xlu0 %1592
        %v1596 = vsel %vm1093, %v1438, 0
        %1598 = vmatprep.subr.mxu0 0.0
        %1599 = vmatpush1.msra.mxu0 %v1593
        %1600 = vmatprep.subr.mxu0 0.0
        %1601 = vmatpush1.msra.mxu0 0.0
        %1602 = vmatprep.subr.mxu0 0.0
        %1603 = vmatpush1.msra.mxu0 0.0
        %1604 = vmatprep.subr.mxu0 0.0
        %1605 = vmatpush1.msra.mxu0 0.0
        %1606 = vmatprep.subr.mxu0 0.0
        %1607 = vmatpush1.msra.mxu0 0.0
        %1608 = vmatprep.subr.mxu0 0.0
        %1609 = vmatpush1.msra.mxu0 0.0
        %1610 = vmatprep.subr.mxu0 0.0
        %1611 = vmatpush1.msra.mxu0 0.0
        %1612 = vmatprep.subr.mxu0 0.0
        %1613 = vmatpush1.msra.mxu0 0.0
        %1614 = vmatprep.subr.mxu0 0.0
        %1615 = vmatpush1.msra.mxu0 0.0
        %1616 = vmatprep.subr.mxu0 0.0
        %1617 = vmatpush1.msra.mxu0 0.0
        %1618 = vmatprep.subr.mxu0 0.0
        %1619 = vmatpush1.msra.mxu0 0.0
        %1620 = vmatprep.subr.mxu0 0.0
        %1621 = vmatpush1.msra.mxu0 0.0
        %1622 = vmatprep.subr.mxu0 0.0
        %1623 = vmatpush1.msra.mxu0 0.0
        %1624 = vmatprep.subr.mxu0 0.0
        %1625 = vmatpush1.msra.mxu0 0.0
        %1626 = vmatprep.subr.mxu0 0.0
        %1627 = vmatpush1.msra.mxu0 0.0
        %1628 = vmatprep.subr.mxu0 0.0
        %1629 = vmatpush1.msra.mxu0 0.0
        %1630 = vmatprep.subr.mxu0 0.0
        %1631 = vmatpush1.msra.mxu0 0.0
        %1632 = vmatprep.subr.mxu0 0.0
        %1633 = vmatpush1.msra.mxu0 0.0
        %1634 = vmatprep.subr.mxu0 0.0
        %1635 = vmatpush1.msra.mxu0 0.0
        %1636 = vmatprep.subr.mxu0 0.0
        %1637 = vmatpush1.msra.mxu0 0.0
        %1638 = vmatprep.subr.mxu0 0.0
        %1639 = vmatpush1.msra.mxu0 0.0
        %1640 = vmatprep.subr.mxu0 0.0
        %1641 = vmatpush1.msra.mxu0 0.0
        %1642 = vmatprep.subr.mxu0 0.0
        %1643 = vmatpush1.msra.mxu0 0.0
        %1644 = vmatprep.subr.mxu0 0.0
        %1645 = vmatpush1.msra.mxu0 0.0
        %1646 = vmatprep.subr.mxu0 0.0
        %1647 = vmatpush1.msra.mxu0 0.0
        %1648 = vmatprep.subr.mxu0 0.0
        %1649 = vmatpush1.msra.mxu0 0.0
        %1650 = vmatprep.subr.mxu0 0.0
        %1651 = vmatpush1.msra.mxu0 0.0
        %1652 = vmatprep.subr.mxu0 0.0
        %1653 = vmatpush1.msra.mxu0 0.0
        %1654 = vmatprep.subr.mxu0 0.0
        %1655 = vmatpush1.msra.mxu0 0.0
        %1656 = vmatprep.subr.mxu0 0.0
        %1657 = vmatpush1.msra.mxu0 0.0
        %1658 = vmatprep.subr.mxu0 0.0
        %1659 = vmatpush1.msra.mxu0 0.0
        %1660 = vmatprep.subr.mxu0 0.0
        %1661 = vmatpush1.msra.mxu0 0.0
        %1662 = vmatprep.mubr.f32.mxu0 0.0
        %1663 = vmatmul.mubr.f32.gmra.mrb[0].mxu0 %v1596
        %v1664 = vpop.f32.mrb[0].mxu0
        %v1665 = vadd.f32 0.0, %v1664
        %v1666 = vpop.f32.mrb[0].mxu0
        %1667 = vdwg.mxu0
        %1668 = vrot.lane.b32.xlu0 %v1090, 64
        %v1669 = vpop.permute.xlu0 %1668
        %v1672 = vsel %vm1093, %v1439, 0
        %1674 = vmatprep.subr.mxu0 0.0
        %1675 = vmatpush1.msra.mxu0 %v1669
        %1676 = vmatprep.subr.mxu0 0.0
        %1677 = vmatpush1.msra.mxu0 0.0
        %1678 = vmatprep.subr.mxu0 0.0
        %1679 = vmatpush1.msra.mxu0 0.0
        %1680 = vmatprep.subr.mxu0 0.0
        %1681 = vmatpush1.msra.mxu0 0.0
        %1682 = vmatprep.subr.mxu0 0.0
        %1683 = vmatpush1.msra.mxu0 0.0
        %1684 = vmatprep.subr.mxu0 0.0
        %1685 = vmatpush1.msra.mxu0 0.0
        %1686 = vmatprep.subr.mxu0 0.0
        %1687 = vmatpush1.msra.mxu0 0.0
        %1688 = vmatprep.subr.mxu0 0.0
        %1689 = vmatpush1.msra.mxu0 0.0
        %1690 = vmatprep.subr.mxu0 0.0
        %1691 = vmatpush1.msra.mxu0 0.0
        %1692 = vmatprep.subr.mxu0 0.0
        %1693 = vmatpush1.msra.mxu0 0.0
        %1694 = vmatprep.subr.mxu0 0.0
        %1695 = vmatpush1.msra.mxu0 0.0
        %1696 = vmatprep.subr.mxu0 0.0
        %1697 = vmatpush1.msra.mxu0 0.0
        %1698 = vmatprep.subr.mxu0 0.0
        %1699 = vmatpush1.msra.mxu0 0.0
        %1700 = vmatprep.subr.mxu0 0.0
        %1701 = vmatpush1.msra.mxu0 0.0
        %1702 = vmatprep.subr.mxu0 0.0
        %1703 = vmatpush1.msra.mxu0 0.0
        %1704 = vmatprep.subr.mxu0 0.0
        %1705 = vmatpush1.msra.mxu0 0.0
        %1706 = vmatprep.subr.mxu0 0.0
        %1707 = vmatpush1.msra.mxu0 0.0
        %1708 = vmatprep.subr.mxu0 0.0
        %1709 = vmatpush1.msra.mxu0 0.0
        %1710 = vmatprep.subr.mxu0 0.0
        %1711 = vmatpush1.msra.mxu0 0.0
        %1712 = vmatprep.subr.mxu0 0.0
        %1713 = vmatpush1.msra.mxu0 0.0
        %1714 = vmatprep.subr.mxu0 0.0
        %1715 = vmatpush1.msra.mxu0 0.0
        %1716 = vmatprep.subr.mxu0 0.0
        %1717 = vmatpush1.msra.mxu0 0.0
        %1718 = vmatprep.subr.mxu0 0.0
        %1719 = vmatpush1.msra.mxu0 0.0
        %1720 = vmatprep.subr.mxu0 0.0
        %1721 = vmatpush1.msra.mxu0 0.0
        %1722 = vmatprep.subr.mxu0 0.0
        %1723 = vmatpush1.msra.mxu0 0.0
        %1724 = vmatprep.subr.mxu0 0.0
        %1725 = vmatpush1.msra.mxu0 0.0
        %1726 = vmatprep.subr.mxu0 0.0
        %1727 = vmatpush1.msra.mxu0 0.0
        %1728 = vmatprep.subr.mxu0 0.0
        %1729 = vmatpush1.msra.mxu0 0.0
        %1730 = vmatprep.subr.mxu0 0.0
        %1731 = vmatpush1.msra.mxu0 0.0
        %1732 = vmatprep.subr.mxu0 0.0
        %1733 = vmatpush1.msra.mxu0 0.0
        %1734 = vmatprep.subr.mxu0 0.0
        %1735 = vmatpush1.msra.mxu0 0.0
        %1736 = vmatprep.subr.mxu0 0.0
        %1737 = vmatpush1.msra.mxu0 0.0
        %1738 = vmatprep.mubr.f32.mxu0 0.0
        %1739 = vmatmul.mubr.f32.gmra.mrb[0].mxu0 %v1672
        %v1740 = vpop.f32.mrb[0].mxu0
        %v1741 = vadd.f32 0.0, %v1740
        %v1742 = vpop.f32.mrb[0].mxu0
        %1743 = vdwg.mxu0
        %1745 = vrot.lane.b32.xlu0 %v1589, 8
        %v1746 = vpop.permute.xlu0 %1745
        %1749 = vrot.lane.b32.xlu0 %v1665, 16
        %v1750 = vpop.permute.xlu0 %1749
        %1753 = vrot.lane.b32.xlu0 %v1741, 24
        %v1754 = vpop.permute.xlu0 %1753
        %v1756 = vsel %vm1093, %v1513, %v1746
        %vm1757 = vcmask 130048
        %v1758 = vsel %vm1757, %v1756, %v1750
        %vm1759 = vcmask 195584
        %v1760 = vsel %vm1759, %v1758, %v1754
        %v1762 = vsel %vm989, %v1760, 0
        %1764 = vmatprep.subr.mxu0 0.0
        %1765 = vmatpush1.msra.mxu0 %v1080
        %1766 = vmatprep.subr.mxu0 0.0
        %1767 = vmatpush1.msra.mxu0 %v1081
        %1768 = vmatprep.subr.mxu0 0.0
        %1769 = vmatpush1.msra.mxu0 %v1082
        %1770 = vmatprep.subr.mxu0 0.0
        %1771 = vmatpush1.msra.mxu0 %v1083
        %1772 = vmatprep.subr.mxu0 0.0
        %1773 = vmatpush1.msra.mxu0 0.0
        %1774 = vmatprep.subr.mxu0 0.0
        %1775 = vmatpush1.msra.mxu0 0.0
        %1776 = vmatprep.subr.mxu0 0.0
        %1777 = vmatpush1.msra.mxu0 0.0
        %1778 = vmatprep.subr.mxu0 0.0
        %1779 = vmatpush1.msra.mxu0 0.0
        %1780 = vmatprep.subr.mxu0 0.0
        %1781 = vmatpush1.msra.mxu0 0.0
        %1782 = vmatprep.subr.mxu0 0.0
        %1783 = vmatpush1.msra.mxu0 0.0
        %1784 = vmatprep.subr.mxu0 0.0
        %1785 = vmatpush1.msra.mxu0 0.0
        %1786 = vmatprep.subr.mxu0 0.0
        %1787 = vmatpush1.msra.mxu0 0.0
        %1788 = vmatprep.subr.mxu0 0.0
        %1789 = vmatpush1.msra.mxu0 0.0
        %1790 = vmatprep.subr.mxu0 0.0
        %1791 = vmatpush1.msra.mxu0 0.0
        %1792 = vmatprep.subr.mxu0 0.0
        %1793 = vmatpush1.msra.mxu0 0.0
        %1794 = vmatprep.subr.mxu0 0.0
        %1795 = vmatpush1.msra.mxu0 0.0
        %1796 = vmatprep.subr.mxu0 0.0
        %1797 = vmatpush1.msra.mxu0 0.0
        %1798 = vmatprep.subr.mxu0 0.0
        %1799 = vmatpush1.msra.mxu0 0.0
        %1800 = vmatprep.subr.mxu0 0.0
        %1801 = vmatpush1.msra.mxu0 0.0
        %1802 = vmatprep.subr.mxu0 0.0
        %1803 = vmatpush1.msra.mxu0 0.0
        %1804 = vmatprep.subr.mxu0 0.0
        %1805 = vmatpush1.msra.mxu0 0.0
        %1806 = vmatprep.subr.mxu0 0.0
        %1807 = vmatpush1.msra.mxu0 0.0
        %1808 = vmatprep.subr.mxu0 0.0
        %1809 = vmatpush1.msra.mxu0 0.0
        %1810 = vmatprep.subr.mxu0 0.0
        %1811 = vmatpush1.msra.mxu0 0.0
        %1812 = vmatprep.subr.mxu0 0.0
        %1813 = vmatpush1.msra.mxu0 0.0
        %1814 = vmatprep.subr.mxu0 0.0
        %1815 = vmatpush1.msra.mxu0 0.0
        %1816 = vmatprep.subr.mxu0 0.0
        %1817 = vmatpush1.msra.mxu0 0.0
        %1818 = vmatprep.subr.mxu0 0.0
        %1819 = vmatpush1.msra.mxu0 0.0
        %1820 = vmatprep.subr.mxu0 0.0
        %1821 = vmatpush1.msra.mxu0 0.0
        %1822 = vmatprep.subr.mxu0 0.0
        %1823 = vmatpush1.msra.mxu0 0.0
        %1824 = vmatprep.subr.mxu0 0.0
        %1825 = vmatpush1.msra.mxu0 0.0
        %1826 = vmatprep.subr.mxu0 0.0
        %1827 = vmatpush1.msra.mxu0 0.0
        %1828 = vmatprep.mubr.f32.mxu0 0.0
        %1829 = vmatmul.mubr.f32.gmra.mrb[0].mxu0 %v1762
        %v1830 = vpop.f32.mrb[0].mxu0
        %v1831 = vadd.f32 0.0, %v1830
        %v1832 = vpop.f32.mrb[0].mxu0
        %1833 = vdwg.mxu0
        %v1834 = vadd.f32 %v971, %v1831
        %v1835 = vmul.f32 %v1834, %v1834
        %v1836 = vsel %vm989, %v1835, 0.0
        %1837 = vadd.xlane.f32.xlu0 %v1836
        %v1838 = vpop.xlane.xlu0 %1837
        %v1839 = vmul.f32 %v1838, %v993
        %v1840 = vadd.f32 %v1839, 1e-06
        %v1841 = vrsqrt.pop %v1840
        %v1842 = vmul.f32 %v1834, %v1841
        %v1843 = vlaneseq
        %v1844 = vshrl.u32 %v1843, 7
        %v1845 = vsub.s32 1, %v1844
        %v1846 = vrot.slane %v987, %v1845
        %v1847 = vmul.f32 %v1842, %v1846
        %v1848 = vld [vmem:[#allocation11] sm:$0xff]
        %v1849 = vld [vmem:[#allocation11 + $0x8] sm:$0xff]
        %v1850 = vld [vmem:[#allocation11 + $0x10] sm:$0xff]
        %v1851 = vld [vmem:[#allocation11 + $0x18] sm:$0xff]
        %v1852 = vld [vmem:[#allocation13] sm:$0xff]
        %v1853 = vld [vmem:[#allocation13 + $0x8] sm:$0xff]
        %v1854 = vld [vmem:[#allocation13 + $0x10] sm:$0xff]
        %v1855 = vld [vmem:[#allocation13 + $0x18] sm:$0xff]
        %v1856 = vld [vmem:[#allocation13 + $0x20] sm:$0xff]
        %v1857 = vld [vmem:[#allocation13 + $0x28] sm:$0xff]
        %v1858 = vld [vmem:[#allocation13 + $0x30] sm:$0xff]
        %v1859 = vld [vmem:[#allocation13 + $0x38] sm:$0xff]
        %v1861 = vsel %vm989, %v1847, 0
        %1863 = vmatprep.subr.mxu0 0.0
        %1864 = vmatpush1.msra.mxu0 %v1848
        %1865 = vmatprep.subr.mxu0 0.0
        %1866 = vmatpush1.msra.mxu0 %v1849
        %1867 = vmatprep.subr.mxu0 0.0
        %1868 = vmatpush1.msra.mxu0 %v1850
        %1869 = vmatprep.subr.mxu0 0.0
        %1870 = vmatpush1.msra.mxu0 %v1851
        %1871 = vmatprep.subr.mxu0 0.0
        %1872 = vmatpush1.msra.mxu0 0.0
        %1873 = vmatprep.subr.mxu0 0.0
        %1874 = vmatpush1.msra.mxu0 0.0
        %1875 = vmatprep.subr.mxu0 0.0
        %1876 = vmatpush1.msra.mxu0 0.0
        %1877 = vmatprep.subr.mxu0 0.0
        %1878 = vmatpush1.msra.mxu0 0.0
        %1879 = vmatprep.subr.mxu0 0.0
        %1880 = vmatpush1.msra.mxu0 0.0
        %1881 = vmatprep.subr.mxu0 0.0
        %1882 = vmatpush1.msra.mxu0 0.0
        %1883 = vmatprep.subr.mxu0 0.0
        %1884 = vmatpush1.msra.mxu0 0.0
        %1885 = vmatprep.subr.mxu0 0.0
        %1886 = vmatpush1.msra.mxu0 0.0
        %1887 = vmatprep.subr.mxu0 0.0
        %1888 = vmatpush1.msra.mxu0 0.0
        %1889 = vmatprep.subr.mxu0 0.0
        %1890 = vmatpush1.msra.mxu0 0.0
        %1891 = vmatprep.subr.mxu0 0.0
        %1892 = vmatpush1.msra.mxu0 0.0
        %1893 = vmatprep.subr.mxu0 0.0
        %1894 = vmatpush1.msra.mxu0 0.0
        %1895 = vmatprep.subr.mxu0 0.0
        %1896 = vmatpush1.msra.mxu0 0.0
        %1897 = vmatprep.subr.mxu0 0.0
        %1898 = vmatpush1.msra.mxu0 0.0
        %1899 = vmatprep.subr.mxu0 0.0
        %1900 = vmatpush1.msra.mxu0 0.0
        %1901 = vmatprep.subr.mxu0 0.0
        %1902 = vmatpush1.msra.mxu0 0.0
        %1903 = vmatprep.subr.mxu0 0.0
        %1904 = vmatpush1.msra.mxu0 0.0
        %1905 = vmatprep.subr.mxu0 0.0
        %1906 = vmatpush1.msra.mxu0 0.0
        %1907 = vmatprep.subr.mxu0 0.0
        %1908 = vmatpush1.msra.mxu0 0.0
        %1909 = vmatprep.subr.mxu0 0.0
        %1910 = vmatpush1.msra.mxu0 0.0
        %1911 = vmatprep.subr.mxu0 0.0
        %1912 = vmatpush1.msra.mxu0 0.0
        %1913 = vmatprep.subr.mxu0 0.0
        %1914 = vmatpush1.msra.mxu0 0.0
        %1915 = vmatprep.subr.mxu0 0.0
        %1916 = vmatpush1.msra.mxu0 0.0
        %1917 = vmatprep.subr.mxu0 0.0
        %1918 = vmatpush1.msra.mxu0 0.0
        %1919 = vmatprep.subr.mxu0 0.0
        %1920 = vmatpush1.msra.mxu0 0.0
        %1921 = vmatprep.subr.mxu0 0.0
        %1922 = vmatpush1.msra.mxu0 0.0
        %1923 = vmatprep.subr.mxu0 0.0
        %1924 = vmatpush1.msra.mxu0 0.0
        %1925 = vmatprep.subr.mxu0 0.0
        %1926 = vmatpush1.msra.mxu0 0.0
        %1927 = vmatprep.mubr.f32.mxu0 0.0
        %1928 = vmatmul.mubr.f32.gmra.mrb[0].mxu0 %v1861
        %v1929 = vpop.f32.mrb[0].mxu0
        %v1930 = vadd.f32 0.0, %v1929
        %v1931 = vpop.f32.mrb[0].mxu0
        %1932 = vdwg.mxu0
        %v1933 = vmax.f32 %v1930, 0.0
        %vm1934 = vcmask 523264
        %v1936 = vsel %vm1934, %v1933, 0
        %1938 = vmatprep.subr.mxu0 0.0
        %1939 = vmatpush1.msra.mxu0 %v1852
        %1940 = vmatprep.subr.mxu0 0.0
        %1941 = vmatpush1.msra.mxu0 %v1853
        %1942 = vmatprep.subr.mxu0 0.0
        %1943 = vmatpush1.msra.mxu0 %v1854
        %1944 = vmatprep.subr.mxu0 0.0
        %1945 = vmatpush1.msra.mxu0 %v1855
        %1946 = vmatprep.subr.mxu0 0.0
        %1947 = vmatpush1.msra.mxu0 %v1856
        %1948 = vmatprep.subr.mxu0 0.0
        %1949 = vmatpush1.msra.mxu0 %v1857
        %1950 = vmatprep.subr.mxu0 0.0
        %1951 = vmatpush1.msra.mxu0 %v1858
        %1952 = vmatprep.subr.mxu0 0.0
        %1953 = vmatpush1.msra.mxu0 %v1859
        %1954 = vmatprep.subr.mxu0 0.0
        %1955 = vmatpush1.msra.mxu0 0.0
        %1956 = vmatprep.subr.mxu0 0.0
        %1957 = vmatpush1.msra.mxu0 0.0
        %1958 = vmatprep.subr.mxu0 0.0
        %1959 = vmatpush1.msra.mxu0 0.0
        %1960 = vmatprep.subr.mxu0 0.0
        %1961 = vmatpush1.msra.mxu0 0.0
        %1962 = vmatprep.subr.mxu0 0.0
        %1963 = vmatpush1.msra.mxu0 0.0
        %1964 = vmatprep.subr.mxu0 0.0
        %1965 = vmatpush1.msra.mxu0 0.0
        %1966 = vmatprep.subr.mxu0 0.0
        %1967 = vmatpush1.msra.mxu0 0.0
        %1968 = vmatprep.subr.mxu0 0.0
        %1969 = vmatpush1.msra.mxu0 0.0
        %1970 = vmatprep.subr.mxu0 0.0
        %1971 = vmatpush1.msra.mxu0 0.0
        %1972 = vmatprep.subr.mxu0 0.0
        %1973 = vmatpush1.msra.mxu0 0.0
        %1974 = vmatprep.subr.mxu0 0.0
        %1975 = vmatpush1.msra.mxu0 0.0
        %1976 = vmatprep.subr.mxu0 0.0
        %1977 = vmatpush1.msra.mxu0 0.0
        %1978 = vmatprep.subr.mxu0 0.0
        %1979 = vmatpush1.msra.mxu0 0.0
        %1980 = vmatprep.subr.mxu0 0.0
        %1981 = vmatpush1.msra.mxu0 0.0
        %1982 = vmatprep.subr.mxu0 0.0
        %1983 = vmatpush1.msra.mxu0 0.0
        %1984 = vmatprep.subr.mxu0 0.0
        %1985 = vmatpush1.msra.mxu0 0.0
        %1986 = vmatprep.subr.mxu0 0.0
        %1987 = vmatpush1.msra.mxu0 0.0
        %1988 = vmatprep.subr.mxu0 0.0
        %1989 = vmatpush1.msra.mxu0 0.0
        %1990 = vmatprep.subr.mxu0 0.0
        %1991 = vmatpush1.msra.mxu0 0.0
        %1992 = vmatprep.subr.mxu0 0.0
        %1993 = vmatpush1.msra.mxu0 0.0
        %1994 = vmatprep.subr.mxu0 0.0
        %1995 = vmatpush1.msra.mxu0 0.0
        %1996 = vmatprep.subr.mxu0 0.0
        %1997 = vmatpush1.msra.mxu0 0.0
        %1998 = vmatprep.subr.mxu0 0.0
        %1999 = vmatpush1.msra.mxu0 0.0
        %2000 = vmatprep.subr.mxu0 0.0
        %2001 = vmatpush1.msra.mxu0 0.0
        %2002 = vmatprep.mubr.f32.mxu0 0.0
        %2003 = vmatmul.mubr.f32.gmra.mrb[0].mxu0 %v1936
        %v2004 = vpop.f32.mrb[0].mxu0
        %v2005 = vadd.f32 0.0, %v2004
        %v2006 = vpop.f32.mrb[0].mxu0
        %2007 = vdwg.mxu0
        %v2008 = vadd.f32 %v1834, %v2005
        %s2009 = scalar_lea.vmem %s9, 2
        %v2010 = vld [vmem:[%s2009] sm:$0x3]
        %v2011 = vmul.f32 %v2008, %v2008
        %v2012 = vsel %vm989, %v2011, 0.0
        %2013 = vadd.xlane.f32.xlu0 %v2012
        %v2014 = vpop.xlane.xlu0 %2013
        %v2015 = vmul.f32 %v2014, %v993
        %v2016 = vadd.f32 %v2015, 1e-06
        %v2017 = vrsqrt.pop %v2016
        %v2018 = vmul.f32 %v2008, %v2017
        %v2019 = vlaneseq
        %v2020 = vshrl.u32 %v2019, 7
        %v2021 = vsub.s32 0, %v2020
        %v2022 = vrot.slane %v2010, %v2021
        %v2023 = vmul.f32 %v2018, %v2022
        %s2024 = scalar_lea.vmem [#allocation8], 32
        %v2025 = vld [vmem:[%s2024] sm:$0xff]
        %v2026 = vld [vmem:[%s2024 + $0x8] sm:$0xff]
        %v2027 = vld [vmem:[%s2024 + $0x10] sm:$0xff]
        %v2028 = vld [vmem:[%s2024 + $0x18] sm:$0xff]
        %v2030 = vsel %vm989, %v2023, 0
        %2032 = vmatprep.subr.mxu0 0.0
        %2033 = vmatpush1.msra.mxu0 %v2025
        %2034 = vmatprep.subr.mxu0 0.0
        %2035 = vmatpush1.msra.mxu0 %v2026
        %2036 = vmatprep.subr.mxu0 0.0
        %2037 = vmatpush1.msra.mxu0 %v2027
        %2038 = vmatprep.subr.mxu0 0.0
        %2039 = vmatpush1.msra.mxu0 %v2028
        %2040 = vmatprep.subr.mxu0 0.0
        %2041 = vmatpush1.msra.mxu0 0.0
        %2042 = vmatprep.subr.mxu0 0.0
        %2043 = vmatpush1.msra.mxu0 0.0
        %2044 = vmatprep.subr.mxu0 0.0
        %2045 = vmatpush1.msra.mxu0 0.0
        %2046 = vmatprep.subr.mxu0 0.0
        %2047 = vmatpush1.msra.mxu0 0.0
        %2048 = vmatprep.subr.mxu0 0.0
        %2049 = vmatpush1.msra.mxu0 0.0
        %2050 = vmatprep.subr.mxu0 0.0
        %2051 = vmatpush1.msra.mxu0 0.0
        %2052 = vmatprep.subr.mxu0 0.0
        %2053 = vmatpush1.msra.mxu0 0.0
        %2054 = vmatprep.subr.mxu0 0.0
        %2055 = vmatpush1.msra.mxu0 0.0
        %2056 = vmatprep.subr.mxu0 0.0
        %2057 = vmatpush1.msra.mxu0 0.0
        %2058 = vmatprep.subr.mxu0 0.0
        %2059 = vmatpush1.msra.mxu0 0.0
        %2060 = vmatprep.subr.mxu0 0.0
        %2061 = vmatpush1.msra.mxu0 0.0
        %2062 = vmatprep.subr.mxu0 0.0
        %2063 = vmatpush1.msra.mxu0 0.0
        %2064 = vmatprep.subr.mxu0 0.0
        %2065 = vmatpush1.msra.mxu0 0.0
        %2066 = vmatprep.subr.mxu0 0.0
        %2067 = vmatpush1.msra.mxu0 0.0
        %2068 = vmatprep.subr.mxu0 0.0
        %2069 = vmatpush1.msra.mxu0 0.0
        %2070 = vmatprep.subr.mxu0 0.0
        %2071 = vmatpush1.msra.mxu0 0.0
        %2072 = vmatprep.subr.mxu0 0.0
        %2073 = vmatpush1.msra.mxu0 0.0
        %2074 = vmatprep.subr.mxu0 0.0
        %2075 = vmatpush1.msra.mxu0 0.0
        %2076 = vmatprep.subr.mxu0 0.0
        %2077 = vmatpush1.msra.mxu0 0.0
        %2078 = vmatprep.subr.mxu0 0.0
        %2079 = vmatpush1.msra.mxu0 0.0
        %2080 = vmatprep.subr.mxu0 0.0
        %2081 = vmatpush1.msra.mxu0 0.0
        %2082 = vmatprep.subr.mxu0 0.0
        %2083 = vmatpush1.msra.mxu0 0.0
        %2084 = vmatprep.subr.mxu0 0.0
        %2085 = vmatpush1.msra.mxu0 0.0
        %2086 = vmatprep.subr.mxu0 0.0
        %2087 = vmatpush1.msra.mxu0 0.0
        %2088 = vmatprep.subr.mxu0 0.0
        %2089 = vmatpush1.msra.mxu0 0.0
        %2090 = vmatprep.subr.mxu0 0.0
        %2091 = vmatpush1.msra.mxu0 0.0
        %2092 = vmatprep.subr.mxu0 0.0
        %2093 = vmatpush1.msra.mxu0 0.0
        %2094 = vmatprep.subr.mxu0 0.0
        %2095 = vmatpush1.msra.mxu0 0.0
        %2096 = vmatprep.mubr.f32.mxu0 0.0
        %2097 = vmatmul.mubr.f32.gmra.mrb[0].mxu0 %v2030
        %v2098 = vpop.f32.mrb[0].mxu0
        %v2099 = vadd.f32 0.0, %v2098
        %v2100 = vpop.f32.mrb[0].mxu0
        %2101 = vdwg.mxu0
        %s2102 = scalar_lea.vmem [#allocation10], 32
        %v2103 = vld [vmem:[%s2102] sm:$0xff]
        %v2104 = vld [vmem:[%s2102 + $0x8] sm:$0xff]
        %v2105 = vld [vmem:[%s2102 + $0x10] sm:$0xff]
        %v2106 = vld [vmem:[%s2102 + $0x18] sm:$0xff]
        %2108 = vrot.lane.b32.xlu0 %v2099, 120
        %v2109 = vpop.permute.xlu0 %2108
        %2110 = vrot.lane.b32.xlu0 %v2099, 112
        %v2111 = vpop.permute.xlu0 %2110
        %2112 = vrot.lane.b32.xlu0 %v2099, 104
        %v2113 = vpop.permute.xlu0 %2112
        %2114 = vrot.lane.b32.xlu0 %v2099, 96
        %v2115 = vpop.permute.xlu0 %2114
        %v2116 = vsel %vm1093, %v2099, 0
        %v2118 = vsel %vm1093, %v2115, 0
        %2120 = vmatprep.subr.mxu0 0.0
        %2121 = vmatpush1.xpose.msra.mxu0 %v2118
        %2122 = vmatprep.subr.mxu0 0.0
        %2123 = vmatpush1.xpose.msra.mxu0 0.0
        %2124 = vmatprep.subr.mxu0 0.0
        %2125 = vmatpush1.xpose.msra.mxu0 0.0
        %2126 = vmatprep.subr.mxu0 0.0
        %2127 = vmatpush1.xpose.msra.mxu0 0.0
        %2128 = vmatprep.subr.mxu0 0.0
        %2129 = vmatpush1.xpose.msra.mxu0 0.0
        %2130 = vmatprep.subr.mxu0 0.0
        %2131 = vmatpush1.xpose.msra.mxu0 0.0
        %2132 = vmatprep.subr.mxu0 0.0
        %2133 = vmatpush1.xpose.msra.mxu0 0.0
        %2134 = vmatprep.subr.mxu0 0.0
        %2135 = vmatpush1.xpose.msra.mxu0 0.0
        %2136 = vmatprep.subr.mxu0 0.0
        %2137 = vmatpush1.xpose.msra.mxu0 0.0
        %2138 = vmatprep.subr.mxu0 0.0
        %2139 = vmatpush1.xpose.msra.mxu0 0.0
        %2140 = vmatprep.subr.mxu0 0.0
        %2141 = vmatpush1.xpose.msra.mxu0 0.0
        %2142 = vmatprep.subr.mxu0 0.0
        %2143 = vmatpush1.xpose.msra.mxu0 0.0
        %2144 = vmatprep.subr.mxu0 0.0
        %2145 = vmatpush1.xpose.msra.mxu0 0.0
        %2146 = vmatprep.subr.mxu0 0.0
        %2147 = vmatpush1.xpose.msra.mxu0 0.0
        %2148 = vmatprep.subr.mxu0 0.0
        %2149 = vmatpush1.xpose.msra.mxu0 0.0
        %2150 = vmatprep.subr.mxu0 0.0
        %2151 = vmatpush1.xpose.msra.mxu0 0.0
        %2152 = vmatprep.subr.mxu0 0.0
        %2153 = vmatpush1.xpose.msra.mxu0 0.0
        %2154 = vmatprep.subr.mxu0 0.0
        %2155 = vmatpush1.xpose.msra.mxu0 0.0
        %2156 = vmatprep.subr.mxu0 0.0
        %2157 = vmatpush1.xpose.msra.mxu0 0.0
        %2158 = vmatprep.subr.mxu0 0.0
        %2159 = vmatpush1.xpose.msra.mxu0 0.0
        %2160 = vmatprep.subr.mxu0 0.0
        %2161 = vmatpush1.xpose.msra.mxu0 0.0
        %2162 = vmatprep.subr.mxu0 0.0
        %2163 = vmatpush1.xpose.msra.mxu0 0.0
        %2164 = vmatprep.subr.mxu0 0.0
        %2165 = vmatpush1.xpose.msra.mxu0 0.0
        %2166 = vmatprep.subr.mxu0 0.0
        %2167 = vmatpush1.xpose.msra.mxu0 0.0
        %2168 = vmatprep.subr.mxu0 0.0
        %2169 = vmatpush1.xpose.msra.mxu0 0.0
        %2170 = vmatprep.subr.mxu0 0.0
        %2171 = vmatpush1.xpose.msra.mxu0 0.0
        %2172 = vmatprep.subr.mxu0 0.0
        %2173 = vmatpush1.xpose.msra.mxu0 0.0
        %2174 = vmatprep.subr.mxu0 0.0
        %2175 = vmatpush1.xpose.msra.mxu0 0.0
        %2176 = vmatprep.subr.mxu0 0.0
        %2177 = vmatpush1.xpose.msra.mxu0 0.0
        %2178 = vmatprep.subr.mxu0 0.0
        %2179 = vmatpush1.xpose.msra.mxu0 0.0
        %2180 = vmatprep.subr.mxu0 0.0
        %2181 = vmatpush1.xpose.msra.mxu0 0.0
        %2182 = vmatprep.subr.mxu0 0.0
        %2183 = vmatpush1.xpose.msra.mxu0 0.0
        %2184 = vmatprep.mubr.f32.mxu0 0.0
        %2185 = vmatmul.mubr.f32.gmra.mrb[0].mxu0 %v2116
        %v2186 = vpop.f32.mrb[0].mxu0
        %v2187 = vadd.f32 %v979, %v2186
        %v2188 = vpop.f32.mrb[0].mxu0
        %2189 = vdwg.mxu0
        %2190 = vrot.lane.b32.xlu0 %v2109, 96
        %v2191 = vpop.permute.xlu0 %2190
        %v2192 = vsel %vm1093, %v2109, 0
        %v2194 = vsel %vm1093, %v2191, 0
        %2196 = vmatprep.subr.mxu0 0.0
        %2197 = vmatpush1.xpose.msra.mxu0 %v2194
        %2198 = vmatprep.subr.mxu0 0.0
        %2199 = vmatpush1.xpose.msra.mxu0 0.0
        %2200 = vmatprep.subr.mxu0 0.0
        %2201 = vmatpush1.xpose.msra.mxu0 0.0
        %2202 = vmatprep.subr.mxu0 0.0
        %2203 = vmatpush1.xpose.msra.mxu0 0.0
        %2204 = vmatprep.subr.mxu0 0.0
        %2205 = vmatpush1.xpose.msra.mxu0 0.0
        %2206 = vmatprep.subr.mxu0 0.0
        %2207 = vmatpush1.xpose.msra.mxu0 0.0
        %2208 = vmatprep.subr.mxu0 0.0
        %2209 = vmatpush1.xpose.msra.mxu0 0.0
        %2210 = vmatprep.subr.mxu0 0.0
        %2211 = vmatpush1.xpose.msra.mxu0 0.0
        %2212 = vmatprep.subr.mxu0 0.0
        %2213 = vmatpush1.xpose.msra.mxu0 0.0
        %2214 = vmatprep.subr.mxu0 0.0
        %2215 = vmatpush1.xpose.msra.mxu0 0.0
        %2216 = vmatprep.subr.mxu0 0.0
        %2217 = vmatpush1.xpose.msra.mxu0 0.0
        %2218 = vmatprep.subr.mxu0 0.0
        %2219 = vmatpush1.xpose.msra.mxu0 0.0
        %2220 = vmatprep.subr.mxu0 0.0
        %2221 = vmatpush1.xpose.msra.mxu0 0.0
        %2222 = vmatprep.subr.mxu0 0.0
        %2223 = vmatpush1.xpose.msra.mxu0 0.0
        %2224 = vmatprep.subr.mxu0 0.0
        %2225 = vmatpush1.xpose.msra.mxu0 0.0
        %2226 = vmatprep.subr.mxu0 0.0
        %2227 = vmatpush1.xpose.msra.mxu0 0.0
        %2228 = vmatprep.subr.mxu0 0.0
        %2229 = vmatpush1.xpose.msra.mxu0 0.0
        %2230 = vmatprep.subr.mxu0 0.0
        %2231 = vmatpush1.xpose.msra.mxu0 0.0
        %2232 = vmatprep.subr.mxu0 0.0
        %2233 = vmatpush1.xpose.msra.mxu0 0.0
        %2234 = vmatprep.subr.mxu0 0.0
        %2235 = vmatpush1.xpose.msra.mxu0 0.0
        %2236 = vmatprep.subr.mxu0 0.0
        %2237 = vmatpush1.xpose.msra.mxu0 0.0
        %2238 = vmatprep.subr.mxu0 0.0
        %2239 = vmatpush1.xpose.msra.mxu0 0.0
        %2240 = vmatprep.subr.mxu0 0.0
        %2241 = vmatpush1.xpose.msra.mxu0 0.0
        %2242 = vmatprep.subr.mxu0 0.0
        %2243 = vmatpush1.xpose.msra.mxu0 0.0
        %2244 = vmatprep.subr.mxu0 0.0
        %2245 = vmatpush1.xpose.msra.mxu0 0.0
        %2246 = vmatprep.subr.mxu0 0.0
        %2247 = vmatpush1.xpose.msra.mxu0 0.0
        %2248 = vmatprep.subr.mxu0 0.0
        %2249 = vmatpush1.xpose.msra.mxu0 0.0
        %2250 = vmatprep.subr.mxu0 0.0
        %2251 = vmatpush1.xpose.msra.mxu0 0.0
        %2252 = vmatprep.subr.mxu0 0.0
        %2253 = vmatpush1.xpose.msra.mxu0 0.0
        %2254 = vmatprep.subr.mxu0 0.0
        %2255 = vmatpush1.xpose.msra.mxu0 0.0
        %2256 = vmatprep.subr.mxu0 0.0
        %2257 = vmatpush1.xpose.msra.mxu0 0.0
        %2258 = vmatprep.subr.mxu0 0.0
        %2259 = vmatpush1.xpose.msra.mxu0 0.0
        %2260 = vmatprep.mubr.f32.mxu0 0.0
        %2261 = vmatmul.mubr.f32.gmra.mrb[0].mxu0 %v2192
        %v2262 = vpop.f32.mrb[0].mxu0
        %v2263 = vadd.f32 %v980, %v2262
        %v2264 = vpop.f32.mrb[0].mxu0
        %2265 = vdwg.mxu0
        %2266 = vrot.lane.b32.xlu0 %v2111, 96
        %v2267 = vpop.permute.xlu0 %2266
        %v2268 = vsel %vm1093, %v2111, 0
        %v2270 = vsel %vm1093, %v2267, 0
        %2272 = vmatprep.subr.mxu0 0.0
        %2273 = vmatpush1.xpose.msra.mxu0 %v2270
        %2274 = vmatprep.subr.mxu0 0.0
        %2275 = vmatpush1.xpose.msra.mxu0 0.0
        %2276 = vmatprep.subr.mxu0 0.0
        %2277 = vmatpush1.xpose.msra.mxu0 0.0
        %2278 = vmatprep.subr.mxu0 0.0
        %2279 = vmatpush1.xpose.msra.mxu0 0.0
        %2280 = vmatprep.subr.mxu0 0.0
        %2281 = vmatpush1.xpose.msra.mxu0 0.0
        %2282 = vmatprep.subr.mxu0 0.0
        %2283 = vmatpush1.xpose.msra.mxu0 0.0
        %2284 = vmatprep.subr.mxu0 0.0
        %2285 = vmatpush1.xpose.msra.mxu0 0.0
        %2286 = vmatprep.subr.mxu0 0.0
        %2287 = vmatpush1.xpose.msra.mxu0 0.0
        %2288 = vmatprep.subr.mxu0 0.0
        %2289 = vmatpush1.xpose.msra.mxu0 0.0
        %2290 = vmatprep.subr.mxu0 0.0
        %2291 = vmatpush1.xpose.msra.mxu0 0.0
        %2292 = vmatprep.subr.mxu0 0.0
        %2293 = vmatpush1.xpose.msra.mxu0 0.0
        %2294 = vmatprep.subr.mxu0 0.0
        %2295 = vmatpush1.xpose.msra.mxu0 0.0
        %2296 = vmatprep.subr.mxu0 0.0
        %2297 = vmatpush1.xpose.msra.mxu0 0.0
        %2298 = vmatprep.subr.mxu0 0.0
        %2299 = vmatpush1.xpose.msra.mxu0 0.0
        %2300 = vmatprep.subr.mxu0 0.0
        %2301 = vmatpush1.xpose.msra.mxu0 0.0
        %2302 = vmatprep.subr.mxu0 0.0
        %2303 = vmatpush1.xpose.msra.mxu0 0.0
        %2304 = vmatprep.subr.mxu0 0.0
        %2305 = vmatpush1.xpose.msra.mxu0 0.0
        %2306 = vmatprep.subr.mxu0 0.0
        %2307 = vmatpush1.xpose.msra.mxu0 0.0
        %2308 = vmatprep.subr.mxu0 0.0
        %2309 = vmatpush1.xpose.msra.mxu0 0.0
        %2310 = vmatprep.subr.mxu0 0.0
        %2311 = vmatpush1.xpose.msra.mxu0 0.0
        %2312 = vmatprep.subr.mxu0 0.0
        %2313 = vmatpush1.xpose.msra.mxu0 0.0
        %2314 = vmatprep.subr.mxu0 0.0
        %2315 = vmatpush1.xpose.msra.mxu0 0.0
        %2316 = vmatprep.subr.mxu0 0.0
        %2317 = vmatpush1.xpose.msra.mxu0 0.0
        %2318 = vmatprep.subr.mxu0 0.0
        %2319 = vmatpush1.xpose.msra.mxu0 0.0
        %2320 = vmatprep.subr.mxu0 0.0
        %2321 = vmatpush1.xpose.msra.mxu0 0.0
        %2322 = vmatprep.subr.mxu0 0.0
        %2323 = vmatpush1.xpose.msra.mxu0 0.0
        %2324 = vmatprep.subr.mxu0 0.0
        %2325 = vmatpush1.xpose.msra.mxu0 0.0
        %2326 = vmatprep.subr.mxu0 0.0
        %2327 = vmatpush1.xpose.msra.mxu0 0.0
        %2328 = vmatprep.subr.mxu0 0.0
        %2329 = vmatpush1.xpose.msra.mxu0 0.0
        %2330 = vmatprep.subr.mxu0 0.0
        %2331 = vmatpush1.xpose.msra.mxu0 0.0
        %2332 = vmatprep.subr.mxu0 0.0
        %2333 = vmatpush1.xpose.msra.mxu0 0.0
        %2334 = vmatprep.subr.mxu0 0.0
        %2335 = vmatpush1.xpose.msra.mxu0 0.0
        %2336 = vmatprep.mubr.f32.mxu0 0.0
        %2337 = vmatmul.mubr.f32.gmra.mrb[0].mxu0 %v2268
        %v2338 = vpop.f32.mrb[0].mxu0
        %v2339 = vadd.f32 %v981, %v2338
        %v2340 = vpop.f32.mrb[0].mxu0
        %2341 = vdwg.mxu0
        %2342 = vrot.lane.b32.xlu0 %v2113, 96
        %v2343 = vpop.permute.xlu0 %2342
        %v2344 = vsel %vm1093, %v2113, 0
        %v2346 = vsel %vm1093, %v2343, 0
        %2348 = vmatprep.subr.mxu0 0.0
        %2349 = vmatpush1.xpose.msra.mxu0 %v2346
        %2350 = vmatprep.subr.mxu0 0.0
        %2351 = vmatpush1.xpose.msra.mxu0 0.0
        %2352 = vmatprep.subr.mxu0 0.0
        %2353 = vmatpush1.xpose.msra.mxu0 0.0
        %2354 = vmatprep.subr.mxu0 0.0
        %2355 = vmatpush1.xpose.msra.mxu0 0.0
        %2356 = vmatprep.subr.mxu0 0.0
        %2357 = vmatpush1.xpose.msra.mxu0 0.0
        %2358 = vmatprep.subr.mxu0 0.0
        %2359 = vmatpush1.xpose.msra.mxu0 0.0
        %2360 = vmatprep.subr.mxu0 0.0
        %2361 = vmatpush1.xpose.msra.mxu0 0.0
        %2362 = vmatprep.subr.mxu0 0.0
        %2363 = vmatpush1.xpose.msra.mxu0 0.0
        %2364 = vmatprep.subr.mxu0 0.0
        %2365 = vmatpush1.xpose.msra.mxu0 0.0
        %2366 = vmatprep.subr.mxu0 0.0
        %2367 = vmatpush1.xpose.msra.mxu0 0.0
        %2368 = vmatprep.subr.mxu0 0.0
        %2369 = vmatpush1.xpose.msra.mxu0 0.0
        %2370 = vmatprep.subr.mxu0 0.0
        %2371 = vmatpush1.xpose.msra.mxu0 0.0
        %2372 = vmatprep.subr.mxu0 0.0
        %2373 = vmatpush1.xpose.msra.mxu0 0.0
        %2374 = vmatprep.subr.mxu0 0.0
        %2375 = vmatpush1.xpose.msra.mxu0 0.0
        %2376 = vmatprep.subr.mxu0 0.0
        %2377 = vmatpush1.xpose.msra.mxu0 0.0
        %2378 = vmatprep.subr.mxu0 0.0
        %2379 = vmatpush1.xpose.msra.mxu0 0.0
        %2380 = vmatprep.subr.mxu0 0.0
        %2381 = vmatpush1.xpose.msra.mxu0 0.0
        %2382 = vmatprep.subr.mxu0 0.0
        %2383 = vmatpush1.xpose.msra.mxu0 0.0
        %2384 = vmatprep.subr.mxu0 0.0
        %2385 = vmatpush1.xpose.msra.mxu0 0.0
        %2386 = vmatprep.subr.mxu0 0.0
        %2387 = vmatpush1.xpose.msra.mxu0 0.0
        %2388 = vmatprep.subr.mxu0 0.0
        %2389 = vmatpush1.xpose.msra.mxu0 0.0
        %2390 = vmatprep.subr.mxu0 0.0
        %2391 = vmatpush1.xpose.msra.mxu0 0.0
        %2392 = vmatprep.subr.mxu0 0.0
        %2393 = vmatpush1.xpose.msra.mxu0 0.0
        %2394 = vmatprep.subr.mxu0 0.0
        %2395 = vmatpush1.xpose.msra.mxu0 0.0
        %2396 = vmatprep.subr.mxu0 0.0
        %2397 = vmatpush1.xpose.msra.mxu0 0.0
        %2398 = vmatprep.subr.mxu0 0.0
        %2399 = vmatpush1.xpose.msra.mxu0 0.0
        %2400 = vmatprep.subr.mxu0 0.0
        %2401 = vmatpush1.xpose.msra.mxu0 0.0
        %2402 = vmatprep.subr.mxu0 0.0
        %2403 = vmatpush1.xpose.msra.mxu0 0.0
        %2404 = vmatprep.subr.mxu0 0.0
        %2405 = vmatpush1.xpose.msra.mxu0 0.0
        %2406 = vmatprep.subr.mxu0 0.0
        %2407 = vmatpush1.xpose.msra.mxu0 0.0
        %2408 = vmatprep.subr.mxu0 0.0
        %2409 = vmatpush1.xpose.msra.mxu0 0.0
        %2410 = vmatprep.subr.mxu0 0.0
        %2411 = vmatpush1.xpose.msra.mxu0 0.0
        %2412 = vmatprep.mubr.f32.mxu0 0.0
        %2413 = vmatmul.mubr.f32.gmra.mrb[0].mxu0 %v2344
        %v2414 = vpop.f32.mrb[0].mxu0
        %v2415 = vadd.f32 %v982, %v2414
        %v2416 = vpop.f32.mrb[0].mxu0
        %2417 = vdwg.mxu0
        %v2418 = vsel %vm1093, %v2187, -inf
        %2419 = vmax.xlane.f32.xlu0 %v2418
        %v2420 = vpop.xlane.xlu0 %2419
        %v2421 = vsel %vm1093, %v2263, -inf
        %2422 = vmax.xlane.f32.xlu0 %v2421
        %v2423 = vpop.xlane.xlu0 %2422
        %v2424 = vsel %vm1093, %v2339, -inf
        %2425 = vmax.xlane.f32.xlu0 %v2424
        %v2426 = vpop.xlane.xlu0 %2425
        %v2427 = vsel %vm1093, %v2415, -inf
        %2428 = vmax.xlane.f32.xlu0 %v2427
        %v2429 = vpop.xlane.xlu0 %2428
        %v2430 = vsub.f32 %v2187, %v2420
        %v2431 = vsub.f32 %v2263, %v2423
        %v2432 = vsub.f32 %v2339, %v2426
        %v2433 = vsub.f32 %v2415, %v2429
        %v2434 = vmul.f32 %v2430, 1.442695
        %v2435 = vpow.pop %v2434
        %v2436 = vmul.f32 %v2431, 1.442695
        %v2437 = vpow.pop %v2436
        %v2438 = vmul.f32 %v2432, 1.442695
        %v2439 = vpow.pop %v2438
        %v2440 = vmul.f32 %v2433, 1.442695
        %v2441 = vpow.pop %v2440
        %v2442 = vsel %vm1093, %v2435, 0.0
        %2443 = vadd.xlane.f32.xlu0 %v2442
        %v2444 = vpop.xlane.xlu0 %2443
        %v2445 = vsel %vm1093, %v2437, 0.0
        %2446 = vadd.xlane.f32.xlu0 %v2445
        %v2447 = vpop.xlane.xlu0 %2446
        %v2448 = vsel %vm1093, %v2439, 0.0
        %2449 = vadd.xlane.f32.xlu0 %v2448
        %v2450 = vpop.xlane.xlu0 %2449
        %v2451 = vsel %vm1093, %v2441, 0.0
        %2452 = vadd.xlane.f32.xlu0 %v2451
        %v2453 = vpop.xlane.xlu0 %2452
        %v2454 = vrcp.pop %v2444
        %v2455 = vrcp.pop %v2447
        %v2456 = vrcp.pop %v2450
        %v2457 = vrcp.pop %v2453
        %v2458 = vmul.f32 %v2435, %v2454
        %v2459 = vmul.f32 %v2437, %v2455
        %v2460 = vmul.f32 %v2439, %v2456
        %v2461 = vmul.f32 %v2441, %v2457
        %2462 = vrot.lane.b32.xlu0 %v2099, 64
        %v2463 = vpop.permute.xlu0 %2462
        %v2466 = vsel %vm1093, %v2458, 0
        %2468 = vmatprep.subr.mxu0 0.0
        %2469 = vmatpush1.msra.mxu0 %v2463
        %2470 = vmatprep.subr.mxu0 0.0
        %2471 = vmatpush1.msra.mxu0 0.0
        %2472 = vmatprep.subr.mxu0 0.0
        %2473 = vmatpush1.msra.mxu0 0.0
        %2474 = vmatprep.subr.mxu0 0.0
        %2475 = vmatpush1.msra.mxu0 0.0
        %2476 = vmatprep.subr.mxu0 0.0
        %2477 = vmatpush1.msra.mxu0 0.0
        %2478 = vmatprep.subr.mxu0 0.0
        %2479 = vmatpush1.msra.mxu0 0.0
        %2480 = vmatprep.subr.mxu0 0.0
        %2481 = vmatpush1.msra.mxu0 0.0
        %2482 = vmatprep.subr.mxu0 0.0
        %2483 = vmatpush1.msra.mxu0 0.0
        %2484 = vmatprep.subr.mxu0 0.0
        %2485 = vmatpush1.msra.mxu0 0.0
        %2486 = vmatprep.subr.mxu0 0.0
        %2487 = vmatpush1.msra.mxu0 0.0
        %2488 = vmatprep.subr.mxu0 0.0
        %2489 = vmatpush1.msra.mxu0 0.0
        %2490 = vmatprep.subr.mxu0 0.0
        %2491 = vmatpush1.msra.mxu0 0.0
        %2492 = vmatprep.subr.mxu0 0.0
        %2493 = vmatpush1.msra.mxu0 0.0
        %2494 = vmatprep.subr.mxu0 0.0
        %2495 = vmatpush1.msra.mxu0 0.0
        %2496 = vmatprep.subr.mxu0 0.0
        %2497 = vmatpush1.msra.mxu0 0.0
        %2498 = vmatprep.subr.mxu0 0.0
        %2499 = vmatpush1.msra.mxu0 0.0
        %2500 = vmatprep.subr.mxu0 0.0
        %2501 = vmatpush1.msra.mxu0 0.0
        %2502 = vmatprep.subr.mxu0 0.0
        %2503 = vmatpush1.msra.mxu0 0.0
        %2504 = vmatprep.subr.mxu0 0.0
        %2505 = vmatpush1.msra.mxu0 0.0
        %2506 = vmatprep.subr.mxu0 0.0
        %2507 = vmatpush1.msra.mxu0 0.0
        %2508 = vmatprep.subr.mxu0 0.0
        %2509 = vmatpush1.msra.mxu0 0.0
        %2510 = vmatprep.subr.mxu0 0.0
        %2511 = vmatpush1.msra.mxu0 0.0
        %2512 = vmatprep.subr.mxu0 0.0
        %2513 = vmatpush1.msra.mxu0 0.0
        %2514 = vmatprep.subr.mxu0 0.0
        %2515 = vmatpush1.msra.mxu0 0.0
        %2516 = vmatprep.subr.mxu0 0.0
        %2517 = vmatpush1.msra.mxu0 0.0
        %2518 = vmatprep.subr.mxu0 0.0
        %2519 = vmatpush1.msra.mxu0 0.0
        %2520 = vmatprep.subr.mxu0 0.0
        %2521 = vmatpush1.msra.mxu0 0.0
        %2522 = vmatprep.subr.mxu0 0.0
        %2523 = vmatpush1.msra.mxu0 0.0
        %2524 = vmatprep.subr.mxu0 0.0
        %2525 = vmatpush1.msra.mxu0 0.0
        %2526 = vmatprep.subr.mxu0 0.0
        %2527 = vmatpush1.msra.mxu0 0.0
        %2528 = vmatprep.subr.mxu0 0.0
        %2529 = vmatpush1.msra.mxu0 0.0
        %2530 = vmatprep.subr.mxu0 0.0
        %2531 = vmatpush1.msra.mxu0 0.0
        %2532 = vmatprep.mubr.f32.mxu0 0.0
        %2533 = vmatmul.mubr.f32.gmra.mrb[0].mxu0 %v2466
        %v2534 = vpop.f32.mrb[0].mxu0
        %v2535 = vadd.f32 0.0, %v2534
        %v2536 = vpop.f32.mrb[0].mxu0
        %2537 = vdwg.mxu0
        %2538 = vrot.lane.b32.xlu0 %v2109, 64
        %v2539 = vpop.permute.xlu0 %2538
        %v2542 = vsel %vm1093, %v2459, 0
        %2544 = vmatprep.subr.mxu0 0.0
        %2545 = vmatpush1.msra.mxu0 %v2539
        %2546 = vmatprep.subr.mxu0 0.0
        %2547 = vmatpush1.msra.mxu0 0.0
        %2548 = vmatprep.subr.mxu0 0.0
        %2549 = vmatpush1.msra.mxu0 0.0
        %2550 = vmatprep.subr.mxu0 0.0
        %2551 = vmatpush1.msra.mxu0 0.0
        %2552 = vmatprep.subr.mxu0 0.0
        %2553 = vmatpush1.msra.mxu0 0.0
        %2554 = vmatprep.subr.mxu0 0.0
        %2555 = vmatpush1.msra.mxu0 0.0
        %2556 = vmatprep.subr.mxu0 0.0
        %2557 = vmatpush1.msra.mxu0 0.0
        %2558 = vmatprep.subr.mxu0 0.0
        %2559 = vmatpush1.msra.mxu0 0.0
        %2560 = vmatprep.subr.mxu0 0.0
        %2561 = vmatpush1.msra.mxu0 0.0
        %2562 = vmatprep.subr.mxu0 0.0
        %2563 = vmatpush1.msra.mxu0 0.0
        %2564 = vmatprep.subr.mxu0 0.0
        %2565 = vmatpush1.msra.mxu0 0.0
        %2566 = vmatprep.subr.mxu0 0.0
        %2567 = vmatpush1.msra.mxu0 0.0
        %2568 = vmatprep.subr.mxu0 0.0
        %2569 = vmatpush1.msra.mxu0 0.0
        %2570 = vmatprep.subr.mxu0 0.0
        %2571 = vmatpush1.msra.mxu0 0.0
        %2572 = vmatprep.subr.mxu0 0.0
        %2573 = vmatpush1.msra.mxu0 0.0
        %2574 = vmatprep.subr.mxu0 0.0
        %2575 = vmatpush1.msra.mxu0 0.0
        %2576 = vmatprep.subr.mxu0 0.0
        %2577 = vmatpush1.msra.mxu0 0.0
        %2578 = vmatprep.subr.mxu0 0.0
        %2579 = vmatpush1.msra.mxu0 0.0
        %2580 = vmatprep.subr.mxu0 0.0
        %2581 = vmatpush1.msra.mxu0 0.0
        %2582 = vmatprep.subr.mxu0 0.0
        %2583 = vmatpush1.msra.mxu0 0.0
        %2584 = vmatprep.subr.mxu0 0.0
        %2585 = vmatpush1.msra.mxu0 0.0
        %2586 = vmatprep.subr.mxu0 0.0
        %2587 = vmatpush1.msra.mxu0 0.0
        %2588 = vmatprep.subr.mxu0 0.0
        %2589 = vmatpush1.msra.mxu0 0.0
        %2590 = vmatprep.subr.mxu0 0.0
        %2591 = vmatpush1.msra.mxu0 0.0
        %2592 = vmatprep.subr.mxu0 0.0
        %2593 = vmatpush1.msra.mxu0 0.0
        %2594 = vmatprep.subr.mxu0 0.0
        %2595 = vmatpush1.msra.mxu0 0.0
        %2596 = vmatprep.subr.mxu0 0.0
        %2597 = vmatpush1.msra.mxu0 0.0
        %2598 = vmatprep.subr.mxu0 0.0
        %2599 = vmatpush1.msra.mxu0 0.0
        %2600 = vmatprep.subr.mxu0 0.0
        %2601 = vmatpush1.msra.mxu0 0.0
        %2602 = vmatprep.subr.mxu0 0.0
        %2603 = vmatpush1.msra.mxu0 0.0
        %2604 = vmatprep.subr.mxu0 0.0
        %2605 = vmatpush1.msra.mxu0 0.0
        %2606 = vmatprep.subr.mxu0 0.0
        %2607 = vmatpush1.msra.mxu0 0.0
        %2608 = vmatprep.mubr.f32.mxu0 0.0
        %2609 = vmatmul.mubr.f32.gmra.mrb[0].mxu0 %v2542
        %v2610 = vpop.f32.mrb[0].mxu0
        %v2611 = vadd.f32 0.0, %v2610
        %v2612 = vpop.f32.mrb[0].mxu0
        %2613 = vdwg.mxu0
        %2614 = vrot.lane.b32.xlu0 %v2111, 64
        %v2615 = vpop.permute.xlu0 %2614
        %v2618 = vsel %vm1093, %v2460, 0
        %2620 = vmatprep.subr.mxu0 0.0
        %2621 = vmatpush1.msra.mxu0 %v2615
        %2622 = vmatprep.subr.mxu0 0.0
        %2623 = vmatpush1.msra.mxu0 0.0
        %2624 = vmatprep.subr.mxu0 0.0
        %2625 = vmatpush1.msra.mxu0 0.0
        %2626 = vmatprep.subr.mxu0 0.0
        %2627 = vmatpush1.msra.mxu0 0.0
        %2628 = vmatprep.subr.mxu0 0.0
        %2629 = vmatpush1.msra.mxu0 0.0
        %2630 = vmatprep.subr.mxu0 0.0
        %2631 = vmatpush1.msra.mxu0 0.0
        %2632 = vmatprep.subr.mxu0 0.0
        %2633 = vmatpush1.msra.mxu0 0.0
        %2634 = vmatprep.subr.mxu0 0.0
        %2635 = vmatpush1.msra.mxu0 0.0
        %2636 = vmatprep.subr.mxu0 0.0
        %2637 = vmatpush1.msra.mxu0 0.0
        %2638 = vmatprep.subr.mxu0 0.0
        %2639 = vmatpush1.msra.mxu0 0.0
        %2640 = vmatprep.subr.mxu0 0.0
        %2641 = vmatpush1.msra.mxu0 0.0
        %2642 = vmatprep.subr.mxu0 0.0
        %2643 = vmatpush1.msra.mxu0 0.0
        %2644 = vmatprep.subr.mxu0 0.0
        %2645 = vmatpush1.msra.mxu0 0.0
        %2646 = vmatprep.subr.mxu0 0.0
        %2647 = vmatpush1.msra.mxu0 0.0
        %2648 = vmatprep.subr.mxu0 0.0
        %2649 = vmatpush1.msra.mxu0 0.0
        %2650 = vmatprep.subr.mxu0 0.0
        %2651 = vmatpush1.msra.mxu0 0.0
        %2652 = vmatprep.subr.mxu0 0.0
        %2653 = vmatpush1.msra.mxu0 0.0
        %2654 = vmatprep.subr.mxu0 0.0
        %2655 = vmatpush1.msra.mxu0 0.0
        %2656 = vmatprep.subr.mxu0 0.0
        %2657 = vmatpush1.msra.mxu0 0.0
        %2658 = vmatprep.subr.mxu0 0.0
        %2659 = vmatpush1.msra.mxu0 0.0
        %2660 = vmatprep.subr.mxu0 0.0
        %2661 = vmatpush1.msra.mxu0 0.0
        %2662 = vmatprep.subr.mxu0 0.0
        %2663 = vmatpush1.msra.mxu0 0.0
        %2664 = vmatprep.subr.mxu0 0.0
        %2665 = vmatpush1.msra.mxu0 0.0
        %2666 = vmatprep.subr.mxu0 0.0
        %2667 = vmatpush1.msra.mxu0 0.0
        %2668 = vmatprep.subr.mxu0 0.0
        %2669 = vmatpush1.msra.mxu0 0.0
        %2670 = vmatprep.subr.mxu0 0.0
        %2671 = vmatpush1.msra.mxu0 0.0
        %2672 = vmatprep.subr.mxu0 0.0
        %2673 = vmatpush1.msra.mxu0 0.0
        %2674 = vmatprep.subr.mxu0 0.0
        %2675 = vmatpush1.msra.mxu0 0.0
        %2676 = vmatprep.subr.mxu0 0.0
        %2677 = vmatpush1.msra.mxu0 0.0
        %2678 = vmatprep.subr.mxu0 0.0
        %2679 = vmatpush1.msra.mxu0 0.0
        %2680 = vmatprep.subr.mxu0 0.0
        %2681 = vmatpush1.msra.mxu0 0.0
        %2682 = vmatprep.subr.mxu0 0.0
        %2683 = vmatpush1.msra.mxu0 0.0
        %2684 = vmatprep.mubr.f32.mxu0 0.0
        %2685 = vmatmul.mubr.f32.gmra.mrb[0].mxu0 %v2618
        %v2686 = vpop.f32.mrb[0].mxu0
        %v2687 = vadd.f32 0.0, %v2686
        %v2688 = vpop.f32.mrb[0].mxu0
        %2689 = vdwg.mxu0
        %2690 = vrot.lane.b32.xlu0 %v2113, 64
        %v2691 = vpop.permute.xlu0 %2690
        %v2694 = vsel %vm1093, %v2461, 0
        %2696 = vmatprep.subr.mxu0 0.0
        %2697 = vmatpush1.msra.mxu0 %v2691
        %2698 = vmatprep.subr.mxu0 0.0
        %2699 = vmatpush1.msra.mxu0 0.0
        %2700 = vmatprep.subr.mxu0 0.0
        %2701 = vmatpush1.msra.mxu0 0.0
        %2702 = vmatprep.subr.mxu0 0.0
        %2703 = vmatpush1.msra.mxu0 0.0
        %2704 = vmatprep.subr.mxu0 0.0
        %2705 = vmatpush1.msra.mxu0 0.0
        %2706 = vmatprep.subr.mxu0 0.0
        %2707 = vmatpush1.msra.mxu0 0.0
        %2708 = vmatprep.subr.mxu0 0.0
        %2709 = vmatpush1.msra.mxu0 0.0
        %2710 = vmatprep.subr.mxu0 0.0
        %2711 = vmatpush1.msra.mxu0 0.0
        %2712 = vmatprep.subr.mxu0 0.0
        %2713 = vmatpush1.msra.mxu0 0.0
        %2714 = vmatprep.subr.mxu0 0.0
        %2715 = vmatpush1.msra.mxu0 0.0
        %2716 = vmatprep.subr.mxu0 0.0
        %2717 = vmatpush1.msra.mxu0 0.0
        %2718 = vmatprep.subr.mxu0 0.0
        %2719 = vmatpush1.msra.mxu0 0.0
        %2720 = vmatprep.subr.mxu0 0.0
        %2721 = vmatpush1.msra.mxu0 0.0
        %2722 = vmatprep.subr.mxu0 0.0
        %2723 = vmatpush1.msra.mxu0 0.0
        %2724 = vmatprep.subr.mxu0 0.0
        %2725 = vmatpush1.msra.mxu0 0.0
        %2726 = vmatprep.subr.mxu0 0.0
        %2727 = vmatpush1.msra.mxu0 0.0
        %2728 = vmatprep.subr.mxu0 0.0
        %2729 = vmatpush1.msra.mxu0 0.0
        %2730 = vmatprep.subr.mxu0 0.0
        %2731 = vmatpush1.msra.mxu0 0.0
        %2732 = vmatprep.subr.mxu0 0.0
        %2733 = vmatpush1.msra.mxu0 0.0
        %2734 = vmatprep.subr.mxu0 0.0
        %2735 = vmatpush1.msra.mxu0 0.0
        %2736 = vmatprep.subr.mxu0 0.0
        %2737 = vmatpush1.msra.mxu0 0.0
        %2738 = vmatprep.subr.mxu0 0.0
        %2739 = vmatpush1.msra.mxu0 0.0
        %2740 = vmatprep.subr.mxu0 0.0
        %2741 = vmatpush1.msra.mxu0 0.0
        %2742 = vmatprep.subr.mxu0 0.0
        %2743 = vmatpush1.msra.mxu0 0.0
        %2744 = vmatprep.subr.mxu0 0.0
        %2745 = vmatpush1.msra.mxu0 0.0
        %2746 = vmatprep.subr.mxu0 0.0
        %2747 = vmatpush1.msra.mxu0 0.0
        %2748 = vmatprep.subr.mxu0 0.0
        %2749 = vmatpush1.msra.mxu0 0.0
        %2750 = vmatprep.subr.mxu0 0.0
        %2751 = vmatpush1.msra.mxu0 0.0
        %2752 = vmatprep.subr.mxu0 0.0
        %2753 = vmatpush1.msra.mxu0 0.0
        %2754 = vmatprep.subr.mxu0 0.0
        %2755 = vmatpush1.msra.mxu0 0.0
        %2756 = vmatprep.subr.mxu0 0.0
        %2757 = vmatpush1.msra.mxu0 0.0
        %2758 = vmatprep.subr.mxu0 0.0
        %2759 = vmatpush1.msra.mxu0 0.0
        %2760 = vmatprep.mubr.f32.mxu0 0.0
        %2761 = vmatmul.mubr.f32.gmra.mrb[0].mxu0 %v2694
        %v2762 = vpop.f32.mrb[0].mxu0
        %v2763 = vadd.f32 0.0, %v2762
        %v2764 = vpop.f32.mrb[0].mxu0
        %2765 = vdwg.mxu0
        %2767 = vrot.lane.b32.xlu0 %v2611, 8
        %v2768 = vpop.permute.xlu0 %2767
        %2771 = vrot.lane.b32.xlu0 %v2687, 16
        %v2772 = vpop.permute.xlu0 %2771
        %2775 = vrot.lane.b32.xlu0 %v2763, 24
        %v2776 = vpop.permute.xlu0 %2775
        %v2778 = vsel %vm1093, %v2535, %v2768
        %v2779 = vsel %vm1757, %v2778, %v2772
        %v2780 = vsel %vm1759, %v2779, %v2776
        %v2782 = vsel %vm989, %v2780, 0
        %2784 = vmatprep.subr.mxu0 0.0
        %2785 = vmatpush1.msra.mxu0 %v2103
        %2786 = vmatprep.subr.mxu0 0.0
        %2787 = vmatpush1.msra.mxu0 %v2104
        %2788 = vmatprep.subr.mxu0 0.0
        %2789 = vmatpush1.msra.mxu0 %v2105
        %2790 = vmatprep.subr.mxu0 0.0
        %2791 = vmatpush1.msra.mxu0 %v2106
        %2792 = vmatprep.subr.mxu0 0.0
        %2793 = vmatpush1.msra.mxu0 0.0
        %2794 = vmatprep.subr.mxu0 0.0
        %2795 = vmatpush1.msra.mxu0 0.0
        %2796 = vmatprep.subr.mxu0 0.0
        %2797 = vmatpush1.msra.mxu0 0.0
        %2798 = vmatprep.subr.mxu0 0.0
        %2799 = vmatpush1.msra.mxu0 0.0
        %2800 = vmatprep.subr.mxu0 0.0
        %2801 = vmatpush1.msra.mxu0 0.0
        %2802 = vmatprep.subr.mxu0 0.0
        %2803 = vmatpush1.msra.mxu0 0.0
        %2804 = vmatprep.subr.mxu0 0.0
        %2805 = vmatpush1.msra.mxu0 0.0
        %2806 = vmatprep.subr.mxu0 0.0
        %2807 = vmatpush1.msra.mxu0 0.0
        %2808 = vmatprep.subr.mxu0 0.0
        %2809 = vmatpush1.msra.mxu0 0.0
        %2810 = vmatprep.subr.mxu0 0.0
        %2811 = vmatpush1.msra.mxu0 0.0
        %2812 = vmatprep.subr.mxu0 0.0
        %2813 = vmatpush1.msra.mxu0 0.0
        %2814 = vmatprep.subr.mxu0 0.0
        %2815 = vmatpush1.msra.mxu0 0.0
        %2816 = vmatprep.subr.mxu0 0.0
        %2817 = vmatpush1.msra.mxu0 0.0
        %2818 = vmatprep.subr.mxu0 0.0
        %2819 = vmatpush1.msra.mxu0 0.0
        %2820 = vmatprep.subr.mxu0 0.0
        %2821 = vmatpush1.msra.mxu0 0.0
        %2822 = vmatprep.subr.mxu0 0.0
        %2823 = vmatpush1.msra.mxu0 0.0
        %2824 = vmatprep.subr.mxu0 0.0
        %2825 = vmatpush1.msra.mxu0 0.0
        %2826 = vmatprep.subr.mxu0 0.0
        %2827 = vmatpush1.msra.mxu0 0.0
        %2828 = vmatprep.subr.mxu0 0.0
        %2829 = vmatpush1.msra.mxu0 0.0
        %2830 = vmatprep.subr.mxu0 0.0
        %2831 = vmatpush1.msra.mxu0 0.0
        %2832 = vmatprep.subr.mxu0 0.0
        %2833 = vmatpush1.msra.mxu0 0.0
        %2834 = vmatprep.subr.mxu0 0.0
        %2835 = vmatpush1.msra.mxu0 0.0
        %2836 = vmatprep.subr.mxu0 0.0
        %2837 = vmatpush1.msra.mxu0 0.0
        %2838 = vmatprep.subr.mxu0 0.0
        %2839 = vmatpush1.msra.mxu0 0.0
        %2840 = vmatprep.subr.mxu0 0.0
        %2841 = vmatpush1.msra.mxu0 0.0
        %2842 = vmatprep.subr.mxu0 0.0
        %2843 = vmatpush1.msra.mxu0 0.0
        %2844 = vmatprep.subr.mxu0 0.0
        %2845 = vmatpush1.msra.mxu0 0.0
        %2846 = vmatprep.subr.mxu0 0.0
        %2847 = vmatpush1.msra.mxu0 0.0
        %2848 = vmatprep.mubr.f32.mxu0 0.0
        %2849 = vmatmul.mubr.f32.gmra.mrb[0].mxu0 %v2782
        %v2850 = vpop.f32.mrb[0].mxu0
        %v2851 = vadd.f32 0.0, %v2850
        %v2852 = vpop.f32.mrb[0].mxu0
        %2853 = vdwg.mxu0
        %v2854 = vadd.f32 %v2008, %v2851
        %v2855 = vmul.f32 %v2854, %v2854
        %v2856 = vsel %vm989, %v2855, 0.0
        %2857 = vadd.xlane.f32.xlu0 %v2856
        %v2858 = vpop.xlane.xlu0 %2857
        %v2859 = vmul.f32 %v2858, %v993
        %v2860 = vadd.f32 %v2859, 1e-06
        %v2861 = vrsqrt.pop %v2860
        %v2862 = vmul.f32 %v2854, %v2861
        %v2863 = vlaneseq
        %v2864 = vshrl.u32 %v2863, 7
        %v2865 = vsub.s32 1, %v2864
        %v2866 = vrot.slane %v2010, %v2865
        %v2867 = vmul.f32 %v2862, %v2866
        %s2868 = scalar_lea.vmem [#allocation11], 32
        %v2869 = vld [vmem:[%s2868] sm:$0xff]
        %v2870 = vld [vmem:[%s2868 + $0x8] sm:$0xff]
        %v2871 = vld [vmem:[%s2868 + $0x10] sm:$0xff]
        %v2872 = vld [vmem:[%s2868 + $0x18] sm:$0xff]
        %s2873 = scalar_lea.vmem [#allocation13], 64
        %v2874 = vld [vmem:[%s2873] sm:$0xff]
        %v2875 = vld [vmem:[%s2873 + $0x8] sm:$0xff]
        %v2876 = vld [vmem:[%s2873 + $0x10] sm:$0xff]
        %v2877 = vld [vmem:[%s2873 + $0x18] sm:$0xff]
        %v2878 = vld [vmem:[%s2873 + $0x20] sm:$0xff]
        %v2879 = vld [vmem:[%s2873 + $0x28] sm:$0xff]
        %v2880 = vld [vmem:[%s2873 + $0x30] sm:$0xff]
        %v2881 = vld [vmem:[%s2873 + $0x38] sm:$0xff]
        %v2883 = vsel %vm989, %v2867, 0
        %2885 = vmatprep.subr.mxu0 0.0
        %2886 = vmatpush1.msra.mxu0 %v2869
        %2887 = vmatprep.subr.mxu0 0.0
        %2888 = vmatpush1.msra.mxu0 %v2870
        %2889 = vmatprep.subr.mxu0 0.0
        %2890 = vmatpush1.msra.mxu0 %v2871
        %2891 = vmatprep.subr.mxu0 0.0
        %2892 = vmatpush1.msra.mxu0 %v2872
        %2893 = vmatprep.subr.mxu0 0.0
        %2894 = vmatpush1.msra.mxu0 0.0
        %2895 = vmatprep.subr.mxu0 0.0
        %2896 = vmatpush1.msra.mxu0 0.0
        %2897 = vmatprep.subr.mxu0 0.0
        %2898 = vmatpush1.msra.mxu0 0.0
        %2899 = vmatprep.subr.mxu0 0.0
        %2900 = vmatpush1.msra.mxu0 0.0
        %2901 = vmatprep.subr.mxu0 0.0
        %2902 = vmatpush1.msra.mxu0 0.0
        %2903 = vmatprep.subr.mxu0 0.0
        %2904 = vmatpush1.msra.mxu0 0.0
        %2905 = vmatprep.subr.mxu0 0.0
        %2906 = vmatpush1.msra.mxu0 0.0
        %2907 = vmatprep.subr.mxu0 0.0
        %2908 = vmatpush1.msra.mxu0 0.0
        %2909 = vmatprep.subr.mxu0 0.0
        %2910 = vmatpush1.msra.mxu0 0.0
        %2911 = vmatprep.subr.mxu0 0.0
        %2912 = vmatpush1.msra.mxu0 0.0
        %2913 = vmatprep.subr.mxu0 0.0
        %2914 = vmatpush1.msra.mxu0 0.0
        %2915 = vmatprep.subr.mxu0 0.0
        %2916 = vmatpush1.msra.mxu0 0.0
        %2917 = vmatprep.subr.mxu0 0.0
        %2918 = vmatpush1.msra.mxu0 0.0
        %2919 = vmatprep.subr.mxu0 0.0
        %2920 = vmatpush1.msra.mxu0 0.0
        %2921 = vmatprep.subr.mxu0 0.0
        %2922 = vmatpush1.msra.mxu0 0.0
        %2923 = vmatprep.subr.mxu0 0.0
        %2924 = vmatpush1.msra.mxu0 0.0
        %2925 = vmatprep.subr.mxu0 0.0
        %2926 = vmatpush1.msra.mxu0 0.0
        %2927 = vmatprep.subr.mxu0 0.0
        %2928 = vmatpush1.msra.mxu0 0.0
        %2929 = vmatprep.subr.mxu0 0.0
        %2930 = vmatpush1.msra.mxu0 0.0
        %2931 = vmatprep.subr.mxu0 0.0
        %2932 = vmatpush1.msra.mxu0 0.0
        %2933 = vmatprep.subr.mxu0 0.0
        %2934 = vmatpush1.msra.mxu0 0.0
        %2935 = vmatprep.subr.mxu0 0.0
        %2936 = vmatpush1.msra.mxu0 0.0
        %2937 = vmatprep.subr.mxu0 0.0
        %2938 = vmatpush1.msra.mxu0 0.0
        %2939 = vmatprep.subr.mxu0 0.0
        %2940 = vmatpush1.msra.mxu0 0.0
        %2941 = vmatprep.subr.mxu0 0.0
        %2942 = vmatpush1.msra.mxu0 0.0
        %2943 = vmatprep.subr.mxu0 0.0
        %2944 = vmatpush1.msra.mxu0 0.0
        %2945 = vmatprep.subr.mxu0 0.0
        %2946 = vmatpush1.msra.mxu0 0.0
        %2947 = vmatprep.subr.mxu0 0.0
        %2948 = vmatpush1.msra.mxu0 0.0
        %2949 = vmatprep.mubr.f32.mxu0 0.0
        %2950 = vmatmul.mubr.f32.gmra.mrb[0].mxu0 %v2883
        %v2951 = vpop.f32.mrb[0].mxu0
        %v2952 = vadd.f32 0.0, %v2951
        %v2953 = vpop.f32.mrb[0].mxu0
        %2954 = vdwg.mxu0
        %v2955 = vmax.f32 %v2952, 0.0
        %v2957 = vsel %vm1934, %v2955, 0
        %2959 = vmatprep.subr.mxu0 0.0
        %2960 = vmatpush1.msra.mxu0 %v2874
        %2961 = vmatprep.subr.mxu0 0.0
        %2962 = vmatpush1.msra.mxu0 %v2875
        %2963 = vmatprep.subr.mxu0 0.0
        %2964 = vmatpush1.msra.mxu0 %v2876
        %2965 = vmatprep.subr.mxu0 0.0
        %2966 = vmatpush1.msra.mxu0 %v2877
        %2967 = vmatprep.subr.mxu0 0.0
        %2968 = vmatpush1.msra.mxu0 %v2878
        %2969 = vmatprep.subr.mxu0 0.0
        %2970 = vmatpush1.msra.mxu0 %v2879
        %2971 = vmatprep.subr.mxu0 0.0
        %2972 = vmatpush1.msra.mxu0 %v2880
        %2973 = vmatprep.subr.mxu0 0.0
        %2974 = vmatpush1.msra.mxu0 %v2881
        %2975 = vmatprep.subr.mxu0 0.0
        %2976 = vmatpush1.msra.mxu0 0.0
        %2977 = vmatprep.subr.mxu0 0.0
        %2978 = vmatpush1.msra.mxu0 0.0
        %2979 = vmatprep.subr.mxu0 0.0
        %2980 = vmatpush1.msra.mxu0 0.0
        %2981 = vmatprep.subr.mxu0 0.0
        %2982 = vmatpush1.msra.mxu0 0.0
        %2983 = vmatprep.subr.mxu0 0.0
        %2984 = vmatpush1.msra.mxu0 0.0
        %2985 = vmatprep.subr.mxu0 0.0
        %2986 = vmatpush1.msra.mxu0 0.0
        %2987 = vmatprep.subr.mxu0 0.0
        %2988 = vmatpush1.msra.mxu0 0.0
        %2989 = vmatprep.subr.mxu0 0.0
        %2990 = vmatpush1.msra.mxu0 0.0
        %2991 = vmatprep.subr.mxu0 0.0
        %2992 = vmatpush1.msra.mxu0 0.0
        %2993 = vmatprep.subr.mxu0 0.0
        %2994 = vmatpush1.msra.mxu0 0.0
        %2995 = vmatprep.subr.mxu0 0.0
        %2996 = vmatpush1.msra.mxu0 0.0
        %2997 = vmatprep.subr.mxu0 0.0
        %2998 = vmatpush1.msra.mxu0 0.0
        %2999 = vmatprep.subr.mxu0 0.0
        %3000 = vmatpush1.msra.mxu0 0.0
        %3001 = vmatprep.subr.mxu0 0.0
        %3002 = vmatpush1.msra.mxu0 0.0
        %3003 = vmatprep.subr.mxu0 0.0
        %3004 = vmatpush1.msra.mxu0 0.0
        %3005 = vmatprep.subr.mxu0 0.0
        %3006 = vmatpush1.msra.mxu0 0.0
        %3007 = vmatprep.subr.mxu0 0.0
        %3008 = vmatpush1.msra.mxu0 0.0
        %3009 = vmatprep.subr.mxu0 0.0
        %3010 = vmatpush1.msra.mxu0 0.0
        %3011 = vmatprep.subr.mxu0 0.0
        %3012 = vmatpush1.msra.mxu0 0.0
        %3013 = vmatprep.subr.mxu0 0.0
        %3014 = vmatpush1.msra.mxu0 0.0
        %3015 = vmatprep.subr.mxu0 0.0
        %3016 = vmatpush1.msra.mxu0 0.0
        %3017 = vmatprep.subr.mxu0 0.0
        %3018 = vmatpush1.msra.mxu0 0.0
        %3019 = vmatprep.subr.mxu0 0.0
        %3020 = vmatpush1.msra.mxu0 0.0
        %3021 = vmatprep.subr.mxu0 0.0
        %3022 = vmatpush1.msra.mxu0 0.0
        %3023 = vmatprep.mubr.f32.mxu0 0.0
        %3024 = vmatmul.mubr.f32.gmra.mrb[0].mxu0 %v2957
        %v3025 = vpop.f32.mrb[0].mxu0
        %v3026 = vadd.f32 0.0, %v3025
        %v3027 = vpop.f32.mrb[0].mxu0
        %3028 = vdwg.mxu0
        %v3029 = vadd.f32 %v2854, %v3026
        %v3030 = vld [vmem:[%s10] sm:$0x1]
        %v3031 = vmul.f32 %v3029, %v3029
        %v3032 = vsel %vm989, %v3031, 0.0
        %3033 = vadd.xlane.f32.xlu0 %v3032
        %v3034 = vpop.xlane.xlu0 %3033
        %v3035 = vmul.f32 %v3034, %v993
        %v3036 = vadd.f32 %v3035, 1e-06
        %v3037 = vrsqrt.pop %v3036
        %v3038 = vmul.f32 %v3029, %v3037
        %v3040 = vlaneseq
        %v3041 = vshrl.u32 %v3040, 7
        %v3042 = vsub.s32 0, %v3041
        %v3043 = vrot.slane %v3030, %v3042
        %v3045 = vmul.f32 %v3038, %v3043
        %v3046 = vld [vmem:[%s18] sm:$0x7]
        %v3047 = vmul.f32 %v976, %v976
        %v3048 = vsel %vm989, %v3047, 0.0
        %3049 = vadd.xlane.f32.xlu0 %v3048
        %v3050 = vpop.xlane.xlu0 %3049
        %v3051 = vmul.f32 %v3050, %v993
        %v3052 = vadd.f32 %v3051, 1e-06
        %v3053 = vrsqrt.pop %v3052
        %v3054 = vmul.f32 %v976, %v3053
        %v3055 = vlaneseq
        %v3056 = vshrl.u32 %v3055, 7
        %v3057 = vsub.s32 0, %v3056
        %v3058 = vrot.slane %v3046, %v3057
        %v3059 = vmul.f32 %v3054, %v3058
        %v3060 = vld [vmem:[#allocation14] sm:$0xff]
        %v3061 = vld [vmem:[#allocation14 + $0x8] sm:$0xff]
        %v3062 = vld [vmem:[#allocation14 + $0x10] sm:$0xff]
        %v3063 = vld [vmem:[#allocation14 + $0x18] sm:$0xff]
        %v3065 = vsel %vm989, %v3059, 0
        %3067 = vmatprep.subr.mxu0 0.0
        %3068 = vmatpush1.msra.mxu0 %v3060
        %3069 = vmatprep.subr.mxu0 0.0
        %3070 = vmatpush1.msra.mxu0 %v3061
        %3071 = vmatprep.subr.mxu0 0.0
        %3072 = vmatpush1.msra.mxu0 %v3062
        %3073 = vmatprep.subr.mxu0 0.0
        %3074 = vmatpush1.msra.mxu0 %v3063
        %3075 = vmatprep.subr.mxu0 0.0
        %3076 = vmatpush1.msra.mxu0 0.0
        %3077 = vmatprep.subr.mxu0 0.0
        %3078 = vmatpush1.msra.mxu0 0.0
        %3079 = vmatprep.subr.mxu0 0.0
        %3080 = vmatpush1.msra.mxu0 0.0
        %3081 = vmatprep.subr.mxu0 0.0
        %3082 = vmatpush1.msra.mxu0 0.0
        %3083 = vmatprep.subr.mxu0 0.0
        %3084 = vmatpush1.msra.mxu0 0.0
        %3085 = vmatprep.subr.mxu0 0.0
        %3086 = vmatpush1.msra.mxu0 0.0
        %3087 = vmatprep.subr.mxu0 0.0
        %3088 = vmatpush1.msra.mxu0 0.0
        %3089 = vmatprep.subr.mxu0 0.0
        %3090 = vmatpush1.msra.mxu0 0.0
        %3091 = vmatprep.subr.mxu0 0.0
        %3092 = vmatpush1.msra.mxu0 0.0
        %3093 = vmatprep.subr.mxu0 0.0
        %3094 = vmatpush1.msra.mxu0 0.0
        %3095 = vmatprep.subr.mxu0 0.0
        %3096 = vmatpush1.msra.mxu0 0.0
        %3097 = vmatprep.subr.mxu0 0.0
        %3098 = vmatpush1.msra.mxu0 0.0
        %3099 = vmatprep.subr.mxu0 0.0
        %3100 = vmatpush1.msra.mxu0 0.0
        %3101 = vmatprep.subr.mxu0 0.0
        %3102 = vmatpush1.msra.mxu0 0.0
        %3103 = vmatprep.subr.mxu0 0.0
        %3104 = vmatpush1.msra.mxu0 0.0
        %3105 = vmatprep.subr.mxu0 0.0
        %3106 = vmatpush1.msra.mxu0 0.0
        %3107 = vmatprep.subr.mxu0 0.0
        %3108 = vmatpush1.msra.mxu0 0.0
        %3109 = vmatprep.subr.mxu0 0.0
        %3110 = vmatpush1.msra.mxu0 0.0
        %3111 = vmatprep.subr.mxu0 0.0
        %3112 = vmatpush1.msra.mxu0 0.0
        %3113 = vmatprep.subr.mxu0 0.0
        %3114 = vmatpush1.msra.mxu0 0.0
        %3115 = vmatprep.subr.mxu0 0.0
        %3116 = vmatpush1.msra.mxu0 0.0
        %3117 = vmatprep.subr.mxu0 0.0
        %3118 = vmatpush1.msra.mxu0 0.0
        %3119 = vmatprep.subr.mxu0 0.0
        %3120 = vmatpush1.msra.mxu0 0.0
        %3121 = vmatprep.subr.mxu0 0.0
        %3122 = vmatpush1.msra.mxu0 0.0
        %3123 = vmatprep.subr.mxu0 0.0
        %3124 = vmatpush1.msra.mxu0 0.0
        %3125 = vmatprep.subr.mxu0 0.0
        %3126 = vmatpush1.msra.mxu0 0.0
        %3127 = vmatprep.subr.mxu0 0.0
        %3128 = vmatpush1.msra.mxu0 0.0
        %3129 = vmatprep.subr.mxu0 0.0
        %3130 = vmatpush1.msra.mxu0 0.0
        %3131 = vmatprep.mubr.f32.mxu0 0.0
        %3132 = vmatmul.mubr.f32.gmra.mrb[0].mxu0 %v3065
        %v3133 = vpop.f32.mrb[0].mxu0
        %v3134 = vadd.f32 0.0, %v3133
        %v3135 = vpop.f32.mrb[0].mxu0
        %3136 = vdwg.mxu0
        %v3137 = vld [vmem:[#allocation16] sm:$0xff]
        %v3138 = vld [vmem:[#allocation16 + $0x8] sm:$0xff]
        %v3139 = vld [vmem:[#allocation16 + $0x10] sm:$0xff]
        %v3140 = vld [vmem:[#allocation16 + $0x18] sm:$0xff]
        %3142 = vrot.lane.b32.xlu0 %v3134, 120
        %v3143 = vpop.permute.xlu0 %3142
        %3144 = vrot.lane.b32.xlu0 %v3134, 112
        %v3145 = vpop.permute.xlu0 %3144
        %3146 = vrot.lane.b32.xlu0 %v3134, 104
        %v3147 = vpop.permute.xlu0 %3146
        %3148 = vrot.lane.b32.xlu0 %v3134, 96
        %v3149 = vpop.permute.xlu0 %3148
        %v3150 = vsel %vm1093, %v3134, 0
        %v3152 = vsel %vm1093, %v3149, 0
        %3154 = vmatprep.subr.mxu0 0.0
        %3155 = vmatpush1.xpose.msra.mxu0 %v3152
        %3156 = vmatprep.subr.mxu0 0.0
        %3157 = vmatpush1.xpose.msra.mxu0 0.0
        %3158 = vmatprep.subr.mxu0 0.0
        %3159 = vmatpush1.xpose.msra.mxu0 0.0
        %3160 = vmatprep.subr.mxu0 0.0
        %3161 = vmatpush1.xpose.msra.mxu0 0.0
        %3162 = vmatprep.subr.mxu0 0.0
        %3163 = vmatpush1.xpose.msra.mxu0 0.0
        %3164 = vmatprep.subr.mxu0 0.0
        %3165 = vmatpush1.xpose.msra.mxu0 0.0
        %3166 = vmatprep.subr.mxu0 0.0
        %3167 = vmatpush1.xpose.msra.mxu0 0.0
        %3168 = vmatprep.subr.mxu0 0.0
        %3169 = vmatpush1.xpose.msra.mxu0 0.0
        %3170 = vmatprep.subr.mxu0 0.0
        %3171 = vmatpush1.xpose.msra.mxu0 0.0
        %3172 = vmatprep.subr.mxu0 0.0
        %3173 = vmatpush1.xpose.msra.mxu0 0.0
        %3174 = vmatprep.subr.mxu0 0.0
        %3175 = vmatpush1.xpose.msra.mxu0 0.0
        %3176 = vmatprep.subr.mxu0 0.0
        %3177 = vmatpush1.xpose.msra.mxu0 0.0
        %3178 = vmatprep.subr.mxu0 0.0
        %3179 = vmatpush1.xpose.msra.mxu0 0.0
        %3180 = vmatprep.subr.mxu0 0.0
        %3181 = vmatpush1.xpose.msra.mxu0 0.0
        %3182 = vmatprep.subr.mxu0 0.0
        %3183 = vmatpush1.xpose.msra.mxu0 0.0
        %3184 = vmatprep.subr.mxu0 0.0
        %3185 = vmatpush1.xpose.msra.mxu0 0.0
        %3186 = vmatprep.subr.mxu0 0.0
        %3187 = vmatpush1.xpose.msra.mxu0 0.0
        %3188 = vmatprep.subr.mxu0 0.0
        %3189 = vmatpush1.xpose.msra.mxu0 0.0
        %3190 = vmatprep.subr.mxu0 0.0
        %3191 = vmatpush1.xpose.msra.mxu0 0.0
        %3192 = vmatprep.subr.mxu0 0.0
        %3193 = vmatpush1.xpose.msra.mxu0 0.0
        %3194 = vmatprep.subr.mxu0 0.0
        %3195 = vmatpush1.xpose.msra.mxu0 0.0
        %3196 = vmatprep.subr.mxu0 0.0
        %3197 = vmatpush1.xpose.msra.mxu0 0.0
        %3198 = vmatprep.subr.mxu0 0.0
        %3199 = vmatpush1.xpose.msra.mxu0 0.0
        %3200 = vmatprep.subr.mxu0 0.0
        %3201 = vmatpush1.xpose.msra.mxu0 0.0
        %3202 = vmatprep.subr.mxu0 0.0
        %3203 = vmatpush1.xpose.msra.mxu0 0.0
        %3204 = vmatprep.subr.mxu0 0.0
        %3205 = vmatpush1.xpose.msra.mxu0 0.0
        %3206 = vmatprep.subr.mxu0 0.0
        %3207 = vmatpush1.xpose.msra.mxu0 0.0
        %3208 = vmatprep.subr.mxu0 0.0
        %3209 = vmatpush1.xpose.msra.mxu0 0.0
        %3210 = vmatprep.subr.mxu0 0.0
        %3211 = vmatpush1.xpose.msra.mxu0 0.0
        %3212 = vmatprep.subr.mxu0 0.0
        %3213 = vmatpush1.xpose.msra.mxu0 0.0
        %3214 = vmatprep.subr.mxu0 0.0
        %3215 = vmatpush1.xpose.msra.mxu0 0.0
        %3216 = vmatprep.subr.mxu0 0.0
        %3217 = vmatpush1.xpose.msra.mxu0 0.0
        %3218 = vmatprep.mubr.f32.mxu0 0.0
        %3219 = vmatmul.mubr.f32.gmra.mrb[0].mxu0 %v3150
        %v3220 = vpop.f32.mrb[0].mxu0
        %v3221 = vadd.f32 %v983, %v3220
        %v3222 = vpop.f32.mrb[0].mxu0
        %3223 = vdwg.mxu0
        %3224 = vrot.lane.b32.xlu0 %v3143, 96
        %v3225 = vpop.permute.xlu0 %3224
        %v3226 = vsel %vm1093, %v3143, 0
        %v3228 = vsel %vm1093, %v3225, 0
        %3230 = vmatprep.subr.mxu0 0.0
        %3231 = vmatpush1.xpose.msra.mxu0 %v3228
        %3232 = vmatprep.subr.mxu0 0.0
        %3233 = vmatpush1.xpose.msra.mxu0 0.0
        %3234 = vmatprep.subr.mxu0 0.0
        %3235 = vmatpush1.xpose.msra.mxu0 0.0
        %3236 = vmatprep.subr.mxu0 0.0
        %3237 = vmatpush1.xpose.msra.mxu0 0.0
        %3238 = vmatprep.subr.mxu0 0.0
        %3239 = vmatpush1.xpose.msra.mxu0 0.0
        %3240 = vmatprep.subr.mxu0 0.0
        %3241 = vmatpush1.xpose.msra.mxu0 0.0
        %3242 = vmatprep.subr.mxu0 0.0
        %3243 = vmatpush1.xpose.msra.mxu0 0.0
        %3244 = vmatprep.subr.mxu0 0.0
        %3245 = vmatpush1.xpose.msra.mxu0 0.0
        %3246 = vmatprep.subr.mxu0 0.0
        %3247 = vmatpush1.xpose.msra.mxu0 0.0
        %3248 = vmatprep.subr.mxu0 0.0
        %3249 = vmatpush1.xpose.msra.mxu0 0.0
        %3250 = vmatprep.subr.mxu0 0.0
        %3251 = vmatpush1.xpose.msra.mxu0 0.0
        %3252 = vmatprep.subr.mxu0 0.0
        %3253 = vmatpush1.xpose.msra.mxu0 0.0
        %3254 = vmatprep.subr.mxu0 0.0
        %3255 = vmatpush1.xpose.msra.mxu0 0.0
        %3256 = vmatprep.subr.mxu0 0.0
        %3257 = vmatpush1.xpose.msra.mxu0 0.0
        %3258 = vmatprep.subr.mxu0 0.0
        %3259 = vmatpush1.xpose.msra.mxu0 0.0
        %3260 = vmatprep.subr.mxu0 0.0
        %3261 = vmatpush1.xpose.msra.mxu0 0.0
        %3262 = vmatprep.subr.mxu0 0.0
        %3263 = vmatpush1.xpose.msra.mxu0 0.0
        %3264 = vmatprep.subr.mxu0 0.0
        %3265 = vmatpush1.xpose.msra.mxu0 0.0
        %3266 = vmatprep.subr.mxu0 0.0
        %3267 = vmatpush1.xpose.msra.mxu0 0.0
        %3268 = vmatprep.subr.mxu0 0.0
        %3269 = vmatpush1.xpose.msra.mxu0 0.0
        %3270 = vmatprep.subr.mxu0 0.0
        %3271 = vmatpush1.xpose.msra.mxu0 0.0
        %3272 = vmatprep.subr.mxu0 0.0
        %3273 = vmatpush1.xpose.msra.mxu0 0.0
        %3274 = vmatprep.subr.mxu0 0.0
        %3275 = vmatpush1.xpose.msra.mxu0 0.0
        %3276 = vmatprep.subr.mxu0 0.0
        %3277 = vmatpush1.xpose.msra.mxu0 0.0
        %3278 = vmatprep.subr.mxu0 0.0
        %3279 = vmatpush1.xpose.msra.mxu0 0.0
        %3280 = vmatprep.subr.mxu0 0.0
        %3281 = vmatpush1.xpose.msra.mxu0 0.0
        %3282 = vmatprep.subr.mxu0 0.0
        %3283 = vmatpush1.xpose.msra.mxu0 0.0
        %3284 = vmatprep.subr.mxu0 0.0
        %3285 = vmatpush1.xpose.msra.mxu0 0.0
        %3286 = vmatprep.subr.mxu0 0.0
        %3287 = vmatpush1.xpose.msra.mxu0 0.0
        %3288 = vmatprep.subr.mxu0 0.0
        %3289 = vmatpush1.xpose.msra.mxu0 0.0
        %3290 = vmatprep.subr.mxu0 0.0
        %3291 = vmatpush1.xpose.msra.mxu0 0.0
        %3292 = vmatprep.subr.mxu0 0.0
        %3293 = vmatpush1.xpose.msra.mxu0 0.0
        %3294 = vmatprep.mubr.f32.mxu0 0.0
        %3295 = vmatmul.mubr.f32.gmra.mrb[0].mxu0 %v3226
        %v3296 = vpop.f32.mrb[0].mxu0
        %v3297 = vadd.f32 %v984, %v3296
        %v3298 = vpop.f32.mrb[0].mxu0
        %3299 = vdwg.mxu0
        %3300 = vrot.lane.b32.xlu0 %v3145, 96
        %v3301 = vpop.permute.xlu0 %3300
        %v3302 = vsel %vm1093, %v3145, 0
        %v3304 = vsel %vm1093, %v3301, 0
        %3306 = vmatprep.subr.mxu0 0.0
        %3307 = vmatpush1.xpose.msra.mxu0 %v3304
        %3308 = vmatprep.subr.mxu0 0.0
        %3309 = vmatpush1.xpose.msra.mxu0 0.0
        %3310 = vmatprep.subr.mxu0 0.0
        %3311 = vmatpush1.xpose.msra.mxu0 0.0
        %3312 = vmatprep.subr.mxu0 0.0
        %3313 = vmatpush1.xpose.msra.mxu0 0.0
        %3314 = vmatprep.subr.mxu0 0.0
        %3315 = vmatpush1.xpose.msra.mxu0 0.0
        %3316 = vmatprep.subr.mxu0 0.0
        %3317 = vmatpush1.xpose.msra.mxu0 0.0
        %3318 = vmatprep.subr.mxu0 0.0
        %3319 = vmatpush1.xpose.msra.mxu0 0.0
        %3320 = vmatprep.subr.mxu0 0.0
        %3321 = vmatpush1.xpose.msra.mxu0 0.0
        %3322 = vmatprep.subr.mxu0 0.0
        %3323 = vmatpush1.xpose.msra.mxu0 0.0
        %3324 = vmatprep.subr.mxu0 0.0
        %3325 = vmatpush1.xpose.msra.mxu0 0.0
        %3326 = vmatprep.subr.mxu0 0.0
        %3327 = vmatpush1.xpose.msra.mxu0 0.0
        %3328 = vmatprep.subr.mxu0 0.0
        %3329 = vmatpush1.xpose.msra.mxu0 0.0
        %3330 = vmatprep.subr.mxu0 0.0
        %3331 = vmatpush1.xpose.msra.mxu0 0.0
        %3332 = vmatprep.subr.mxu0 0.0
        %3333 = vmatpush1.xpose.msra.mxu0 0.0
        %3334 = vmatprep.subr.mxu0 0.0
        %3335 = vmatpush1.xpose.msra.mxu0 0.0
        %3336 = vmatprep.subr.mxu0 0.0
        %3337 = vmatpush1.xpose.msra.mxu0 0.0
        %3338 = vmatprep.subr.mxu0 0.0
        %3339 = vmatpush1.xpose.msra.mxu0 0.0
        %3340 = vmatprep.subr.mxu0 0.0
        %3341 = vmatpush1.xpose.msra.mxu0 0.0
        %3342 = vmatprep.subr.mxu0 0.0
        %3343 = vmatpush1.xpose.msra.mxu0 0.0
        %3344 = vmatprep.subr.mxu0 0.0
        %3345 = vmatpush1.xpose.msra.mxu0 0.0
        %3346 = vmatprep.subr.mxu0 0.0
        %3347 = vmatpush1.xpose.msra.mxu0 0.0
        %3348 = vmatprep.subr.mxu0 0.0
        %3349 = vmatpush1.xpose.msra.mxu0 0.0
        %3350 = vmatprep.subr.mxu0 0.0
        %3351 = vmatpush1.xpose.msra.mxu0 0.0
        %3352 = vmatprep.subr.mxu0 0.0
        %3353 = vmatpush1.xpose.msra.mxu0 0.0
        %3354 = vmatprep.subr.mxu0 0.0
        %3355 = vmatpush1.xpose.msra.mxu0 0.0
        %3356 = vmatprep.subr.mxu0 0.0
        %3357 = vmatpush1.xpose.msra.mxu0 0.0
        %3358 = vmatprep.subr.mxu0 0.0
        %3359 = vmatpush1.xpose.msra.mxu0 0.0
        %3360 = vmatprep.subr.mxu0 0.0
        %3361 = vmatpush1.xpose.msra.mxu0 0.0
        %3362 = vmatprep.subr.mxu0 0.0
        %3363 = vmatpush1.xpose.msra.mxu0 0.0
        %3364 = vmatprep.subr.mxu0 0.0
        %3365 = vmatpush1.xpose.msra.mxu0 0.0
        %3366 = vmatprep.subr.mxu0 0.0
        %3367 = vmatpush1.xpose.msra.mxu0 0.0
        %3368 = vmatprep.subr.mxu0 0.0
        %3369 = vmatpush1.xpose.msra.mxu0 0.0
        %3370 = vmatprep.mubr.f32.mxu0 0.0
        %3371 = vmatmul.mubr.f32.gmra.mrb[0].mxu0 %v3302
        %v3372 = vpop.f32.mrb[0].mxu0
        %v3373 = vadd.f32 %v985, %v3372
        %v3374 = vpop.f32.mrb[0].mxu0
        %3375 = vdwg.mxu0
        %3376 = vrot.lane.b32.xlu0 %v3147, 96
        %v3377 = vpop.permute.xlu0 %3376
        %v3378 = vsel %vm1093, %v3147, 0
        %v3380 = vsel %vm1093, %v3377, 0
        %3382 = vmatprep.subr.mxu0 0.0
        %3383 = vmatpush1.xpose.msra.mxu0 %v3380
        %3384 = vmatprep.subr.mxu0 0.0
        %3385 = vmatpush1.xpose.msra.mxu0 0.0
        %3386 = vmatprep.subr.mxu0 0.0
        %3387 = vmatpush1.xpose.msra.mxu0 0.0
        %3388 = vmatprep.subr.mxu0 0.0
        %3389 = vmatpush1.xpose.msra.mxu0 0.0
        %3390 = vmatprep.subr.mxu0 0.0
        %3391 = vmatpush1.xpose.msra.mxu0 0.0
        %3392 = vmatprep.subr.mxu0 0.0
        %3393 = vmatpush1.xpose.msra.mxu0 0.0
        %3394 = vmatprep.subr.mxu0 0.0
        %3395 = vmatpush1.xpose.msra.mxu0 0.0
        %3396 = vmatprep.subr.mxu0 0.0
        %3397 = vmatpush1.xpose.msra.mxu0 0.0
        %3398 = vmatprep.subr.mxu0 0.0
        %3399 = vmatpush1.xpose.msra.mxu0 0.0
        %3400 = vmatprep.subr.mxu0 0.0
        %3401 = vmatpush1.xpose.msra.mxu0 0.0
        %3402 = vmatprep.subr.mxu0 0.0
        %3403 = vmatpush1.xpose.msra.mxu0 0.0
        %3404 = vmatprep.subr.mxu0 0.0
        %3405 = vmatpush1.xpose.msra.mxu0 0.0
        %3406 = vmatprep.subr.mxu0 0.0
        %3407 = vmatpush1.xpose.msra.mxu0 0.0
        %3408 = vmatprep.subr.mxu0 0.0
        %3409 = vmatpush1.xpose.msra.mxu0 0.0
        %3410 = vmatprep.subr.mxu0 0.0
        %3411 = vmatpush1.xpose.msra.mxu0 0.0
        %3412 = vmatprep.subr.mxu0 0.0
        %3413 = vmatpush1.xpose.msra.mxu0 0.0
        %3414 = vmatprep.subr.mxu0 0.0
        %3415 = vmatpush1.xpose.msra.mxu0 0.0
        %3416 = vmatprep.subr.mxu0 0.0
        %3417 = vmatpush1.xpose.msra.mxu0 0.0
        %3418 = vmatprep.subr.mxu0 0.0
        %3419 = vmatpush1.xpose.msra.mxu0 0.0
        %3420 = vmatprep.subr.mxu0 0.0
        %3421 = vmatpush1.xpose.msra.mxu0 0.0
        %3422 = vmatprep.subr.mxu0 0.0
        %3423 = vmatpush1.xpose.msra.mxu0 0.0
        %3424 = vmatprep.subr.mxu0 0.0
        %3425 = vmatpush1.xpose.msra.mxu0 0.0
        %3426 = vmatprep.subr.mxu0 0.0
        %3427 = vmatpush1.xpose.msra.mxu0 0.0
        %3428 = vmatprep.subr.mxu0 0.0
        %3429 = vmatpush1.xpose.msra.mxu0 0.0
        %3430 = vmatprep.subr.mxu0 0.0
        %3431 = vmatpush1.xpose.msra.mxu0 0.0
        %3432 = vmatprep.subr.mxu0 0.0
        %3433 = vmatpush1.xpose.msra.mxu0 0.0
        %3434 = vmatprep.subr.mxu0 0.0
        %3435 = vmatpush1.xpose.msra.mxu0 0.0
        %3436 = vmatprep.subr.mxu0 0.0
        %3437 = vmatpush1.xpose.msra.mxu0 0.0
        %3438 = vmatprep.subr.mxu0 0.0
        %3439 = vmatpush1.xpose.msra.mxu0 0.0
        %3440 = vmatprep.subr.mxu0 0.0
        %3441 = vmatpush1.xpose.msra.mxu0 0.0
        %3442 = vmatprep.subr.mxu0 0.0
        %3443 = vmatpush1.xpose.msra.mxu0 0.0
        %3444 = vmatprep.subr.mxu0 0.0
        %3445 = vmatpush1.xpose.msra.mxu0 0.0
        %3446 = vmatprep.mubr.f32.mxu0 0.0
        %3447 = vmatmul.mubr.f32.gmra.mrb[0].mxu0 %v3378
        %v3448 = vpop.f32.mrb[0].mxu0
        %v3449 = vadd.f32 %v986, %v3448
        %v3450 = vpop.f32.mrb[0].mxu0
        %3451 = vdwg.mxu0
        %v3452 = vsel %vm1093, %v3221, -inf
        %3453 = vmax.xlane.f32.xlu0 %v3452
        %v3454 = vpop.xlane.xlu0 %3453
        %v3455 = vsel %vm1093, %v3297, -inf
        %3456 = vmax.xlane.f32.xlu0 %v3455
        %v3457 = vpop.xlane.xlu0 %3456
        %v3458 = vsel %vm1093, %v3373, -inf
        %3459 = vmax.xlane.f32.xlu0 %v3458
        %v3460 = vpop.xlane.xlu0 %3459
        %v3461 = vsel %vm1093, %v3449, -inf
        %3462 = vmax.xlane.f32.xlu0 %v3461
        %v3463 = vpop.xlane.xlu0 %3462
        %v3464 = vsub.f32 %v3221, %v3454
        %v3465 = vsub.f32 %v3297, %v3457
        %v3466 = vsub.f32 %v3373, %v3460
        %v3467 = vsub.f32 %v3449, %v3463
        %v3468 = vmul.f32 %v3464, 1.442695
        %v3469 = vpow.pop %v3468
        %v3470 = vmul.f32 %v3465, 1.442695
        %v3471 = vpow.pop %v3470
        %v3472 = vmul.f32 %v3466, 1.442695
        %v3473 = vpow.pop %v3472
        %v3474 = vmul.f32 %v3467, 1.442695
        %v3475 = vpow.pop %v3474
        %v3476 = vsel %vm1093, %v3469, 0.0
        %3477 = vadd.xlane.f32.xlu0 %v3476
        %v3478 = vpop.xlane.xlu0 %3477
        %v3479 = vsel %vm1093, %v3471, 0.0
        %3480 = vadd.xlane.f32.xlu0 %v3479
        %v3481 = vpop.xlane.xlu0 %3480
        %v3482 = vsel %vm1093, %v3473, 0.0
        %3483 = vadd.xlane.f32.xlu0 %v3482
        %v3484 = vpop.xlane.xlu0 %3483
        %v3485 = vsel %vm1093, %v3475, 0.0
        %3486 = vadd.xlane.f32.xlu0 %v3485
        %v3487 = vpop.xlane.xlu0 %3486
        %v3488 = vrcp.pop %v3478
        %v3489 = vrcp.pop %v3481
        %v3490 = vrcp.pop %v3484
        %v3491 = vrcp.pop %v3487
        %v3492 = vmul.f32 %v3469, %v3488
        %v3493 = vmul.f32 %v3471, %v3489
        %v3494 = vmul.f32 %v3473, %v3490
        %v3495 = vmul.f32 %v3475, %v3491
        %3496 = vrot.lane.b32.xlu0 %v3134, 64
        %v3497 = vpop.permute.xlu0 %3496
        %v3500 = vsel %vm1093, %v3492, 0
        %3502 = vmatprep.subr.mxu0 0.0
        %3503 = vmatpush1.msra.mxu0 %v3497
        %3504 = vmatprep.subr.mxu0 0.0
        %3505 = vmatpush1.msra.mxu0 0.0
        %3506 = vmatprep.subr.mxu0 0.0
        %3507 = vmatpush1.msra.mxu0 0.0
        %3508 = vmatprep.subr.mxu0 0.0
        %3509 = vmatpush1.msra.mxu0 0.0
        %3510 = vmatprep.subr.mxu0 0.0
        %3511 = vmatpush1.msra.mxu0 0.0
        %3512 = vmatprep.subr.mxu0 0.0
        %3513 = vmatpush1.msra.mxu0 0.0
        %3514 = vmatprep.subr.mxu0 0.0
        %3515 = vmatpush1.msra.mxu0 0.0
        %3516 = vmatprep.subr.mxu0 0.0
        %3517 = vmatpush1.msra.mxu0 0.0
        %3518 = vmatprep.subr.mxu0 0.0
        %3519 = vmatpush1.msra.mxu0 0.0
        %3520 = vmatprep.subr.mxu0 0.0
        %3521 = vmatpush1.msra.mxu0 0.0
        %3522 = vmatprep.subr.mxu0 0.0
        %3523 = vmatpush1.msra.mxu0 0.0
        %3524 = vmatprep.subr.mxu0 0.0
        %3525 = vmatpush1.msra.mxu0 0.0
        %3526 = vmatprep.subr.mxu0 0.0
        %3527 = vmatpush1.msra.mxu0 0.0
        %3528 = vmatprep.subr.mxu0 0.0
        %3529 = vmatpush1.msra.mxu0 0.0
        %3530 = vmatprep.subr.mxu0 0.0
        %3531 = vmatpush1.msra.mxu0 0.0
        %3532 = vmatprep.subr.mxu0 0.0
        %3533 = vmatpush1.msra.mxu0 0.0
        %3534 = vmatprep.subr.mxu0 0.0
        %3535 = vmatpush1.msra.mxu0 0.0
        %3536 = vmatprep.subr.mxu0 0.0
        %3537 = vmatpush1.msra.mxu0 0.0
        %3538 = vmatprep.subr.mxu0 0.0
        %3539 = vmatpush1.msra.mxu0 0.0
        %3540 = vmatprep.subr.mxu0 0.0
        %3541 = vmatpush1.msra.mxu0 0.0
        %3542 = vmatprep.subr.mxu0 0.0
        %3543 = vmatpush1.msra.mxu0 0.0
        %3544 = vmatprep.subr.mxu0 0.0
        %3545 = vmatpush1.msra.mxu0 0.0
        %3546 = vmatprep.subr.mxu0 0.0
        %3547 = vmatpush1.msra.mxu0 0.0
        %3548 = vmatprep.subr.mxu0 0.0
        %3549 = vmatpush1.msra.mxu0 0.0
        %3550 = vmatprep.subr.mxu0 0.0
        %3551 = vmatpush1.msra.mxu0 0.0
        %3552 = vmatprep.subr.mxu0 0.0
        %3553 = vmatpush1.msra.mxu0 0.0
        %3554 = vmatprep.subr.mxu0 0.0
        %3555 = vmatpush1.msra.mxu0 0.0
        %3556 = vmatprep.subr.mxu0 0.0
        %3557 = vmatpush1.msra.mxu0 0.0
        %3558 = vmatprep.subr.mxu0 0.0
        %3559 = vmatpush1.msra.mxu0 0.0
        %3560 = vmatprep.subr.mxu0 0.0
        %3561 = vmatpush1.msra.mxu0 0.0
        %3562 = vmatprep.subr.mxu0 0.0
        %3563 = vmatpush1.msra.mxu0 0.0
        %3564 = vmatprep.subr.mxu0 0.0
        %3565 = vmatpush1.msra.mxu0 0.0
        %3566 = vmatprep.mubr.f32.mxu0 0.0
        %3567 = vmatmul.mubr.f32.gmra.mrb[0].mxu0 %v3500
        %v3568 = vpop.f32.mrb[0].mxu0
        %v3569 = vadd.f32 0.0, %v3568
        %v3570 = vpop.f32.mrb[0].mxu0
        %3571 = vdwg.mxu0
        %3572 = vrot.lane.b32.xlu0 %v3143, 64
        %v3573 = vpop.permute.xlu0 %3572
        %v3576 = vsel %vm1093, %v3493, 0
        %3578 = vmatprep.subr.mxu0 0.0
        %3579 = vmatpush1.msra.mxu0 %v3573
        %3580 = vmatprep.subr.mxu0 0.0
        %3581 = vmatpush1.msra.mxu0 0.0
        %3582 = vmatprep.subr.mxu0 0.0
        %3583 = vmatpush1.msra.mxu0 0.0
        %3584 = vmatprep.subr.mxu0 0.0
        %3585 = vmatpush1.msra.mxu0 0.0
        %3586 = vmatprep.subr.mxu0 0.0
        %3587 = vmatpush1.msra.mxu0 0.0
        %3588 = vmatprep.subr.mxu0 0.0
        %3589 = vmatpush1.msra.mxu0 0.0
        %3590 = vmatprep.subr.mxu0 0.0
        %3591 = vmatpush1.msra.mxu0 0.0
        %3592 = vmatprep.subr.mxu0 0.0
        %3593 = vmatpush1.msra.mxu0 0.0
        %3594 = vmatprep.subr.mxu0 0.0
        %3595 = vmatpush1.msra.mxu0 0.0
        %3596 = vmatprep.subr.mxu0 0.0
        %3597 = vmatpush1.msra.mxu0 0.0
        %3598 = vmatprep.subr.mxu0 0.0
        %3599 = vmatpush1.msra.mxu0 0.0
        %3600 = vmatprep.subr.mxu0 0.0
        %3601 = vmatpush1.msra.mxu0 0.0
        %3602 = vmatprep.subr.mxu0 0.0
        %3603 = vmatpush1.msra.mxu0 0.0
        %3604 = vmatprep.subr.mxu0 0.0
        %3605 = vmatpush1.msra.mxu0 0.0
        %3606 = vmatprep.subr.mxu0 0.0
        %3607 = vmatpush1.msra.mxu0 0.0
        %3608 = vmatprep.subr.mxu0 0.0
        %3609 = vmatpush1.msra.mxu0 0.0
        %3610 = vmatprep.subr.mxu0 0.0
        %3611 = vmatpush1.msra.mxu0 0.0
        %3612 = vmatprep.subr.mxu0 0.0
        %3613 = vmatpush1.msra.mxu0 0.0
        %3614 = vmatprep.subr.mxu0 0.0
        %3615 = vmatpush1.msra.mxu0 0.0
        %3616 = vmatprep.subr.mxu0 0.0
        %3617 = vmatpush1.msra.mxu0 0.0
        %3618 = vmatprep.subr.mxu0 0.0
        %3619 = vmatpush1.msra.mxu0 0.0
        %3620 = vmatprep.subr.mxu0 0.0
        %3621 = vmatpush1.msra.mxu0 0.0
        %3622 = vmatprep.subr.mxu0 0.0
        %3623 = vmatpush1.msra.mxu0 0.0
        %3624 = vmatprep.subr.mxu0 0.0
        %3625 = vmatpush1.msra.mxu0 0.0
        %3626 = vmatprep.subr.mxu0 0.0
        %3627 = vmatpush1.msra.mxu0 0.0
        %3628 = vmatprep.subr.mxu0 0.0
        %3629 = vmatpush1.msra.mxu0 0.0
        %3630 = vmatprep.subr.mxu0 0.0
        %3631 = vmatpush1.msra.mxu0 0.0
        %3632 = vmatprep.subr.mxu0 0.0
        %3633 = vmatpush1.msra.mxu0 0.0
        %3634 = vmatprep.subr.mxu0 0.0
        %3635 = vmatpush1.msra.mxu0 0.0
        %3636 = vmatprep.subr.mxu0 0.0
        %3637 = vmatpush1.msra.mxu0 0.0
        %3638 = vmatprep.subr.mxu0 0.0
        %3639 = vmatpush1.msra.mxu0 0.0
        %3640 = vmatprep.subr.mxu0 0.0
        %3641 = vmatpush1.msra.mxu0 0.0
        %3642 = vmatprep.mubr.f32.mxu0 0.0
        %3643 = vmatmul.mubr.f32.gmra.mrb[0].mxu0 %v3576
        %v3644 = vpop.f32.mrb[0].mxu0
        %v3645 = vadd.f32 0.0, %v3644
        %v3646 = vpop.f32.mrb[0].mxu0
        %3647 = vdwg.mxu0
        %3648 = vrot.lane.b32.xlu0 %v3145, 64
        %v3649 = vpop.permute.xlu0 %3648
        %v3652 = vsel %vm1093, %v3494, 0
        %3654 = vmatprep.subr.mxu0 0.0
        %3655 = vmatpush1.msra.mxu0 %v3649
        %3656 = vmatprep.subr.mxu0 0.0
        %3657 = vmatpush1.msra.mxu0 0.0
        %3658 = vmatprep.subr.mxu0 0.0
        %3659 = vmatpush1.msra.mxu0 0.0
        %3660 = vmatprep.subr.mxu0 0.0
        %3661 = vmatpush1.msra.mxu0 0.0
        %3662 = vmatprep.subr.mxu0 0.0
        %3663 = vmatpush1.msra.mxu0 0.0
        %3664 = vmatprep.subr.mxu0 0.0
        %3665 = vmatpush1.msra.mxu0 0.0
        %3666 = vmatprep.subr.mxu0 0.0
        %3667 = vmatpush1.msra.mxu0 0.0
        %3668 = vmatprep.subr.mxu0 0.0
        %3669 = vmatpush1.msra.mxu0 0.0
        %3670 = vmatprep.subr.mxu0 0.0
        %3671 = vmatpush1.msra.mxu0 0.0
        %3672 = vmatprep.subr.mxu0 0.0
        %3673 = vmatpush1.msra.mxu0 0.0
        %3674 = vmatprep.subr.mxu0 0.0
        %3675 = vmatpush1.msra.mxu0 0.0
        %3676 = vmatprep.subr.mxu0 0.0
        %3677 = vmatpush1.msra.mxu0 0.0
        %3678 = vmatprep.subr.mxu0 0.0
        %3679 = vmatpush1.msra.mxu0 0.0
        %3680 = vmatprep.subr.mxu0 0.0
        %3681 = vmatpush1.msra.mxu0 0.0
        %3682 = vmatprep.subr.mxu0 0.0
        %3683 = vmatpush1.msra.mxu0 0.0
        %3684 = vmatprep.subr.mxu0 0.0
        %3685 = vmatpush1.msra.mxu0 0.0
        %3686 = vmatprep.subr.mxu0 0.0
        %3687 = vmatpush1.msra.mxu0 0.0
        %3688 = vmatprep.subr.mxu0 0.0
        %3689 = vmatpush1.msra.mxu0 0.0
        %3690 = vmatprep.subr.mxu0 0.0
        %3691 = vmatpush1.msra.mxu0 0.0
        %3692 = vmatprep.subr.mxu0 0.0
        %3693 = vmatpush1.msra.mxu0 0.0
        %3694 = vmatprep.subr.mxu0 0.0
        %3695 = vmatpush1.msra.mxu0 0.0
        %3696 = vmatprep.subr.mxu0 0.0
        %3697 = vmatpush1.msra.mxu0 0.0
        %3698 = vmatprep.subr.mxu0 0.0
        %3699 = vmatpush1.msra.mxu0 0.0
        %3700 = vmatprep.subr.mxu0 0.0
        %3701 = vmatpush1.msra.mxu0 0.0
        %3702 = vmatprep.subr.mxu0 0.0
        %3703 = vmatpush1.msra.mxu0 0.0
        %3704 = vmatprep.subr.mxu0 0.0
        %3705 = vmatpush1.msra.mxu0 0.0
        %3706 = vmatprep.subr.mxu0 0.0
        %3707 = vmatpush1.msra.mxu0 0.0
        %3708 = vmatprep.subr.mxu0 0.0
        %3709 = vmatpush1.msra.mxu0 0.0
        %3710 = vmatprep.subr.mxu0 0.0
        %3711 = vmatpush1.msra.mxu0 0.0
        %3712 = vmatprep.subr.mxu0 0.0
        %3713 = vmatpush1.msra.mxu0 0.0
        %3714 = vmatprep.subr.mxu0 0.0
        %3715 = vmatpush1.msra.mxu0 0.0
        %3716 = vmatprep.subr.mxu0 0.0
        %3717 = vmatpush1.msra.mxu0 0.0
        %3718 = vmatprep.mubr.f32.mxu0 0.0
        %3719 = vmatmul.mubr.f32.gmra.mrb[0].mxu0 %v3652
        %v3720 = vpop.f32.mrb[0].mxu0
        %v3721 = vadd.f32 0.0, %v3720
        %v3722 = vpop.f32.mrb[0].mxu0
        %3723 = vdwg.mxu0
        %3724 = vrot.lane.b32.xlu0 %v3147, 64
        %v3725 = vpop.permute.xlu0 %3724
        %v3728 = vsel %vm1093, %v3495, 0
        %3730 = vmatprep.subr.mxu0 0.0
        %3731 = vmatpush1.msra.mxu0 %v3725
        %3732 = vmatprep.subr.mxu0 0.0
        %3733 = vmatpush1.msra.mxu0 0.0
        %3734 = vmatprep.subr.mxu0 0.0
        %3735 = vmatpush1.msra.mxu0 0.0
        %3736 = vmatprep.subr.mxu0 0.0
        %3737 = vmatpush1.msra.mxu0 0.0
        %3738 = vmatprep.subr.mxu0 0.0
        %3739 = vmatpush1.msra.mxu0 0.0
        %3740 = vmatprep.subr.mxu0 0.0
        %3741 = vmatpush1.msra.mxu0 0.0
        %3742 = vmatprep.subr.mxu0 0.0
        %3743 = vmatpush1.msra.mxu0 0.0
        %3744 = vmatprep.subr.mxu0 0.0
        %3745 = vmatpush1.msra.mxu0 0.0
        %3746 = vmatprep.subr.mxu0 0.0
        %3747 = vmatpush1.msra.mxu0 0.0
        %3748 = vmatprep.subr.mxu0 0.0
        %3749 = vmatpush1.msra.mxu0 0.0
        %3750 = vmatprep.subr.mxu0 0.0
        %3751 = vmatpush1.msra.mxu0 0.0
        %3752 = vmatprep.subr.mxu0 0.0
        %3753 = vmatpush1.msra.mxu0 0.0
        %3754 = vmatprep.subr.mxu0 0.0
        %3755 = vmatpush1.msra.mxu0 0.0
        %3756 = vmatprep.subr.mxu0 0.0
        %3757 = vmatpush1.msra.mxu0 0.0
        %3758 = vmatprep.subr.mxu0 0.0
        %3759 = vmatpush1.msra.mxu0 0.0
        %3760 = vmatprep.subr.mxu0 0.0
        %3761 = vmatpush1.msra.mxu0 0.0
        %3762 = vmatprep.subr.mxu0 0.0
        %3763 = vmatpush1.msra.mxu0 0.0
        %3764 = vmatprep.subr.mxu0 0.0
        %3765 = vmatpush1.msra.mxu0 0.0
        %3766 = vmatprep.subr.mxu0 0.0
        %3767 = vmatpush1.msra.mxu0 0.0
        %3768 = vmatprep.subr.mxu0 0.0
        %3769 = vmatpush1.msra.mxu0 0.0
        %3770 = vmatprep.subr.mxu0 0.0
        %3771 = vmatpush1.msra.mxu0 0.0
        %3772 = vmatprep.subr.mxu0 0.0
        %3773 = vmatpush1.msra.mxu0 0.0
        %3774 = vmatprep.subr.mxu0 0.0
        %3775 = vmatpush1.msra.mxu0 0.0
        %3776 = vmatprep.subr.mxu0 0.0
        %3777 = vmatpush1.msra.mxu0 0.0
        %3778 = vmatprep.subr.mxu0 0.0
        %3779 = vmatpush1.msra.mxu0 0.0
        %3780 = vmatprep.subr.mxu0 0.0
        %3781 = vmatpush1.msra.mxu0 0.0
        %3782 = vmatprep.subr.mxu0 0.0
        %3783 = vmatpush1.msra.mxu0 0.0
        %3784 = vmatprep.subr.mxu0 0.0
        %3785 = vmatpush1.msra.mxu0 0.0
        %3786 = vmatprep.subr.mxu0 0.0
        %3787 = vmatpush1.msra.mxu0 0.0
        %3788 = vmatprep.subr.mxu0 0.0
        %3789 = vmatpush1.msra.mxu0 0.0
        %3790 = vmatprep.subr.mxu0 0.0
        %3791 = vmatpush1.msra.mxu0 0.0
        %3792 = vmatprep.subr.mxu0 0.0
        %3793 = vmatpush1.msra.mxu0 0.0
        %3794 = vmatprep.mubr.f32.mxu0 0.0
        %3795 = vmatmul.mubr.f32.gmra.mrb[0].mxu0 %v3728
        %v3796 = vpop.f32.mrb[0].mxu0
        %v3797 = vadd.f32 0.0, %v3796
        %v3798 = vpop.f32.mrb[0].mxu0
        %3799 = vdwg.mxu0
        %3801 = vrot.lane.b32.xlu0 %v3645, 8
        %v3802 = vpop.permute.xlu0 %3801
        %3805 = vrot.lane.b32.xlu0 %v3721, 16
        %v3806 = vpop.permute.xlu0 %3805
        %3809 = vrot.lane.b32.xlu0 %v3797, 24
        %v3810 = vpop.permute.xlu0 %3809
        %v3812 = vsel %vm1093, %v3569, %v3802
        %v3813 = vsel %vm1757, %v3812, %v3806
        %v3814 = vsel %vm1759, %v3813, %v3810
        %v3816 = vsel %vm989, %v3814, 0
        %3818 = vmatprep.subr.mxu0 0.0
        %3819 = vmatpush1.msra.mxu0 %v3137
        %3820 = vmatprep.subr.mxu0 0.0
        %3821 = vmatpush1.msra.mxu0 %v3138
        %3822 = vmatprep.subr.mxu0 0.0
        %3823 = vmatpush1.msra.mxu0 %v3139
        %3824 = vmatprep.subr.mxu0 0.0
        %3825 = vmatpush1.msra.mxu0 %v3140
        %3826 = vmatprep.subr.mxu0 0.0
        %3827 = vmatpush1.msra.mxu0 0.0
        %3828 = vmatprep.subr.mxu0 0.0
        %3829 = vmatpush1.msra.mxu0 0.0
        %3830 = vmatprep.subr.mxu0 0.0
        %3831 = vmatpush1.msra.mxu0 0.0
        %3832 = vmatprep.subr.mxu0 0.0
        %3833 = vmatpush1.msra.mxu0 0.0
        %3834 = vmatprep.subr.mxu0 0.0
        %3835 = vmatpush1.msra.mxu0 0.0
        %3836 = vmatprep.subr.mxu0 0.0
        %3837 = vmatpush1.msra.mxu0 0.0
        %3838 = vmatprep.subr.mxu0 0.0
        %3839 = vmatpush1.msra.mxu0 0.0
        %3840 = vmatprep.subr.mxu0 0.0
        %3841 = vmatpush1.msra.mxu0 0.0
        %3842 = vmatprep.subr.mxu0 0.0
        %3843 = vmatpush1.msra.mxu0 0.0
        %3844 = vmatprep.subr.mxu0 0.0
        %3845 = vmatpush1.msra.mxu0 0.0
        %3846 = vmatprep.subr.mxu0 0.0
        %3847 = vmatpush1.msra.mxu0 0.0
        %3848 = vmatprep.subr.mxu0 0.0
        %3849 = vmatpush1.msra.mxu0 0.0
        %3850 = vmatprep.subr.mxu0 0.0
        %3851 = vmatpush1.msra.mxu0 0.0
        %3852 = vmatprep.subr.mxu0 0.0
        %3853 = vmatpush1.msra.mxu0 0.0
        %3854 = vmatprep.subr.mxu0 0.0
        %3855 = vmatpush1.msra.mxu0 0.0
        %3856 = vmatprep.subr.mxu0 0.0
        %3857 = vmatpush1.msra.mxu0 0.0
        %3858 = vmatprep.subr.mxu0 0.0
        %3859 = vmatpush1.msra.mxu0 0.0
        %3860 = vmatprep.subr.mxu0 0.0
        %3861 = vmatpush1.msra.mxu0 0.0
        %3862 = vmatprep.subr.mxu0 0.0
        %3863 = vmatpush1.msra.mxu0 0.0
        %3864 = vmatprep.subr.mxu0 0.0
        %3865 = vmatpush1.msra.mxu0 0.0
        %3866 = vmatprep.subr.mxu0 0.0
        %3867 = vmatpush1.msra.mxu0 0.0
        %3868 = vmatprep.subr.mxu0 0.0
        %3869 = vmatpush1.msra.mxu0 0.0
        %3870 = vmatprep.subr.mxu0 0.0
        %3871 = vmatpush1.msra.mxu0 0.0
        %3872 = vmatprep.subr.mxu0 0.0
        %3873 = vmatpush1.msra.mxu0 0.0
        %3874 = vmatprep.subr.mxu0 0.0
        %3875 = vmatpush1.msra.mxu0 0.0
        %3876 = vmatprep.subr.mxu0 0.0
        %3877 = vmatpush1.msra.mxu0 0.0
        %3878 = vmatprep.subr.mxu0 0.0
        %3879 = vmatpush1.msra.mxu0 0.0
        %3880 = vmatprep.subr.mxu0 0.0
        %3881 = vmatpush1.msra.mxu0 0.0
        %3882 = vmatprep.mubr.f32.mxu0 0.0
        %3883 = vmatmul.mubr.f32.gmra.mrb[0].mxu0 %v3816
        %v3884 = vpop.f32.mrb[0].mxu0
        %v3885 = vadd.f32 0.0, %v3884
        %v3886 = vpop.f32.mrb[0].mxu0
        %3887 = vdwg.mxu0
        %v3888 = vadd.f32 %v976, %v3885
        %v3889 = vmul.f32 %v3888, %v3888
        %v3890 = vsel %vm989, %v3889, 0.0
        %3891 = vadd.xlane.f32.xlu0 %v3890
        %v3892 = vpop.xlane.xlu0 %3891
        %v3893 = vmul.f32 %v3892, %v993
        %v3894 = vadd.f32 %v3893, 1e-06
        %v3895 = vrsqrt.pop %v3894
        %v3896 = vmul.f32 %v3888, %v3895
        %v3897 = vlaneseq
        %v3898 = vshrl.u32 %v3897, 7
        %v3899 = vsub.s32 1, %v3898
        %v3900 = vrot.slane %v3046, %v3899
        %v3901 = vmul.f32 %v3896, %v3900
        %v3902 = vld [vmem:[#allocation17] sm:$0xff]
        %v3903 = vld [vmem:[#allocation17 + $0x8] sm:$0xff]
        %v3904 = vld [vmem:[#allocation17 + $0x10] sm:$0xff]
        %v3905 = vld [vmem:[#allocation17 + $0x18] sm:$0xff]
        %v3907 = vsel %vm989, %v3901, 0
        %3909 = vmatprep.subr.mxu0 0.0
        %3910 = vmatpush1.msra.mxu0 %v3902
        %3911 = vmatprep.subr.mxu0 0.0
        %3912 = vmatpush1.msra.mxu0 %v3903
        %3913 = vmatprep.subr.mxu0 0.0
        %3914 = vmatpush1.msra.mxu0 %v3904
        %3915 = vmatprep.subr.mxu0 0.0
        %3916 = vmatpush1.msra.mxu0 %v3905
        %3917 = vmatprep.subr.mxu0 0.0
        %3918 = vmatpush1.msra.mxu0 0.0
        %3919 = vmatprep.subr.mxu0 0.0
        %3920 = vmatpush1.msra.mxu0 0.0
        %3921 = vmatprep.subr.mxu0 0.0
        %3922 = vmatpush1.msra.mxu0 0.0
        %3923 = vmatprep.subr.mxu0 0.0
        %3924 = vmatpush1.msra.mxu0 0.0
        %3925 = vmatprep.subr.mxu0 0.0
        %3926 = vmatpush1.msra.mxu0 0.0
        %3927 = vmatprep.subr.mxu0 0.0
        %3928 = vmatpush1.msra.mxu0 0.0
        %3929 = vmatprep.subr.mxu0 0.0
        %3930 = vmatpush1.msra.mxu0 0.0
        %3931 = vmatprep.subr.mxu0 0.0
        %3932 = vmatpush1.msra.mxu0 0.0
        %3933 = vmatprep.subr.mxu0 0.0
        %3934 = vmatpush1.msra.mxu0 0.0
        %3935 = vmatprep.subr.mxu0 0.0
        %3936 = vmatpush1.msra.mxu0 0.0
        %3937 = vmatprep.subr.mxu0 0.0
        %3938 = vmatpush1.msra.mxu0 0.0
        %3939 = vmatprep.subr.mxu0 0.0
        %3940 = vmatpush1.msra.mxu0 0.0
        %3941 = vmatprep.subr.mxu0 0.0
        %3942 = vmatpush1.msra.mxu0 0.0
        %3943 = vmatprep.subr.mxu0 0.0
        %3944 = vmatpush1.msra.mxu0 0.0
        %3945 = vmatprep.subr.mxu0 0.0
        %3946 = vmatpush1.msra.mxu0 0.0
        %3947 = vmatprep.subr.mxu0 0.0
        %3948 = vmatpush1.msra.mxu0 0.0
        %3949 = vmatprep.subr.mxu0 0.0
        %3950 = vmatpush1.msra.mxu0 0.0
        %3951 = vmatprep.subr.mxu0 0.0
        %3952 = vmatpush1.msra.mxu0 0.0
        %3953 = vmatprep.subr.mxu0 0.0
        %3954 = vmatpush1.msra.mxu0 0.0
        %3955 = vmatprep.subr.mxu0 0.0
        %3956 = vmatpush1.msra.mxu0 0.0
        %3957 = vmatprep.subr.mxu0 0.0
        %3958 = vmatpush1.msra.mxu0 0.0
        %3959 = vmatprep.subr.mxu0 0.0
        %3960 = vmatpush1.msra.mxu0 0.0
        %3961 = vmatprep.subr.mxu0 0.0
        %3962 = vmatpush1.msra.mxu0 0.0
        %3963 = vmatprep.subr.mxu0 0.0
        %3964 = vmatpush1.msra.mxu0 0.0
        %3965 = vmatprep.subr.mxu0 0.0
        %3966 = vmatpush1.msra.mxu0 0.0
        %3967 = vmatprep.subr.mxu0 0.0
        %3968 = vmatpush1.msra.mxu0 0.0
        %3969 = vmatprep.subr.mxu0 0.0
        %3970 = vmatpush1.msra.mxu0 0.0
        %3971 = vmatprep.subr.mxu0 0.0
        %3972 = vmatpush1.msra.mxu0 0.0
        %3973 = vmatprep.mubr.f32.mxu0 0.0
        %3974 = vmatmul.mubr.f32.gmra.mrb[0].mxu0 %v3907
        %v3975 = vpop.f32.mrb[0].mxu0
        %v3976 = vadd.f32 0.0, %v3975
        %v3977 = vpop.f32.mrb[0].mxu0
        %3978 = vdwg.mxu0
        %v3979 = vld [vmem:[#allocation19] sm:$0xff]
        %v3980 = vld [vmem:[#allocation19 + $0x8] sm:$0xff]
        %v3981 = vld [vmem:[#allocation19 + $0x10] sm:$0xff]
        %v3982 = vld [vmem:[#allocation19 + $0x18] sm:$0xff]
        %v3984 = vsel %vm989, %v3045, 0
        %3986 = vmatprep.subr.mxu0 0.0
        %3987 = vmatpush1.msra.mxu0 %v3979
        %3988 = vmatprep.subr.mxu0 0.0
        %3989 = vmatpush1.msra.mxu0 %v3980
        %3990 = vmatprep.subr.mxu0 0.0
        %3991 = vmatpush1.msra.mxu0 %v3981
        %3992 = vmatprep.subr.mxu0 0.0
        %3993 = vmatpush1.msra.mxu0 %v3982
        %3994 = vmatprep.subr.mxu0 0.0
        %3995 = vmatpush1.msra.mxu0 0.0
        %3996 = vmatprep.subr.mxu0 0.0
        %3997 = vmatpush1.msra.mxu0 0.0
        %3998 = vmatprep.subr.mxu0 0.0
        %3999 = vmatpush1.msra.mxu0 0.0
        %4000 = vmatprep.subr.mxu0 0.0
        %4001 = vmatpush1.msra.mxu0 0.0
        %4002 = vmatprep.subr.mxu0 0.0
        %4003 = vmatpush1.msra.mxu0 0.0
        %4004 = vmatprep.subr.mxu0 0.0
        %4005 = vmatpush1.msra.mxu0 0.0
        %4006 = vmatprep.subr.mxu0 0.0
        %4007 = vmatpush1.msra.mxu0 0.0
        %4008 = vmatprep.subr.mxu0 0.0
        %4009 = vmatpush1.msra.mxu0 0.0
        %4010 = vmatprep.subr.mxu0 0.0
        %4011 = vmatpush1.msra.mxu0 0.0
        %4012 = vmatprep.subr.mxu0 0.0
        %4013 = vmatpush1.msra.mxu0 0.0
        %4014 = vmatprep.subr.mxu0 0.0
        %4015 = vmatpush1.msra.mxu0 0.0
        %4016 = vmatprep.subr.mxu0 0.0
        %4017 = vmatpush1.msra.mxu0 0.0
        %4018 = vmatprep.subr.mxu0 0.0
        %4019 = vmatpush1.msra.mxu0 0.0
        %4020 = vmatprep.subr.mxu0 0.0
        %4021 = vmatpush1.msra.mxu0 0.0
        %4022 = vmatprep.subr.mxu0 0.0
        %4023 = vmatpush1.msra.mxu0 0.0
        %4024 = vmatprep.subr.mxu0 0.0
        %4025 = vmatpush1.msra.mxu0 0.0
        %4026 = vmatprep.subr.mxu0 0.0
        %4027 = vmatpush1.msra.mxu0 0.0
        %4028 = vmatprep.subr.mxu0 0.0
        %4029 = vmatpush1.msra.mxu0 0.0
        %4030 = vmatprep.subr.mxu0 0.0
        %4031 = vmatpush1.msra.mxu0 0.0
        %4032 = vmatprep.subr.mxu0 0.0
        %4033 = vmatpush1.msra.mxu0 0.0
        %4034 = vmatprep.subr.mxu0 0.0
        %4035 = vmatpush1.msra.mxu0 0.0
        %4036 = vmatprep.subr.mxu0 0.0
        %4037 = vmatpush1.msra.mxu0 0.0
        %4038 = vmatprep.subr.mxu0 0.0
        %4039 = vmatpush1.msra.mxu0 0.0
        %4040 = vmatprep.subr.mxu0 0.0
        %4041 = vmatpush1.msra.mxu0 0.0
        %4042 = vmatprep.subr.mxu0 0.0
        %4043 = vmatpush1.msra.mxu0 0.0
        %4044 = vmatprep.subr.mxu0 0.0
        %4045 = vmatpush1.msra.mxu0 0.0
        %4046 = vmatprep.subr.mxu0 0.0
        %4047 = vmatpush1.msra.mxu0 0.0
        %4048 = vmatprep.subr.mxu0 0.0
        %4049 = vmatpush1.msra.mxu0 0.0
        %4050 = vmatprep.mubr.f32.mxu0 0.0
        %4051 = vmatmul.mubr.f32.gmra.mrb[0].mxu0 %v3984
        %v4052 = vpop.f32.mrb[0].mxu0
        %v4053 = vadd.f32 0.0, %v4052
        %v4054 = vpop.f32.mrb[0].mxu0
        %4055 = vdwg.mxu0
        %v4056 = vld [vmem:[#allocation20] sm:$0xff]
        %v4057 = vld [vmem:[#allocation20 + $0x8] sm:$0xff]
        %v4058 = vld [vmem:[#allocation20 + $0x10] sm:$0xff]
        %v4059 = vld [vmem:[#allocation20 + $0x18] sm:$0xff]
        %4061 = vrot.lane.b32.xlu0 %v3976, 120
        %v4062 = vpop.permute.xlu0 %4061
        %4063 = vrot.lane.b32.xlu0 %v3976, 112
        %v4064 = vpop.permute.xlu0 %4063
        %4065 = vrot.lane.b32.xlu0 %v3976, 104
        %v4066 = vpop.permute.xlu0 %4065
        %4068 = vrot.lane.b32.xlu0 %v4053, 120
        %v4069 = vpop.permute.xlu0 %4068
        %4070 = vrot.lane.b32.xlu0 %v4053, 112
        %v4071 = vpop.permute.xlu0 %4070
        %4072 = vrot.lane.b32.xlu0 %v4053, 104
        %v4073 = vpop.permute.xlu0 %4072
        %v4074 = vsel %vm1093, %v3976, 0
        %v4076 = vsel %vm1093, %v4053, 0
        %4078 = vmatprep.subr.mxu0 0.0
        %4079 = vmatpush1.xpose.msra.mxu0 %v4076
        %4080 = vmatprep.subr.mxu0 0.0
        %4081 = vmatpush1.xpose.msra.mxu0 0.0
        %4082 = vmatprep.subr.mxu0 0.0
        %4083 = vmatpush1.xpose.msra.mxu0 0.0
        %4084 = vmatprep.subr.mxu0 0.0
        %4085 = vmatpush1.xpose.msra.mxu0 0.0
        %4086 = vmatprep.subr.mxu0 0.0
        %4087 = vmatpush1.xpose.msra.mxu0 0.0
        %4088 = vmatprep.subr.mxu0 0.0
        %4089 = vmatpush1.xpose.msra.mxu0 0.0
        %4090 = vmatprep.subr.mxu0 0.0
        %4091 = vmatpush1.xpose.msra.mxu0 0.0
        %4092 = vmatprep.subr.mxu0 0.0
        %4093 = vmatpush1.xpose.msra.mxu0 0.0
        %4094 = vmatprep.subr.mxu0 0.0
        %4095 = vmatpush1.xpose.msra.mxu0 0.0
        %4096 = vmatprep.subr.mxu0 0.0
        %4097 = vmatpush1.xpose.msra.mxu0 0.0
        %4098 = vmatprep.subr.mxu0 0.0
        %4099 = vmatpush1.xpose.msra.mxu0 0.0
        %4100 = vmatprep.subr.mxu0 0.0
        %4101 = vmatpush1.xpose.msra.mxu0 0.0
        %4102 = vmatprep.subr.mxu0 0.0
        %4103 = vmatpush1.xpose.msra.mxu0 0.0
        %4104 = vmatprep.subr.mxu0 0.0
        %4105 = vmatpush1.xpose.msra.mxu0 0.0
        %4106 = vmatprep.subr.mxu0 0.0
        %4107 = vmatpush1.xpose.msra.mxu0 0.0
        %4108 = vmatprep.subr.mxu0 0.0
        %4109 = vmatpush1.xpose.msra.mxu0 0.0
        %4110 = vmatprep.subr.mxu0 0.0
        %4111 = vmatpush1.xpose.msra.mxu0 0.0
        %4112 = vmatprep.subr.mxu0 0.0
        %4113 = vmatpush1.xpose.msra.mxu0 0.0
        %4114 = vmatprep.subr.mxu0 0.0
        %4115 = vmatpush1.xpose.msra.mxu0 0.0
        %4116 = vmatprep.subr.mxu0 0.0
        %4117 = vmatpush1.xpose.msra.mxu0 0.0
        %4118 = vmatprep.subr.mxu0 0.0
        %4119 = vmatpush1.xpose.msra.mxu0 0.0
        %4120 = vmatprep.subr.mxu0 0.0
        %4121 = vmatpush1.xpose.msra.mxu0 0.0
        %4122 = vmatprep.subr.mxu0 0.0
        %4123 = vmatpush1.xpose.msra.mxu0 0.0
        %4124 = vmatprep.subr.mxu0 0.0
        %4125 = vmatpush1.xpose.msra.mxu0 0.0
        %4126 = vmatprep.subr.mxu0 0.0
        %4127 = vmatpush1.xpose.msra.mxu0 0.0
        %4128 = vmatprep.subr.mxu0 0.0
        %4129 = vmatpush1.xpose.msra.mxu0 0.0
        %4130 = vmatprep.subr.mxu0 0.0
        %4131 = vmatpush1.xpose.msra.mxu0 0.0
        %4132 = vmatprep.subr.mxu0 0.0
        %4133 = vmatpush1.xpose.msra.mxu0 0.0
        %4134 = vmatprep.subr.mxu0 0.0
        %4135 = vmatpush1.xpose.msra.mxu0 0.0
        %4136 = vmatprep.subr.mxu0 0.0
        %4137 = vmatpush1.xpose.msra.mxu0 0.0
        %4138 = vmatprep.subr.mxu0 0.0
        %4139 = vmatpush1.xpose.msra.mxu0 0.0
        %4140 = vmatprep.subr.mxu0 0.0
        %4141 = vmatpush1.xpose.msra.mxu0 0.0
        %4142 = vmatprep.mubr.f32.mxu0 0.0
        %4143 = vmatmul.mubr.f32.gmra.mrb[0].mxu0 %v4074
        %v4144 = vpop.f32.mrb[0].mxu0
        %v4145 = vadd.f32 0.0, %v4144
        %v4146 = vpop.f32.mrb[0].mxu0
        %4147 = vdwg.mxu0
        %v4148 = vsel %vm1093, %v4062, 0
        %v4150 = vsel %vm1093, %v4069, 0
        %4152 = vmatprep.subr.mxu0 0.0
        %4153 = vmatpush1.xpose.msra.mxu0 %v4150
        %4154 = vmatprep.subr.mxu0 0.0
        %4155 = vmatpush1.xpose.msra.mxu0 0.0
        %4156 = vmatprep.subr.mxu0 0.0
        %4157 = vmatpush1.xpose.msra.mxu0 0.0
        %4158 = vmatprep.subr.mxu0 0.0
        %4159 = vmatpush1.xpose.msra.mxu0 0.0
        %4160 = vmatprep.subr.mxu0 0.0
        %4161 = vmatpush1.xpose.msra.mxu0 0.0
        %4162 = vmatprep.subr.mxu0 0.0
        %4163 = vmatpush1.xpose.msra.mxu0 0.0
        %4164 = vmatprep.subr.mxu0 0.0
        %4165 = vmatpush1.xpose.msra.mxu0 0.0
        %4166 = vmatprep.subr.mxu0 0.0
        %4167 = vmatpush1.xpose.msra.mxu0 0.0
        %4168 = vmatprep.subr.mxu0 0.0
        %4169 = vmatpush1.xpose.msra.mxu0 0.0
        %4170 = vmatprep.subr.mxu0 0.0
        %4171 = vmatpush1.xpose.msra.mxu0 0.0
        %4172 = vmatprep.subr.mxu0 0.0
        %4173 = vmatpush1.xpose.msra.mxu0 0.0
        %4174 = vmatprep.subr.mxu0 0.0
        %4175 = vmatpush1.xpose.msra.mxu0 0.0
        %4176 = vmatprep.subr.mxu0 0.0
        %4177 = vmatpush1.xpose.msra.mxu0 0.0
        %4178 = vmatprep.subr.mxu0 0.0
        %4179 = vmatpush1.xpose.msra.mxu0 0.0
        %4180 = vmatprep.subr.mxu0 0.0
        %4181 = vmatpush1.xpose.msra.mxu0 0.0
        %4182 = vmatprep.subr.mxu0 0.0
        %4183 = vmatpush1.xpose.msra.mxu0 0.0
        %4184 = vmatprep.subr.mxu0 0.0
        %4185 = vmatpush1.xpose.msra.mxu0 0.0
        %4186 = vmatprep.subr.mxu0 0.0
        %4187 = vmatpush1.xpose.msra.mxu0 0.0
        %4188 = vmatprep.subr.mxu0 0.0
        %4189 = vmatpush1.xpose.msra.mxu0 0.0
        %4190 = vmatprep.subr.mxu0 0.0
        %4191 = vmatpush1.xpose.msra.mxu0 0.0
        %4192 = vmatprep.subr.mxu0 0.0
        %4193 = vmatpush1.xpose.msra.mxu0 0.0
        %4194 = vmatprep.subr.mxu0 0.0
        %4195 = vmatpush1.xpose.msra.mxu0 0.0
        %4196 = vmatprep.subr.mxu0 0.0
        %4197 = vmatpush1.xpose.msra.mxu0 0.0
        %4198 = vmatprep.subr.mxu0 0.0
        %4199 = vmatpush1.xpose.msra.mxu0 0.0
        %4200 = vmatprep.subr.mxu0 0.0
        %4201 = vmatpush1.xpose.msra.mxu0 0.0
        %4202 = vmatprep.subr.mxu0 0.0
        %4203 = vmatpush1.xpose.msra.mxu0 0.0
        %4204 = vmatprep.subr.mxu0 0.0
        %4205 = vmatpush1.xpose.msra.mxu0 0.0
        %4206 = vmatprep.subr.mxu0 0.0
        %4207 = vmatpush1.xpose.msra.mxu0 0.0
        %4208 = vmatprep.subr.mxu0 0.0
        %4209 = vmatpush1.xpose.msra.mxu0 0.0
        %4210 = vmatprep.subr.mxu0 0.0
        %4211 = vmatpush1.xpose.msra.mxu0 0.0
        %4212 = vmatprep.subr.mxu0 0.0
        %4213 = vmatpush1.xpose.msra.mxu0 0.0
        %4214 = vmatprep.subr.mxu0 0.0
        %4215 = vmatpush1.xpose.msra.mxu0 0.0
        %4216 = vmatprep.mubr.f32.mxu0 0.0
        %4217 = vmatmul.mubr.f32.gmra.mrb[0].mxu0 %v4148
        %v4218 = vpop.f32.mrb[0].mxu0
        %v4219 = vadd.f32 0.0, %v4218
        %v4220 = vpop.f32.mrb[0].mxu0
        %4221 = vdwg.mxu0
        %v4222 = vsel %vm1093, %v4064, 0
        %v4224 = vsel %vm1093, %v4071, 0
        %4226 = vmatprep.subr.mxu0 0.0
        %4227 = vmatpush1.xpose.msra.mxu0 %v4224
        %4228 = vmatprep.subr.mxu0 0.0
        %4229 = vmatpush1.xpose.msra.mxu0 0.0
        %4230 = vmatprep.subr.mxu0 0.0
        %4231 = vmatpush1.xpose.msra.mxu0 0.0
        %4232 = vmatprep.subr.mxu0 0.0
        %4233 = vmatpush1.xpose.msra.mxu0 0.0
        %4234 = vmatprep.subr.mxu0 0.0
        %4235 = vmatpush1.xpose.msra.mxu0 0.0
        %4236 = vmatprep.subr.mxu0 0.0
        %4237 = vmatpush1.xpose.msra.mxu0 0.0
        %4238 = vmatprep.subr.mxu0 0.0
        %4239 = vmatpush1.xpose.msra.mxu0 0.0
        %4240 = vmatprep.subr.mxu0 0.0
        %4241 = vmatpush1.xpose.msra.mxu0 0.0
        %4242 = vmatprep.subr.mxu0 0.0
        %4243 = vmatpush1.xpose.msra.mxu0 0.0
        %4244 = vmatprep.subr.mxu0 0.0
        %4245 = vmatpush1.xpose.msra.mxu0 0.0
        %4246 = vmatprep.subr.mxu0 0.0
        %4247 = vmatpush1.xpose.msra.mxu0 0.0
        %4248 = vmatprep.subr.mxu0 0.0
        %4249 = vmatpush1.xpose.msra.mxu0 0.0
        %4250 = vmatprep.subr.mxu0 0.0
        %4251 = vmatpush1.xpose.msra.mxu0 0.0
        %4252 = vmatprep.subr.mxu0 0.0
        %4253 = vmatpush1.xpose.msra.mxu0 0.0
        %4254 = vmatprep.subr.mxu0 0.0
        %4255 = vmatpush1.xpose.msra.mxu0 0.0
        %4256 = vmatprep.subr.mxu0 0.0
        %4257 = vmatpush1.xpose.msra.mxu0 0.0
        %4258 = vmatprep.subr.mxu0 0.0
        %4259 = vmatpush1.xpose.msra.mxu0 0.0
        %4260 = vmatprep.subr.mxu0 0.0
        %4261 = vmatpush1.xpose.msra.mxu0 0.0
        %4262 = vmatprep.subr.mxu0 0.0
        %4263 = vmatpush1.xpose.msra.mxu0 0.0
        %4264 = vmatprep.subr.mxu0 0.0
        %4265 = vmatpush1.xpose.msra.mxu0 0.0
        %4266 = vmatprep.subr.mxu0 0.0
        %4267 = vmatpush1.xpose.msra.mxu0 0.0
        %4268 = vmatprep.subr.mxu0 0.0
        %4269 = vmatpush1.xpose.msra.mxu0 0.0
        %4270 = vmatprep.subr.mxu0 0.0
        %4271 = vmatpush1.xpose.msra.mxu0 0.0
        %4272 = vmatprep.subr.mxu0 0.0
        %4273 = vmatpush1.xpose.msra.mxu0 0.0
        %4274 = vmatprep.subr.mxu0 0.0
        %4275 = vmatpush1.xpose.msra.mxu0 0.0
        %4276 = vmatprep.subr.mxu0 0.0
        %4277 = vmatpush1.xpose.msra.mxu0 0.0
        %4278 = vmatprep.subr.mxu0 0.0
        %4279 = vmatpush1.xpose.msra.mxu0 0.0
        %4280 = vmatprep.subr.mxu0 0.0
        %4281 = vmatpush1.xpose.msra.mxu0 0.0
        %4282 = vmatprep.subr.mxu0 0.0
        %4283 = vmatpush1.xpose.msra.mxu0 0.0
        %4284 = vmatprep.subr.mxu0 0.0
        %4285 = vmatpush1.xpose.msra.mxu0 0.0
        %4286 = vmatprep.subr.mxu0 0.0
        %4287 = vmatpush1.xpose.msra.mxu0 0.0
        %4288 = vmatprep.subr.mxu0 0.0
        %4289 = vmatpush1.xpose.msra.mxu0 0.0
        %4290 = vmatprep.mubr.f32.mxu0 0.0
        %4291 = vmatmul.mubr.f32.gmra.mrb[0].mxu0 %v4222
        %v4292 = vpop.f32.mrb[0].mxu0
        %v4293 = vadd.f32 0.0, %v4292
        %v4294 = vpop.f32.mrb[0].mxu0
        %4295 = vdwg.mxu0
        %v4296 = vsel %vm1093, %v4066, 0
        %v4298 = vsel %vm1093, %v4073, 0
        %4300 = vmatprep.subr.mxu0 0.0
        %4301 = vmatpush1.xpose.msra.mxu0 %v4298
        %4302 = vmatprep.subr.mxu0 0.0
        %4303 = vmatpush1.xpose.msra.mxu0 0.0
        %4304 = vmatprep.subr.mxu0 0.0
        %4305 = vmatpush1.xpose.msra.mxu0 0.0
        %4306 = vmatprep.subr.mxu0 0.0
        %4307 = vmatpush1.xpose.msra.mxu0 0.0
        %4308 = vmatprep.subr.mxu0 0.0
        %4309 = vmatpush1.xpose.msra.mxu0 0.0
        %4310 = vmatprep.subr.mxu0 0.0
        %4311 = vmatpush1.xpose.msra.mxu0 0.0
        %4312 = vmatprep.subr.mxu0 0.0
        %4313 = vmatpush1.xpose.msra.mxu0 0.0
        %4314 = vmatprep.subr.mxu0 0.0
        %4315 = vmatpush1.xpose.msra.mxu0 0.0
        %4316 = vmatprep.subr.mxu0 0.0
        %4317 = vmatpush1.xpose.msra.mxu0 0.0
        %4318 = vmatprep.subr.mxu0 0.0
        %4319 = vmatpush1.xpose.msra.mxu0 0.0
        %4320 = vmatprep.subr.mxu0 0.0
        %4321 = vmatpush1.xpose.msra.mxu0 0.0
        %4322 = vmatprep.subr.mxu0 0.0
        %4323 = vmatpush1.xpose.msra.mxu0 0.0
        %4324 = vmatprep.subr.mxu0 0.0
        %4325 = vmatpush1.xpose.msra.mxu0 0.0
        %4326 = vmatprep.subr.mxu0 0.0
        %4327 = vmatpush1.xpose.msra.mxu0 0.0
        %4328 = vmatprep.subr.mxu0 0.0
        %4329 = vmatpush1.xpose.msra.mxu0 0.0
        %4330 = vmatprep.subr.mxu0 0.0
        %4331 = vmatpush1.xpose.msra.mxu0 0.0
        %4332 = vmatprep.subr.mxu0 0.0
        %4333 = vmatpush1.xpose.msra.mxu0 0.0
        %4334 = vmatprep.subr.mxu0 0.0
        %4335 = vmatpush1.xpose.msra.mxu0 0.0
        %4336 = vmatprep.subr.mxu0 0.0
        %4337 = vmatpush1.xpose.msra.mxu0 0.0
        %4338 = vmatprep.subr.mxu0 0.0
        %4339 = vmatpush1.xpose.msra.mxu0 0.0
        %4340 = vmatprep.subr.mxu0 0.0
        %4341 = vmatpush1.xpose.msra.mxu0 0.0
        %4342 = vmatprep.subr.mxu0 0.0
        %4343 = vmatpush1.xpose.msra.mxu0 0.0
        %4344 = vmatprep.subr.mxu0 0.0
        %4345 = vmatpush1.xpose.msra.mxu0 0.0
        %4346 = vmatprep.subr.mxu0 0.0
        %4347 = vmatpush1.xpose.msra.mxu0 0.0
        %4348 = vmatprep.subr.mxu0 0.0
        %4349 = vmatpush1.xpose.msra.mxu0 0.0
        %4350 = vmatprep.subr.mxu0 0.0
        %4351 = vmatpush1.xpose.msra.mxu0 0.0
        %4352 = vmatprep.subr.mxu0 0.0
        %4353 = vmatpush1.xpose.msra.mxu0 0.0
        %4354 = vmatprep.subr.mxu0 0.0
        %4355 = vmatpush1.xpose.msra.mxu0 0.0
        %4356 = vmatprep.subr.mxu0 0.0
        %4357 = vmatpush1.xpose.msra.mxu0 0.0
        %4358 = vmatprep.subr.mxu0 0.0
        %4359 = vmatpush1.xpose.msra.mxu0 0.0
        %4360 = vmatprep.subr.mxu0 0.0
        %4361 = vmatpush1.xpose.msra.mxu0 0.0
        %4362 = vmatprep.subr.mxu0 0.0
        %4363 = vmatpush1.xpose.msra.mxu0 0.0
        %4364 = vmatprep.mubr.f32.mxu0 0.0
        %4365 = vmatmul.mubr.f32.gmra.mrb[0].mxu0 %v4296
        %v4366 = vpop.f32.mrb[0].mxu0
        %v4367 = vadd.f32 0.0, %v4366
        %v4368 = vpop.f32.mrb[0].mxu0
        %4369 = vdwg.mxu0
        %v4370 = vsel %vm1093, %v4145, -inf
        %4371 = vmax.xlane.f32.xlu0 %v4370
        %v4372 = vpop.xlane.xlu0 %4371
        %v4373 = vsel %vm1093, %v4219, -inf
        %4374 = vmax.xlane.f32.xlu0 %v4373
        %v4375 = vpop.xlane.xlu0 %4374
        %v4376 = vsel %vm1093, %v4293, -inf
        %4377 = vmax.xlane.f32.xlu0 %v4376
        %v4378 = vpop.xlane.xlu0 %4377
        %v4379 = vsel %vm1093, %v4367, -inf
        %4380 = vmax.xlane.f32.xlu0 %v4379
        %v4381 = vpop.xlane.xlu0 %4380
        %v4382 = vsub.f32 %v4145, %v4372
        %v4383 = vsub.f32 %v4219, %v4375
        %v4384 = vsub.f32 %v4293, %v4378
        %v4385 = vsub.f32 %v4367, %v4381
        %v4386 = vmul.f32 %v4382, 1.442695
        %v4387 = vpow.pop %v4386
        %v4388 = vmul.f32 %v4383, 1.442695
        %v4389 = vpow.pop %v4388
        %v4390 = vmul.f32 %v4384, 1.442695
        %v4391 = vpow.pop %v4390
        %v4392 = vmul.f32 %v4385, 1.442695
        %v4393 = vpow.pop %v4392
        %v4394 = vsel %vm1093, %v4387, 0.0
        %4395 = vadd.xlane.f32.xlu0 %v4394
        %v4396 = vpop.xlane.xlu0 %4395
        %v4397 = vsel %vm1093, %v4389, 0.0
        %4398 = vadd.xlane.f32.xlu0 %v4397
        %v4399 = vpop.xlane.xlu0 %4398
        %v4400 = vsel %vm1093, %v4391, 0.0
        %4401 = vadd.xlane.f32.xlu0 %v4400
        %v4402 = vpop.xlane.xlu0 %4401
        %v4403 = vsel %vm1093, %v4393, 0.0
        %4404 = vadd.xlane.f32.xlu0 %v4403
        %v4405 = vpop.xlane.xlu0 %4404
        %v4406 = vrcp.pop %v4396
        %v4407 = vrcp.pop %v4399
        %v4408 = vrcp.pop %v4402
        %v4409 = vrcp.pop %v4405
        %v4410 = vmul.f32 %v4387, %v4406
        %v4411 = vmul.f32 %v4389, %v4407
        %v4412 = vmul.f32 %v4391, %v4408
        %v4413 = vmul.f32 %v4393, %v4409
        %4414 = vrot.lane.b32.xlu0 %v4053, 96
        %v4415 = vpop.permute.xlu0 %4414
        %v4418 = vsel %vm1093, %v4410, 0
        %4420 = vmatprep.subr.mxu0 0.0
        %4421 = vmatpush1.msra.mxu0 %v4415
        %4422 = vmatprep.subr.mxu0 0.0
        %4423 = vmatpush1.msra.mxu0 0.0
        %4424 = vmatprep.subr.mxu0 0.0
        %4425 = vmatpush1.msra.mxu0 0.0
        %4426 = vmatprep.subr.mxu0 0.0
        %4427 = vmatpush1.msra.mxu0 0.0
        %4428 = vmatprep.subr.mxu0 0.0
        %4429 = vmatpush1.msra.mxu0 0.0
        %4430 = vmatprep.subr.mxu0 0.0
        %4431 = vmatpush1.msra.mxu0 0.0
        %4432 = vmatprep.subr.mxu0 0.0
        %4433 = vmatpush1.msra.mxu0 0.0
        %4434 = vmatprep.subr.mxu0 0.0
        %4435 = vmatpush1.msra.mxu0 0.0
        %4436 = vmatprep.subr.mxu0 0.0
        %4437 = vmatpush1.msra.mxu0 0.0
        %4438 = vmatprep.subr.mxu0 0.0
        %4439 = vmatpush1.msra.mxu0 0.0
        %4440 = vmatprep.subr.mxu0 0.0
        %4441 = vmatpush1.msra.mxu0 0.0
        %4442 = vmatprep.subr.mxu0 0.0
        %4443 = vmatpush1.msra.mxu0 0.0
        %4444 = vmatprep.subr.mxu0 0.0
        %4445 = vmatpush1.msra.mxu0 0.0
        %4446 = vmatprep.subr.mxu0 0.0
        %4447 = vmatpush1.msra.mxu0 0.0
        %4448 = vmatprep.subr.mxu0 0.0
        %4449 = vmatpush1.msra.mxu0 0.0
        %4450 = vmatprep.subr.mxu0 0.0
        %4451 = vmatpush1.msra.mxu0 0.0
        %4452 = vmatprep.subr.mxu0 0.0
        %4453 = vmatpush1.msra.mxu0 0.0
        %4454 = vmatprep.subr.mxu0 0.0
        %4455 = vmatpush1.msra.mxu0 0.0
        %4456 = vmatprep.subr.mxu0 0.0
        %4457 = vmatpush1.msra.mxu0 0.0
        %4458 = vmatprep.subr.mxu0 0.0
        %4459 = vmatpush1.msra.mxu0 0.0
        %4460 = vmatprep.subr.mxu0 0.0
        %4461 = vmatpush1.msra.mxu0 0.0
        %4462 = vmatprep.subr.mxu0 0.0
        %4463 = vmatpush1.msra.mxu0 0.0
        %4464 = vmatprep.subr.mxu0 0.0
        %4465 = vmatpush1.msra.mxu0 0.0
        %4466 = vmatprep.subr.mxu0 0.0
        %4467 = vmatpush1.msra.mxu0 0.0
        %4468 = vmatprep.subr.mxu0 0.0
        %4469 = vmatpush1.msra.mxu0 0.0
        %4470 = vmatprep.subr.mxu0 0.0
        %4471 = vmatpush1.msra.mxu0 0.0
        %4472 = vmatprep.subr.mxu0 0.0
        %4473 = vmatpush1.msra.mxu0 0.0
        %4474 = vmatprep.subr.mxu0 0.0
        %4475 = vmatpush1.msra.mxu0 0.0
        %4476 = vmatprep.subr.mxu0 0.0
        %4477 = vmatpush1.msra.mxu0 0.0
        %4478 = vmatprep.subr.mxu0 0.0
        %4479 = vmatpush1.msra.mxu0 0.0
        %4480 = vmatprep.subr.mxu0 0.0
        %4481 = vmatpush1.msra.mxu0 0.0
        %4482 = vmatprep.subr.mxu0 0.0
        %4483 = vmatpush1.msra.mxu0 0.0
        %4484 = vmatprep.mubr.f32.mxu0 0.0
        %4485 = vmatmul.mubr.f32.gmra.mrb[0].mxu0 %v4418
        %v4486 = vpop.f32.mrb[0].mxu0
        %v4487 = vadd.f32 0.0, %v4486
        %v4488 = vpop.f32.mrb[0].mxu0
        %4489 = vdwg.mxu0
        %4490 = vrot.lane.b32.xlu0 %v4069, 96
        %v4491 = vpop.permute.xlu0 %4490
        %v4494 = vsel %vm1093, %v4411, 0
        %4496 = vmatprep.subr.mxu0 0.0
        %4497 = vmatpush1.msra.mxu0 %v4491
        %4498 = vmatprep.subr.mxu0 0.0
        %4499 = vmatpush1.msra.mxu0 0.0
        %4500 = vmatprep.subr.mxu0 0.0
        %4501 = vmatpush1.msra.mxu0 0.0
        %4502 = vmatprep.subr.mxu0 0.0
        %4503 = vmatpush1.msra.mxu0 0.0
        %4504 = vmatprep.subr.mxu0 0.0
        %4505 = vmatpush1.msra.mxu0 0.0
        %4506 = vmatprep.subr.mxu0 0.0
        %4507 = vmatpush1.msra.mxu0 0.0
        %4508 = vmatprep.subr.mxu0 0.0
        %4509 = vmatpush1.msra.mxu0 0.0
        %4510 = vmatprep.subr.mxu0 0.0
        %4511 = vmatpush1.msra.mxu0 0.0
        %4512 = vmatprep.subr.mxu0 0.0
        %4513 = vmatpush1.msra.mxu0 0.0
        %4514 = vmatprep.subr.mxu0 0.0
        %4515 = vmatpush1.msra.mxu0 0.0
        %4516 = vmatprep.subr.mxu0 0.0
        %4517 = vmatpush1.msra.mxu0 0.0
        %4518 = vmatprep.subr.mxu0 0.0
        %4519 = vmatpush1.msra.mxu0 0.0
        %4520 = vmatprep.subr.mxu0 0.0
        %4521 = vmatpush1.msra.mxu0 0.0
        %4522 = vmatprep.subr.mxu0 0.0
        %4523 = vmatpush1.msra.mxu0 0.0
        %4524 = vmatprep.subr.mxu0 0.0
        %4525 = vmatpush1.msra.mxu0 0.0
        %4526 = vmatprep.subr.mxu0 0.0
        %4527 = vmatpush1.msra.mxu0 0.0
        %4528 = vmatprep.subr.mxu0 0.0
        %4529 = vmatpush1.msra.mxu0 0.0
        %4530 = vmatprep.subr.mxu0 0.0
        %4531 = vmatpush1.msra.mxu0 0.0
        %4532 = vmatprep.subr.mxu0 0.0
        %4533 = vmatpush1.msra.mxu0 0.0
        %4534 = vmatprep.subr.mxu0 0.0
        %4535 = vmatpush1.msra.mxu0 0.0
        %4536 = vmatprep.subr.mxu0 0.0
        %4537 = vmatpush1.msra.mxu0 0.0
        %4538 = vmatprep.subr.mxu0 0.0
        %4539 = vmatpush1.msra.mxu0 0.0
        %4540 = vmatprep.subr.mxu0 0.0
        %4541 = vmatpush1.msra.mxu0 0.0
        %4542 = vmatprep.subr.mxu0 0.0
        %4543 = vmatpush1.msra.mxu0 0.0
        %4544 = vmatprep.subr.mxu0 0.0
        %4545 = vmatpush1.msra.mxu0 0.0
        %4546 = vmatprep.subr.mxu0 0.0
        %4547 = vmatpush1.msra.mxu0 0.0
        %4548 = vmatprep.subr.mxu0 0.0
        %4549 = vmatpush1.msra.mxu0 0.0
        %4550 = vmatprep.subr.mxu0 0.0
        %4551 = vmatpush1.msra.mxu0 0.0
        %4552 = vmatprep.subr.mxu0 0.0
        %4553 = vmatpush1.msra.mxu0 0.0
        %4554 = vmatprep.subr.mxu0 0.0
        %4555 = vmatpush1.msra.mxu0 0.0
        %4556 = vmatprep.subr.mxu0 0.0
        %4557 = vmatpush1.msra.mxu0 0.0
        %4558 = vmatprep.subr.mxu0 0.0
        %4559 = vmatpush1.msra.mxu0 0.0
        %4560 = vmatprep.mubr.f32.mxu0 0.0
        %4561 = vmatmul.mubr.f32.gmra.mrb[0].mxu0 %v4494
        %v4562 = vpop.f32.mrb[0].mxu0
        %v4563 = vadd.f32 0.0, %v4562
        %v4564 = vpop.f32.mrb[0].mxu0
        %4565 = vdwg.mxu0
        %4566 = vrot.lane.b32.xlu0 %v4071, 96
        %v4567 = vpop.permute.xlu0 %4566
        %v4570 = vsel %vm1093, %v4412, 0
        %4572 = vmatprep.subr.mxu0 0.0
        %4573 = vmatpush1.msra.mxu0 %v4567
        %4574 = vmatprep.subr.mxu0 0.0
        %4575 = vmatpush1.msra.mxu0 0.0
        %4576 = vmatprep.subr.mxu0 0.0
        %4577 = vmatpush1.msra.mxu0 0.0
        %4578 = vmatprep.subr.mxu0 0.0
        %4579 = vmatpush1.msra.mxu0 0.0
        %4580 = vmatprep.subr.mxu0 0.0
        %4581 = vmatpush1.msra.mxu0 0.0
        %4582 = vmatprep.subr.mxu0 0.0
        %4583 = vmatpush1.msra.mxu0 0.0
        %4584 = vmatprep.subr.mxu0 0.0
        %4585 = vmatpush1.msra.mxu0 0.0
        %4586 = vmatprep.subr.mxu0 0.0
        %4587 = vmatpush1.msra.mxu0 0.0
        %4588 = vmatprep.subr.mxu0 0.0
        %4589 = vmatpush1.msra.mxu0 0.0
        %4590 = vmatprep.subr.mxu0 0.0
        %4591 = vmatpush1.msra.mxu0 0.0
        %4592 = vmatprep.subr.mxu0 0.0
        %4593 = vmatpush1.msra.mxu0 0.0
        %4594 = vmatprep.subr.mxu0 0.0
        %4595 = vmatpush1.msra.mxu0 0.0
        %4596 = vmatprep.subr.mxu0 0.0
        %4597 = vmatpush1.msra.mxu0 0.0
        %4598 = vmatprep.subr.mxu0 0.0
        %4599 = vmatpush1.msra.mxu0 0.0
        %4600 = vmatprep.subr.mxu0 0.0
        %4601 = vmatpush1.msra.mxu0 0.0
        %4602 = vmatprep.subr.mxu0 0.0
        %4603 = vmatpush1.msra.mxu0 0.0
        %4604 = vmatprep.subr.mxu0 0.0
        %4605 = vmatpush1.msra.mxu0 0.0
        %4606 = vmatprep.subr.mxu0 0.0
        %4607 = vmatpush1.msra.mxu0 0.0
        %4608 = vmatprep.subr.mxu0 0.0
        %4609 = vmatpush1.msra.mxu0 0.0
        %4610 = vmatprep.subr.mxu0 0.0
        %4611 = vmatpush1.msra.mxu0 0.0
        %4612 = vmatprep.subr.mxu0 0.0
        %4613 = vmatpush1.msra.mxu0 0.0
        %4614 = vmatprep.subr.mxu0 0.0
        %4615 = vmatpush1.msra.mxu0 0.0
        %4616 = vmatprep.subr.mxu0 0.0
        %4617 = vmatpush1.msra.mxu0 0.0
        %4618 = vmatprep.subr.mxu0 0.0
        %4619 = vmatpush1.msra.mxu0 0.0
        %4620 = vmatprep.subr.mxu0 0.0
        %4621 = vmatpush1.msra.mxu0 0.0
        %4622 = vmatprep.subr.mxu0 0.0
        %4623 = vmatpush1.msra.mxu0 0.0
        %4624 = vmatprep.subr.mxu0 0.0
        %4625 = vmatpush1.msra.mxu0 0.0
        %4626 = vmatprep.subr.mxu0 0.0
        %4627 = vmatpush1.msra.mxu0 0.0
        %4628 = vmatprep.subr.mxu0 0.0
        %4629 = vmatpush1.msra.mxu0 0.0
        %4630 = vmatprep.subr.mxu0 0.0
        %4631 = vmatpush1.msra.mxu0 0.0
        %4632 = vmatprep.subr.mxu0 0.0
        %4633 = vmatpush1.msra.mxu0 0.0
        %4634 = vmatprep.subr.mxu0 0.0
        %4635 = vmatpush1.msra.mxu0 0.0
        %4636 = vmatprep.mubr.f32.mxu0 0.0
        %4637 = vmatmul.mubr.f32.gmra.mrb[0].mxu0 %v4570
        %v4638 = vpop.f32.mrb[0].mxu0
        %v4639 = vadd.f32 0.0, %v4638
        %v4640 = vpop.f32.mrb[0].mxu0
        %4641 = vdwg.mxu0
        %4642 = vrot.lane.b32.xlu0 %v4073, 96
        %v4643 = vpop.permute.xlu0 %4642
        %v4646 = vsel %vm1093, %v4413, 0
        %4648 = vmatprep.subr.mxu0 0.0
        %4649 = vmatpush1.msra.mxu0 %v4643
        %4650 = vmatprep.subr.mxu0 0.0
        %4651 = vmatpush1.msra.mxu0 0.0
        %4652 = vmatprep.subr.mxu0 0.0
        %4653 = vmatpush1.msra.mxu0 0.0
        %4654 = vmatprep.subr.mxu0 0.0
        %4655 = vmatpush1.msra.mxu0 0.0
        %4656 = vmatprep.subr.mxu0 0.0
        %4657 = vmatpush1.msra.mxu0 0.0
        %4658 = vmatprep.subr.mxu0 0.0
        %4659 = vmatpush1.msra.mxu0 0.0
        %4660 = vmatprep.subr.mxu0 0.0
        %4661 = vmatpush1.msra.mxu0 0.0
        %4662 = vmatprep.subr.mxu0 0.0
        %4663 = vmatpush1.msra.mxu0 0.0
        %4664 = vmatprep.subr.mxu0 0.0
        %4665 = vmatpush1.msra.mxu0 0.0
        %4666 = vmatprep.subr.mxu0 0.0
        %4667 = vmatpush1.msra.mxu0 0.0
        %4668 = vmatprep.subr.mxu0 0.0
        %4669 = vmatpush1.msra.mxu0 0.0
        %4670 = vmatprep.subr.mxu0 0.0
        %4671 = vmatpush1.msra.mxu0 0.0
        %4672 = vmatprep.subr.mxu0 0.0
        %4673 = vmatpush1.msra.mxu0 0.0
        %4674 = vmatprep.subr.mxu0 0.0
        %4675 = vmatpush1.msra.mxu0 0.0
        %4676 = vmatprep.subr.mxu0 0.0
        %4677 = vmatpush1.msra.mxu0 0.0
        %4678 = vmatprep.subr.mxu0 0.0
        %4679 = vmatpush1.msra.mxu0 0.0
        %4680 = vmatprep.subr.mxu0 0.0
        %4681 = vmatpush1.msra.mxu0 0.0
        %4682 = vmatprep.subr.mxu0 0.0
        %4683 = vmatpush1.msra.mxu0 0.0
        %4684 = vmatprep.subr.mxu0 0.0
        %4685 = vmatpush1.msra.mxu0 0.0
        %4686 = vmatprep.subr.mxu0 0.0
        %4687 = vmatpush1.msra.mxu0 0.0
        %4688 = vmatprep.subr.mxu0 0.0
        %4689 = vmatpush1.msra.mxu0 0.0
        %4690 = vmatprep.subr.mxu0 0.0
        %4691 = vmatpush1.msra.mxu0 0.0
        %4692 = vmatprep.subr.mxu0 0.0
        %4693 = vmatpush1.msra.mxu0 0.0
        %4694 = vmatprep.subr.mxu0 0.0
        %4695 = vmatpush1.msra.mxu0 0.0
        %4696 = vmatprep.subr.mxu0 0.0
        %4697 = vmatpush1.msra.mxu0 0.0
        %4698 = vmatprep.subr.mxu0 0.0
        %4699 = vmatpush1.msra.mxu0 0.0
        %4700 = vmatprep.subr.mxu0 0.0
        %4701 = vmatpush1.msra.mxu0 0.0
        %4702 = vmatprep.subr.mxu0 0.0
        %4703 = vmatpush1.msra.mxu0 0.0
        %4704 = vmatprep.subr.mxu0 0.0
        %4705 = vmatpush1.msra.mxu0 0.0
        %4706 = vmatprep.subr.mxu0 0.0
        %4707 = vmatpush1.msra.mxu0 0.0
        %4708 = vmatprep.subr.mxu0 0.0
        %4709 = vmatpush1.msra.mxu0 0.0
        %4710 = vmatprep.subr.mxu0 0.0
        %4711 = vmatpush1.msra.mxu0 0.0
        %4712 = vmatprep.mubr.f32.mxu0 0.0
        %4713 = vmatmul.mubr.f32.gmra.mrb[0].mxu0 %v4646
        %v4714 = vpop.f32.mrb[0].mxu0
        %v4715 = vadd.f32 0.0, %v4714
        %v4716 = vpop.f32.mrb[0].mxu0
        %4717 = vdwg.mxu0
        %4719 = vrot.lane.b32.xlu0 %v4563, 8
        %v4720 = vpop.permute.xlu0 %4719
        %4723 = vrot.lane.b32.xlu0 %v4639, 16
        %v4724 = vpop.permute.xlu0 %4723
        %4727 = vrot.lane.b32.xlu0 %v4715, 24
        %v4728 = vpop.permute.xlu0 %4727
        %v4730 = vsel %vm1093, %v4487, %v4720
        %v4731 = vsel %vm1757, %v4730, %v4724
        %v4732 = vsel %vm1759, %v4731, %v4728
        %v4734 = vsel %vm989, %v4732, 0
        %4736 = vmatprep.subr.mxu0 0.0
        %4737 = vmatpush1.msra.mxu0 %v4056
        %4738 = vmatprep.subr.mxu0 0.0
        %4739 = vmatpush1.msra.mxu0 %v4057
        %4740 = vmatprep.subr.mxu0 0.0
        %4741 = vmatpush1.msra.mxu0 %v4058
        %4742 = vmatprep.subr.mxu0 0.0
        %4743 = vmatpush1.msra.mxu0 %v4059
        %4744 = vmatprep.subr.mxu0 0.0
        %4745 = vmatpush1.msra.mxu0 0.0
        %4746 = vmatprep.subr.mxu0 0.0
        %4747 = vmatpush1.msra.mxu0 0.0
        %4748 = vmatprep.subr.mxu0 0.0
        %4749 = vmatpush1.msra.mxu0 0.0
        %4750 = vmatprep.subr.mxu0 0.0
        %4751 = vmatpush1.msra.mxu0 0.0
        %4752 = vmatprep.subr.mxu0 0.0
        %4753 = vmatpush1.msra.mxu0 0.0
        %4754 = vmatprep.subr.mxu0 0.0
        %4755 = vmatpush1.msra.mxu0 0.0
        %4756 = vmatprep.subr.mxu0 0.0
        %4757 = vmatpush1.msra.mxu0 0.0
        %4758 = vmatprep.subr.mxu0 0.0
        %4759 = vmatpush1.msra.mxu0 0.0
        %4760 = vmatprep.subr.mxu0 0.0
        %4761 = vmatpush1.msra.mxu0 0.0
        %4762 = vmatprep.subr.mxu0 0.0
        %4763 = vmatpush1.msra.mxu0 0.0
        %4764 = vmatprep.subr.mxu0 0.0
        %4765 = vmatpush1.msra.mxu0 0.0
        %4766 = vmatprep.subr.mxu0 0.0
        %4767 = vmatpush1.msra.mxu0 0.0
        %4768 = vmatprep.subr.mxu0 0.0
        %4769 = vmatpush1.msra.mxu0 0.0
        %4770 = vmatprep.subr.mxu0 0.0
        %4771 = vmatpush1.msra.mxu0 0.0
        %4772 = vmatprep.subr.mxu0 0.0
        %4773 = vmatpush1.msra.mxu0 0.0
        %4774 = vmatprep.subr.mxu0 0.0
        %4775 = vmatpush1.msra.mxu0 0.0
        %4776 = vmatprep.subr.mxu0 0.0
        %4777 = vmatpush1.msra.mxu0 0.0
        %4778 = vmatprep.subr.mxu0 0.0
        %4779 = vmatpush1.msra.mxu0 0.0
        %4780 = vmatprep.subr.mxu0 0.0
        %4781 = vmatpush1.msra.mxu0 0.0
        %4782 = vmatprep.subr.mxu0 0.0
        %4783 = vmatpush1.msra.mxu0 0.0
        %4784 = vmatprep.subr.mxu0 0.0
        %4785 = vmatpush1.msra.mxu0 0.0
        %4786 = vmatprep.subr.mxu0 0.0
        %4787 = vmatpush1.msra.mxu0 0.0
        %4788 = vmatprep.subr.mxu0 0.0
        %4789 = vmatpush1.msra.mxu0 0.0
        %4790 = vmatprep.subr.mxu0 0.0
        %4791 = vmatpush1.msra.mxu0 0.0
        %4792 = vmatprep.subr.mxu0 0.0
        %4793 = vmatpush1.msra.mxu0 0.0
        %4794 = vmatprep.subr.mxu0 0.0
        %4795 = vmatpush1.msra.mxu0 0.0
        %4796 = vmatprep.subr.mxu0 0.0
        %4797 = vmatpush1.msra.mxu0 0.0
        %4798 = vmatprep.subr.mxu0 0.0
        %4799 = vmatpush1.msra.mxu0 0.0
        %4800 = vmatprep.mubr.f32.mxu0 0.0
        %4801 = vmatmul.mubr.f32.gmra.mrb[0].mxu0 %v4734
        %v4802 = vpop.f32.mrb[0].mxu0
        %v4803 = vadd.f32 0.0, %v4802
        %v4804 = vpop.f32.mrb[0].mxu0
        %4805 = vdwg.mxu0
        %v4806 = vadd.f32 %v3888, %v4803
        %v4807 = vmul.f32 %v4806, %v4806
        %v4808 = vsel %vm989, %v4807, 0.0
        %4809 = vadd.xlane.f32.xlu0 %v4808
        %v4810 = vpop.xlane.xlu0 %4809
        %v4811 = vmul.f32 %v4810, %v993
        %v4812 = vadd.f32 %v4811, 1e-06
        %v4813 = vrsqrt.pop %v4812
        %v4814 = vmul.f32 %v4806, %v4813
        %v4815 = vlaneseq
        %v4816 = vshrl.u32 %v4815, 7
        %v4817 = vsub.s32 2, %v4816
        %v4818 = vrot.slane %v3046, %v4817
        %v4819 = vmul.f32 %v4814, %v4818
        %v4820 = vld [vmem:[#allocation22] sm:$0xff]
        %v4821 = vld [vmem:[#allocation22 + $0x8] sm:$0xff]
        %v4822 = vld [vmem:[#allocation22 + $0x10] sm:$0xff]
        %v4823 = vld [vmem:[#allocation22 + $0x18] sm:$0xff]
        %v4824 = vld [vmem:[%s17] sm:$0xff]
        %v4825 = vld [vmem:[%s17 + $0x8] sm:$0xff]
        %v4826 = vld [vmem:[%s17 + $0x10] sm:$0xff]
        %v4827 = vld [vmem:[%s17 + $0x18] sm:$0xff]
        %v4828 = vld [vmem:[%s17 + $0x20] sm:$0xff]
        %v4829 = vld [vmem:[%s17 + $0x28] sm:$0xff]
        %v4830 = vld [vmem:[%s17 + $0x30] sm:$0xff]
        %v4831 = vld [vmem:[%s17 + $0x38] sm:$0xff]
        %v4833 = vsel %vm989, %v4819, 0
        %4835 = vmatprep.subr.mxu0 0.0
        %4836 = vmatpush1.msra.mxu0 %v4820
        %4837 = vmatprep.subr.mxu0 0.0
        %4838 = vmatpush1.msra.mxu0 %v4821
        %4839 = vmatprep.subr.mxu0 0.0
        %4840 = vmatpush1.msra.mxu0 %v4822
        %4841 = vmatprep.subr.mxu0 0.0
        %4842 = vmatpush1.msra.mxu0 %v4823
        %4843 = vmatprep.subr.mxu0 0.0
        %4844 = vmatpush1.msra.mxu0 0.0
        %4845 = vmatprep.subr.mxu0 0.0
        %4846 = vmatpush1.msra.mxu0 0.0
        %4847 = vmatprep.subr.mxu0 0.0
        %4848 = vmatpush1.msra.mxu0 0.0
        %4849 = vmatprep.subr.mxu0 0.0
        %4850 = vmatpush1.msra.mxu0 0.0
        %4851 = vmatprep.subr.mxu0 0.0
        %4852 = vmatpush1.msra.mxu0 0.0
        %4853 = vmatprep.subr.mxu0 0.0
        %4854 = vmatpush1.msra.mxu0 0.0
        %4855 = vmatprep.subr.mxu0 0.0
        %4856 = vmatpush1.msra.mxu0 0.0
        %4857 = vmatprep.subr.mxu0 0.0
        %4858 = vmatpush1.msra.mxu0 0.0
        %4859 = vmatprep.subr.mxu0 0.0
        %4860 = vmatpush1.msra.mxu0 0.0
        %4861 = vmatprep.subr.mxu0 0.0
        %4862 = vmatpush1.msra.mxu0 0.0
        %4863 = vmatprep.subr.mxu0 0.0
        %4864 = vmatpush1.msra.mxu0 0.0
        %4865 = vmatprep.subr.mxu0 0.0
        %4866 = vmatpush1.msra.mxu0 0.0
        %4867 = vmatprep.subr.mxu0 0.0
        %4868 = vmatpush1.msra.mxu0 0.0
        %4869 = vmatprep.subr.mxu0 0.0
        %4870 = vmatpush1.msra.mxu0 0.0
        %4871 = vmatprep.subr.mxu0 0.0
        %4872 = vmatpush1.msra.mxu0 0.0
        %4873 = vmatprep.subr.mxu0 0.0
        %4874 = vmatpush1.msra.mxu0 0.0
        %4875 = vmatprep.subr.mxu0 0.0
        %4876 = vmatpush1.msra.mxu0 0.0
        %4877 = vmatprep.subr.mxu0 0.0
        %4878 = vmatpush1.msra.mxu0 0.0
        %4879 = vmatprep.subr.mxu0 0.0
        %4880 = vmatpush1.msra.mxu0 0.0
        %4881 = vmatprep.subr.mxu0 0.0
        %4882 = vmatpush1.msra.mxu0 0.0
        %4883 = vmatprep.subr.mxu0 0.0
        %4884 = vmatpush1.msra.mxu0 0.0
        %4885 = vmatprep.subr.mxu0 0.0
        %4886 = vmatpush1.msra.mxu0 0.0
        %4887 = vmatprep.subr.mxu0 0.0
        %4888 = vmatpush1.msra.mxu0 0.0
        %4889 = vmatprep.subr.mxu0 0.0
        %4890 = vmatpush1.msra.mxu0 0.0
        %4891 = vmatprep.subr.mxu0 0.0
        %4892 = vmatpush1.msra.mxu0 0.0
        %4893 = vmatprep.subr.mxu0 0.0
        %4894 = vmatpush1.msra.mxu0 0.0
        %4895 = vmatprep.subr.mxu0 0.0
        %4896 = vmatpush1.msra.mxu0 0.0
        %4897 = vmatprep.subr.mxu0 0.0
        %4898 = vmatpush1.msra.mxu0 0.0
        %4899 = vmatprep.mubr.f32.mxu0 0.0
        %4900 = vmatmul.mubr.f32.gmra.mrb[0].mxu0 %v4833
        %v4901 = vpop.f32.mrb[0].mxu0
        %v4902 = vadd.f32 0.0, %v4901
        %v4903 = vpop.f32.mrb[0].mxu0
        %4904 = vdwg.mxu0
        %v4905 = vmax.f32 %v4902, 0.0
        %v4907 = vsel %vm1934, %v4905, 0
        %4909 = vmatprep.subr.mxu0 0.0
        %4910 = vmatpush1.msra.mxu0 %v4824
        %4911 = vmatprep.subr.mxu0 0.0
        %4912 = vmatpush1.msra.mxu0 %v4825
        %4913 = vmatprep.subr.mxu0 0.0
        %4914 = vmatpush1.msra.mxu0 %v4826
        %4915 = vmatprep.subr.mxu0 0.0
        %4916 = vmatpush1.msra.mxu0 %v4827
        %4917 = vmatprep.subr.mxu0 0.0
        %4918 = vmatpush1.msra.mxu0 %v4828
        %4919 = vmatprep.subr.mxu0 0.0
        %4920 = vmatpush1.msra.mxu0 %v4829
        %4921 = vmatprep.subr.mxu0 0.0
        %4922 = vmatpush1.msra.mxu0 %v4830
        %4923 = vmatprep.subr.mxu0 0.0
        %4924 = vmatpush1.msra.mxu0 %v4831
        %4925 = vmatprep.subr.mxu0 0.0
        %4926 = vmatpush1.msra.mxu0 0.0
        %4927 = vmatprep.subr.mxu0 0.0
        %4928 = vmatpush1.msra.mxu0 0.0
        %4929 = vmatprep.subr.mxu0 0.0
        %4930 = vmatpush1.msra.mxu0 0.0
        %4931 = vmatprep.subr.mxu0 0.0
        %4932 = vmatpush1.msra.mxu0 0.0
        %4933 = vmatprep.subr.mxu0 0.0
        %4934 = vmatpush1.msra.mxu0 0.0
        %4935 = vmatprep.subr.mxu0 0.0
        %4936 = vmatpush1.msra.mxu0 0.0
        %4937 = vmatprep.subr.mxu0 0.0
        %4938 = vmatpush1.msra.mxu0 0.0
        %4939 = vmatprep.subr.mxu0 0.0
        %4940 = vmatpush1.msra.mxu0 0.0
        %4941 = vmatprep.subr.mxu0 0.0
        %4942 = vmatpush1.msra.mxu0 0.0
        %4943 = vmatprep.subr.mxu0 0.0
        %4944 = vmatpush1.msra.mxu0 0.0
        %4945 = vmatprep.subr.mxu0 0.0
        %4946 = vmatpush1.msra.mxu0 0.0
        %4947 = vmatprep.subr.mxu0 0.0
        %4948 = vmatpush1.msra.mxu0 0.0
        %4949 = vmatprep.subr.mxu0 0.0
        %4950 = vmatpush1.msra.mxu0 0.0
        %4951 = vmatprep.subr.mxu0 0.0
        %4952 = vmatpush1.msra.mxu0 0.0
        %4953 = vmatprep.subr.mxu0 0.0
        %4954 = vmatpush1.msra.mxu0 0.0
        %4955 = vmatprep.subr.mxu0 0.0
        %4956 = vmatpush1.msra.mxu0 0.0
        %4957 = vmatprep.subr.mxu0 0.0
        %4958 = vmatpush1.msra.mxu0 0.0
        %4959 = vmatprep.subr.mxu0 0.0
        %4960 = vmatpush1.msra.mxu0 0.0
        %4961 = vmatprep.subr.mxu0 0.0
        %4962 = vmatpush1.msra.mxu0 0.0
        %4963 = vmatprep.subr.mxu0 0.0
        %4964 = vmatpush1.msra.mxu0 0.0
        %4965 = vmatprep.subr.mxu0 0.0
        %4966 = vmatpush1.msra.mxu0 0.0
        %4967 = vmatprep.subr.mxu0 0.0
        %4968 = vmatpush1.msra.mxu0 0.0
        %4969 = vmatprep.subr.mxu0 0.0
        %4970 = vmatpush1.msra.mxu0 0.0
        %4971 = vmatprep.subr.mxu0 0.0
        %4972 = vmatpush1.msra.mxu0 0.0
        %4973 = vmatprep.mubr.f32.mxu0 0.0
        %4974 = vmatmul.mubr.f32.gmra.mrb[0].mxu0 %v4907
        %v4975 = vpop.f32.mrb[0].mxu0
        %v4976 = vadd.f32 0.0, %v4975
        %v4977 = vpop.f32.mrb[0].mxu0
        %4978 = vdwg.mxu0
        %v4979 = vadd.f32 %v4806, %v4976
        %s4980 = scalar_lea.vmem %s18, 4
        %v4981 = vld [vmem:[%s4980] sm:$0x7]
        %v4982 = vmul.f32 %v4979, %v4979
        %v4983 = vsel %vm989, %v4982, 0.0
        %4984 = vadd.xlane.f32.xlu0 %v4983
        %v4985 = vpop.xlane.xlu0 %4984
        %v4986 = vmul.f32 %v4985, %v993
        %v4987 = vadd.f32 %v4986, 1e-06
        %v4988 = vrsqrt.pop %v4987
        %v4989 = vmul.f32 %v4979, %v4988
        %v4990 = vlaneseq
        %v4991 = vshrl.u32 %v4990, 7
        %v4992 = vsub.s32 0, %v4991
        %v4993 = vrot.slane %v4981, %v4992
        %v4994 = vmul.f32 %v4989, %v4993
        %s4995 = scalar_lea.vmem [#allocation14], 32
        %v4996 = vld [vmem:[%s4995] sm:$0xff]
        %v4997 = vld [vmem:[%s4995 + $0x8] sm:$0xff]
        %v4998 = vld [vmem:[%s4995 + $0x10] sm:$0xff]
        %v4999 = vld [vmem:[%s4995 + $0x18] sm:$0xff]
        %v5001 = vsel %vm989, %v4994, 0
        %5003 = vmatprep.subr.mxu0 0.0
        %5004 = vmatpush1.msra.mxu0 %v4996
        %5005 = vmatprep.subr.mxu0 0.0
        %5006 = vmatpush1.msra.mxu0 %v4997
        %5007 = vmatprep.subr.mxu0 0.0
        %5008 = vmatpush1.msra.mxu0 %v4998
        %5009 = vmatprep.subr.mxu0 0.0
        %5010 = vmatpush1.msra.mxu0 %v4999
        %5011 = vmatprep.subr.mxu0 0.0
        %5012 = vmatpush1.msra.mxu0 0.0
        %5013 = vmatprep.subr.mxu0 0.0
        %5014 = vmatpush1.msra.mxu0 0.0
        %5015 = vmatprep.subr.mxu0 0.0
        %5016 = vmatpush1.msra.mxu0 0.0
        %5017 = vmatprep.subr.mxu0 0.0
        %5018 = vmatpush1.msra.mxu0 0.0
        %5019 = vmatprep.subr.mxu0 0.0
        %5020 = vmatpush1.msra.mxu0 0.0
        %5021 = vmatprep.subr.mxu0 0.0
        %5022 = vmatpush1.msra.mxu0 0.0
        %5023 = vmatprep.subr.mxu0 0.0
        %5024 = vmatpush1.msra.mxu0 0.0
        %5025 = vmatprep.subr.mxu0 0.0
        %5026 = vmatpush1.msra.mxu0 0.0
        %5027 = vmatprep.subr.mxu0 0.0
        %5028 = vmatpush1.msra.mxu0 0.0
        %5029 = vmatprep.subr.mxu0 0.0
        %5030 = vmatpush1.msra.mxu0 0.0
        %5031 = vmatprep.subr.mxu0 0.0
        %5032 = vmatpush1.msra.mxu0 0.0
        %5033 = vmatprep.subr.mxu0 0.0
        %5034 = vmatpush1.msra.mxu0 0.0
        %5035 = vmatprep.subr.mxu0 0.0
        %5036 = vmatpush1.msra.mxu0 0.0
        %5037 = vmatprep.subr.mxu0 0.0
        %5038 = vmatpush1.msra.mxu0 0.0
        %5039 = vmatprep.subr.mxu0 0.0
        %5040 = vmatpush1.msra.mxu0 0.0
        %5041 = vmatprep.subr.mxu0 0.0
        %5042 = vmatpush1.msra.mxu0 0.0
        %5043 = vmatprep.subr.mxu0 0.0
        %5044 = vmatpush1.msra.mxu0 0.0
        %5045 = vmatprep.subr.mxu0 0.0
        %5046 = vmatpush1.msra.mxu0 0.0
        %5047 = vmatprep.subr.mxu0 0.0
        %5048 = vmatpush1.msra.mxu0 0.0
        %5049 = vmatprep.subr.mxu0 0.0
        %5050 = vmatpush1.msra.mxu0 0.0
        %5051 = vmatprep.subr.mxu0 0.0
        %5052 = vmatpush1.msra.mxu0 0.0
        %5053 = vmatprep.subr.mxu0 0.0
        %5054 = vmatpush1.msra.mxu0 0.0
        %5055 = vmatprep.subr.mxu0 0.0
        %5056 = vmatpush1.msra.mxu0 0.0
        %5057 = vmatprep.subr.mxu0 0.0
        %5058 = vmatpush1.msra.mxu0 0.0
        %5059 = vmatprep.subr.mxu0 0.0
        %5060 = vmatpush1.msra.mxu0 0.0
        %5061 = vmatprep.subr.mxu0 0.0
        %5062 = vmatpush1.msra.mxu0 0.0
        %5063 = vmatprep.subr.mxu0 0.0
        %5064 = vmatpush1.msra.mxu0 0.0
        %5065 = vmatprep.subr.mxu0 0.0
        %5066 = vmatpush1.msra.mxu0 0.0
        %5067 = vmatprep.mubr.f32.mxu0 0.0
        %5068 = vmatmul.mubr.f32.gmra.mrb[0].mxu0 %v5001
        %v5069 = vpop.f32.mrb[0].mxu0
        %v5070 = vadd.f32 0.0, %v5069
        %v5071 = vpop.f32.mrb[0].mxu0
        %5072 = vdwg.mxu0
        %s5073 = scalar_lea.vmem [#allocation16], 32
        %v5074 = vld [vmem:[%s5073] sm:$0xff]
        %v5075 = vld [vmem:[%s5073 + $0x8] sm:$0xff]
        %v5076 = vld [vmem:[%s5073 + $0x10] sm:$0xff]
        %v5077 = vld [vmem:[%s5073 + $0x18] sm:$0xff]
        %5079 = vrot.lane.b32.xlu0 %v5070, 120
        %v5080 = vpop.permute.xlu0 %5079
        %5081 = vrot.lane.b32.xlu0 %v5070, 112
        %v5082 = vpop.permute.xlu0 %5081
        %5083 = vrot.lane.b32.xlu0 %v5070, 104
        %v5084 = vpop.permute.xlu0 %5083
        %5085 = vrot.lane.b32.xlu0 %v5070, 96
        %v5086 = vpop.permute.xlu0 %5085
        %v5087 = vsel %vm1093, %v5070, 0
        %v5089 = vsel %vm1093, %v5086, 0
        %5091 = vmatprep.subr.mxu0 0.0
        %5092 = vmatpush1.xpose.msra.mxu0 %v5089
        %5093 = vmatprep.subr.mxu0 0.0
        %5094 = vmatpush1.xpose.msra.mxu0 0.0
        %5095 = vmatprep.subr.mxu0 0.0
        %5096 = vmatpush1.xpose.msra.mxu0 0.0
        %5097 = vmatprep.subr.mxu0 0.0
        %5098 = vmatpush1.xpose.msra.mxu0 0.0
        %5099 = vmatprep.subr.mxu0 0.0
        %5100 = vmatpush1.xpose.msra.mxu0 0.0
        %5101 = vmatprep.subr.mxu0 0.0
        %5102 = vmatpush1.xpose.msra.mxu0 0.0
        %5103 = vmatprep.subr.mxu0 0.0
        %5104 = vmatpush1.xpose.msra.mxu0 0.0
        %5105 = vmatprep.subr.mxu0 0.0
        %5106 = vmatpush1.xpose.msra.mxu0 0.0
        %5107 = vmatprep.subr.mxu0 0.0
        %5108 = vmatpush1.xpose.msra.mxu0 0.0
        %5109 = vmatprep.subr.mxu0 0.0
        %5110 = vmatpush1.xpose.msra.mxu0 0.0
        %5111 = vmatprep.subr.mxu0 0.0
        %5112 = vmatpush1.xpose.msra.mxu0 0.0
        %5113 = vmatprep.subr.mxu0 0.0
        %5114 = vmatpush1.xpose.msra.mxu0 0.0
        %5115 = vmatprep.subr.mxu0 0.0
        %5116 = vmatpush1.xpose.msra.mxu0 0.0
        %5117 = vmatprep.subr.mxu0 0.0
        %5118 = vmatpush1.xpose.msra.mxu0 0.0
        %5119 = vmatprep.subr.mxu0 0.0
        %5120 = vmatpush1.xpose.msra.mxu0 0.0
        %5121 = vmatprep.subr.mxu0 0.0
        %5122 = vmatpush1.xpose.msra.mxu0 0.0
        %5123 = vmatprep.subr.mxu0 0.0
        %5124 = vmatpush1.xpose.msra.mxu0 0.0
        %5125 = vmatprep.subr.mxu0 0.0
        %5126 = vmatpush1.xpose.msra.mxu0 0.0
        %5127 = vmatprep.subr.mxu0 0.0
        %5128 = vmatpush1.xpose.msra.mxu0 0.0
        %5129 = vmatprep.subr.mxu0 0.0
        %5130 = vmatpush1.xpose.msra.mxu0 0.0
        %5131 = vmatprep.subr.mxu0 0.0
        %5132 = vmatpush1.xpose.msra.mxu0 0.0
        %5133 = vmatprep.subr.mxu0 0.0
        %5134 = vmatpush1.xpose.msra.mxu0 0.0
        %5135 = vmatprep.subr.mxu0 0.0
        %5136 = vmatpush1.xpose.msra.mxu0 0.0
        %5137 = vmatprep.subr.mxu0 0.0
        %5138 = vmatpush1.xpose.msra.mxu0 0.0
        %5139 = vmatprep.subr.mxu0 0.0
        %5140 = vmatpush1.xpose.msra.mxu0 0.0
        %5141 = vmatprep.subr.mxu0 0.0
        %5142 = vmatpush1.xpose.msra.mxu0 0.0
        %5143 = vmatprep.subr.mxu0 0.0
        %5144 = vmatpush1.xpose.msra.mxu0 0.0
        %5145 = vmatprep.subr.mxu0 0.0
        %5146 = vmatpush1.xpose.msra.mxu0 0.0
        %5147 = vmatprep.subr.mxu0 0.0
        %5148 = vmatpush1.xpose.msra.mxu0 0.0
        %5149 = vmatprep.subr.mxu0 0.0
        %5150 = vmatpush1.xpose.msra.mxu0 0.0
        %5151 = vmatprep.subr.mxu0 0.0
        %5152 = vmatpush1.xpose.msra.mxu0 0.0
        %5153 = vmatprep.subr.mxu0 0.0
        %5154 = vmatpush1.xpose.msra.mxu0 0.0
        %5155 = vmatprep.mubr.f32.mxu0 0.0
        %5156 = vmatmul.mubr.f32.gmra.mrb[0].mxu0 %v5087
        %v5157 = vpop.f32.mrb[0].mxu0
        %v5158 = vadd.f32 %v983, %v5157
        %v5159 = vpop.f32.mrb[0].mxu0
        %5160 = vdwg.mxu0
        %5161 = vrot.lane.b32.xlu0 %v5080, 96
        %v5162 = vpop.permute.xlu0 %5161
        %v5163 = vsel %vm1093, %v5080, 0
        %v5165 = vsel %vm1093, %v5162, 0
        %5167 = vmatprep.subr.mxu0 0.0
        %5168 = vmatpush1.xpose.msra.mxu0 %v5165
        %5169 = vmatprep.subr.mxu0 0.0
        %5170 = vmatpush1.xpose.msra.mxu0 0.0
        %5171 = vmatprep.subr.mxu0 0.0
        %5172 = vmatpush1.xpose.msra.mxu0 0.0
        %5173 = vmatprep.subr.mxu0 0.0
        %5174 = vmatpush1.xpose.msra.mxu0 0.0
        %5175 = vmatprep.subr.mxu0 0.0
        %5176 = vmatpush1.xpose.msra.mxu0 0.0
        %5177 = vmatprep.subr.mxu0 0.0
        %5178 = vmatpush1.xpose.msra.mxu0 0.0
        %5179 = vmatprep.subr.mxu0 0.0
        %5180 = vmatpush1.xpose.msra.mxu0 0.0
        %5181 = vmatprep.subr.mxu0 0.0
        %5182 = vmatpush1.xpose.msra.mxu0 0.0
        %5183 = vmatprep.subr.mxu0 0.0
        %5184 = vmatpush1.xpose.msra.mxu0 0.0
        %5185 = vmatprep.subr.mxu0 0.0
        %5186 = vmatpush1.xpose.msra.mxu0 0.0
        %5187 = vmatprep.subr.mxu0 0.0
        %5188 = vmatpush1.xpose.msra.mxu0 0.0
        %5189 = vmatprep.subr.mxu0 0.0
        %5190 = vmatpush1.xpose.msra.mxu0 0.0
        %5191 = vmatprep.subr.mxu0 0.0
        %5192 = vmatpush1.xpose.msra.mxu0 0.0
        %5193 = vmatprep.subr.mxu0 0.0
        %5194 = vmatpush1.xpose.msra.mxu0 0.0
        %5195 = vmatprep.subr.mxu0 0.0
        %5196 = vmatpush1.xpose.msra.mxu0 0.0
        %5197 = vmatprep.subr.mxu0 0.0
        %5198 = vmatpush1.xpose.msra.mxu0 0.0
        %5199 = vmatprep.subr.mxu0 0.0
        %5200 = vmatpush1.xpose.msra.mxu0 0.0
        %5201 = vmatprep.subr.mxu0 0.0
        %5202 = vmatpush1.xpose.msra.mxu0 0.0
        %5203 = vmatprep.subr.mxu0 0.0
        %5204 = vmatpush1.xpose.msra.mxu0 0.0
        %5205 = vmatprep.subr.mxu0 0.0
        %5206 = vmatpush1.xpose.msra.mxu0 0.0
        %5207 = vmatprep.subr.mxu0 0.0
        %5208 = vmatpush1.xpose.msra.mxu0 0.0
        %5209 = vmatprep.subr.mxu0 0.0
        %5210 = vmatpush1.xpose.msra.mxu0 0.0
        %5211 = vmatprep.subr.mxu0 0.0
        %5212 = vmatpush1.xpose.msra.mxu0 0.0
        %5213 = vmatprep.subr.mxu0 0.0
        %5214 = vmatpush1.xpose.msra.mxu0 0.0
        %5215 = vmatprep.subr.mxu0 0.0
        %5216 = vmatpush1.xpose.msra.mxu0 0.0
        %5217 = vmatprep.subr.mxu0 0.0
        %5218 = vmatpush1.xpose.msra.mxu0 0.0
        %5219 = vmatprep.subr.mxu0 0.0
        %5220 = vmatpush1.xpose.msra.mxu0 0.0
        %5221 = vmatprep.subr.mxu0 0.0
        %5222 = vmatpush1.xpose.msra.mxu0 0.0
        %5223 = vmatprep.subr.mxu0 0.0
        %5224 = vmatpush1.xpose.msra.mxu0 0.0
        %5225 = vmatprep.subr.mxu0 0.0
        %5226 = vmatpush1.xpose.msra.mxu0 0.0
        %5227 = vmatprep.subr.mxu0 0.0
        %5228 = vmatpush1.xpose.msra.mxu0 0.0
        %5229 = vmatprep.subr.mxu0 0.0
        %5230 = vmatpush1.xpose.msra.mxu0 0.0
        %5231 = vmatprep.mubr.f32.mxu0 0.0
        %5232 = vmatmul.mubr.f32.gmra.mrb[0].mxu0 %v5163
        %v5233 = vpop.f32.mrb[0].mxu0
        %v5234 = vadd.f32 %v984, %v5233
        %v5235 = vpop.f32.mrb[0].mxu0
        %5236 = vdwg.mxu0
        %5237 = vrot.lane.b32.xlu0 %v5082, 96
        %v5238 = vpop.permute.xlu0 %5237
        %v5239 = vsel %vm1093, %v5082, 0
        %v5241 = vsel %vm1093, %v5238, 0
        %5243 = vmatprep.subr.mxu0 0.0
        %5244 = vmatpush1.xpose.msra.mxu0 %v5241
        %5245 = vmatprep.subr.mxu0 0.0
        %5246 = vmatpush1.xpose.msra.mxu0 0.0
        %5247 = vmatprep.subr.mxu0 0.0
        %5248 = vmatpush1.xpose.msra.mxu0 0.0
        %5249 = vmatprep.subr.mxu0 0.0
        %5250 = vmatpush1.xpose.msra.mxu0 0.0
        %5251 = vmatprep.subr.mxu0 0.0
        %5252 = vmatpush1.xpose.msra.mxu0 0.0
        %5253 = vmatprep.subr.mxu0 0.0
        %5254 = vmatpush1.xpose.msra.mxu0 0.0
        %5255 = vmatprep.subr.mxu0 0.0
        %5256 = vmatpush1.xpose.msra.mxu0 0.0
        %5257 = vmatprep.subr.mxu0 0.0
        %5258 = vmatpush1.xpose.msra.mxu0 0.0
        %5259 = vmatprep.subr.mxu0 0.0
        %5260 = vmatpush1.xpose.msra.mxu0 0.0
        %5261 = vmatprep.subr.mxu0 0.0
        %5262 = vmatpush1.xpose.msra.mxu0 0.0
        %5263 = vmatprep.subr.mxu0 0.0
        %5264 = vmatpush1.xpose.msra.mxu0 0.0
        %5265 = vmatprep.subr.mxu0 0.0
        %5266 = vmatpush1.xpose.msra.mxu0 0.0
        %5267 = vmatprep.subr.mxu0 0.0
        %5268 = vmatpush1.xpose.msra.mxu0 0.0
        %5269 = vmatprep.subr.mxu0 0.0
        %5270 = vmatpush1.xpose.msra.mxu0 0.0
        %5271 = vmatprep.subr.mxu0 0.0
        %5272 = vmatpush1.xpose.msra.mxu0 0.0
        %5273 = vmatprep.subr.mxu0 0.0
        %5274 = vmatpush1.xpose.msra.mxu0 0.0
        %5275 = vmatprep.subr.mxu0 0.0
        %5276 = vmatpush1.xpose.msra.mxu0 0.0
        %5277 = vmatprep.subr.mxu0 0.0
        %5278 = vmatpush1.xpose.msra.mxu0 0.0
        %5279 = vmatprep.subr.mxu0 0.0
        %5280 = vmatpush1.xpose.msra.mxu0 0.0
        %5281 = vmatprep.subr.mxu0 0.0
        %5282 = vmatpush1.xpose.msra.mxu0 0.0
        %5283 = vmatprep.subr.mxu0 0.0
        %5284 = vmatpush1.xpose.msra.mxu0 0.0
        %5285 = vmatprep.subr.mxu0 0.0
        %5286 = vmatpush1.xpose.msra.mxu0 0.0
        %5287 = vmatprep.subr.mxu0 0.0
        %5288 = vmatpush1.xpose.msra.mxu0 0.0
        %5289 = vmatprep.subr.mxu0 0.0
        %5290 = vmatpush1.xpose.msra.mxu0 0.0
        %5291 = vmatprep.subr.mxu0 0.0
        %5292 = vmatpush1.xpose.msra.mxu0 0.0
        %5293 = vmatprep.subr.mxu0 0.0
        %5294 = vmatpush1.xpose.msra.mxu0 0.0
        %5295 = vmatprep.subr.mxu0 0.0
        %5296 = vmatpush1.xpose.msra.mxu0 0.0
        %5297 = vmatprep.subr.mxu0 0.0
        %5298 = vmatpush1.xpose.msra.mxu0 0.0
        %5299 = vmatprep.subr.mxu0 0.0
        %5300 = vmatpush1.xpose.msra.mxu0 0.0
        %5301 = vmatprep.subr.mxu0 0.0
        %5302 = vmatpush1.xpose.msra.mxu0 0.0
        %5303 = vmatprep.subr.mxu0 0.0
        %5304 = vmatpush1.xpose.msra.mxu0 0.0
        %5305 = vmatprep.subr.mxu0 0.0
        %5306 = vmatpush1.xpose.msra.mxu0 0.0
        %5307 = vmatprep.mubr.f32.mxu0 0.0
        %5308 = vmatmul.mubr.f32.gmra.mrb[0].mxu0 %v5239
        %v5309 = vpop.f32.mrb[0].mxu0
        %v5310 = vadd.f32 %v985, %v5309
        %v5311 = vpop.f32.mrb[0].mxu0
        %5312 = vdwg.mxu0
        %5313 = vrot.lane.b32.xlu0 %v5084, 96
        %v5314 = vpop.permute.xlu0 %5313
        %v5315 = vsel %vm1093, %v5084, 0
        %v5317 = vsel %vm1093, %v5314, 0
        %5319 = vmatprep.subr.mxu0 0.0
        %5320 = vmatpush1.xpose.msra.mxu0 %v5317
        %5321 = vmatprep.subr.mxu0 0.0
        %5322 = vmatpush1.xpose.msra.mxu0 0.0
        %5323 = vmatprep.subr.mxu0 0.0
        %5324 = vmatpush1.xpose.msra.mxu0 0.0
        %5325 = vmatprep.subr.mxu0 0.0
        %5326 = vmatpush1.xpose.msra.mxu0 0.0
        %5327 = vmatprep.subr.mxu0 0.0
        %5328 = vmatpush1.xpose.msra.mxu0 0.0
        %5329 = vmatprep.subr.mxu0 0.0
        %5330 = vmatpush1.xpose.msra.mxu0 0.0
        %5331 = vmatprep.subr.mxu0 0.0
        %5332 = vmatpush1.xpose.msra.mxu0 0.0
        %5333 = vmatprep.subr.mxu0 0.0
        %5334 = vmatpush1.xpose.msra.mxu0 0.0
        %5335 = vmatprep.subr.mxu0 0.0
        %5336 = vmatpush1.xpose.msra.mxu0 0.0
        %5337 = vmatprep.subr.mxu0 0.0
        %5338 = vmatpush1.xpose.msra.mxu0 0.0
        %5339 = vmatprep.subr.mxu0 0.0
        %5340 = vmatpush1.xpose.msra.mxu0 0.0
        %5341 = vmatprep.subr.mxu0 0.0
        %5342 = vmatpush1.xpose.msra.mxu0 0.0
        %5343 = vmatprep.subr.mxu0 0.0
        %5344 = vmatpush1.xpose.msra.mxu0 0.0
        %5345 = vmatprep.subr.mxu0 0.0
        %5346 = vmatpush1.xpose.msra.mxu0 0.0
        %5347 = vmatprep.subr.mxu0 0.0
        %5348 = vmatpush1.xpose.msra.mxu0 0.0
        %5349 = vmatprep.subr.mxu0 0.0
        %5350 = vmatpush1.xpose.msra.mxu0 0.0
        %5351 = vmatprep.subr.mxu0 0.0
        %5352 = vmatpush1.xpose.msra.mxu0 0.0
        %5353 = vmatprep.subr.mxu0 0.0
        %5354 = vmatpush1.xpose.msra.mxu0 0.0
        %5355 = vmatprep.subr.mxu0 0.0
        %5356 = vmatpush1.xpose.msra.mxu0 0.0
        %5357 = vmatprep.subr.mxu0 0.0
        %5358 = vmatpush1.xpose.msra.mxu0 0.0
        %5359 = vmatprep.subr.mxu0 0.0
        %5360 = vmatpush1.xpose.msra.mxu0 0.0
        %5361 = vmatprep.subr.mxu0 0.0
        %5362 = vmatpush1.xpose.msra.mxu0 0.0
        %5363 = vmatprep.subr.mxu0 0.0
        %5364 = vmatpush1.xpose.msra.mxu0 0.0
        %5365 = vmatprep.subr.mxu0 0.0
        %5366 = vmatpush1.xpose.msra.mxu0 0.0
        %5367 = vmatprep.subr.mxu0 0.0
        %5368 = vmatpush1.xpose.msra.mxu0 0.0
        %5369 = vmatprep.subr.mxu0 0.0
        %5370 = vmatpush1.xpose.msra.mxu0 0.0
        %5371 = vmatprep.subr.mxu0 0.0
        %5372 = vmatpush1.xpose.msra.mxu0 0.0
        %5373 = vmatprep.subr.mxu0 0.0
        %5374 = vmatpush1.xpose.msra.mxu0 0.0
        %5375 = vmatprep.subr.mxu0 0.0
        %5376 = vmatpush1.xpose.msra.mxu0 0.0
        %5377 = vmatprep.subr.mxu0 0.0
        %5378 = vmatpush1.xpose.msra.mxu0 0.0
        %5379 = vmatprep.subr.mxu0 0.0
        %5380 = vmatpush1.xpose.msra.mxu0 0.0
        %5381 = vmatprep.subr.mxu0 0.0
        %5382 = vmatpush1.xpose.msra.mxu0 0.0
        %5383 = vmatprep.mubr.f32.mxu0 0.0
        %5384 = vmatmul.mubr.f32.gmra.mrb[0].mxu0 %v5315
        %v5385 = vpop.f32.mrb[0].mxu0
        %v5386 = vadd.f32 %v986, %v5385
        %v5387 = vpop.f32.mrb[0].mxu0
        %5388 = vdwg.mxu0
        %v5389 = vsel %vm1093, %v5158, -inf
        %5390 = vmax.xlane.f32.xlu0 %v5389
        %v5391 = vpop.xlane.xlu0 %5390
        %v5392 = vsel %vm1093, %v5234, -inf
        %5393 = vmax.xlane.f32.xlu0 %v5392
        %v5394 = vpop.xlane.xlu0 %5393
        %v5395 = vsel %vm1093, %v5310, -inf
        %5396 = vmax.xlane.f32.xlu0 %v5395
        %v5397 = vpop.xlane.xlu0 %5396
        %v5398 = vsel %vm1093, %v5386, -inf
        %5399 = vmax.xlane.f32.xlu0 %v5398
        %v5400 = vpop.xlane.xlu0 %5399
        %v5401 = vsub.f32 %v5158, %v5391
        %v5402 = vsub.f32 %v5234, %v5394
        %v5403 = vsub.f32 %v5310, %v5397
        %v5404 = vsub.f32 %v5386, %v5400
        %v5405 = vmul.f32 %v5401, 1.442695
        %v5406 = vpow.pop %v5405
        %v5407 = vmul.f32 %v5402, 1.442695
        %v5408 = vpow.pop %v5407
        %v5409 = vmul.f32 %v5403, 1.442695
        %v5410 = vpow.pop %v5409
        %v5411 = vmul.f32 %v5404, 1.442695
        %v5412 = vpow.pop %v5411
        %v5413 = vsel %vm1093, %v5406, 0.0
        %5414 = vadd.xlane.f32.xlu0 %v5413
        %v5415 = vpop.xlane.xlu0 %5414
        %v5416 = vsel %vm1093, %v5408, 0.0
        %5417 = vadd.xlane.f32.xlu0 %v5416
        %v5418 = vpop.xlane.xlu0 %5417
        %v5419 = vsel %vm1093, %v5410, 0.0
        %5420 = vadd.xlane.f32.xlu0 %v5419
        %v5421 = vpop.xlane.xlu0 %5420
        %v5422 = vsel %vm1093, %v5412, 0.0
        %5423 = vadd.xlane.f32.xlu0 %v5422
        %v5424 = vpop.xlane.xlu0 %5423
        %v5425 = vrcp.pop %v5415
        %v5426 = vrcp.pop %v5418
        %v5427 = vrcp.pop %v5421
        %v5428 = vrcp.pop %v5424
        %v5429 = vmul.f32 %v5406, %v5425
        %v5430 = vmul.f32 %v5408, %v5426
        %v5431 = vmul.f32 %v5410, %v5427
        %v5432 = vmul.f32 %v5412, %v5428
        %5433 = vrot.lane.b32.xlu0 %v5070, 64
        %v5434 = vpop.permute.xlu0 %5433
        %v5437 = vsel %vm1093, %v5429, 0
        %5439 = vmatprep.subr.mxu0 0.0
        %5440 = vmatpush1.msra.mxu0 %v5434
        %5441 = vmatprep.subr.mxu0 0.0
        %5442 = vmatpush1.msra.mxu0 0.0
        %5443 = vmatprep.subr.mxu0 0.0
        %5444 = vmatpush1.msra.mxu0 0.0
        %5445 = vmatprep.subr.mxu0 0.0
        %5446 = vmatpush1.msra.mxu0 0.0
        %5447 = vmatprep.subr.mxu0 0.0
        %5448 = vmatpush1.msra.mxu0 0.0
        %5449 = vmatprep.subr.mxu0 0.0
        %5450 = vmatpush1.msra.mxu0 0.0
        %5451 = vmatprep.subr.mxu0 0.0
        %5452 = vmatpush1.msra.mxu0 0.0
        %5453 = vmatprep.subr.mxu0 0.0
        %5454 = vmatpush1.msra.mxu0 0.0
        %5455 = vmatprep.subr.mxu0 0.0
        %5456 = vmatpush1.msra.mxu0 0.0
        %5457 = vmatprep.subr.mxu0 0.0
        %5458 = vmatpush1.msra.mxu0 0.0
        %5459 = vmatprep.subr.mxu0 0.0
        %5460 = vmatpush1.msra.mxu0 0.0
        %5461 = vmatprep.subr.mxu0 0.0
        %5462 = vmatpush1.msra.mxu0 0.0
        %5463 = vmatprep.subr.mxu0 0.0
        %5464 = vmatpush1.msra.mxu0 0.0
        %5465 = vmatprep.subr.mxu0 0.0
        %5466 = vmatpush1.msra.mxu0 0.0
        %5467 = vmatprep.subr.mxu0 0.0
        %5468 = vmatpush1.msra.mxu0 0.0
        %5469 = vmatprep.subr.mxu0 0.0
        %5470 = vmatpush1.msra.mxu0 0.0
        %5471 = vmatprep.subr.mxu0 0.0
        %5472 = vmatpush1.msra.mxu0 0.0
        %5473 = vmatprep.subr.mxu0 0.0
        %5474 = vmatpush1.msra.mxu0 0.0
        %5475 = vmatprep.subr.mxu0 0.0
        %5476 = vmatpush1.msra.mxu0 0.0
        %5477 = vmatprep.subr.mxu0 0.0
        %5478 = vmatpush1.msra.mxu0 0.0
        %5479 = vmatprep.subr.mxu0 0.0
        %5480 = vmatpush1.msra.mxu0 0.0
        %5481 = vmatprep.subr.mxu0 0.0
        %5482 = vmatpush1.msra.mxu0 0.0
        %5483 = vmatprep.subr.mxu0 0.0
        %5484 = vmatpush1.msra.mxu0 0.0
        %5485 = vmatprep.subr.mxu0 0.0
        %5486 = vmatpush1.msra.mxu0 0.0
        %5487 = vmatprep.subr.mxu0 0.0
        %5488 = vmatpush1.msra.mxu0 0.0
        %5489 = vmatprep.subr.mxu0 0.0
        %5490 = vmatpush1.msra.mxu0 0.0
        %5491 = vmatprep.subr.mxu0 0.0
        %5492 = vmatpush1.msra.mxu0 0.0
        %5493 = vmatprep.subr.mxu0 0.0
        %5494 = vmatpush1.msra.mxu0 0.0
        %5495 = vmatprep.subr.mxu0 0.0
        %5496 = vmatpush1.msra.mxu0 0.0
        %5497 = vmatprep.subr.mxu0 0.0
        %5498 = vmatpush1.msra.mxu0 0.0
        %5499 = vmatprep.subr.mxu0 0.0
        %5500 = vmatpush1.msra.mxu0 0.0
        %5501 = vmatprep.subr.mxu0 0.0
        %5502 = vmatpush1.msra.mxu0 0.0
        %5503 = vmatprep.mubr.f32.mxu0 0.0
        %5504 = vmatmul.mubr.f32.gmra.mrb[0].mxu0 %v5437
        %v5505 = vpop.f32.mrb[0].mxu0
        %v5506 = vadd.f32 0.0, %v5505
        %v5507 = vpop.f32.mrb[0].mxu0
        %5508 = vdwg.mxu0
        %5509 = vrot.lane.b32.xlu0 %v5080, 64
        %v5510 = vpop.permute.xlu0 %5509
        %v5513 = vsel %vm1093, %v5430, 0
        %5515 = vmatprep.subr.mxu0 0.0
        %5516 = vmatpush1.msra.mxu0 %v5510
        %5517 = vmatprep.subr.mxu0 0.0
        %5518 = vmatpush1.msra.mxu0 0.0
        %5519 = vmatprep.subr.mxu0 0.0
        %5520 = vmatpush1.msra.mxu0 0.0
        %5521 = vmatprep.subr.mxu0 0.0
        %5522 = vmatpush1.msra.mxu0 0.0
        %5523 = vmatprep.subr.mxu0 0.0
        %5524 = vmatpush1.msra.mxu0 0.0
        %5525 = vmatprep.subr.mxu0 0.0
        %5526 = vmatpush1.msra.mxu0 0.0
        %5527 = vmatprep.subr.mxu0 0.0
        %5528 = vmatpush1.msra.mxu0 0.0
        %5529 = vmatprep.subr.mxu0 0.0
        %5530 = vmatpush1.msra.mxu0 0.0
        %5531 = vmatprep.subr.mxu0 0.0
        %5532 = vmatpush1.msra.mxu0 0.0
        %5533 = vmatprep.subr.mxu0 0.0
        %5534 = vmatpush1.msra.mxu0 0.0
        %5535 = vmatprep.subr.mxu0 0.0
        %5536 = vmatpush1.msra.mxu0 0.0
        %5537 = vmatprep.subr.mxu0 0.0
        %5538 = vmatpush1.msra.mxu0 0.0
        %5539 = vmatprep.subr.mxu0 0.0
        %5540 = vmatpush1.msra.mxu0 0.0
        %5541 = vmatprep.subr.mxu0 0.0
        %5542 = vmatpush1.msra.mxu0 0.0
        %5543 = vmatprep.subr.mxu0 0.0
        %5544 = vmatpush1.msra.mxu0 0.0
        %5545 = vmatprep.subr.mxu0 0.0
        %5546 = vmatpush1.msra.mxu0 0.0
        %5547 = vmatprep.subr.mxu0 0.0
        %5548 = vmatpush1.msra.mxu0 0.0
        %5549 = vmatprep.subr.mxu0 0.0
        %5550 = vmatpush1.msra.mxu0 0.0
        %5551 = vmatprep.subr.mxu0 0.0
        %5552 = vmatpush1.msra.mxu0 0.0
        %5553 = vmatprep.subr.mxu0 0.0
        %5554 = vmatpush1.msra.mxu0 0.0
        %5555 = vmatprep.subr.mxu0 0.0
        %5556 = vmatpush1.msra.mxu0 0.0
        %5557 = vmatprep.subr.mxu0 0.0
        %5558 = vmatpush1.msra.mxu0 0.0
        %5559 = vmatprep.subr.mxu0 0.0
        %5560 = vmatpush1.msra.mxu0 0.0
        %5561 = vmatprep.subr.mxu0 0.0
        %5562 = vmatpush1.msra.mxu0 0.0
        %5563 = vmatprep.subr.mxu0 0.0
        %5564 = vmatpush1.msra.mxu0 0.0
        %5565 = vmatprep.subr.mxu0 0.0
        %5566 = vmatpush1.msra.mxu0 0.0
        %5567 = vmatprep.subr.mxu0 0.0
        %5568 = vmatpush1.msra.mxu0 0.0
        %5569 = vmatprep.subr.mxu0 0.0
        %5570 = vmatpush1.msra.mxu0 0.0
        %5571 = vmatprep.subr.mxu0 0.0
        %5572 = vmatpush1.msra.mxu0 0.0
        %5573 = vmatprep.subr.mxu0 0.0
        %5574 = vmatpush1.msra.mxu0 0.0
        %5575 = vmatprep.subr.mxu0 0.0
        %5576 = vmatpush1.msra.mxu0 0.0
        %5577 = vmatprep.subr.mxu0 0.0
        %5578 = vmatpush1.msra.mxu0 0.0
        %5579 = vmatprep.mubr.f32.mxu0 0.0
        %5580 = vmatmul.mubr.f32.gmra.mrb[0].mxu0 %v5513
        %v5581 = vpop.f32.mrb[0].mxu0
        %v5582 = vadd.f32 0.0, %v5581
        %v5583 = vpop.f32.mrb[0].mxu0
        %5584 = vdwg.mxu0
        %5585 = vrot.lane.b32.xlu0 %v5082, 64
        %v5586 = vpop.permute.xlu0 %5585
        %v5589 = vsel %vm1093, %v5431, 0
        %5591 = vmatprep.subr.mxu0 0.0
        %5592 = vmatpush1.msra.mxu0 %v5586
        %5593 = vmatprep.subr.mxu0 0.0
        %5594 = vmatpush1.msra.mxu0 0.0
        %5595 = vmatprep.subr.mxu0 0.0
        %5596 = vmatpush1.msra.mxu0 0.0
        %5597 = vmatprep.subr.mxu0 0.0
        %5598 = vmatpush1.msra.mxu0 0.0
        %5599 = vmatprep.subr.mxu0 0.0
        %5600 = vmatpush1.msra.mxu0 0.0
        %5601 = vmatprep.subr.mxu0 0.0
        %5602 = vmatpush1.msra.mxu0 0.0
        %5603 = vmatprep.subr.mxu0 0.0
        %5604 = vmatpush1.msra.mxu0 0.0
        %5605 = vmatprep.subr.mxu0 0.0
        %5606 = vmatpush1.msra.mxu0 0.0
        %5607 = vmatprep.subr.mxu0 0.0
        %5608 = vmatpush1.msra.mxu0 0.0
        %5609 = vmatprep.subr.mxu0 0.0
        %5610 = vmatpush1.msra.mxu0 0.0
        %5611 = vmatprep.subr.mxu0 0.0
        %5612 = vmatpush1.msra.mxu0 0.0
        %5613 = vmatprep.subr.mxu0 0.0
        %5614 = vmatpush1.msra.mxu0 0.0
        %5615 = vmatprep.subr.mxu0 0.0
        %5616 = vmatpush1.msra.mxu0 0.0
        %5617 = vmatprep.subr.mxu0 0.0
        %5618 = vmatpush1.msra.mxu0 0.0
        %5619 = vmatprep.subr.mxu0 0.0
        %5620 = vmatpush1.msra.mxu0 0.0
        %5621 = vmatprep.subr.mxu0 0.0
        %5622 = vmatpush1.msra.mxu0 0.0
        %5623 = vmatprep.subr.mxu0 0.0
        %5624 = vmatpush1.msra.mxu0 0.0
        %5625 = vmatprep.subr.mxu0 0.0
        %5626 = vmatpush1.msra.mxu0 0.0
        %5627 = vmatprep.subr.mxu0 0.0
        %5628 = vmatpush1.msra.mxu0 0.0
        %5629 = vmatprep.subr.mxu0 0.0
        %5630 = vmatpush1.msra.mxu0 0.0
        %5631 = vmatprep.subr.mxu0 0.0
        %5632 = vmatpush1.msra.mxu0 0.0
        %5633 = vmatprep.subr.mxu0 0.0
        %5634 = vmatpush1.msra.mxu0 0.0
        %5635 = vmatprep.subr.mxu0 0.0
        %5636 = vmatpush1.msra.mxu0 0.0
        %5637 = vmatprep.subr.mxu0 0.0
        %5638 = vmatpush1.msra.mxu0 0.0
        %5639 = vmatprep.subr.mxu0 0.0
        %5640 = vmatpush1.msra.mxu0 0.0
        %5641 = vmatprep.subr.mxu0 0.0
        %5642 = vmatpush1.msra.mxu0 0.0
        %5643 = vmatprep.subr.mxu0 0.0
        %5644 = vmatpush1.msra.mxu0 0.0
        %5645 = vmatprep.subr.mxu0 0.0
        %5646 = vmatpush1.msra.mxu0 0.0
        %5647 = vmatprep.subr.mxu0 0.0
        %5648 = vmatpush1.msra.mxu0 0.0
        %5649 = vmatprep.subr.mxu0 0.0
        %5650 = vmatpush1.msra.mxu0 0.0
        %5651 = vmatprep.subr.mxu0 0.0
        %5652 = vmatpush1.msra.mxu0 0.0
        %5653 = vmatprep.subr.mxu0 0.0
        %5654 = vmatpush1.msra.mxu0 0.0
        %5655 = vmatprep.mubr.f32.mxu0 0.0
        %5656 = vmatmul.mubr.f32.gmra.mrb[0].mxu0 %v5589
        %v5657 = vpop.f32.mrb[0].mxu0
        %v5658 = vadd.f32 0.0, %v5657
        %v5659 = vpop.f32.mrb[0].mxu0
        %5660 = vdwg.mxu0
        %5661 = vrot.lane.b32.xlu0 %v5084, 64
        %v5662 = vpop.permute.xlu0 %5661
        %v5665 = vsel %vm1093, %v5432, 0
        %5667 = vmatprep.subr.mxu0 0.0
        %5668 = vmatpush1.msra.mxu0 %v5662
        %5669 = vmatprep.subr.mxu0 0.0
        %5670 = vmatpush1.msra.mxu0 0.0
        %5671 = vmatprep.subr.mxu0 0.0
        %5672 = vmatpush1.msra.mxu0 0.0
        %5673 = vmatprep.subr.mxu0 0.0
        %5674 = vmatpush1.msra.mxu0 0.0
        %5675 = vmatprep.subr.mxu0 0.0
        %5676 = vmatpush1.msra.mxu0 0.0
        %5677 = vmatprep.subr.mxu0 0.0
        %5678 = vmatpush1.msra.mxu0 0.0
        %5679 = vmatprep.subr.mxu0 0.0
        %5680 = vmatpush1.msra.mxu0 0.0
        %5681 = vmatprep.subr.mxu0 0.0
        %5682 = vmatpush1.msra.mxu0 0.0
        %5683 = vmatprep.subr.mxu0 0.0
        %5684 = vmatpush1.msra.mxu0 0.0
        %5685 = vmatprep.subr.mxu0 0.0
        %5686 = vmatpush1.msra.mxu0 0.0
        %5687 = vmatprep.subr.mxu0 0.0
        %5688 = vmatpush1.msra.mxu0 0.0
        %5689 = vmatprep.subr.mxu0 0.0
        %5690 = vmatpush1.msra.mxu0 0.0
        %5691 = vmatprep.subr.mxu0 0.0
        %5692 = vmatpush1.msra.mxu0 0.0
        %5693 = vmatprep.subr.mxu0 0.0
        %5694 = vmatpush1.msra.mxu0 0.0
        %5695 = vmatprep.subr.mxu0 0.0
        %5696 = vmatpush1.msra.mxu0 0.0
        %5697 = vmatprep.subr.mxu0 0.0
        %5698 = vmatpush1.msra.mxu0 0.0
        %5699 = vmatprep.subr.mxu0 0.0
        %5700 = vmatpush1.msra.mxu0 0.0
        %5701 = vmatprep.subr.mxu0 0.0
        %5702 = vmatpush1.msra.mxu0 0.0
        %5703 = vmatprep.subr.mxu0 0.0
        %5704 = vmatpush1.msra.mxu0 0.0
        %5705 = vmatprep.subr.mxu0 0.0
        %5706 = vmatpush1.msra.mxu0 0.0
        %5707 = vmatprep.subr.mxu0 0.0
        %5708 = vmatpush1.msra.mxu0 0.0
        %5709 = vmatprep.subr.mxu0 0.0
        %5710 = vmatpush1.msra.mxu0 0.0
        %5711 = vmatprep.subr.mxu0 0.0
        %5712 = vmatpush1.msra.mxu0 0.0
        %5713 = vmatprep.subr.mxu0 0.0
        %5714 = vmatpush1.msra.mxu0 0.0
        %5715 = vmatprep.subr.mxu0 0.0
        %5716 = vmatpush1.msra.mxu0 0.0
        %5717 = vmatprep.subr.mxu0 0.0
        %5718 = vmatpush1.msra.mxu0 0.0
        %5719 = vmatprep.subr.mxu0 0.0
        %5720 = vmatpush1.msra.mxu0 0.0
        %5721 = vmatprep.subr.mxu0 0.0
        %5722 = vmatpush1.msra.mxu0 0.0
        %5723 = vmatprep.subr.mxu0 0.0
        %5724 = vmatpush1.msra.mxu0 0.0
        %5725 = vmatprep.subr.mxu0 0.0
        %5726 = vmatpush1.msra.mxu0 0.0
        %5727 = vmatprep.subr.mxu0 0.0
        %5728 = vmatpush1.msra.mxu0 0.0
        %5729 = vmatprep.subr.mxu0 0.0
        %5730 = vmatpush1.msra.mxu0 0.0
        %5731 = vmatprep.mubr.f32.mxu0 0.0
        %5732 = vmatmul.mubr.f32.gmra.mrb[0].mxu0 %v5665
        %v5733 = vpop.f32.mrb[0].mxu0
        %v5734 = vadd.f32 0.0, %v5733
        %v5735 = vpop.f32.mrb[0].mxu0
        %5736 = vdwg.mxu0
        %5738 = vrot.lane.b32.xlu0 %v5582, 8
        %v5739 = vpop.permute.xlu0 %5738
        %5742 = vrot.lane.b32.xlu0 %v5658, 16
        %v5743 = vpop.permute.xlu0 %5742
        %5746 = vrot.lane.b32.xlu0 %v5734, 24
        %v5747 = vpop.permute.xlu0 %5746
        %v5749 = vsel %vm1093, %v5506, %v5739
        %v5750 = vsel %vm1757, %v5749, %v5743
        %v5751 = vsel %vm1759, %v5750, %v5747
        %v5753 = vsel %vm989, %v5751, 0
        %5755 = vmatprep.subr.mxu0 0.0
        %5756 = vmatpush1.msra.mxu0 %v5074
        %5757 = vmatprep.subr.mxu0 0.0
        %5758 = vmatpush1.msra.mxu0 %v5075
        %5759 = vmatprep.subr.mxu0 0.0
        %5760 = vmatpush1.msra.mxu0 %v5076
        %5761 = vmatprep.subr.mxu0 0.0
        %5762 = vmatpush1.msra.mxu0 %v5077
        %5763 = vmatprep.subr.mxu0 0.0
        %5764 = vmatpush1.msra.mxu0 0.0
        %5765 = vmatprep.subr.mxu0 0.0
        %5766 = vmatpush1.msra.mxu0 0.0
        %5767 = vmatprep.subr.mxu0 0.0
        %5768 = vmatpush1.msra.mxu0 0.0
        %5769 = vmatprep.subr.mxu0 0.0
        %5770 = vmatpush1.msra.mxu0 0.0
        %5771 = vmatprep.subr.mxu0 0.0
        %5772 = vmatpush1.msra.mxu0 0.0
        %5773 = vmatprep.subr.mxu0 0.0
        %5774 = vmatpush1.msra.mxu0 0.0
        %5775 = vmatprep.subr.mxu0 0.0
        %5776 = vmatpush1.msra.mxu0 0.0
        %5777 = vmatprep.subr.mxu0 0.0
        %5778 = vmatpush1.msra.mxu0 0.0
        %5779 = vmatprep.subr.mxu0 0.0
        %5780 = vmatpush1.msra.mxu0 0.0
        %5781 = vmatprep.subr.mxu0 0.0
        %5782 = vmatpush1.msra.mxu0 0.0
        %5783 = vmatprep.subr.mxu0 0.0
        %5784 = vmatpush1.msra.mxu0 0.0
        %5785 = vmatprep.subr.mxu0 0.0
        %5786 = vmatpush1.msra.mxu0 0.0
        %5787 = vmatprep.subr.mxu0 0.0
        %5788 = vmatpush1.msra.mxu0 0.0
        %5789 = vmatprep.subr.mxu0 0.0
        %5790 = vmatpush1.msra.mxu0 0.0
        %5791 = vmatprep.subr.mxu0 0.0
        %5792 = vmatpush1.msra.mxu0 0.0
        %5793 = vmatprep.subr.mxu0 0.0
        %5794 = vmatpush1.msra.mxu0 0.0
        %5795 = vmatprep.subr.mxu0 0.0
        %5796 = vmatpush1.msra.mxu0 0.0
        %5797 = vmatprep.subr.mxu0 0.0
        %5798 = vmatpush1.msra.mxu0 0.0
        %5799 = vmatprep.subr.mxu0 0.0
        %5800 = vmatpush1.msra.mxu0 0.0
        %5801 = vmatprep.subr.mxu0 0.0
        %5802 = vmatpush1.msra.mxu0 0.0
        %5803 = vmatprep.subr.mxu0 0.0
        %5804 = vmatpush1.msra.mxu0 0.0
        %5805 = vmatprep.subr.mxu0 0.0
        %5806 = vmatpush1.msra.mxu0 0.0
        %5807 = vmatprep.subr.mxu0 0.0
        %5808 = vmatpush1.msra.mxu0 0.0
        %5809 = vmatprep.subr.mxu0 0.0
        %5810 = vmatpush1.msra.mxu0 0.0
        %5811 = vmatprep.subr.mxu0 0.0
        %5812 = vmatpush1.msra.mxu0 0.0
        %5813 = vmatprep.subr.mxu0 0.0
        %5814 = vmatpush1.msra.mxu0 0.0
        %5815 = vmatprep.subr.mxu0 0.0
        %5816 = vmatpush1.msra.mxu0 0.0
        %5817 = vmatprep.subr.mxu0 0.0
        %5818 = vmatpush1.msra.mxu0 0.0
        %5819 = vmatprep.mubr.f32.mxu0 0.0
        %5820 = vmatmul.mubr.f32.gmra.mrb[0].mxu0 %v5753
        %v5821 = vpop.f32.mrb[0].mxu0
        %v5822 = vadd.f32 0.0, %v5821
        %v5823 = vpop.f32.mrb[0].mxu0
        %5824 = vdwg.mxu0
        %v5825 = vadd.f32 %v4979, %v5822
        %v5826 = vmul.f32 %v5825, %v5825
        %v5827 = vsel %vm989, %v5826, 0.0
        %5828 = vadd.xlane.f32.xlu0 %v5827
        %v5829 = vpop.xlane.xlu0 %5828
        %v5830 = vmul.f32 %v5829, %v993
        %v5831 = vadd.f32 %v5830, 1e-06
        %v5832 = vrsqrt.pop %v5831
        %v5833 = vmul.f32 %v5825, %v5832
        %v5834 = vlaneseq
        %v5835 = vshrl.u32 %v5834, 7
        %v5836 = vsub.s32 1, %v5835
        %v5837 = vrot.slane %v4981, %v5836
        %v5838 = vmul.f32 %v5833, %v5837
        %s5839 = scalar_lea.vmem [#allocation17], 32
        %v5840 = vld [vmem:[%s5839] sm:$0xff]
        %v5841 = vld [vmem:[%s5839 + $0x8] sm:$0xff]
        %v5842 = vld [vmem:[%s5839 + $0x10] sm:$0xff]
        %v5843 = vld [vmem:[%s5839 + $0x18] sm:$0xff]
        %v5845 = vsel %vm989, %v5838, 0
        %5847 = vmatprep.subr.mxu0 0.0
        %5848 = vmatpush1.msra.mxu0 %v5840
        %5849 = vmatprep.subr.mxu0 0.0
        %5850 = vmatpush1.msra.mxu0 %v5841
        %5851 = vmatprep.subr.mxu0 0.0
        %5852 = vmatpush1.msra.mxu0 %v5842
        %5853 = vmatprep.subr.mxu0 0.0
        %5854 = vmatpush1.msra.mxu0 %v5843
        %5855 = vmatprep.subr.mxu0 0.0
        %5856 = vmatpush1.msra.mxu0 0.0
        %5857 = vmatprep.subr.mxu0 0.0
        %5858 = vmatpush1.msra.mxu0 0.0
        %5859 = vmatprep.subr.mxu0 0.0
        %5860 = vmatpush1.msra.mxu0 0.0
        %5861 = vmatprep.subr.mxu0 0.0
        %5862 = vmatpush1.msra.mxu0 0.0
        %5863 = vmatprep.subr.mxu0 0.0
        %5864 = vmatpush1.msra.mxu0 0.0
        %5865 = vmatprep.subr.mxu0 0.0
        %5866 = vmatpush1.msra.mxu0 0.0
        %5867 = vmatprep.subr.mxu0 0.0
        %5868 = vmatpush1.msra.mxu0 0.0
        %5869 = vmatprep.subr.mxu0 0.0
        %5870 = vmatpush1.msra.mxu0 0.0
        %5871 = vmatprep.subr.mxu0 0.0
        %5872 = vmatpush1.msra.mxu0 0.0
        %5873 = vmatprep.subr.mxu0 0.0
        %5874 = vmatpush1.msra.mxu0 0.0
        %5875 = vmatprep.subr.mxu0 0.0
        %5876 = vmatpush1.msra.mxu0 0.0
        %5877 = vmatprep.subr.mxu0 0.0
        %5878 = vmatpush1.msra.mxu0 0.0
        %5879 = vmatprep.subr.mxu0 0.0
        %5880 = vmatpush1.msra.mxu0 0.0
        %5881 = vmatprep.subr.mxu0 0.0
        %5882 = vmatpush1.msra.mxu0 0.0
        %5883 = vmatprep.subr.mxu0 0.0
        %5884 = vmatpush1.msra.mxu0 0.0
        %5885 = vmatprep.subr.mxu0 0.0
        %5886 = vmatpush1.msra.mxu0 0.0
        %5887 = vmatprep.subr.mxu0 0.0
        %5888 = vmatpush1.msra.mxu0 0.0
        %5889 = vmatprep.subr.mxu0 0.0
        %5890 = vmatpush1.msra.mxu0 0.0
        %5891 = vmatprep.subr.mxu0 0.0
        %5892 = vmatpush1.msra.mxu0 0.0
        %5893 = vmatprep.subr.mxu0 0.0
        %5894 = vmatpush1.msra.mxu0 0.0
        %5895 = vmatprep.subr.mxu0 0.0
        %5896 = vmatpush1.msra.mxu0 0.0
        %5897 = vmatprep.subr.mxu0 0.0
        %5898 = vmatpush1.msra.mxu0 0.0
        %5899 = vmatprep.subr.mxu0 0.0
        %5900 = vmatpush1.msra.mxu0 0.0
        %5901 = vmatprep.subr.mxu0 0.0
        %5902 = vmatpush1.msra.mxu0 0.0
        %5903 = vmatprep.subr.mxu0 0.0
        %5904 = vmatpush1.msra.mxu0 0.0
        %5905 = vmatprep.subr.mxu0 0.0
        %5906 = vmatpush1.msra.mxu0 0.0
        %5907 = vmatprep.subr.mxu0 0.0
        %5908 = vmatpush1.msra.mxu0 0.0
        %5909 = vmatprep.subr.mxu0 0.0
        %5910 = vmatpush1.msra.mxu0 0.0
        %5911 = vmatprep.mubr.f32.mxu0 0.0
        %5912 = vmatmul.mubr.f32.gmra.mrb[0].mxu0 %v5845
        %v5913 = vpop.f32.mrb[0].mxu0
        %v5914 = vadd.f32 0.0, %v5913
        %v5915 = vpop.f32.mrb[0].mxu0
        %5916 = vdwg.mxu0
        %s5917 = scalar_lea.vmem [#allocation19], 32
        %v5918 = vld [vmem:[%s5917] sm:$0xff]
        %v5919 = vld [vmem:[%s5917 + $0x8] sm:$0xff]
        %v5920 = vld [vmem:[%s5917 + $0x10] sm:$0xff]
        %v5921 = vld [vmem:[%s5917 + $0x18] sm:$0xff]
        %5922 = vmatprep.subr.mxu0 0.0
        %5923 = vmatpush1.msra.mxu0 %v5918
        %5924 = vmatprep.subr.mxu0 0.0
        %5925 = vmatpush1.msra.mxu0 %v5919
        %5926 = vmatprep.subr.mxu0 0.0
        %5927 = vmatpush1.msra.mxu0 %v5920
        %5928 = vmatprep.subr.mxu0 0.0
        %5929 = vmatpush1.msra.mxu0 %v5921
        %5930 = vmatprep.subr.mxu0 0.0
        %5931 = vmatpush1.msra.mxu0 0.0
        %5932 = vmatprep.subr.mxu0 0.0
        %5933 = vmatpush1.msra.mxu0 0.0
        %5934 = vmatprep.subr.mxu0 0.0
        %5935 = vmatpush1.msra.mxu0 0.0
        %5936 = vmatprep.subr.mxu0 0.0
        %5937 = vmatpush1.msra.mxu0 0.0
        %5938 = vmatprep.subr.mxu0 0.0
        %5939 = vmatpush1.msra.mxu0 0.0
        %5940 = vmatprep.subr.mxu0 0.0
        %5941 = vmatpush1.msra.mxu0 0.0
        %5942 = vmatprep.subr.mxu0 0.0
        %5943 = vmatpush1.msra.mxu0 0.0
        %5944 = vmatprep.subr.mxu0 0.0
        %5945 = vmatpush1.msra.mxu0 0.0
        %5946 = vmatprep.subr.mxu0 0.0
        %5947 = vmatpush1.msra.mxu0 0.0
        %5948 = vmatprep.subr.mxu0 0.0
        %5949 = vmatpush1.msra.mxu0 0.0
        %5950 = vmatprep.subr.mxu0 0.0
        %5951 = vmatpush1.msra.mxu0 0.0
        %5952 = vmatprep.subr.mxu0 0.0
        %5953 = vmatpush1.msra.mxu0 0.0
        %5954 = vmatprep.subr.mxu0 0.0
        %5955 = vmatpush1.msra.mxu0 0.0
        %5956 = vmatprep.subr.mxu0 0.0
        %5957 = vmatpush1.msra.mxu0 0.0
        %5958 = vmatprep.subr.mxu0 0.0
        %5959 = vmatpush1.msra.mxu0 0.0
        %5960 = vmatprep.subr.mxu0 0.0
        %5961 = vmatpush1.msra.mxu0 0.0
        %5962 = vmatprep.subr.mxu0 0.0
        %5963 = vmatpush1.msra.mxu0 0.0
        %5964 = vmatprep.subr.mxu0 0.0
        %5965 = vmatpush1.msra.mxu0 0.0
        %5966 = vmatprep.subr.mxu0 0.0
        %5967 = vmatpush1.msra.mxu0 0.0
        %5968 = vmatprep.subr.mxu0 0.0
        %5969 = vmatpush1.msra.mxu0 0.0
        %5970 = vmatprep.subr.mxu0 0.0
        %5971 = vmatpush1.msra.mxu0 0.0
        %5972 = vmatprep.subr.mxu0 0.0
        %5973 = vmatpush1.msra.mxu0 0.0
        %5974 = vmatprep.subr.mxu0 0.0
        %5975 = vmatpush1.msra.mxu0 0.0
        %5976 = vmatprep.subr.mxu0 0.0
        %5977 = vmatpush1.msra.mxu0 0.0
        %5978 = vmatprep.subr.mxu0 0.0
        %5979 = vmatpush1.msra.mxu0 0.0
        %5980 = vmatprep.subr.mxu0 0.0
        %5981 = vmatpush1.msra.mxu0 0.0
        %5982 = vmatprep.subr.mxu0 0.0
        %5983 = vmatpush1.msra.mxu0 0.0
        %5984 = vmatprep.subr.mxu0 0.0
        %5985 = vmatpush1.msra.mxu0 0.0
        %5986 = vmatprep.mubr.f32.mxu0 0.0
        %5987 = vmatmul.mubr.f32.gmra.mrb[0].mxu0 %v3984
        %v5988 = vpop.f32.mrb[0].mxu0
        %v5989 = vadd.f32 0.0, %v5988
        %v5990 = vpop.f32.mrb[0].mxu0
        %5991 = vdwg.mxu0
        %s5992 = scalar_lea.vmem [#allocation20], 32
        %v5993 = vld [vmem:[%s5992] sm:$0xff]
        %v5994 = vld [vmem:[%s5992 + $0x8] sm:$0xff]
        %v5995 = vld [vmem:[%s5992 + $0x10] sm:$0xff]
        %v5996 = vld [vmem:[%s5992 + $0x18] sm:$0xff]
        %5998 = vrot.lane.b32.xlu0 %v5914, 120
        %v5999 = vpop.permute.xlu0 %5998
        %6000 = vrot.lane.b32.xlu0 %v5914, 112
        %v6001 = vpop.permute.xlu0 %6000
        %6002 = vrot.lane.b32.xlu0 %v5914, 104
        %v6003 = vpop.permute.xlu0 %6002
        %6005 = vrot.lane.b32.xlu0 %v5989, 120
        %v6006 = vpop.permute.xlu0 %6005
        %6007 = vrot.lane.b32.xlu0 %v5989, 112
        %v6008 = vpop.permute.xlu0 %6007
        %6009 = vrot.lane.b32.xlu0 %v5989, 104
        %v6010 = vpop.permute.xlu0 %6009
        %v6011 = vsel %vm1093, %v5914, 0
        %v6013 = vsel %vm1093, %v5989, 0
        %6015 = vmatprep.subr.mxu0 0.0
        %6016 = vmatpush1.xpose.msra.mxu0 %v6013
        %6017 = vmatprep.subr.mxu0 0.0
        %6018 = vmatpush1.xpose.msra.mxu0 0.0
        %6019 = vmatprep.subr.mxu0 0.0
        %6020 = vmatpush1.xpose.msra.mxu0 0.0
        %6021 = vmatprep.subr.mxu0 0.0
        %6022 = vmatpush1.xpose.msra.mxu0 0.0
        %6023 = vmatprep.subr.mxu0 0.0
        %6024 = vmatpush1.xpose.msra.mxu0 0.0
        %6025 = vmatprep.subr.mxu0 0.0
        %6026 = vmatpush1.xpose.msra.mxu0 0.0
        %6027 = vmatprep.subr.mxu0 0.0
        %6028 = vmatpush1.xpose.msra.mxu0 0.0
        %6029 = vmatprep.subr.mxu0 0.0
        %6030 = vmatpush1.xpose.msra.mxu0 0.0
        %6031 = vmatprep.subr.mxu0 0.0
        %6032 = vmatpush1.xpose.msra.mxu0 0.0
        %6033 = vmatprep.subr.mxu0 0.0
        %6034 = vmatpush1.xpose.msra.mxu0 0.0
        %6035 = vmatprep.subr.mxu0 0.0
        %6036 = vmatpush1.xpose.msra.mxu0 0.0
        %6037 = vmatprep.subr.mxu0 0.0
        %6038 = vmatpush1.xpose.msra.mxu0 0.0
        %6039 = vmatprep.subr.mxu0 0.0
        %6040 = vmatpush1.xpose.msra.mxu0 0.0
        %6041 = vmatprep.subr.mxu0 0.0
        %6042 = vmatpush1.xpose.msra.mxu0 0.0
        %6043 = vmatprep.subr.mxu0 0.0
        %6044 = vmatpush1.xpose.msra.mxu0 0.0
        %6045 = vmatprep.subr.mxu0 0.0
        %6046 = vmatpush1.xpose.msra.mxu0 0.0
        %6047 = vmatprep.subr.mxu0 0.0
        %6048 = vmatpush1.xpose.msra.mxu0 0.0
        %6049 = vmatprep.subr.mxu0 0.0
        %6050 = vmatpush1.xpose.msra.mxu0 0.0
        %6051 = vmatprep.subr.mxu0 0.0
        %6052 = vmatpush1.xpose.msra.mxu0 0.0
        %6053 = vmatprep.subr.mxu0 0.0
        %6054 = vmatpush1.xpose.msra.mxu0 0.0
        %6055 = vmatprep.subr.mxu0 0.0
        %6056 = vmatpush1.xpose.msra.mxu0 0.0
        %6057 = vmatprep.subr.mxu0 0.0
        %6058 = vmatpush1.xpose.msra.mxu0 0.0
        %6059 = vmatprep.subr.mxu0 0.0
        %6060 = vmatpush1.xpose.msra.mxu0 0.0
        %6061 = vmatprep.subr.mxu0 0.0
        %6062 = vmatpush1.xpose.msra.mxu0 0.0
        %6063 = vmatprep.subr.mxu0 0.0
        %6064 = vmatpush1.xpose.msra.mxu0 0.0
        %6065 = vmatprep.subr.mxu0 0.0
        %6066 = vmatpush1.xpose.msra.mxu0 0.0
        %6067 = vmatprep.subr.mxu0 0.0
        %6068 = vmatpush1.xpose.msra.mxu0 0.0
        %6069 = vmatprep.subr.mxu0 0.0
        %6070 = vmatpush1.xpose.msra.mxu0 0.0
        %6071 = vmatprep.subr.mxu0 0.0
        %6072 = vmatpush1.xpose.msra.mxu0 0.0
        %6073 = vmatprep.subr.mxu0 0.0
        %6074 = vmatpush1.xpose.msra.mxu0 0.0
        %6075 = vmatprep.subr.mxu0 0.0
        %6076 = vmatpush1.xpose.msra.mxu0 0.0
        %6077 = vmatprep.subr.mxu0 0.0
        %6078 = vmatpush1.xpose.msra.mxu0 0.0
        %6079 = vmatprep.mubr.f32.mxu0 0.0
        %6080 = vmatmul.mubr.f32.gmra.mrb[0].mxu0 %v6011
        %v6081 = vpop.f32.mrb[0].mxu0
        %v6082 = vadd.f32 0.0, %v6081
        %v6083 = vpop.f32.mrb[0].mxu0
        %6084 = vdwg.mxu0
        %v6085 = vsel %vm1093, %v5999, 0
        %v6087 = vsel %vm1093, %v6006, 0
        %6089 = vmatprep.subr.mxu0 0.0
        %6090 = vmatpush1.xpose.msra.mxu0 %v6087
        %6091 = vmatprep.subr.mxu0 0.0
        %6092 = vmatpush1.xpose.msra.mxu0 0.0
        %6093 = vmatprep.subr.mxu0 0.0
        %6094 = vmatpush1.xpose.msra.mxu0 0.0
        %6095 = vmatprep.subr.mxu0 0.0
        %6096 = vmatpush1.xpose.msra.mxu0 0.0
        %6097 = vmatprep.subr.mxu0 0.0
        %6098 = vmatpush1.xpose.msra.mxu0 0.0
        %6099 = vmatprep.subr.mxu0 0.0
        %6100 = vmatpush1.xpose.msra.mxu0 0.0
        %6101 = vmatprep.subr.mxu0 0.0
        %6102 = vmatpush1.xpose.msra.mxu0 0.0
        %6103 = vmatprep.subr.mxu0 0.0
        %6104 = vmatpush1.xpose.msra.mxu0 0.0
        %6105 = vmatprep.subr.mxu0 0.0
        %6106 = vmatpush1.xpose.msra.mxu0 0.0
        %6107 = vmatprep.subr.mxu0 0.0
        %6108 = vmatpush1.xpose.msra.mxu0 0.0
        %6109 = vmatprep.subr.mxu0 0.0
        %6110 = vmatpush1.xpose.msra.mxu0 0.0
        %6111 = vmatprep.subr.mxu0 0.0
        %6112 = vmatpush1.xpose.msra.mxu0 0.0
        %6113 = vmatprep.subr.mxu0 0.0
        %6114 = vmatpush1.xpose.msra.mxu0 0.0
        %6115 = vmatprep.subr.mxu0 0.0
        %6116 = vmatpush1.xpose.msra.mxu0 0.0
        %6117 = vmatprep.subr.mxu0 0.0
        %6118 = vmatpush1.xpose.msra.mxu0 0.0
        %6119 = vmatprep.subr.mxu0 0.0
        %6120 = vmatpush1.xpose.msra.mxu0 0.0
        %6121 = vmatprep.subr.mxu0 0.0
        %6122 = vmatpush1.xpose.msra.mxu0 0.0
        %6123 = vmatprep.subr.mxu0 0.0
        %6124 = vmatpush1.xpose.msra.mxu0 0.0
        %6125 = vmatprep.subr.mxu0 0.0
        %6126 = vmatpush1.xpose.msra.mxu0 0.0
        %6127 = vmatprep.subr.mxu0 0.0
        %6128 = vmatpush1.xpose.msra.mxu0 0.0
        %6129 = vmatprep.subr.mxu0 0.0
        %6130 = vmatpush1.xpose.msra.mxu0 0.0
        %6131 = vmatprep.subr.mxu0 0.0
        %6132 = vmatpush1.xpose.msra.mxu0 0.0
        %6133 = vmatprep.subr.mxu0 0.0
        %6134 = vmatpush1.xpose.msra.mxu0 0.0
        %6135 = vmatprep.subr.mxu0 0.0
        %6136 = vmatpush1.xpose.msra.mxu0 0.0
        %6137 = vmatprep.subr.mxu0 0.0
        %6138 = vmatpush1.xpose.msra.mxu0 0.0
        %6139 = vmatprep.subr.mxu0 0.0
        %6140 = vmatpush1.xpose.msra.mxu0 0.0
        %6141 = vmatprep.subr.mxu0 0.0
        %6142 = vmatpush1.xpose.msra.mxu0 0.0
        %6143 = vmatprep.subr.mxu0 0.0
        %6144 = vmatpush1.xpose.msra.mxu0 0.0
        %6145 = vmatprep.subr.mxu0 0.0
        %6146 = vmatpush1.xpose.msra.mxu0 0.0
        %6147 = vmatprep.subr.mxu0 0.0
        %6148 = vmatpush1.xpose.msra.mxu0 0.0
        %6149 = vmatprep.subr.mxu0 0.0
        %6150 = vmatpush1.xpose.msra.mxu0 0.0
        %6151 = vmatprep.subr.mxu0 0.0
        %6152 = vmatpush1.xpose.msra.mxu0 0.0
        %6153 = vmatprep.mubr.f32.mxu0 0.0
        %6154 = vmatmul.mubr.f32.gmra.mrb[0].mxu0 %v6085
        %v6155 = vpop.f32.mrb[0].mxu0
        %v6156 = vadd.f32 0.0, %v6155
        %v6157 = vpop.f32.mrb[0].mxu0
        %6158 = vdwg.mxu0
        %v6159 = vsel %vm1093, %v6001, 0
        %v6161 = vsel %vm1093, %v6008, 0
        %6163 = vmatprep.subr.mxu0 0.0
        %6164 = vmatpush1.xpose.msra.mxu0 %v6161
        %6165 = vmatprep.subr.mxu0 0.0
        %6166 = vmatpush1.xpose.msra.mxu0 0.0
        %6167 = vmatprep.subr.mxu0 0.0
        %6168 = vmatpush1.xpose.msra.mxu0 0.0
        %6169 = vmatprep.subr.mxu0 0.0
        %6170 = vmatpush1.xpose.msra.mxu0 0.0
        %6171 = vmatprep.subr.mxu0 0.0
        %6172 = vmatpush1.xpose.msra.mxu0 0.0
        %6173 = vmatprep.subr.mxu0 0.0
        %6174 = vmatpush1.xpose.msra.mxu0 0.0
        %6175 = vmatprep.subr.mxu0 0.0
        %6176 = vmatpush1.xpose.msra.mxu0 0.0
        %6177 = vmatprep.subr.mxu0 0.0
        %6178 = vmatpush1.xpose.msra.mxu0 0.0
        %6179 = vmatprep.subr.mxu0 0.0
        %6180 = vmatpush1.xpose.msra.mxu0 0.0
        %6181 = vmatprep.subr.mxu0 0.0
        %6182 = vmatpush1.xpose.msra.mxu0 0.0
        %6183 = vmatprep.subr.mxu0 0.0
        %6184 = vmatpush1.xpose.msra.mxu0 0.0
        %6185 = vmatprep.subr.mxu0 0.0
        %6186 = vmatpush1.xpose.msra.mxu0 0.0
        %6187 = vmatprep.subr.mxu0 0.0
        %6188 = vmatpush1.xpose.msra.mxu0 0.0
        %6189 = vmatprep.subr.mxu0 0.0
        %6190 = vmatpush1.xpose.msra.mxu0 0.0
        %6191 = vmatprep.subr.mxu0 0.0
        %6192 = vmatpush1.xpose.msra.mxu0 0.0
        %6193 = vmatprep.subr.mxu0 0.0
        %6194 = vmatpush1.xpose.msra.mxu0 0.0
        %6195 = vmatprep.subr.mxu0 0.0
        %6196 = vmatpush1.xpose.msra.mxu0 0.0
        %6197 = vmatprep.subr.mxu0 0.0
        %6198 = vmatpush1.xpose.msra.mxu0 0.0
        %6199 = vmatprep.subr.mxu0 0.0
        %6200 = vmatpush1.xpose.msra.mxu0 0.0
        %6201 = vmatprep.subr.mxu0 0.0
        %6202 = vmatpush1.xpose.msra.mxu0 0.0
        %6203 = vmatprep.subr.mxu0 0.0
        %6204 = vmatpush1.xpose.msra.mxu0 0.0
        %6205 = vmatprep.subr.mxu0 0.0
        %6206 = vmatpush1.xpose.msra.mxu0 0.0
        %6207 = vmatprep.subr.mxu0 0.0
        %6208 = vmatpush1.xpose.msra.mxu0 0.0
        %6209 = vmatprep.subr.mxu0 0.0
        %6210 = vmatpush1.xpose.msra.mxu0 0.0
        %6211 = vmatprep.subr.mxu0 0.0
        %6212 = vmatpush1.xpose.msra.mxu0 0.0
        %6213 = vmatprep.subr.mxu0 0.0
        %6214 = vmatpush1.xpose.msra.mxu0 0.0
        %6215 = vmatprep.subr.mxu0 0.0
        %6216 = vmatpush1.xpose.msra.mxu0 0.0
        %6217 = vmatprep.subr.mxu0 0.0
        %6218 = vmatpush1.xpose.msra.mxu0 0.0
        %6219 = vmatprep.subr.mxu0 0.0
        %6220 = vmatpush1.xpose.msra.mxu0 0.0
        %6221 = vmatprep.subr.mxu0 0.0
        %6222 = vmatpush1.xpose.msra.mxu0 0.0
        %6223 = vmatprep.subr.mxu0 0.0
        %6224 = vmatpush1.xpose.msra.mxu0 0.0
        %6225 = vmatprep.subr.mxu0 0.0
        %6226 = vmatpush1.xpose.msra.mxu0 0.0
        %6227 = vmatprep.mubr.f32.mxu0 0.0
        %6228 = vmatmul.mubr.f32.gmra.mrb[0].mxu0 %v6159
        %v6229 = vpop.f32.mrb[0].mxu0
        %v6230 = vadd.f32 0.0, %v6229
        %v6231 = vpop.f32.mrb[0].mxu0
        %6232 = vdwg.mxu0
        %v6233 = vsel %vm1093, %v6003, 0
        %v6235 = vsel %vm1093, %v6010, 0
        %6237 = vmatprep.subr.mxu0 0.0
        %6238 = vmatpush1.xpose.msra.mxu0 %v6235
        %6239 = vmatprep.subr.mxu0 0.0
        %6240 = vmatpush1.xpose.msra.mxu0 0.0
        %6241 = vmatprep.subr.mxu0 0.0
        %6242 = vmatpush1.xpose.msra.mxu0 0.0
        %6243 = vmatprep.subr.mxu0 0.0
        %6244 = vmatpush1.xpose.msra.mxu0 0.0
        %6245 = vmatprep.subr.mxu0 0.0
        %6246 = vmatpush1.xpose.msra.mxu0 0.0
        %6247 = vmatprep.subr.mxu0 0.0
        %6248 = vmatpush1.xpose.msra.mxu0 0.0
        %6249 = vmatprep.subr.mxu0 0.0
        %6250 = vmatpush1.xpose.msra.mxu0 0.0
        %6251 = vmatprep.subr.mxu0 0.0
        %6252 = vmatpush1.xpose.msra.mxu0 0.0
        %6253 = vmatprep.subr.mxu0 0.0
        %6254 = vmatpush1.xpose.msra.mxu0 0.0
        %6255 = vmatprep.subr.mxu0 0.0
        %6256 = vmatpush1.xpose.msra.mxu0 0.0
        %6257 = vmatprep.subr.mxu0 0.0
        %6258 = vmatpush1.xpose.msra.mxu0 0.0
        %6259 = vmatprep.subr.mxu0 0.0
        %6260 = vmatpush1.xpose.msra.mxu0 0.0
        %6261 = vmatprep.subr.mxu0 0.0
        %6262 = vmatpush1.xpose.msra.mxu0 0.0
        %6263 = vmatprep.subr.mxu0 0.0
        %6264 = vmatpush1.xpose.msra.mxu0 0.0
        %6265 = vmatprep.subr.mxu0 0.0
        %6266 = vmatpush1.xpose.msra.mxu0 0.0
        %6267 = vmatprep.subr.mxu0 0.0
        %6268 = vmatpush1.xpose.msra.mxu0 0.0
        %6269 = vmatprep.subr.mxu0 0.0
        %6270 = vmatpush1.xpose.msra.mxu0 0.0
        %6271 = vmatprep.subr.mxu0 0.0
        %6272 = vmatpush1.xpose.msra.mxu0 0.0
        %6273 = vmatprep.subr.mxu0 0.0
        %6274 = vmatpush1.xpose.msra.mxu0 0.0
        %6275 = vmatprep.subr.mxu0 0.0
        %6276 = vmatpush1.xpose.msra.mxu0 0.0
        %6277 = vmatprep.subr.mxu0 0.0
        %6278 = vmatpush1.xpose.msra.mxu0 0.0
        %6279 = vmatprep.subr.mxu0 0.0
        %6280 = vmatpush1.xpose.msra.mxu0 0.0
        %6281 = vmatprep.subr.mxu0 0.0
        %6282 = vmatpush1.xpose.msra.mxu0 0.0
        %6283 = vmatprep.subr.mxu0 0.0
        %6284 = vmatpush1.xpose.msra.mxu0 0.0
        %6285 = vmatprep.subr.mxu0 0.0
        %6286 = vmatpush1.xpose.msra.mxu0 0.0
        %6287 = vmatprep.subr.mxu0 0.0
        %6288 = vmatpush1.xpose.msra.mxu0 0.0
        %6289 = vmatprep.subr.mxu0 0.0
        %6290 = vmatpush1.xpose.msra.mxu0 0.0
        %6291 = vmatprep.subr.mxu0 0.0
        %6292 = vmatpush1.xpose.msra.mxu0 0.0
        %6293 = vmatprep.subr.mxu0 0.0
        %6294 = vmatpush1.xpose.msra.mxu0 0.0
        %6295 = vmatprep.subr.mxu0 0.0
        %6296 = vmatpush1.xpose.msra.mxu0 0.0
        %6297 = vmatprep.subr.mxu0 0.0
        %6298 = vmatpush1.xpose.msra.mxu0 0.0
        %6299 = vmatprep.subr.mxu0 0.0
        %6300 = vmatpush1.xpose.msra.mxu0 0.0
        %6301 = vmatprep.mubr.f32.mxu0 0.0
        %6302 = vmatmul.mubr.f32.gmra.mrb[0].mxu0 %v6233
        %v6303 = vpop.f32.mrb[0].mxu0
        %v6304 = vadd.f32 0.0, %v6303
        %v6305 = vpop.f32.mrb[0].mxu0
        %6306 = vdwg.mxu0
        %v6307 = vsel %vm1093, %v6082, -inf
        %6308 = vmax.xlane.f32.xlu0 %v6307
        %v6309 = vpop.xlane.xlu0 %6308
        %v6310 = vsel %vm1093, %v6156, -inf
        %6311 = vmax.xlane.f32.xlu0 %v6310
        %v6312 = vpop.xlane.xlu0 %6311
        %v6313 = vsel %vm1093, %v6230, -inf
        %6314 = vmax.xlane.f32.xlu0 %v6313
        %v6315 = vpop.xlane.xlu0 %6314
        %v6316 = vsel %vm1093, %v6304, -inf
        %6317 = vmax.xlane.f32.xlu0 %v6316
        %v6318 = vpop.xlane.xlu0 %6317
        %v6319 = vsub.f32 %v6082, %v6309
        %v6320 = vsub.f32 %v6156, %v6312
        %v6321 = vsub.f32 %v6230, %v6315
        %v6322 = vsub.f32 %v6304, %v6318
        %v6323 = vmul.f32 %v6319, 1.442695
        %v6324 = vpow.pop %v6323
        %v6325 = vmul.f32 %v6320, 1.442695
        %v6326 = vpow.pop %v6325
        %v6327 = vmul.f32 %v6321, 1.442695
        %v6328 = vpow.pop %v6327
        %v6329 = vmul.f32 %v6322, 1.442695
        %v6330 = vpow.pop %v6329
        %v6331 = vsel %vm1093, %v6324, 0.0
        %6332 = vadd.xlane.f32.xlu0 %v6331
        %v6333 = vpop.xlane.xlu0 %6332
        %v6334 = vsel %vm1093, %v6326, 0.0
        %6335 = vadd.xlane.f32.xlu0 %v6334
        %v6336 = vpop.xlane.xlu0 %6335
        %v6337 = vsel %vm1093, %v6328, 0.0
        %6338 = vadd.xlane.f32.xlu0 %v6337
        %v6339 = vpop.xlane.xlu0 %6338
        %v6340 = vsel %vm1093, %v6330, 0.0
        %6341 = vadd.xlane.f32.xlu0 %v6340
        %v6342 = vpop.xlane.xlu0 %6341
        %v6343 = vrcp.pop %v6333
        %v6344 = vrcp.pop %v6336
        %v6345 = vrcp.pop %v6339
        %v6346 = vrcp.pop %v6342
        %v6347 = vmul.f32 %v6324, %v6343
        %v6348 = vmul.f32 %v6326, %v6344
        %v6349 = vmul.f32 %v6328, %v6345
        %v6350 = vmul.f32 %v6330, %v6346
        %6351 = vrot.lane.b32.xlu0 %v5989, 96
        %v6352 = vpop.permute.xlu0 %6351
        %v6355 = vsel %vm1093, %v6347, 0
        %6357 = vmatprep.subr.mxu0 0.0
        %6358 = vmatpush1.msra.mxu0 %v6352
        %6359 = vmatprep.subr.mxu0 0.0
        %6360 = vmatpush1.msra.mxu0 0.0
        %6361 = vmatprep.subr.mxu0 0.0
        %6362 = vmatpush1.msra.mxu0 0.0
        %6363 = vmatprep.subr.mxu0 0.0
        %6364 = vmatpush1.msra.mxu0 0.0
        %6365 = vmatprep.subr.mxu0 0.0
        %6366 = vmatpush1.msra.mxu0 0.0
        %6367 = vmatprep.subr.mxu0 0.0
        %6368 = vmatpush1.msra.mxu0 0.0
        %6369 = vmatprep.subr.mxu0 0.0
        %6370 = vmatpush1.msra.mxu0 0.0
        %6371 = vmatprep.subr.mxu0 0.0
        %6372 = vmatpush1.msra.mxu0 0.0
        %6373 = vmatprep.subr.mxu0 0.0
        %6374 = vmatpush1.msra.mxu0 0.0
        %6375 = vmatprep.subr.mxu0 0.0
        %6376 = vmatpush1.msra.mxu0 0.0
        %6377 = vmatprep.subr.mxu0 0.0
        %6378 = vmatpush1.msra.mxu0 0.0
        %6379 = vmatprep.subr.mxu0 0.0
        %6380 = vmatpush1.msra.mxu0 0.0
        %6381 = vmatprep.subr.mxu0 0.0
        %6382 = vmatpush1.msra.mxu0 0.0
        %6383 = vmatprep.subr.mxu0 0.0
        %6384 = vmatpush1.msra.mxu0 0.0
        %6385 = vmatprep.subr.mxu0 0.0
        %6386 = vmatpush1.msra.mxu0 0.0
        %6387 = vmatprep.subr.mxu0 0.0
        %6388 = vmatpush1.msra.mxu0 0.0
        %6389 = vmatprep.subr.mxu0 0.0
        %6390 = vmatpush1.msra.mxu0 0.0
        %6391 = vmatprep.subr.mxu0 0.0
        %6392 = vmatpush1.msra.mxu0 0.0
        %6393 = vmatprep.subr.mxu0 0.0
        %6394 = vmatpush1.msra.mxu0 0.0
        %6395 = vmatprep.subr.mxu0 0.0
        %6396 = vmatpush1.msra.mxu0 0.0
        %6397 = vmatprep.subr.mxu0 0.0
        %6398 = vmatpush1.msra.mxu0 0.0
        %6399 = vmatprep.subr.mxu0 0.0
        %6400 = vmatpush1.msra.mxu0 0.0
        %6401 = vmatprep.subr.mxu0 0.0
        %6402 = vmatpush1.msra.mxu0 0.0
        %6403 = vmatprep.subr.mxu0 0.0
        %6404 = vmatpush1.msra.mxu0 0.0
        %6405 = vmatprep.subr.mxu0 0.0
        %6406 = vmatpush1.msra.mxu0 0.0
        %6407 = vmatprep.subr.mxu0 0.0
        %6408 = vmatpush1.msra.mxu0 0.0
        %6409 = vmatprep.subr.mxu0 0.0
        %6410 = vmatpush1.msra.mxu0 0.0
        %6411 = vmatprep.subr.mxu0 0.0
        %6412 = vmatpush1.msra.mxu0 0.0
        %6413 = vmatprep.subr.mxu0 0.0
        %6414 = vmatpush1.msra.mxu0 0.0
        %6415 = vmatprep.subr.mxu0 0.0
        %6416 = vmatpush1.msra.mxu0 0.0
        %6417 = vmatprep.subr.mxu0 0.0
        %6418 = vmatpush1.msra.mxu0 0.0
        %6419 = vmatprep.subr.mxu0 0.0
        %6420 = vmatpush1.msra.mxu0 0.0
        %6421 = vmatprep.mubr.f32.mxu0 0.0
        %6422 = vmatmul.mubr.f32.gmra.mrb[0].mxu0 %v6355
        %v6423 = vpop.f32.mrb[0].mxu0
        %v6424 = vadd.f32 0.0, %v6423
        %v6425 = vpop.f32.mrb[0].mxu0
        %6426 = vdwg.mxu0
        %6427 = vrot.lane.b32.xlu0 %v6006, 96
        %v6428 = vpop.permute.xlu0 %6427
        %v6431 = vsel %vm1093, %v6348, 0
        %6433 = vmatprep.subr.mxu0 0.0
        %6434 = vmatpush1.msra.mxu0 %v6428
        %6435 = vmatprep.subr.mxu0 0.0
        %6436 = vmatpush1.msra.mxu0 0.0
        %6437 = vmatprep.subr.mxu0 0.0
        %6438 = vmatpush1.msra.mxu0 0.0
        %6439 = vmatprep.subr.mxu0 0.0
        %6440 = vmatpush1.msra.mxu0 0.0
        %6441 = vmatprep.subr.mxu0 0.0
        %6442 = vmatpush1.msra.mxu0 0.0
        %6443 = vmatprep.subr.mxu0 0.0
        %6444 = vmatpush1.msra.mxu0 0.0
        %6445 = vmatprep.subr.mxu0 0.0
        %6446 = vmatpush1.msra.mxu0 0.0
        %6447 = vmatprep.subr.mxu0 0.0
        %6448 = vmatpush1.msra.mxu0 0.0
        %6449 = vmatprep.subr.mxu0 0.0
        %6450 = vmatpush1.msra.mxu0 0.0
        %6451 = vmatprep.subr.mxu0 0.0
        %6452 = vmatpush1.msra.mxu0 0.0
        %6453 = vmatprep.subr.mxu0 0.0
        %6454 = vmatpush1.msra.mxu0 0.0
        %6455 = vmatprep.subr.mxu0 0.0
        %6456 = vmatpush1.msra.mxu0 0.0
        %6457 = vmatprep.subr.mxu0 0.0
        %6458 = vmatpush1.msra.mxu0 0.0
        %6459 = vmatprep.subr.mxu0 0.0
        %6460 = vmatpush1.msra.mxu0 0.0
        %6461 = vmatprep.subr.mxu0 0.0
        %6462 = vmatpush1.msra.mxu0 0.0
        %6463 = vmatprep.subr.mxu0 0.0
        %6464 = vmatpush1.msra.mxu0 0.0
        %6465 = vmatprep.subr.mxu0 0.0
        %6466 = vmatpush1.msra.mxu0 0.0
        %6467 = vmatprep.subr.mxu0 0.0
        %6468 = vmatpush1.msra.mxu0 0.0
        %6469 = vmatprep.subr.mxu0 0.0
        %6470 = vmatpush1.msra.mxu0 0.0
        %6471 = vmatprep.subr.mxu0 0.0
        %6472 = vmatpush1.msra.mxu0 0.0
        %6473 = vmatprep.subr.mxu0 0.0
        %6474 = vmatpush1.msra.mxu0 0.0
        %6475 = vmatprep.subr.mxu0 0.0
        %6476 = vmatpush1.msra.mxu0 0.0
        %6477 = vmatprep.subr.mxu0 0.0
        %6478 = vmatpush1.msra.mxu0 0.0
        %6479 = vmatprep.subr.mxu0 0.0
        %6480 = vmatpush1.msra.mxu0 0.0
        %6481 = vmatprep.subr.mxu0 0.0
        %6482 = vmatpush1.msra.mxu0 0.0
        %6483 = vmatprep.subr.mxu0 0.0
        %6484 = vmatpush1.msra.mxu0 0.0
        %6485 = vmatprep.subr.mxu0 0.0
        %6486 = vmatpush1.msra.mxu0 0.0
        %6487 = vmatprep.subr.mxu0 0.0
        %6488 = vmatpush1.msra.mxu0 0.0
        %6489 = vmatprep.subr.mxu0 0.0
        %6490 = vmatpush1.msra.mxu0 0.0
        %6491 = vmatprep.subr.mxu0 0.0
        %6492 = vmatpush1.msra.mxu0 0.0
        %6493 = vmatprep.subr.mxu0 0.0
        %6494 = vmatpush1.msra.mxu0 0.0
        %6495 = vmatprep.subr.mxu0 0.0
        %6496 = vmatpush1.msra.mxu0 0.0
        %6497 = vmatprep.mubr.f32.mxu0 0.0
        %6498 = vmatmul.mubr.f32.gmra.mrb[0].mxu0 %v6431
        %v6499 = vpop.f32.mrb[0].mxu0
        %v6500 = vadd.f32 0.0, %v6499
        %v6501 = vpop.f32.mrb[0].mxu0
        %6502 = vdwg.mxu0
        %6503 = vrot.lane.b32.xlu0 %v6008, 96
        %v6504 = vpop.permute.xlu0 %6503
        %v6507 = vsel %vm1093, %v6349, 0
        %6509 = vmatprep.subr.mxu0 0.0
        %6510 = vmatpush1.msra.mxu0 %v6504
        %6511 = vmatprep.subr.mxu0 0.0
        %6512 = vmatpush1.msra.mxu0 0.0
        %6513 = vmatprep.subr.mxu0 0.0
        %6514 = vmatpush1.msra.mxu0 0.0
        %6515 = vmatprep.subr.mxu0 0.0
        %6516 = vmatpush1.msra.mxu0 0.0
        %6517 = vmatprep.subr.mxu0 0.0
        %6518 = vmatpush1.msra.mxu0 0.0
        %6519 = vmatprep.subr.mxu0 0.0
        %6520 = vmatpush1.msra.mxu0 0.0
        %6521 = vmatprep.subr.mxu0 0.0
        %6522 = vmatpush1.msra.mxu0 0.0
        %6523 = vmatprep.subr.mxu0 0.0
        %6524 = vmatpush1.msra.mxu0 0.0
        %6525 = vmatprep.subr.mxu0 0.0
        %6526 = vmatpush1.msra.mxu0 0.0
        %6527 = vmatprep.subr.mxu0 0.0
        %6528 = vmatpush1.msra.mxu0 0.0
        %6529 = vmatprep.subr.mxu0 0.0
        %6530 = vmatpush1.msra.mxu0 0.0
        %6531 = vmatprep.subr.mxu0 0.0
        %6532 = vmatpush1.msra.mxu0 0.0
        %6533 = vmatprep.subr.mxu0 0.0
        %6534 = vmatpush1.msra.mxu0 0.0
        %6535 = vmatprep.subr.mxu0 0.0
        %6536 = vmatpush1.msra.mxu0 0.0
        %6537 = vmatprep.subr.mxu0 0.0
        %6538 = vmatpush1.msra.mxu0 0.0
        %6539 = vmatprep.subr.mxu0 0.0
        %6540 = vmatpush1.msra.mxu0 0.0
        %6541 = vmatprep.subr.mxu0 0.0
        %6542 = vmatpush1.msra.mxu0 0.0
        %6543 = vmatprep.subr.mxu0 0.0
        %6544 = vmatpush1.msra.mxu0 0.0
        %6545 = vmatprep.subr.mxu0 0.0
        %6546 = vmatpush1.msra.mxu0 0.0
        %6547 = vmatprep.subr.mxu0 0.0
        %6548 = vmatpush1.msra.mxu0 0.0
        %6549 = vmatprep.subr.mxu0 0.0
        %6550 = vmatpush1.msra.mxu0 0.0
        %6551 = vmatprep.subr.mxu0 0.0
        %6552 = vmatpush1.msra.mxu0 0.0
        %6553 = vmatprep.subr.mxu0 0.0
        %6554 = vmatpush1.msra.mxu0 0.0
        %6555 = vmatprep.subr.mxu0 0.0
        %6556 = vmatpush1.msra.mxu0 0.0
        %6557 = vmatprep.subr.mxu0 0.0
        %6558 = vmatpush1.msra.mxu0 0.0
        %6559 = vmatprep.subr.mxu0 0.0
        %6560 = vmatpush1.msra.mxu0 0.0
        %6561 = vmatprep.subr.mxu0 0.0
        %6562 = vmatpush1.msra.mxu0 0.0
        %6563 = vmatprep.subr.mxu0 0.0
        %6564 = vmatpush1.msra.mxu0 0.0
        %6565 = vmatprep.subr.mxu0 0.0
        %6566 = vmatpush1.msra.mxu0 0.0
        %6567 = vmatprep.subr.mxu0 0.0
        %6568 = vmatpush1.msra.mxu0 0.0
        %6569 = vmatprep.subr.mxu0 0.0
        %6570 = vmatpush1.msra.mxu0 0.0
        %6571 = vmatprep.subr.mxu0 0.0
        %6572 = vmatpush1.msra.mxu0 0.0
        %6573 = vmatprep.mubr.f32.mxu0 0.0
        %6574 = vmatmul.mubr.f32.gmra.mrb[0].mxu0 %v6507
        %v6575 = vpop.f32.mrb[0].mxu0
        %v6576 = vadd.f32 0.0, %v6575
        %v6577 = vpop.f32.mrb[0].mxu0
        %6578 = vdwg.mxu0
        %6579 = vrot.lane.b32.xlu0 %v6010, 96
        %v6580 = vpop.permute.xlu0 %6579
        %v6583 = vsel %vm1093, %v6350, 0
        %6585 = vmatprep.subr.mxu0 0.0
        %6586 = vmatpush1.msra.mxu0 %v6580
        %6587 = vmatprep.subr.mxu0 0.0
        %6588 = vmatpush1.msra.mxu0 0.0
        %6589 = vmatprep.subr.mxu0 0.0
        %6590 = vmatpush1.msra.mxu0 0.0
        %6591 = vmatprep.subr.mxu0 0.0
        %6592 = vmatpush1.msra.mxu0 0.0
        %6593 = vmatprep.subr.mxu0 0.0
        %6594 = vmatpush1.msra.mxu0 0.0
        %6595 = vmatprep.subr.mxu0 0.0
        %6596 = vmatpush1.msra.mxu0 0.0
        %6597 = vmatprep.subr.mxu0 0.0
        %6598 = vmatpush1.msra.mxu0 0.0
        %6599 = vmatprep.subr.mxu0 0.0
        %6600 = vmatpush1.msra.mxu0 0.0
        %6601 = vmatprep.subr.mxu0 0.0
        %6602 = vmatpush1.msra.mxu0 0.0
        %6603 = vmatprep.subr.mxu0 0.0
        %6604 = vmatpush1.msra.mxu0 0.0
        %6605 = vmatprep.subr.mxu0 0.0
        %6606 = vmatpush1.msra.mxu0 0.0
        %6607 = vmatprep.subr.mxu0 0.0
        %6608 = vmatpush1.msra.mxu0 0.0
        %6609 = vmatprep.subr.mxu0 0.0
        %6610 = vmatpush1.msra.mxu0 0.0
        %6611 = vmatprep.subr.mxu0 0.0
        %6612 = vmatpush1.msra.mxu0 0.0
        %6613 = vmatprep.subr.mxu0 0.0
        %6614 = vmatpush1.msra.mxu0 0.0
        %6615 = vmatprep.subr.mxu0 0.0
        %6616 = vmatpush1.msra.mxu0 0.0
        %6617 = vmatprep.subr.mxu0 0.0
        %6618 = vmatpush1.msra.mxu0 0.0
        %6619 = vmatprep.subr.mxu0 0.0
        %6620 = vmatpush1.msra.mxu0 0.0
        %6621 = vmatprep.subr.mxu0 0.0
        %6622 = vmatpush1.msra.mxu0 0.0
        %6623 = vmatprep.subr.mxu0 0.0
        %6624 = vmatpush1.msra.mxu0 0.0
        %6625 = vmatprep.subr.mxu0 0.0
        %6626 = vmatpush1.msra.mxu0 0.0
        %6627 = vmatprep.subr.mxu0 0.0
        %6628 = vmatpush1.msra.mxu0 0.0
        %6629 = vmatprep.subr.mxu0 0.0
        %6630 = vmatpush1.msra.mxu0 0.0
        %6631 = vmatprep.subr.mxu0 0.0
        %6632 = vmatpush1.msra.mxu0 0.0
        %6633 = vmatprep.subr.mxu0 0.0
        %6634 = vmatpush1.msra.mxu0 0.0
        %6635 = vmatprep.subr.mxu0 0.0
        %6636 = vmatpush1.msra.mxu0 0.0
        %6637 = vmatprep.subr.mxu0 0.0
        %6638 = vmatpush1.msra.mxu0 0.0
        %6639 = vmatprep.subr.mxu0 0.0
        %6640 = vmatpush1.msra.mxu0 0.0
        %6641 = vmatprep.subr.mxu0 0.0
        %6642 = vmatpush1.msra.mxu0 0.0
        %6643 = vmatprep.subr.mxu0 0.0
        %6644 = vmatpush1.msra.mxu0 0.0
        %6645 = vmatprep.subr.mxu0 0.0
        %6646 = vmatpush1.msra.mxu0 0.0
        %6647 = vmatprep.subr.mxu0 0.0
        %6648 = vmatpush1.msra.mxu0 0.0
        %6649 = vmatprep.mubr.f32.mxu0 0.0
        %6650 = vmatmul.mubr.f32.gmra.mrb[0].mxu0 %v6583
        %v6651 = vpop.f32.mrb[0].mxu0
        %v6652 = vadd.f32 0.0, %v6651
        %v6653 = vpop.f32.mrb[0].mxu0
        %6654 = vdwg.mxu0
        %6656 = vrot.lane.b32.xlu0 %v6500, 8
        %v6657 = vpop.permute.xlu0 %6656
        %6660 = vrot.lane.b32.xlu0 %v6576, 16
        %v6661 = vpop.permute.xlu0 %6660
        %6664 = vrot.lane.b32.xlu0 %v6652, 24
        %v6665 = vpop.permute.xlu0 %6664
        %v6667 = vsel %vm1093, %v6424, %v6657
        %v6668 = vsel %vm1757, %v6667, %v6661
        %v6669 = vsel %vm1759, %v6668, %v6665
        %v6671 = vsel %vm989, %v6669, 0
        %6673 = vmatprep.subr.mxu0 0.0
        %6674 = vmatpush1.msra.mxu0 %v5993
        %6675 = vmatprep.subr.mxu0 0.0
        %6676 = vmatpush1.msra.mxu0 %v5994
        %6677 = vmatprep.subr.mxu0 0.0
        %6678 = vmatpush1.msra.mxu0 %v5995
        %6679 = vmatprep.subr.mxu0 0.0
        %6680 = vmatpush1.msra.mxu0 %v5996
        %6681 = vmatprep.subr.mxu0 0.0
        %6682 = vmatpush1.msra.mxu0 0.0
        %6683 = vmatprep.subr.mxu0 0.0
        %6684 = vmatpush1.msra.mxu0 0.0
        %6685 = vmatprep.subr.mxu0 0.0
        %6686 = vmatpush1.msra.mxu0 0.0
        %6687 = vmatprep.subr.mxu0 0.0
        %6688 = vmatpush1.msra.mxu0 0.0
        %6689 = vmatprep.subr.mxu0 0.0
        %6690 = vmatpush1.msra.mxu0 0.0
        %6691 = vmatprep.subr.mxu0 0.0
        %6692 = vmatpush1.msra.mxu0 0.0
        %6693 = vmatprep.subr.mxu0 0.0
        %6694 = vmatpush1.msra.mxu0 0.0
        %6695 = vmatprep.subr.mxu0 0.0
        %6696 = vmatpush1.msra.mxu0 0.0
        %6697 = vmatprep.subr.mxu0 0.0
        %6698 = vmatpush1.msra.mxu0 0.0
        %6699 = vmatprep.subr.mxu0 0.0
        %6700 = vmatpush1.msra.mxu0 0.0
        %6701 = vmatprep.subr.mxu0 0.0
        %6702 = vmatpush1.msra.mxu0 0.0
        %6703 = vmatprep.subr.mxu0 0.0
        %6704 = vmatpush1.msra.mxu0 0.0
        %6705 = vmatprep.subr.mxu0 0.0
        %6706 = vmatpush1.msra.mxu0 0.0
        %6707 = vmatprep.subr.mxu0 0.0
        %6708 = vmatpush1.msra.mxu0 0.0
        %6709 = vmatprep.subr.mxu0 0.0
        %6710 = vmatpush1.msra.mxu0 0.0
        %6711 = vmatprep.subr.mxu0 0.0
        %6712 = vmatpush1.msra.mxu0 0.0
        %6713 = vmatprep.subr.mxu0 0.0
        %6714 = vmatpush1.msra.mxu0 0.0
        %6715 = vmatprep.subr.mxu0 0.0
        %6716 = vmatpush1.msra.mxu0 0.0
        %6717 = vmatprep.subr.mxu0 0.0
        %6718 = vmatpush1.msra.mxu0 0.0
        %6719 = vmatprep.subr.mxu0 0.0
        %6720 = vmatpush1.msra.mxu0 0.0
        %6721 = vmatprep.subr.mxu0 0.0
        %6722 = vmatpush1.msra.mxu0 0.0
        %6723 = vmatprep.subr.mxu0 0.0
        %6724 = vmatpush1.msra.mxu0 0.0
        %6725 = vmatprep.subr.mxu0 0.0
        %6726 = vmatpush1.msra.mxu0 0.0
        %6727 = vmatprep.subr.mxu0 0.0
        %6728 = vmatpush1.msra.mxu0 0.0
        %6729 = vmatprep.subr.mxu0 0.0
        %6730 = vmatpush1.msra.mxu0 0.0
        %6731 = vmatprep.subr.mxu0 0.0
        %6732 = vmatpush1.msra.mxu0 0.0
        %6733 = vmatprep.subr.mxu0 0.0
        %6734 = vmatpush1.msra.mxu0 0.0
        %6735 = vmatprep.subr.mxu0 0.0
        %6736 = vmatpush1.msra.mxu0 0.0
        %6737 = vmatprep.mubr.f32.mxu0 0.0
        %6738 = vmatmul.mubr.f32.gmra.mrb[0].mxu0 %v6671
        %v6739 = vpop.f32.mrb[0].mxu0
        %v6740 = vadd.f32 0.0, %v6739
        %v6741 = vpop.f32.mrb[0].mxu0
        %6742 = vdwg.mxu0
        %v6743 = vadd.f32 %v5825, %v6740
        %v6744 = vmul.f32 %v6743, %v6743
        %v6745 = vsel %vm989, %v6744, 0.0
        %6746 = vadd.xlane.f32.xlu0 %v6745
        %v6747 = vpop.xlane.xlu0 %6746
        %v6748 = vmul.f32 %v6747, %v993
        %v6749 = vadd.f32 %v6748, 1e-06
        %v6750 = vrsqrt.pop %v6749
        %v6751 = vmul.f32 %v6743, %v6750
        %v6752 = vlaneseq
        %v6753 = vshrl.u32 %v6752, 7
        %v6754 = vsub.s32 2, %v6753
        %v6755 = vrot.slane %v4981, %v6754
        %v6756 = vmul.f32 %v6751, %v6755
        %s6757 = scalar_lea.vmem [#allocation22], 32
        %v6758 = vld [vmem:[%s6757] sm:$0xff]
        %v6759 = vld [vmem:[%s6757 + $0x8] sm:$0xff]
        %v6760 = vld [vmem:[%s6757 + $0x10] sm:$0xff]
        %v6761 = vld [vmem:[%s6757 + $0x18] sm:$0xff]
        %s6762 = scalar_lea.vmem %s17, 64
        %v6763 = vld [vmem:[%s6762] sm:$0xff]
        %v6764 = vld [vmem:[%s6762 + $0x8] sm:$0xff]
        %v6765 = vld [vmem:[%s6762 + $0x10] sm:$0xff]
        %v6766 = vld [vmem:[%s6762 + $0x18] sm:$0xff]
        %v6767 = vld [vmem:[%s6762 + $0x20] sm:$0xff]
        %v6768 = vld [vmem:[%s6762 + $0x28] sm:$0xff]
        %v6769 = vld [vmem:[%s6762 + $0x30] sm:$0xff]
        %v6770 = vld [vmem:[%s6762 + $0x38] sm:$0xff]
        %v6772 = vsel %vm989, %v6756, 0
        %6774 = vmatprep.subr.mxu0 0.0
        %6775 = vmatpush1.msra.mxu0 %v6758
        %6776 = vmatprep.subr.mxu0 0.0
        %6777 = vmatpush1.msra.mxu0 %v6759
        %6778 = vmatprep.subr.mxu0 0.0
        %6779 = vmatpush1.msra.mxu0 %v6760
        %6780 = vmatprep.subr.mxu0 0.0
        %6781 = vmatpush1.msra.mxu0 %v6761
        %6782 = vmatprep.subr.mxu0 0.0
        %6783 = vmatpush1.msra.mxu0 0.0
        %6784 = vmatprep.subr.mxu0 0.0
        %6785 = vmatpush1.msra.mxu0 0.0
        %6786 = vmatprep.subr.mxu0 0.0
        %6787 = vmatpush1.msra.mxu0 0.0
        %6788 = vmatprep.subr.mxu0 0.0
        %6789 = vmatpush1.msra.mxu0 0.0
        %6790 = vmatprep.subr.mxu0 0.0
        %6791 = vmatpush1.msra.mxu0 0.0
        %6792 = vmatprep.subr.mxu0 0.0
        %6793 = vmatpush1.msra.mxu0 0.0
        %6794 = vmatprep.subr.mxu0 0.0
        %6795 = vmatpush1.msra.mxu0 0.0
        %6796 = vmatprep.subr.mxu0 0.0
        %6797 = vmatpush1.msra.mxu0 0.0
        %6798 = vmatprep.subr.mxu0 0.0
        %6799 = vmatpush1.msra.mxu0 0.0
        %6800 = vmatprep.subr.mxu0 0.0
        %6801 = vmatpush1.msra.mxu0 0.0
        %6802 = vmatprep.subr.mxu0 0.0
        %6803 = vmatpush1.msra.mxu0 0.0
        %6804 = vmatprep.subr.mxu0 0.0
        %6805 = vmatpush1.msra.mxu0 0.0
        %6806 = vmatprep.subr.mxu0 0.0
        %6807 = vmatpush1.msra.mxu0 0.0
        %6808 = vmatprep.subr.mxu0 0.0
        %6809 = vmatpush1.msra.mxu0 0.0
        %6810 = vmatprep.subr.mxu0 0.0
        %6811 = vmatpush1.msra.mxu0 0.0
        %6812 = vmatprep.subr.mxu0 0.0
        %6813 = vmatpush1.msra.mxu0 0.0
        %6814 = vmatprep.subr.mxu0 0.0
        %6815 = vmatpush1.msra.mxu0 0.0
        %6816 = vmatprep.subr.mxu0 0.0
        %6817 = vmatpush1.msra.mxu0 0.0
        %6818 = vmatprep.subr.mxu0 0.0
        %6819 = vmatpush1.msra.mxu0 0.0
        %6820 = vmatprep.subr.mxu0 0.0
        %6821 = vmatpush1.msra.mxu0 0.0
        %6822 = vmatprep.subr.mxu0 0.0
        %6823 = vmatpush1.msra.mxu0 0.0
        %6824 = vmatprep.subr.mxu0 0.0
        %6825 = vmatpush1.msra.mxu0 0.0
        %6826 = vmatprep.subr.mxu0 0.0
        %6827 = vmatpush1.msra.mxu0 0.0
        %6828 = vmatprep.subr.mxu0 0.0
        %6829 = vmatpush1.msra.mxu0 0.0
        %6830 = vmatprep.subr.mxu0 0.0
        %6831 = vmatpush1.msra.mxu0 0.0
        %6832 = vmatprep.subr.mxu0 0.0
        %6833 = vmatpush1.msra.mxu0 0.0
        %6834 = vmatprep.subr.mxu0 0.0
        %6835 = vmatpush1.msra.mxu0 0.0
        %6836 = vmatprep.subr.mxu0 0.0
        %6837 = vmatpush1.msra.mxu0 0.0
        %6838 = vmatprep.mubr.f32.mxu0 0.0
        %6839 = vmatmul.mubr.f32.gmra.mrb[0].mxu0 %v6772
        %v6840 = vpop.f32.mrb[0].mxu0
        %v6841 = vadd.f32 0.0, %v6840
        %v6842 = vpop.f32.mrb[0].mxu0
        %6843 = vdwg.mxu0
        %v6844 = vmax.f32 %v6841, 0.0
        %v6846 = vsel %vm1934, %v6844, 0
        %6848 = vmatprep.subr.mxu0 0.0
        %6849 = vmatpush1.msra.mxu0 %v6763
        %6850 = vmatprep.subr.mxu0 0.0
        %6851 = vmatpush1.msra.mxu0 %v6764
        %6852 = vmatprep.subr.mxu0 0.0
        %6853 = vmatpush1.msra.mxu0 %v6765
        %6854 = vmatprep.subr.mxu0 0.0
        %6855 = vmatpush1.msra.mxu0 %v6766
        %6856 = vmatprep.subr.mxu0 0.0
        %6857 = vmatpush1.msra.mxu0 %v6767
        %6858 = vmatprep.subr.mxu0 0.0
        %6859 = vmatpush1.msra.mxu0 %v6768
        %6860 = vmatprep.subr.mxu0 0.0
        %6861 = vmatpush1.msra.mxu0 %v6769
        %6862 = vmatprep.subr.mxu0 0.0
        %6863 = vmatpush1.msra.mxu0 %v6770
        %6864 = vmatprep.subr.mxu0 0.0
        %6865 = vmatpush1.msra.mxu0 0.0
        %6866 = vmatprep.subr.mxu0 0.0
        %6867 = vmatpush1.msra.mxu0 0.0
        %6868 = vmatprep.subr.mxu0 0.0
        %6869 = vmatpush1.msra.mxu0 0.0
        %6870 = vmatprep.subr.mxu0 0.0
        %6871 = vmatpush1.msra.mxu0 0.0
        %6872 = vmatprep.subr.mxu0 0.0
        %6873 = vmatpush1.msra.mxu0 0.0
        %6874 = vmatprep.subr.mxu0 0.0
        %6875 = vmatpush1.msra.mxu0 0.0
        %6876 = vmatprep.subr.mxu0 0.0
        %6877 = vmatpush1.msra.mxu0 0.0
        %6878 = vmatprep.subr.mxu0 0.0
        %6879 = vmatpush1.msra.mxu0 0.0
        %6880 = vmatprep.subr.mxu0 0.0
        %6881 = vmatpush1.msra.mxu0 0.0
        %6882 = vmatprep.subr.mxu0 0.0
        %6883 = vmatpush1.msra.mxu0 0.0
        %6884 = vmatprep.subr.mxu0 0.0
        %6885 = vmatpush1.msra.mxu0 0.0
        %6886 = vmatprep.subr.mxu0 0.0
        %6887 = vmatpush1.msra.mxu0 0.0
        %6888 = vmatprep.subr.mxu0 0.0
        %6889 = vmatpush1.msra.mxu0 0.0
        %6890 = vmatprep.subr.mxu0 0.0
        %6891 = vmatpush1.msra.mxu0 0.0
        %6892 = vmatprep.subr.mxu0 0.0
        %6893 = vmatpush1.msra.mxu0 0.0
        %6894 = vmatprep.subr.mxu0 0.0
        %6895 = vmatpush1.msra.mxu0 0.0
        %6896 = vmatprep.subr.mxu0 0.0
        %6897 = vmatpush1.msra.mxu0 0.0
        %6898 = vmatprep.subr.mxu0 0.0
        %6899 = vmatpush1.msra.mxu0 0.0
        %6900 = vmatprep.subr.mxu0 0.0
        %6901 = vmatpush1.msra.mxu0 0.0
        %6902 = vmatprep.subr.mxu0 0.0
        %6903 = vmatpush1.msra.mxu0 0.0
        %6904 = vmatprep.subr.mxu0 0.0
        %6905 = vmatpush1.msra.mxu0 0.0
        %6906 = vmatprep.subr.mxu0 0.0
        %6907 = vmatpush1.msra.mxu0 0.0
        %6908 = vmatprep.subr.mxu0 0.0
        %6909 = vmatpush1.msra.mxu0 0.0
        %6910 = vmatprep.subr.mxu0 0.0
        %6911 = vmatpush1.msra.mxu0 0.0
        %6912 = vmatprep.mubr.f32.mxu0 0.0
        %6913 = vmatmul.mubr.f32.gmra.mrb[0].mxu0 %v6846
        %v6914 = vpop.f32.mrb[0].mxu0
        %v6915 = vadd.f32 0.0, %v6914
        %v6916 = vpop.f32.mrb[0].mxu0
        %6917 = vdwg.mxu0
        %v6918 = vadd.f32 %v6743, %v6915
        %v6919 = vld [vmem:[%s19] sm:$0x1]
        %v6920 = vmul.f32 %v6918, %v6918
        %v6921 = vsel %vm989, %v6920, 0.0
        %6922 = vadd.xlane.f32.xlu0 %v6921
        %v6923 = vpop.xlane.xlu0 %6922
        %v6924 = vmul.f32 %v6923, %v993
        %v6925 = vadd.f32 %v6924, 1e-06
        %v6926 = vrsqrt.pop %v6925
        %v6927 = vmul.f32 %v6918, %v6926
        %v6929 = vlaneseq
        %v6930 = vshrl.u32 %v6929, 7
        %v6931 = vsub.s32 0, %v6930
        %v6932 = vrot.slane %v6919, %v6931
        %v6934 = vmul.f32 %v6927, %v6932
        %v6936 = vsel %vm989, %v6934, 0
        %v6939 = vsel %vm989, %v872, 0
        %v6942 = vsel %vm989, %v873, 0
        %v6945 = vsel %vm989, %v874, 0
        %v6948 = vsel %vm989, %v875, 0
        %v6951 = vsel %vm989, %v876, 0
        %v6954 = vsel %vm989, %v877, 0
        %v6957 = vsel %vm989, %v878, 0
        %v6960 = vsel %vm989, %v879, 0
        %v6963 = vsel %vm989, %v880, 0
        %v6966 = vsel %vm989, %v881, 0
        %v6969 = vsel %vm989, %v882, 0
        %v6972 = vsel %vm989, %v883, 0
        %v6975 = vsel %vm989, %v884, 0
        %v6978 = vsel %vm989, %v885, 0
        %v6981 = vsel %vm989, %v886, 0
        %v6984 = vsel %vm989, %v887, 0
        %6986 = vmatprep.subr.mxu0 0.0
        %6987 = vmatpush1.xpose.msra.mxu0 %v6939
        %6988 = vmatprep.subr.mxu0 0.0
        %6989 = vmatpush1.xpose.msra.mxu0 %v6942
        %6990 = vmatprep.subr.mxu0 0.0
        %6991 = vmatpush1.xpose.msra.mxu0 %v6945
        %6992 = vmatprep.subr.mxu0 0.0
        %6993 = vmatpush1.xpose.msra.mxu0 %v6948
        %6994 = vmatprep.subr.mxu0 0.0
        %6995 = vmatpush1.xpose.msra.mxu0 %v6951
        %6996 = vmatprep.subr.mxu0 0.0
        %6997 = vmatpush1.xpose.msra.mxu0 %v6954
        %6998 = vmatprep.subr.mxu0 0.0
        %6999 = vmatpush1.xpose.msra.mxu0 %v6957
        %7000 = vmatprep.subr.mxu0 0.0
        %7001 = vmatpush1.xpose.msra.mxu0 %v6960
        %7002 = vmatprep.subr.mxu0 0.0
        %7003 = vmatpush1.xpose.msra.mxu0 %v6963
        %7004 = vmatprep.subr.mxu0 0.0
        %7005 = vmatpush1.xpose.msra.mxu0 %v6966
        %7006 = vmatprep.subr.mxu0 0.0
        %7007 = vmatpush1.xpose.msra.mxu0 %v6969
        %7008 = vmatprep.subr.mxu0 0.0
        %7009 = vmatpush1.xpose.msra.mxu0 %v6972
        %7010 = vmatprep.subr.mxu0 0.0
        %7011 = vmatpush1.xpose.msra.mxu0 %v6975
        %7012 = vmatprep.subr.mxu0 0.0
        %7013 = vmatpush1.xpose.msra.mxu0 %v6978
        %7014 = vmatprep.subr.mxu0 0.0
        %7015 = vmatpush1.xpose.msra.mxu0 %v6981
        %7016 = vmatprep.subr.mxu0 0.0
        %7017 = vmatpush1.xpose.msra.mxu0 %v6984
        %7018 = vmatprep.subr.mxu0 0.0
        %7019 = vmatpush1.xpose.msra.mxu0 0.0
        %7020 = vmatprep.subr.mxu0 0.0
        %7021 = vmatpush1.xpose.msra.mxu0 0.0
        %7022 = vmatprep.subr.mxu0 0.0
        %7023 = vmatpush1.xpose.msra.mxu0 0.0
        %7024 = vmatprep.subr.mxu0 0.0
        %7025 = vmatpush1.xpose.msra.mxu0 0.0
        %7026 = vmatprep.subr.mxu0 0.0
        %7027 = vmatpush1.xpose.msra.mxu0 0.0
        %7028 = vmatprep.subr.mxu0 0.0
        %7029 = vmatpush1.xpose.msra.mxu0 0.0
        %7030 = vmatprep.subr.mxu0 0.0
        %7031 = vmatpush1.xpose.msra.mxu0 0.0
        %7032 = vmatprep.subr.mxu0 0.0
        %7033 = vmatpush1.xpose.msra.mxu0 0.0
        %7034 = vmatprep.subr.mxu0 0.0
        %7035 = vmatpush1.xpose.msra.mxu0 0.0
        %7036 = vmatprep.subr.mxu0 0.0
        %7037 = vmatpush1.xpose.msra.mxu0 0.0
        %7038 = vmatprep.subr.mxu0 0.0
        %7039 = vmatpush1.xpose.msra.mxu0 0.0
        %7040 = vmatprep.subr.mxu0 0.0
        %7041 = vmatpush1.xpose.msra.mxu0 0.0
        %7042 = vmatprep.subr.mxu0 0.0
        %7043 = vmatpush1.xpose.msra.mxu0 0.0
        %7044 = vmatprep.subr.mxu0 0.0
        %7045 = vmatpush1.xpose.msra.mxu0 0.0
        %7046 = vmatprep.subr.mxu0 0.0
        %7047 = vmatpush1.xpose.msra.mxu0 0.0
        %7048 = vmatprep.subr.mxu0 0.0
        %7049 = vmatpush1.xpose.msra.mxu0 0.0
        %7050 = vmatprep.mubr.f32.mxu0 0.0
        %7051 = vmatmul.mubr.f32.gmra.mrb[0].mxu0 %v6936
        %v7052 = vpop.f32.mrb[0].mxu0
        %v7053 = vadd.f32 0.0, %v7052
        %v7054 = vpop.f32.mrb[0].mxu0
        %7055 = vdwg.mxu0
        %7056 = vst [vmem:[%s852] sm:$0xff] %v7053
        %v7057 = vld [vmem:[%s867] sm:$0xff]
        %vm7058 = vcmp.lt.s32.totalorder %v891, 64
        %v7059 = vsel %vm7058, %v7053, -1e+09
        %7060 = vmax.xlane.f32.xlu0 %v7059
        %v7061 = vpop.xlane.xlu0 %7060
        %v7062 = vsub.f32 %v7059, %v7061
        %v7063 = vmul.f32 %v7062, 1.442695
        %v7064 = vpow.pop %v7063
        %7065 = vadd.xlane.f32.xlu0 %v7064
        %v7066 = vpop.xlane.xlu0 %7065
        %v7067 = vlog2.pop %v7066
        %v7068 = vmul.f32 %v7067, 0.6931472
        %v7069 = vadd.f32 %v7068, %v7061
        %7070 = vset.pattern.permute.xlu0 0
        %7071 = vperm.xlu0 %7070, %v7057
        %v7072 = vpop.permute.xlu0 %7071
        %vm7073 = vcmp.eq.s32.totalorder %v891, %v7072
        %v7074 = vsel %vm7073, 1, 0
        %v7075 = vcvt.s32.f32 %v7074
        %v7076 = vmul.f32 %v7053, %v7075
        %7077 = vadd.xlane.f32.xlu0 %v7076
        %v7078 = vpop.xlane.xlu0 %7077
        %vm7079 = vcmp.ne.s32.totalorder %v7057, 4294967196
        %v7080 = vsel %vm7079, 1, 0
        %v7081 = vcvt.s32.f32 %v7080
        %v7082 = vsub.f32 %v7069, %v7078
        %v7083 = vmul.f32 %v7082, %v7081
        %vm7084 = vcmask 7168
        %v7085 = vsel %vm7084, %v7083, 0.0
        %7086 = vadd.xlane.f32.xlu0 %v7085
        %v7087 = vpop.xlane.xlu0 %7086
        %v7088 = vrot.slane %v7087, 4
        %v7089 = vadd.f32 %v7087, %v7088
        %v7090 = vrot.slane %v7089, 2
        %v7091 = vadd.f32 %v7089, %v7090
        %v7092 = vrot.slane %v7091, 1
        %v7093 = vadd.f32 %v7091, %v7092
        %s7094 = vtos %v7093
        %v7095 = vsel %vm7084, %v7081, 0.0
        %7096 = vadd.xlane.f32.xlu0 %v7095
        %v7097 = vpop.xlane.xlu0 %7096
        %v7098 = vrot.slane %v7097, 4
        %v7099 = vadd.f32 %v7097, %v7098
        %v7100 = vrot.slane %v7099, 2
        %v7101 = vadd.f32 %v7099, %v7100
        %v7102 = vrot.slane %v7101, 1
        %v7103 = vadd.f32 %v7101, %v7102
        %s7104 = vtos %v7103
        %vm7105 = vcmp.eq.s32.totalorder %v891, 0
        %vm7106 = vcmp.eq.s32.totalorder %v891, 1
        %v7107 = vstv %s7104
        %v7108 = vsel %vm7106, %v7107, 0.0
        %v7109 = vstv %s7094
        %v7110 = vsel %vm7105, %v7109, %v7108
        %7111 = vst [vmem:[%s871] sm:$0xff] %v7110
        %s7112 = sand.u32 %s481, 1
        %s7113 = scalar_lea.sflag [#allocation4], %s7112
        %s7114 = sand.u32 %s481, 1
        %s7115 = smul.addr %s7114, 8
        %s7116 = scalar_lea.vmem [#allocation23], %s7115
        %p7117 = scmp.lt.s32.totalorder %s43, 1
        %s7118 = scalar_select %p7117, %s43, 1
        %s7119 = smul.addr %s7118, 8
        %s7120 = scalar_lea.vmem %s21, %s7119
        // Predicated region
        $region153: #{t5_forward.1} parent=99 // pred_check
          %p7121 = pneg %p491
        $region154: #{t5_forward.1} parent=99 // pred_check_branch
          %7123 = sbr.rel (%p7121) target = $region156
        $region155: #{t5_forward.1} parent=99 // pred_region
          %s7125 = ssub.s32 128, 128
          %7126 = vsyncadd %s7113, %s7125
          %s7127 = smul.addr %s43, 128
          %s7128 = scalar_lea.hbm %s20, %s7127
          %s7130 = sshll.u32 %s7116, 4
          %s7131 = int_to_ptr.vmem [resolvable:$true] %s7130
          %7133 = dma.vmem_to_hbm [thread:$0]  %s7131, 128, %s7128, %s7113
        $region156: #{t5_forward.1} parent=99 // pred_fallthru
          _
        // Predicated region
        $region157: #{t5_forward.1} parent=99 // pred_check
          %p7134 = pneg %p517
        $region158: #{t5_forward.1} parent=99 // pred_check_branch
          %7136 = sbr.rel (%p7134) target = $region160
        $region159: #{t5_forward.1} parent=99 // pred_region
          _
        $region160: #{t5_forward.1} parent=99 // pred_fallthru
          _
      $region100: #{t5_forward.1} parent=5 // pred_fallthru
        _
      %p7137 = scmp.le.s32.totalorder 2, %s38
      // Predicated region
      $region161: #{t5_forward.1} parent=5 // pred_check
        %p7138 = pneg %p7137
      $region162: #{t5_forward.1} parent=5 // pred_check_branch
        %7140 = sbr.rel (%p7138) target = $region164
      $region163: #{t5_forward.1} parent=5 // pred_region
        %s7141 = ssub.s32 %s38, 2
        // Predicated region
        $region165: #{t5_forward.1} parent=163 // pred_check
          %p7142 = pneg %p497
        $region166: #{t5_forward.1} parent=163 // pred_check_branch
          %7144 = sbr.rel (%p7142) target = $region168
        $region167: #{t5_forward.1} parent=163 // pred_region
          %s7145 = sand.u32 %s482, 1
          %s7146 = scalar_lea.sflag [#allocation4], %s7145
          %s7147 = sand.u32 %s482, 1
          %s7148 = smul.addr %s7147, 8
          %s7149 = scalar_lea.vmem [#allocation23], %s7148
          %7150 = dma.done %s7146, 128
        $region168: #{t5_forward.1} parent=163 // pred_fallthru
          _
        // Predicated region
        $region169: #{t5_forward.1} parent=163 // pred_check
          %p7151 = pneg %p523
        $region170: #{t5_forward.1} parent=163 // pred_check_branch
          %7153 = sbr.rel (%p7151) target = $region172
        $region171: #{t5_forward.1} parent=163 // pred_region
          %p7154 = scmp.lt.s32.totalorder %s44, 1
          %s7155 = scalar_select %p7154, %s44, 1
          %s7156 = smul.addr %s7155, 8
          %s7157 = scalar_lea.vmem %s21, %s7156
        $region172: #{t5_forward.1} parent=163 // pred_fallthru
          _
      $region164: #{t5_forward.1} parent=5 // pred_fallthru
        _
    $region6: #{t5_forward.1} parent=1 // loop_footer
      %s42 = sadd.s32 1, %s38
    $region7: #{t5_forward.1} parent=1 // loop_footer_branch
      %37 = sbr.rel target = $region3
    $region8: #{t5_forward.1} parent=1 // loop_exit
      _
    %7158 = vsyncpa [#allocation3], 1
    %s7159 = scalar_lea.sflag [#allocation3], 1
    %7160 = vsyncpa %s7159, 1
    %7161 = vsyncpa [#allocation6], 1
    %7162 = vsyncpa [#allocation9], 1
    %7163 = vsyncpa [#allocation12], 1
    %7164 = vsyncpa [#allocation15], 1
    %7165 = vsyncpa [#allocation18], 1
    %7166 = vsyncpa [#allocation21], 1
    %7167 = vsyncpa [#allocation4], 1
    %s7168 = scalar_lea.sflag [#allocation4], 1
    %7169 = vsyncpa %s7168, 1

</llo_original>
